<compile_context>
chip_gen: v6e
topology: v6e:2x2x1
jax: 0.10.0
libtpu: 0.0.40
codegen_flags: <defaults>
</compile_context>

<pallas_src>
import jax
import jax.numpy as jnp
from jax import lax
from jax.experimental import pallas as pl
from jax.experimental.pallas import tpu as pltpu


def _softmax_last(x):
    m = jnp.max(x, axis=-1, keepdims=True)
    e = jnp.exp(x - m)
    return e / jnp.sum(e, axis=-1, keepdims=True)


def _make_kernel(Vps, C, HW, CV):
    inv_hw = 1.0 / HW
    inv_vps = 1.0 / Vps

    def kernel(x_ref, w_ref, b_ref, wrow_ref, pt_ref, gamma_ref,
               out_ref, y_scr, m_acc, g_scr, z2_scr):
        # x_ref   : (Cin, HW)      bf16  current view's input slab
        # w_ref   : (C, Cin)       bf16  1x1 conv weight, rows permuted
        # b_ref   : (C, 1)         f32   conv bias, permuted
        # wrow_ref: (1, C)         f32   self.weight (original order)
        # pt_ref  : (C, C)         f32   un-permutation matrix (Pt @ g_perm = g)
        # gamma_ref: SMEM (1,)     f32
        # out_ref : (C, Vps*HW)    f32   module's flat output buffer
        # y_scr   : (Vps, C, HW)   bf16  per-view conv outputs (permuted rows)
        # m_acc   : (C, HW)        f32   running sum over views
        # g_scr   : (C, Vps)       f32   per-view GAP (permuted rows)
        # z2_scr  : (C, Vps*HW)    bf16  x_sm2 in the "c_v" layout
        v = pl.program_id(0)

        @pl.when(v == 0)
        def _():
            m_acc[...] = jnp.zeros_like(m_acc)
            g_scr[...] = jnp.zeros_like(g_scr)

        # ---- per-view 1x1 conv: one bf16 MXU matmul, f32 accumulate ----
        y1 = jnp.dot(w_ref[...], x_ref[...],
                     preferred_element_type=jnp.float32) + b_ref[...]
        y_scr[v] = y1.astype(jnp.bfloat16)

        # ---- view-sum accumulator + per-view GAP (overlaps the MXU work) ----
        m_acc[...] += y1
        g_col = jnp.sum(y1, axis=1, keepdims=True) * inv_hw            # (C, 1)
        onehot = (lax.broadcasted_iota(jnp.int32, (1, Vps), 1) == v
                  ).astype(jnp.float32)                                  # (1, Vps)
        g_scr[...] += g_col * onehot

        # ---- epilogue on the last view ----
        @pl.when(v == Vps - 1)
        def _():
            gamma = gamma_ref[0]

            # gap1 in original channel order + analytic gap2
            g1 = jnp.dot(pt_ref[...], g_scr[...],
                         preferred_element_type=jnp.float32)            # (C, Vps)
            # softmax of a row-constant matrix is exactly uniform (1/Vps)
            corr = jnp.mean(g1, axis=1, keepdims=True)                  # (C, 1)
            g2 = g1 + gamma * corr                                      # gap2^T
            att_c = lax.dot_general(g2, g2, (((1,), (1,)), ((), ())),
                                    preferred_element_type=jnp.float32)  # (C, C)
            eye = (lax.broadcasted_iota(jnp.int32, (C, C), 0) ==
                   lax.broadcasted_iota(jnp.int32, (C, C), 1)
                   ).astype(jnp.float32)
            # residual folded into the channel matrix: (softmax*weight) + I
            c_mat_plus = (_softmax_last(att_c) * wrow_ref[...] + eye
                          ).astype(jnp.bfloat16)

            # gamma * view-mean (exact uniform view attention), in place
            m_acc[...] = m_acc[...] * (gamma * inv_vps)                 # (C, HW)

            # x_sm2 emitted directly in the c_v layout (contiguous, aligned
            # block transpose), bf16 stores only
            for vv in range(Vps):
                rout = vv * CV
                for c0 in range(Vps):
                    r0 = c0 * CV
                    blk = (m_acc[r0:r0 + CV, :] +
                           y_scr[vv, r0:r0 + CV, :].astype(jnp.float32))
                    z2_scr[rout:rout + CV, c0 * HW:(c0 + 1) * HW] = (
                        blk.astype(jnp.bfloat16))

            # channel attention + residual: ONE bf16 MXU matmul, out written once
            out_ref[...] = jnp.dot(c_mat_plus, z2_scr[...],
                                   preferred_element_type=jnp.float32)

    return kernel


def _vmem_limit_bytes():
    cap = 64 * 1024 * 1024
    try:
        info = pltpu.get_tpu_info()
        cap = int(getattr(info, "vmem_capacity_bytes", cap))
    except Exception:
        pass
    return int(min(cap * 3 // 4, 96 * 1024 * 1024))


def distortion_adaptive_perception(x1234, params):
    conv_w, conv_b, _lin_w, gamma, weight = params   # liner is functionally dead
    x1, x2, x3, x4 = x1234
    up = lambda t: jnp.repeat(jnp.repeat(t, 2, axis=2), 2, axis=3)  # nearest x2
    x_cat = jnp.concatenate([x1, up(x2), up(up(x3)), up(up(x4))], axis=1)
    Vps, Cin, H, W = x_cat.shape
    C = conv_w.shape[0]
    HW = H * W
    assert C % Vps == 0, "kernel layout requires Vps | C"
    assert HW % 128 == 0, "lane-aligned column blocks require 128 | H*W"
    CV = C // Vps  # CV >= 16 keeps the bf16 block-transpose stores fully aligned

    # per-view input slabs, fed to the kernel without any HBM transpose
    x_in = x_cat.reshape(Vps, Cin, HW).astype(jnp.bfloat16)

    # channel permutation c = c1*Vps + c0  ->  p = c0*CV + c1
    ar = jnp.arange(C)
    perm = (ar % Vps) * CV + ar // Vps
    inv_perm = (ar % CV) * Vps + ar // CV
    w_perm = conv_w[inv_perm].astype(jnp.bfloat16)                 # (C, Cin)
    b_perm = conv_b[inv_perm].reshape(C, 1).astype(jnp.float32)    # (C, 1)
    pt = jnp.zeros((C, C), jnp.float32).at[ar, perm].set(1.0)      # Pt @ g_perm = g

    kernel = _make_kernel(Vps, C, HW, CV)
    flops = 2 * C * Cin * Vps * HW + 2 * C * C * Vps * HW
    bytes_accessed = (Vps * Cin * HW * 2 + C * Vps * HW * 4
                      + C * Cin * 2 + C * C * 4 + 3 * C * 4)

    out_cv = pl.pallas_call(
        kernel,
        out_shape=jax.ShapeDtypeStruct((C, Vps * HW), jnp.float32),
        grid=(Vps,),
        in_specs=[
            pl.BlockSpec((None, Cin, HW), lambda v: (v, 0, 0)),   # one view / step
            pl.BlockSpec((C, Cin), lambda v: (0, 0)),             # conv weight (perm)
            pl.BlockSpec((C, 1), lambda v: (0, 0)),               # conv bias (perm)
            pl.BlockSpec((1, C), lambda v: (0, 0)),               # self.weight row
            pl.BlockSpec((C, C), lambda v: (0, 0)),               # un-permutation
            pl.BlockSpec(memory_space=pltpu.MemorySpace.SMEM),    # gamma scalar
        ],
        out_specs=pl.BlockSpec((C, Vps * HW), lambda v: (0, 0)),
        scratch_shapes=[
            pltpu.VMEM((Vps, C, HW), jnp.bfloat16),   # per-view conv outputs
            pltpu.VMEM((C, HW), jnp.float32),         # view-sum accumulator
            pltpu.VMEM((C, Vps), jnp.float32),        # per-view GAP
            pltpu.VMEM((C, Vps * HW), jnp.bfloat16),  # x_sm2 in the c_v layout
        ],
        compiler_params=pltpu.CompilerParams(
            dimension_semantics=("arbitrary",),
            vmem_limit_bytes=_vmem_limit_bytes()),
        cost_estimate=pl.CostEstimate(
            flops=int(flops), transcendentals=int(C * C),
            bytes_accessed=int(bytes_accessed)),
    )(
        x_in, w_perm, b_perm,
        weight.reshape(1, C).astype(jnp.float32),
        pt,
        jnp.asarray(gamma, jnp.float32).reshape(1),
    )
    # kernel output flat buffer == module output flat buffer: plain reshape only
    return out_cv.reshape(Vps, C, HW)


def reference_forward(x1234, params):
    """Plain-JAX mirror of the PyTorch forward (for numerical validation)."""
    conv_w, conv_b, lin_w, gamma, weight = params
    x1, x2, x3, x4 = x1234
    up = lambda t: jnp.repeat(jnp.repeat(t, 2, axis=2), 2, axis=3)
    x_sm = jnp.concatenate([x1, up(x2), up(up(x3)), up(up(x4))], axis=1)
    x_sm = jnp.einsum('oc,vchw->vohw', conv_w, x_sm) + conv_b[None, :, None, None]
    Vps, C, H, W = x_sm.shape
    v_q = x_sm.mean(axis=(2, 3)) @ lin_w.T                               # (Vps, 1)
    att = v_q @ v_q.T
    att_new = jnp.broadcast_to(jnp.max(att, -1, keepdims=True), att.shape)
    vps_mat = jax.nn.softmax(att_new, axis=-1)
    vps_att = (vps_mat @ x_sm.reshape(Vps, C * H * W)).reshape(Vps, C, H, W)
    x_sm = vps_att * gamma + x_sm
    c_q = x_sm.mean(axis=(2, 3))
    attC = c_q.T @ c_q
    C_mat = jax.nn.softmax(attC, axis=-1) * weight
    C_att = (C_mat @ x_sm.reshape(C, Vps * H * W)).reshape(Vps, C, H, W)
    out = C_att + x_sm
    return out.reshape(Vps, C, H * W)


if __name__ == "__main__":
    key = jax.random.PRNGKey(0)
    kx1, kx2, kx3, kx4, kw, kb, kl, kwt = jax.random.split(key, 8)

    # Module-consistent small shapes: conv2_1 is 512 -> in_dim=128, four
    # pyramid levels (128 channels each), finest spatial level 16x16, Vps=8.
    Vps, C_each, H, W = 8, 128, 16, 16
    in_dim = 128
    Cin = 4 * C_each  # 512

    x1 = jax.random.normal(kx1, (Vps, C_each, H, W), jnp.float32)
    x2 = jax.random.normal(kx2, (Vps, C_each, H // 2, W // 2), jnp.float32)
    x3 = jax.random.normal(kx3, (Vps, C_each, H // 4, W // 4), jnp.float32)
    x4 = jax.random.normal(kx4, (Vps, C_each, H // 4, W // 4), jnp.float32)

    # Parameter shapes from __init__.  gamma is set nonzero (unlike the
    # module's zero init) so the view-attention path is numerically exercised.
    conv_w = 0.02 * jax.random.normal(kw, (in_dim, Cin), jnp.float32)     # conv2_1.weight
    conv_b = 0.02 * jax.random.normal(kb, (in_dim,), jnp.float32)         # conv2_1.bias
    lin_w = 0.1 * jax.random.normal(kl, (1, in_dim), jnp.float32)         # liner.weight (dead)
    gamma = jnp.asarray(0.5, jnp.float32)                                 # gamma
    weight = 1.0 + 0.05 * jax.random.normal(kwt, (in_dim,), jnp.float32)  # weight
    # note: self.gamma1 is never used in forward(), so it is omitted.
    params = (conv_w, conv_b, lin_w, gamma, weight)

    out = distortion_adaptive_perception((x1, x2, x3, x4), params)
    out = jax.block_until_ready(out)

    ref = reference_forward((x1, x2, x3, x4), params)
    assert out.shape == (Vps, in_dim, H * W)
    max_err = float(jnp.max(jnp.abs(out - ref)))
    assert max_err < 3e-2, f"max abs err {max_err}"
    print("KERNEL_OK")
</pallas_src>

<mosaic_0001>
module attributes {stable_mosaic.version = 11 : i64} {
  func.func @kernel(%arg0: i32, %arg1: memref<1x512x256xbf16, #tpu.memory_space<vmem>>, %arg2: memref<128x512xbf16, #tpu.memory_space<vmem>>, %arg3: memref<128x1xf32, #tpu.memory_space<vmem>>, %arg4: memref<1x128xf32, #tpu.memory_space<vmem>>, %arg5: memref<128x128xf32, #tpu.memory_space<vmem>>, %arg6: memref<1xf32, #tpu.memory_space<smem>>, %arg7: memref<128x2048xf32, #tpu.memory_space<vmem>>, %arg8: memref<8x128x256xbf16, #tpu.memory_space<vmem>>, %arg9: memref<128x256xf32, #tpu.memory_space<vmem>>, %arg10: memref<128x8xf32, #tpu.memory_space<vmem>>, %arg11: memref<128x2048xbf16, #tpu.memory_space<vmem>>) attributes {dimension_semantics = [#tpu.dimension_semantics<arbitrary>], iteration_bounds = array<i64: 8>, scalar_prefetch = 0 : i64, scratch_operands = 4 : i64, tpu.core_type = #tpu.core_type<tc>, window_params = [{transform_indices = @transform_0, window_bounds = array<i64: 1, 512, 256>}, {pipeline_mode = #tpu.pipeline_mode<synchronous>, transform_indices = @transform_1, window_bounds = array<i64: 128, 512>}, {pipeline_mode = #tpu.pipeline_mode<synchronous>, transform_indices = @transform_2, window_bounds = array<i64: 128, 1>}, {pipeline_mode = #tpu.pipeline_mode<synchronous>, transform_indices = @transform_3, window_bounds = array<i64: 1, 128>}, {pipeline_mode = #tpu.pipeline_mode<synchronous>, transform_indices = @transform_4, window_bounds = array<i64: 128, 128>}, {transform_indices = @transform_5, window_bounds = array<i64: 1>}, {pipeline_mode = #tpu.pipeline_mode<synchronous>, transform_indices = @transform_6, window_bounds = array<i64: 128, 2048>}]} {
    %c0_i32 = arith.constant 0 : i32
    %0 = arith.cmpi eq, %arg0, %c0_i32 : i32
    %1 = arith.extui %0 : i1 to i32
    %c0_i32_0 = arith.constant 0 : i32
    %2 = arith.cmpi ne, %1, %c0_i32_0 : i32
    scf.if %2 {
      %cst_20 = arith.constant 0.000000e+00 : f32
      %36 = vector.broadcast %cst_20 : f32 to vector<128x256xf32>
      %c0_21 = arith.constant 0 : index
      %c0_22 = arith.constant 0 : index
      %37 = vector.load %arg9[%c0_21, %c0_22] : memref<128x256xf32, #tpu.memory_space<vmem>>, vector<128x256xf32>
      tpu.vector_store %arg9[%c0_21, %c0_22], %36 {strides = array<i32>} : memref<128x256xf32, #tpu.memory_space<vmem>>, vector<128x256xf32>,
      %cst_23 = arith.constant 0.000000e+00 : f32
      %38 = vector.broadcast %cst_23 : f32 to vector<128x8xf32>
      %c0_24 = arith.constant 0 : index
      %c0_25 = arith.constant 0 : index
      %39 = vector.load %arg10[%c0_24, %c0_25] : memref<128x8xf32, #tpu.memory_space<vmem>>, vector<128x8xf32>
      tpu.vector_store %arg10[%c0_24, %c0_25], %38 {strides = array<i32>} : memref<128x8xf32, #tpu.memory_space<vmem>>, vector<128x8xf32>,
    } else {
    }
    %c0 = arith.constant 0 : index
    %c0_1 = arith.constant 0 : index
    %3 = vector.load %arg2[%c0, %c0_1] : memref<128x512xbf16, #tpu.memory_space<vmem>>, vector<128x512xbf16>
    %c0_2 = arith.constant 0 : index
    %c0_3 = arith.constant 0 : index
    %c0_4 = arith.constant 0 : index
    %4 = vector.load %arg1[%c0_2, %c0_3, %c0_4] : memref<1x512x256xbf16, #tpu.memory_space<vmem>>, vector<1x512x256xbf16>
    %5 = vector.shape_cast %4 : vector<1x512x256xbf16> to vector<512x256xbf16>
    %cst = arith.constant dense<0.000000e+00> : vector<128x256xf32>
    %6 = tpu.matmul %3, %5, %cst {dimension_numbers = #tpu.dot_dimension_numbers<[1], [0], [0], [1], [0, 0, 1, 1], [], []>} : vector<128x512xbf16>, vector<512x256xbf16>, vector<128x256xf32> -> vector<128x256xf32>
    %c0_5 = arith.constant 0 : index
    %c0_6 = arith.constant 0 : index
    %7 = vector.load %arg3[%c0_5, %c0_6] : memref<128x1xf32, #tpu.memory_space<vmem>>, vector<128x1xf32>
    %8 = vector.broadcast %7 : vector<128x1xf32> to vector<128x256xf32>
    %9 = arith.addf %6, %8 : vector<128x256xf32>
    %10 = arith.truncf %9 : vector<128x256xf32> to vector<128x256xbf16>
    %11 = arith.index_cast %arg0 : i32 to index
    %c0_7 = arith.constant 0 : index
    %c0_8 = arith.constant 0 : index
    %12 = vector.load %arg8[%11, %c0_7, %c0_8] : memref<8x128x256xbf16, #tpu.memory_space<vmem>>, vector<1x128x256xbf16>
    %13 = vector.shape_cast %12 : vector<1x128x256xbf16> to vector<128x256xbf16>
    %14 = vector.shape_cast %10 : vector<128x256xbf16> to vector<1x128x256xbf16>
    tpu.vector_store %arg8[%11, %c0_7, %c0_8], %14 {strides = array<i32>} : memref<8x128x256xbf16, #tpu.memory_space<vmem>>, vector<1x128x256xbf16>,
    %c0_9 = arith.constant 0 : index
    %c0_10 = arith.constant 0 : index
    %15 = vector.load %arg9[%c0_9, %c0_10] : memref<128x256xf32, #tpu.memory_space<vmem>>, vector<128x256xf32>
    %16 = arith.addf %15, %9 : vector<128x256xf32>
    %c0_11 = arith.constant 0 : index
    %c0_12 = arith.constant 0 : index
    %17 = vector.load %arg9[%c0_11, %c0_12] : memref<128x256xf32, #tpu.memory_space<vmem>>, vector<128x256xf32>
    tpu.vector_store %arg9[%c0_11, %c0_12], %16 {strides = array<i32>} : memref<128x256xf32, #tpu.memory_space<vmem>>, vector<128x256xf32>,
    %cst_13 = arith.constant dense<0.000000e+00> : vector<128xf32>
    %18 = vector.multi_reduction <add>, %9, %cst_13 [1] : vector<128x256xf32> to vector<128xf32>
    %19 = vector.shape_cast %18 : vector<128xf32> to vector<128x1xf32>
    %cst_14 = arith.constant 3.906250e-03 : f32
    %20 = vector.broadcast %cst_14 : f32 to vector<128x1xf32>
    %21 = arith.mulf %19, %20 : vector<128x1xf32>
    %22 = tpu.iota {dimensions = array<i32: 1>} : vector<1x8xi32>
    %23 = vector.broadcast %arg0 : i32 to vector<1x8xi32>
    %24 = arith.cmpi eq, %22, %23 : vector<1x8xi32>
    %25 = arith.extui %24 : vector<1x8xi1> to vector<1x8xi32>
    %26 = arith.sitofp %25 : vector<1x8xi32> to vector<1x8xf32>
    %c0_15 = arith.constant 0 : index
    %c0_16 = arith.constant 0 : index
    %27 = vector.load %arg10[%c0_15, %c0_16] : memref<128x8xf32, #tpu.memory_space<vmem>>, vector<128x8xf32>
    %28 = vector.broadcast %21 : vector<128x1xf32> to vector<128x8xf32>
    %29 = vector.broadcast %26 : vector<1x8xf32> to vector<128x8xf32>
    %30 = arith.mulf %28, %29 : vector<128x8xf32>
    %31 = arith.addf %27, %30 : vector<128x8xf32>
    %c0_17 = arith.constant 0 : index
    %c0_18 = arith.constant 0 : index
    %32 = vector.load %arg10[%c0_17, %c0_18] : memref<128x8xf32, #tpu.memory_space<vmem>>, vector<128x8xf32>
    tpu.vector_store %arg10[%c0_17, %c0_18], %31 {strides = array<i32>} : memref<128x8xf32, #tpu.memory_space<vmem>>, vector<128x8xf32>,
    %c7_i32 = arith.constant 7 : i32
    %33 = arith.cmpi eq, %arg0, %c7_i32 : i32
    %34 = arith.extui %33 : i1 to i32
    %c0_i32_19 = arith.constant 0 : i32
    %35 = arith.cmpi ne, %34, %c0_i32_19 : i32
    scf.if %35 {
      %c0_20 = arith.constant 0 : index
      %36 = memref.load %arg6[%c0_20] : memref<1xf32, #tpu.memory_space<smem>>
      %c0_21 = arith.constant 0 : index
      %c0_22 = arith.constant 0 : index
      %37 = vector.load %arg5[%c0_21, %c0_22] : memref<128x128xf32, #tpu.memory_space<vmem>>, vector<128x128xf32>
      %c0_23 = arith.constant 0 : index
      %c0_24 = arith.constant 0 : index
      %38 = vector.load %arg10[%c0_23, %c0_24] : memref<128x8xf32, #tpu.memory_space<vmem>>, vector<128x8xf32>
      %cst_25 = arith.constant dense<0.000000e+00> : vector<128x8xf32>
      %39 = tpu.matmul %37, %38, %cst_25 {dimension_numbers = #tpu.dot_dimension_numbers<[1], [0], [0], [1], [0, 0, 1, 1], [], []>} : vector<128x128xf32>, vector<128x8xf32>, vector<128x8xf32> -> vector<128x8xf32>
      %cst_26 = arith.constant dense<0.000000e+00> : vector<128xf32>
      %40 = vector.multi_reduction <add>, %39, %cst_26 [1] : vector<128x8xf32> to vector<128xf32>
      %41 = vector.shape_cast %40 : vector<128xf32> to vector<128x1xf32>
      %cst_27 = arith.constant 8.000000e+00 : f32
      %42 = vector.broadcast %cst_27 : f32 to vector<128x1xf32>
      %43 = arith.divf %41, %42 : vector<128x1xf32>
      %44 = vector.broadcast %36 : f32 to vector<128x1xf32>
      %45 = arith.mulf %44, %43 : vector<128x1xf32>
      %46 = vector.broadcast %45 : vector<128x1xf32> to vector<128x8xf32>
      %47 = arith.addf %39, %46 : vector<128x8xf32>
      %cst_28 = arith.constant dense<0.000000e+00> : vector<128x128xf32>
      %48 = tpu.matmul %47, %47, %cst_28 {dimension_numbers = #tpu.dot_dimension_numbers<[1], [1], [0], [0], [0, 0, 1, 0], [], []>} : vector<128x8xf32>, vector<128x8xf32>, vector<128x128xf32> -> vector<128x128xf32>
      %49 = tpu.iota {dimensions = array<i32: 0>} : vector<128x128xi32>
      %50 = tpu.iota {dimensions = array<i32: 1>} : vector<128x128xi32>
      %51 = arith.cmpi eq, %49, %50 : vector<128x128xi32>
      %52 = arith.extui %51 : vector<128x128xi1> to vector<128x128xi32>
      %53 = arith.sitofp %52 : vector<128x128xi32> to vector<128x128xf32>
      %cst_29 = arith.constant dense<0xFF800000> : vector<128xf32>
      %54 = vector.multi_reduction <maximumf>, %48, %cst_29 [1] : vector<128x128xf32> to vector<128xf32>
      %55 = vector.shape_cast %54 : vector<128xf32> to vector<128x1xf32>
      %56 = vector.broadcast %55 : vector<128x1xf32> to vector<128x128xf32>
      %57 = arith.subf %48, %56 : vector<128x128xf32>
      %58 = math.exp %57 : vector<128x128xf32>
      %cst_30 = arith.constant dense<0.000000e+00> : vector<128xf32>
      %59 = vector.multi_reduction <add>, %58, %cst_30 [1] : vector<128x128xf32> to vector<128xf32>
      %60 = vector.shape_cast %59 : vector<128xf32> to vector<128x1xf32>
      %61 = vector.broadcast %60 : vector<128x1xf32> to vector<128x128xf32>
      %62 = arith.divf %58, %61 : vector<128x128xf32>
      %c0_31 = arith.constant 0 : index
      %c0_32 = arith.constant 0 : index
      %63 = vector.load %arg4[%c0_31, %c0_32] : memref<1x128xf32, #tpu.memory_space<vmem>>, vector<1x128xf32>
      %64 = vector.broadcast %63 : vector<1x128xf32> to vector<128x128xf32>
      %65 = arith.mulf %62, %64 : vector<128x128xf32>
      %66 = arith.addf %65, %53 : vector<128x128xf32>
      %67 = arith.truncf %66 : vector<128x128xf32> to vector<128x128xbf16>
      %c0_33 = arith.constant 0 : index
      %c0_34 = arith.constant 0 : index
      %68 = vector.load %arg9[%c0_33, %c0_34] : memref<128x256xf32, #tpu.memory_space<vmem>>, vector<128x256xf32>
      %cst_35 = arith.constant 1.250000e-01 : f32
      %69 = arith.mulf %36, %cst_35 : f32
      %70 = vector.broadcast %69 : f32 to vector<128x256xf32>
      %71 = arith.mulf %68, %70 : vector<128x256xf32>
      %c0_36 = arith.constant 0 : index
      %c0_37 = arith.constant 0 : index
      %72 = vector.load %arg9[%c0_36, %c0_37] : memref<128x256xf32, #tpu.memory_space<vmem>>, vector<128x256xf32>
      tpu.vector_store %arg9[%c0_36, %c0_37], %71 {strides = array<i32>} : memref<128x256xf32, #tpu.memory_space<vmem>>, vector<128x256xf32>,
      %c0_38 = arith.constant 0 : index
      %c0_39 = arith.constant 0 : index
      %73 = vector.load %arg9[%c0_38, %c0_39] : memref<128x256xf32, #tpu.memory_space<vmem>>, vector<16x256xf32>
      %c0_40 = arith.constant 0 : index
      %c0_41 = arith.constant 0 : index
      %c0_42 = arith.constant 0 : index
      %74 = vector.load %arg8[%c0_40, %c0_41, %c0_42] : memref<8x128x256xbf16, #tpu.memory_space<vmem>>, vector<1x16x256xbf16>
      %75 = vector.shape_cast %74 : vector<1x16x256xbf16> to vector<16x256xbf16>
      %76 = arith.extf %75 : vector<16x256xbf16> to vector<16x256xf32>
      %77 = arith.addf %73, %76 : vector<16x256xf32>
      %78 = arith.truncf %77 : vector<16x256xf32> to vector<16x256xbf16>
      %c0_43 = arith.constant 0 : index
      %c0_44 = arith.constant 0 : index
      %79 = vector.load %arg11[%c0_43, %c0_44] : memref<128x2048xbf16, #tpu.memory_space<vmem>>, vector<16x256xbf16>
      tpu.vector_store %arg11[%c0_43, %c0_44], %78 {strides = array<i32>} : memref<128x2048xbf16, #tpu.memory_space<vmem>>, vector<16x256xbf16>,
      %c16 = arith.constant 16 : index
      %c0_45 = arith.constant 0 : index
      %80 = vector.load %arg9[%c16, %c0_45] : memref<128x256xf32, #tpu.memory_space<vmem>>, vector<16x256xf32>
      %c0_46 = arith.constant 0 : index
      %c16_47 = arith.constant 16 : index
      %c0_48 = arith.constant 0 : index
      %81 = vector.load %arg8[%c0_46, %c16_47, %c0_48] : memref<8x128x256xbf16, #tpu.memory_space<vmem>>, vector<1x16x256xbf16>
      %82 = vector.shape_cast %81 : vector<1x16x256xbf16> to vector<16x256xbf16>
      %83 = arith.extf %82 : vector<16x256xbf16> to vector<16x256xf32>
      %84 = arith.addf %80, %83 : vector<16x256xf32>
      %85 = arith.truncf %84 : vector<16x256xf32> to vector<16x256xbf16>
      %c0_49 = arith.constant 0 : index
      %c256 = arith.constant 256 : index
      %86 = vector.load %arg11[%c0_49, %c256] : memref<128x2048xbf16, #tpu.memory_space<vmem>>, vector<16x256xbf16>
      tpu.vector_store %arg11[%c0_49, %c256], %85 {strides = array<i32>} : memref<128x2048xbf16, #tpu.memory_space<vmem>>, vector<16x256xbf16>,
      %c32 = arith.constant 32 : index
      %c0_50 = arith.constant 0 : index
      %87 = vector.load %arg9[%c32, %c0_50] : memref<128x256xf32, #tpu.memory_space<vmem>>, vector<16x256xf32>
      %c0_51 = arith.constant 0 : index
      %c32_52 = arith.constant 32 : index
      %c0_53 = arith.constant 0 : index
      %88 = vector.load %arg8[%c0_51, %c32_52, %c0_53] : memref<8x128x256xbf16, #tpu.memory_space<vmem>>, vector<1x16x256xbf16>
      %89 = vector.shape_cast %88 : vector<1x16x256xbf16> to vector<16x256xbf16>
      %90 = arith.extf %89 : vector<16x256xbf16> to vector<16x256xf32>
      %91 = arith.addf %87, %90 : vector<16x256xf32>
      %92 = arith.truncf %91 : vector<16x256xf32> to vector<16x256xbf16>
      %c0_54 = arith.constant 0 : index
      %c512 = arith.constant 512 : index
      %93 = vector.load %arg11[%c0_54, %c512] : memref<128x2048xbf16, #tpu.memory_space<vmem>>, vector<16x256xbf16>
      tpu.vector_store %arg11[%c0_54, %c512], %92 {strides = array<i32>} : memref<128x2048xbf16, #tpu.memory_space<vmem>>, vector<16x256xbf16>,
      %c48 = arith.constant 48 : index
      %c0_55 = arith.constant 0 : index
      %94 = vector.load %arg9[%c48, %c0_55] : memref<128x256xf32, #tpu.memory_space<vmem>>, vector<16x256xf32>
      %c0_56 = arith.constant 0 : index
      %c48_57 = arith.constant 48 : index
      %c0_58 = arith.constant 0 : index
      %95 = vector.load %arg8[%c0_56, %c48_57, %c0_58] : memref<8x128x256xbf16, #tpu.memory_space<vmem>>, vector<1x16x256xbf16>
      %96 = vector.shape_cast %95 : vector<1x16x256xbf16> to vector<16x256xbf16>
      %97 = arith.extf %96 : vector<16x256xbf16> to vector<16x256xf32>
      %98 = arith.addf %94, %97 : vector<16x256xf32>
      %99 = arith.truncf %98 : vector<16x256xf32> to vector<16x256xbf16>
      %c0_59 = arith.constant 0 : index
      %c768 = arith.constant 768 : index
      %100 = vector.load %arg11[%c0_59, %c768] : memref<128x2048xbf16, #tpu.memory_space<vmem>>, vector<16x256xbf16>
      tpu.vector_store %arg11[%c0_59, %c768], %99 {strides = array<i32>} : memref<128x2048xbf16, #tpu.memory_space<vmem>>, vector<16x256xbf16>,
      %c64 = arith.constant 64 : index
      %c0_60 = arith.constant 0 : index
      %101 = vector.load %arg9[%c64, %c0_60] : memref<128x256xf32, #tpu.memory_space<vmem>>, vector<16x256xf32>
      %c0_61 = arith.constant 0 : index
      %c64_62 = arith.constant 64 : index
      %c0_63 = arith.constant 0 : index
      %102 = vector.load %arg8[%c0_61, %c64_62, %c0_63] : memref<8x128x256xbf16, #tpu.memory_space<vmem>>, vector<1x16x256xbf16>
      %103 = vector.shape_cast %102 : vector<1x16x256xbf16> to vector<16x256xbf16>
      %104 = arith.extf %103 : vector<16x256xbf16> to vector<16x256xf32>
      %105 = arith.addf %101, %104 : vector<16x256xf32>
      %106 = arith.truncf %105 : vector<16x256xf32> to vector<16x256xbf16>
      %c0_64 = arith.constant 0 : index
      %c1024 = arith.constant 1024 : index
      %107 = vector.load %arg11[%c0_64, %c1024] : memref<128x2048xbf16, #tpu.memory_space<vmem>>, vector<16x256xbf16>
      tpu.vector_store %arg11[%c0_64, %c1024], %106 {strides = array<i32>} : memref<128x2048xbf16, #tpu.memory_space<vmem>>, vector<16x256xbf16>,
      %c80 = arith.constant 80 : index
      %c0_65 = arith.constant 0 : index
      %108 = vector.load %arg9[%c80, %c0_65] : memref<128x256xf32, #tpu.memory_space<vmem>>, vector<16x256xf32>
      %c0_66 = arith.constant 0 : index
      %c80_67 = arith.constant 80 : index
      %c0_68 = arith.constant 0 : index
      %109 = vector.load %arg8[%c0_66, %c80_67, %c0_68] : memref<8x128x256xbf16, #tpu.memory_space<vmem>>, vector<1x16x256xbf16>
      %110 = vector.shape_cast %109 : vector<1x16x256xbf16> to vector<16x256xbf16>
      %111 = arith.extf %110 : vector<16x256xbf16> to vector<16x256xf32>
      %112 = arith.addf %108, %111 : vector<16x256xf32>
      %113 = arith.truncf %112 : vector<16x256xf32> to vector<16x256xbf16>
      %c0_69 = arith.constant 0 : index
      %c1280 = arith.constant 1280 : index
      %114 = vector.load %arg11[%c0_69, %c1280] : memref<128x2048xbf16, #tpu.memory_space<vmem>>, vector<16x256xbf16>
      tpu.vector_store %arg11[%c0_69, %c1280], %113 {strides = array<i32>} : memref<128x2048xbf16, #tpu.memory_space<vmem>>, vector<16x256xbf16>,
      %c96 = arith.constant 96 : index
      %c0_70 = arith.constant 0 : index
      %115 = vector.load %arg9[%c96, %c0_70] : memref<128x256xf32, #tpu.memory_space<vmem>>, vector<16x256xf32>
      %c0_71 = arith.constant 0 : index
      %c96_72 = arith.constant 96 : index
      %c0_73 = arith.constant 0 : index
      %116 = vector.load %arg8[%c0_71, %c96_72, %c0_73] : memref<8x128x256xbf16, #tpu.memory_space<vmem>>, vector<1x16x256xbf16>
      %117 = vector.shape_cast %116 : vector<1x16x256xbf16> to vector<16x256xbf16>
      %118 = arith.extf %117 : vector<16x256xbf16> to vector<16x256xf32>
      %119 = arith.addf %115, %118 : vector<16x256xf32>
      %120 = arith.truncf %119 : vector<16x256xf32> to vector<16x256xbf16>
      %c0_74 = arith.constant 0 : index
      %c1536 = arith.constant 1536 : index
      %121 = vector.load %arg11[%c0_74, %c1536] : memref<128x2048xbf16, #tpu.memory_space<vmem>>, vector<16x256xbf16>
      tpu.vector_store %arg11[%c0_74, %c1536], %120 {strides = array<i32>} : memref<128x2048xbf16, #tpu.memory_space<vmem>>, vector<16x256xbf16>,
      %c112 = arith.constant 112 : index
      %c0_75 = arith.constant 0 : index
      %122 = vector.load %arg9[%c112, %c0_75] : memref<128x256xf32, #tpu.memory_space<vmem>>, vector<16x256xf32>
      %c0_76 = arith.constant 0 : index
      %c112_77 = arith.constant 112 : index
      %c0_78 = arith.constant 0 : index
      %123 = vector.load %arg8[%c0_76, %c112_77, %c0_78] : memref<8x128x256xbf16, #tpu.memory_space<vmem>>, vector<1x16x256xbf16>
      %124 = vector.shape_cast %123 : vector<1x16x256xbf16> to vector<16x256xbf16>
      %125 = arith.extf %124 : vector<16x256xbf16> to vector<16x256xf32>
      %126 = arith.addf %122, %125 : vector<16x256xf32>
      %127 = arith.truncf %126 : vector<16x256xf32> to vector<16x256xbf16>
      %c0_79 = arith.constant 0 : index
      %c1792 = arith.constant 1792 : index
      %128 = vector.load %arg11[%c0_79, %c1792] : memref<128x2048xbf16, #tpu.memory_space<vmem>>, vector<16x256xbf16>
      tpu.vector_store %arg11[%c0_79, %c1792], %127 {strides = array<i32>} : memref<128x2048xbf16, #tpu.memory_space<vmem>>, vector<16x256xbf16>,
      %c0_80 = arith.constant 0 : index
      %c0_81 = arith.constant 0 : index
      %129 = vector.load %arg9[%c0_80, %c0_81] : memref<128x256xf32, #tpu.memory_space<vmem>>, vector<16x256xf32>
      %c1 = arith.constant 1 : index
      %c0_82 = arith.constant 0 : index
      %c0_83 = arith.constant 0 : index
      %130 = vector.load %arg8[%c1, %c0_82, %c0_83] : memref<8x128x256xbf16, #tpu.memory_space<vmem>>, vector<1x16x256xbf16>
      %131 = vector.shape_cast %130 : vector<1x16x256xbf16> to vector<16x256xbf16>
      %132 = arith.extf %131 : vector<16x256xbf16> to vector<16x256xf32>
      %133 = arith.addf %129, %132 : vector<16x256xf32>
      %134 = arith.truncf %133 : vector<16x256xf32> to vector<16x256xbf16>
      %c16_84 = arith.constant 16 : index
      %c0_85 = arith.constant 0 : index
      %135 = vector.load %arg11[%c16_84, %c0_85] : memref<128x2048xbf16, #tpu.memory_space<vmem>>, vector<16x256xbf16>
      tpu.vector_store %arg11[%c16_84, %c0_85], %134 {strides = array<i32>} : memref<128x2048xbf16, #tpu.memory_space<vmem>>, vector<16x256xbf16>,
      %c16_86 = arith.constant 16 : index
      %c0_87 = arith.constant 0 : index
      %136 = vector.load %arg9[%c16_86, %c0_87] : memref<128x256xf32, #tpu.memory_space<vmem>>, vector<16x256xf32>
      %c1_88 = arith.constant 1 : index
      %c16_89 = arith.constant 16 : index
      %c0_90 = arith.constant 0 : index
      %137 = vector.load %arg8[%c1_88, %c16_89, %c0_90] : memref<8x128x256xbf16, #tpu.memory_space<vmem>>, vector<1x16x256xbf16>
      %138 = vector.shape_cast %137 : vector<1x16x256xbf16> to vector<16x256xbf16>
      %139 = arith.extf %138 : vector<16x256xbf16> to vector<16x256xf32>
      %140 = arith.addf %136, %139 : vector<16x256xf32>
      %141 = arith.truncf %140 : vector<16x256xf32> to vector<16x256xbf16>
      %c16_91 = arith.constant 16 : index
      %c256_92 = arith.constant 256 : index
      %142 = vector.load %arg11[%c16_91, %c256_92] : memref<128x2048xbf16, #tpu.memory_space<vmem>>, vector<16x256xbf16>
      tpu.vector_store %arg11[%c16_91, %c256_92], %141 {strides = array<i32>} : memref<128x2048xbf16, #tpu.memory_space<vmem>>, vector<16x256xbf16>,
      %c32_93 = arith.constant 32 : index
      %c0_94 = arith.constant 0 : index
      %143 = vector.load %arg9[%c32_93, %c0_94] : memref<128x256xf32, #tpu.memory_space<vmem>>, vector<16x256xf32>
      %c1_95 = arith.constant 1 : index
      %c32_96 = arith.constant 32 : index
      %c0_97 = arith.constant 0 : index
      %144 = vector.load %arg8[%c1_95, %c32_96, %c0_97] : memref<8x128x256xbf16, #tpu.memory_space<vmem>>, vector<1x16x256xbf16>
      %145 = vector.shape_cast %144 : vector<1x16x256xbf16> to vector<16x256xbf16>
      %146 = arith.extf %145 : vector<16x256xbf16> to vector<16x256xf32>
      %147 = arith.addf %143, %146 : vector<16x256xf32>
      %148 = arith.truncf %147 : vector<16x256xf32> to vector<16x256xbf16>
      %c16_98 = arith.constant 16 : index
      %c512_99 = arith.constant 512 : index
      %149 = vector.load %arg11[%c16_98, %c512_99] : memref<128x2048xbf16, #tpu.memory_space<vmem>>, vector<16x256xbf16>
      tpu.vector_store %arg11[%c16_98, %c512_99], %148 {strides = array<i32>} : memref<128x2048xbf16, #tpu.memory_space<vmem>>, vector<16x256xbf16>,
      %c48_100 = arith.constant 48 : index
      %c0_101 = arith.constant 0 : index
      %150 = vector.load %arg9[%c48_100, %c0_101] : memref<128x256xf32, #tpu.memory_space<vmem>>, vector<16x256xf32>
      %c1_102 = arith.constant 1 : index
      %c48_103 = arith.constant 48 : index
      %c0_104 = arith.constant 0 : index
      %151 = vector.load %arg8[%c1_102, %c48_103, %c0_104] : memref<8x128x256xbf16, #tpu.memory_space<vmem>>, vector<1x16x256xbf16>
      %152 = vector.shape_cast %151 : vector<1x16x256xbf16> to vector<16x256xbf16>
      %153 = arith.extf %152 : vector<16x256xbf16> to vector<16x256xf32>
      %154 = arith.addf %150, %153 : vector<16x256xf32>
      %155 = arith.truncf %154 : vector<16x256xf32> to vector<16x256xbf16>
      %c16_105 = arith.constant 16 : index
      %c768_106 = arith.constant 768 : index
      %156 = vector.load %arg11[%c16_105, %c768_106] : memref<128x2048xbf16, #tpu.memory_space<vmem>>, vector<16x256xbf16>
      tpu.vector_store %arg11[%c16_105, %c768_106], %155 {strides = array<i32>} : memref<128x2048xbf16, #tpu.memory_space<vmem>>, vector<16x256xbf16>,
      %c64_107 = arith.constant 64 : index
      %c0_108 = arith.constant 0 : index
      %157 = vector.load %arg9[%c64_107, %c0_108] : memref<128x256xf32, #tpu.memory_space<vmem>>, vector<16x256xf32>
      %c1_109 = arith.constant 1 : index
      %c64_110 = arith.constant 64 : index
      %c0_111 = arith.constant 0 : index
      %158 = vector.load %arg8[%c1_109, %c64_110, %c0_111] : memref<8x128x256xbf16, #tpu.memory_space<vmem>>, vector<1x16x256xbf16>
      %159 = vector.shape_cast %158 : vector<1x16x256xbf16> to vector<16x256xbf16>
      %160 = arith.extf %159 : vector<16x256xbf16> to vector<16x256xf32>
      %161 = arith.addf %157, %160 : vector<16x256xf32>
      %162 = arith.truncf %161 : vector<16x256xf32> to vector<16x256xbf16>
      %c16_112 = arith.constant 16 : index
      %c1024_113 = arith.constant 1024 : index
      %163 = vector.load %arg11[%c16_112, %c1024_113] : memref<128x2048xbf16, #tpu.memory_space<vmem>>, vector<16x256xbf16>
      tpu.vector_store %arg11[%c16_112, %c1024_113], %162 {strides = array<i32>} : memref<128x2048xbf16, #tpu.memory_space<vmem>>, vector<16x256xbf16>,
      %c80_114 = arith.constant 80 : index
      %c0_115 = arith.constant 0 : index
      %164 = vector.load %arg9[%c80_114, %c0_115] : memref<128x256xf32, #tpu.memory_space<vmem>>, vector<16x256xf32>
      %c1_116 = arith.constant 1 : index
      %c80_117 = arith.constant 80 : index
      %c0_118 = arith.constant 0 : index
      %165 = vector.load %arg8[%c1_116, %c80_117, %c0_118] : memref<8x128x256xbf16, #tpu.memory_space<vmem>>, vector<1x16x256xbf16>
      %166 = vector.shape_cast %165 : vector<1x16x256xbf16> to vector<16x256xbf16>
      %167 = arith.extf %166 : vector<16x256xbf16> to vector<16x256xf32>
      %168 = arith.addf %164, %167 : vector<16x256xf32>
      %169 = arith.truncf %168 : vector<16x256xf32> to vector<16x256xbf16>
      %c16_119 = arith.constant 16 : index
      %c1280_120 = arith.constant 1280 : index
      %170 = vector.load %arg11[%c16_119, %c1280_120] : memref<128x2048xbf16, #tpu.memory_space<vmem>>, vector<16x256xbf16>
      tpu.vector_store %arg11[%c16_119, %c1280_120], %169 {strides = array<i32>} : memref<128x2048xbf16, #tpu.memory_space<vmem>>, vector<16x256xbf16>,
      %c96_121 = arith.constant 96 : index
      %c0_122 = arith.constant 0 : index
      %171 = vector.load %arg9[%c96_121, %c0_122] : memref<128x256xf32, #tpu.memory_space<vmem>>, vector<16x256xf32>
      %c1_123 = arith.constant 1 : index
      %c96_124 = arith.constant 96 : index
      %c0_125 = arith.constant 0 : index
      %172 = vector.load %arg8[%c1_123, %c96_124, %c0_125] : memref<8x128x256xbf16, #tpu.memory_space<vmem>>, vector<1x16x256xbf16>
      %173 = vector.shape_cast %172 : vector<1x16x256xbf16> to vector<16x256xbf16>
      %174 = arith.extf %173 : vector<16x256xbf16> to vector<16x256xf32>
      %175 = arith.addf %171, %174 : vector<16x256xf32>
      %176 = arith.truncf %175 : vector<16x256xf32> to vector<16x256xbf16>
      %c16_126 = arith.constant 16 : index
      %c1536_127 = arith.constant 1536 : index
      %177 = vector.load %arg11[%c16_126, %c1536_127] : memref<128x2048xbf16, #tpu.memory_space<vmem>>, vector<16x256xbf16>
      tpu.vector_store %arg11[%c16_126, %c1536_127], %176 {strides = array<i32>} : memref<128x2048xbf16, #tpu.memory_space<vmem>>, vector<16x256xbf16>,
      %c112_128 = arith.constant 112 : index
      %c0_129 = arith.constant 0 : index
      %178 = vector.load %arg9[%c112_128, %c0_129] : memref<128x256xf32, #tpu.memory_space<vmem>>, vector<16x256xf32>
      %c1_130 = arith.constant 1 : index
      %c112_131 = arith.constant 112 : index
      %c0_132 = arith.constant 0 : index
      %179 = vector.load %arg8[%c1_130, %c112_131, %c0_132] : memref<8x128x256xbf16, #tpu.memory_space<vmem>>, vector<1x16x256xbf16>
      %180 = vector.shape_cast %179 : vector<1x16x256xbf16> to vector<16x256xbf16>
      %181 = arith.extf %180 : vector<16x256xbf16> to vector<16x256xf32>
      %182 = arith.addf %178, %181 : vector<16x256xf32>
      %183 = arith.truncf %182 : vector<16x256xf32> to vector<16x256xbf16>
      %c16_133 = arith.constant 16 : index
      %c1792_134 = arith.constant 1792 : index
      %184 = vector.load %arg11[%c16_133, %c1792_134] : memref<128x2048xbf16, #tpu.memory_space<vmem>>, vector<16x256xbf16>
      tpu.vector_store %arg11[%c16_133, %c1792_134], %183 {strides = array<i32>} : memref<128x2048xbf16, #tpu.memory_space<vmem>>, vector<16x256xbf16>,
      %c0_135 = arith.constant 0 : index
      %c0_136 = arith.constant 0 : index
      %185 = vector.load %arg9[%c0_135, %c0_136] : memref<128x256xf32, #tpu.memory_space<vmem>>, vector<16x256xf32>
      %c2 = arith.constant 2 : index
      %c0_137 = arith.constant 0 : index
      %c0_138 = arith.constant 0 : index
      %186 = vector.load %arg8[%c2, %c0_137, %c0_138] : memref<8x128x256xbf16, #tpu.memory_space<vmem>>, vector<1x16x256xbf16>
      %187 = vector.shape_cast %186 : vector<1x16x256xbf16> to vector<16x256xbf16>
      %188 = arith.extf %187 : vector<16x256xbf16> to vector<16x256xf32>
      %189 = arith.addf %185, %188 : vector<16x256xf32>
      %190 = arith.truncf %189 : vector<16x256xf32> to vector<16x256xbf16>
      %c32_139 = arith.constant 32 : index
      %c0_140 = arith.constant 0 : index
      %191 = vector.load %arg11[%c32_139, %c0_140] : memref<128x2048xbf16, #tpu.memory_space<vmem>>, vector<16x256xbf16>
      tpu.vector_store %arg11[%c32_139, %c0_140], %190 {strides = array<i32>} : memref<128x2048xbf16, #tpu.memory_space<vmem>>, vector<16x256xbf16>,
      %c16_141 = arith.constant 16 : index
      %c0_142 = arith.constant 0 : index
      %192 = vector.load %arg9[%c16_141, %c0_142] : memref<128x256xf32, #tpu.memory_space<vmem>>, vector<16x256xf32>
      %c2_143 = arith.constant 2 : index
      %c16_144 = arith.constant 16 : index
      %c0_145 = arith.constant 0 : index
      %193 = vector.load %arg8[%c2_143, %c16_144, %c0_145] : memref<8x128x256xbf16, #tpu.memory_space<vmem>>, vector<1x16x256xbf16>
      %194 = vector.shape_cast %193 : vector<1x16x256xbf16> to vector<16x256xbf16>
      %195 = arith.extf %194 : vector<16x256xbf16> to vector<16x256xf32>
      %196 = arith.addf %192, %195 : vector<16x256xf32>
      %197 = arith.truncf %196 : vector<16x256xf32> to vector<16x256xbf16>
      %c32_146 = arith.constant 32 : index
      %c256_147 = arith.constant 256 : index
      %198 = vector.load %arg11[%c32_146, %c256_147] : memref<128x2048xbf16, #tpu.memory_space<vmem>>, vector<16x256xbf16>
      tpu.vector_store %arg11[%c32_146, %c256_147], %197 {strides = array<i32>} : memref<128x2048xbf16, #tpu.memory_space<vmem>>, vector<16x256xbf16>,
      %c32_148 = arith.constant 32 : index
      %c0_149 = arith.constant 0 : index
      %199 = vector.load %arg9[%c32_148, %c0_149] : memref<128x256xf32, #tpu.memory_space<vmem>>, vector<16x256xf32>
      %c2_150 = arith.constant 2 : index
      %c32_151 = arith.constant 32 : index
      %c0_152 = arith.constant 0 : index
      %200 = vector.load %arg8[%c2_150, %c32_151, %c0_152] : memref<8x128x256xbf16, #tpu.memory_space<vmem>>, vector<1x16x256xbf16>
      %201 = vector.shape_cast %200 : vector<1x16x256xbf16> to vector<16x256xbf16>
      %202 = arith.extf %201 : vector<16x256xbf16> to vector<16x256xf32>
      %203 = arith.addf %199, %202 : vector<16x256xf32>
      %204 = arith.truncf %203 : vector<16x256xf32> to vector<16x256xbf16>
      %c32_153 = arith.constant 32 : index
      %c512_154 = arith.constant 512 : index
      %205 = vector.load %arg11[%c32_153, %c512_154] : memref<128x2048xbf16, #tpu.memory_space<vmem>>, vector<16x256xbf16>
      tpu.vector_store %arg11[%c32_153, %c512_154], %204 {strides = array<i32>} : memref<128x2048xbf16, #tpu.memory_space<vmem>>, vector<16x256xbf16>,
      %c48_155 = arith.constant 48 : index
      %c0_156 = arith.constant 0 : index
      %206 = vector.load %arg9[%c48_155, %c0_156] : memref<128x256xf32, #tpu.memory_space<vmem>>, vector<16x256xf32>
      %c2_157 = arith.constant 2 : index
      %c48_158 = arith.constant 48 : index
      %c0_159 = arith.constant 0 : index
      %207 = vector.load %arg8[%c2_157, %c48_158, %c0_159] : memref<8x128x256xbf16, #tpu.memory_space<vmem>>, vector<1x16x256xbf16>
      %208 = vector.shape_cast %207 : vector<1x16x256xbf16> to vector<16x256xbf16>
      %209 = arith.extf %208 : vector<16x256xbf16> to vector<16x256xf32>
      %210 = arith.addf %206, %209 : vector<16x256xf32>
      %211 = arith.truncf %210 : vector<16x256xf32> to vector<16x256xbf16>
      %c32_160 = arith.constant 32 : index
      %c768_161 = arith.constant 768 : index
      %212 = vector.load %arg11[%c32_160, %c768_161] : memref<128x2048xbf16, #tpu.memory_space<vmem>>, vector<16x256xbf16>
      tpu.vector_store %arg11[%c32_160, %c768_161], %211 {strides = array<i32>} : memref<128x2048xbf16, #tpu.memory_space<vmem>>, vector<16x256xbf16>,
      %c64_162 = arith.constant 64 : index
      %c0_163 = arith.constant 0 : index
      %213 = vector.load %arg9[%c64_162, %c0_163] : memref<128x256xf32, #tpu.memory_space<vmem>>, vector<16x256xf32>
      %c2_164 = arith.constant 2 : index
      %c64_165 = arith.constant 64 : index
      %c0_166 = arith.constant 0 : index
      %214 = vector.load %arg8[%c2_164, %c64_165, %c0_166] : memref<8x128x256xbf16, #tpu.memory_space<vmem>>, vector<1x16x256xbf16>
      %215 = vector.shape_cast %214 : vector<1x16x256xbf16> to vector<16x256xbf16>
      %216 = arith.extf %215 : vector<16x256xbf16> to vector<16x256xf32>
      %217 = arith.addf %213, %216 : vector<16x256xf32>
      %218 = arith.truncf %217 : vector<16x256xf32> to vector<16x256xbf16>
      %c32_167 = arith.constant 32 : index
      %c1024_168 = arith.constant 1024 : index
      %219 = vector.load %arg11[%c32_167, %c1024_168] : memref<128x2048xbf16, #tpu.memory_space<vmem>>, vector<16x256xbf16>
      tpu.vector_store %arg11[%c32_167, %c1024_168], %218 {strides = array<i32>} : memref<128x2048xbf16, #tpu.memory_space<vmem>>, vector<16x256xbf16>,
      %c80_169 = arith.constant 80 : index
      %c0_170 = arith.constant 0 : index
      %220 = vector.load %arg9[%c80_169, %c0_170] : memref<128x256xf32, #tpu.memory_space<vmem>>, vector<16x256xf32>
      %c2_171 = arith.constant 2 : index
      %c80_172 = arith.constant 80 : index
      %c0_173 = arith.constant 0 : index
      %221 = vector.load %arg8[%c2_171, %c80_172, %c0_173] : memref<8x128x256xbf16, #tpu.memory_space<vmem>>, vector<1x16x256xbf16>
      %222 = vector.shape_cast %221 : vector<1x16x256xbf16> to vector<16x256xbf16>
      %223 = arith.extf %222 : vector<16x256xbf16> to vector<16x256xf32>
      %224 = arith.addf %220, %223 : vector<16x256xf32>
      %225 = arith.truncf %224 : vector<16x256xf32> to vector<16x256xbf16>
      %c32_174 = arith.constant 32 : index
      %c1280_175 = arith.constant 1280 : index
      %226 = vector.load %arg11[%c32_174, %c1280_175] : memref<128x2048xbf16, #tpu.memory_space<vmem>>, vector<16x256xbf16>
      tpu.vector_store %arg11[%c32_174, %c1280_175], %225 {strides = array<i32>} : memref<128x2048xbf16, #tpu.memory_space<vmem>>, vector<16x256xbf16>,
      %c96_176 = arith.constant 96 : index
      %c0_177 = arith.constant 0 : index
      %227 = vector.load %arg9[%c96_176, %c0_177] : memref<128x256xf32, #tpu.memory_space<vmem>>, vector<16x256xf32>
      %c2_178 = arith.constant 2 : index
      %c96_179 = arith.constant 96 : index
      %c0_180 = arith.constant 0 : index
      %228 = vector.load %arg8[%c2_178, %c96_179, %c0_180] : memref<8x128x256xbf16, #tpu.memory_space<vmem>>, vector<1x16x256xbf16>
      %229 = vector.shape_cast %228 : vector<1x16x256xbf16> to vector<16x256xbf16>
      %230 = arith.extf %229 : vector<16x256xbf16> to vector<16x256xf32>
      %231 = arith.addf %227, %230 : vector<16x256xf32>
      %232 = arith.truncf %231 : vector<16x256xf32> to vector<16x256xbf16>
      %c32_181 = arith.constant 32 : index
      %c1536_182 = arith.constant 1536 : index
      %233 = vector.load %arg11[%c32_181, %c1536_182] : memref<128x2048xbf16, #tpu.memory_space<vmem>>, vector<16x256xbf16>
      tpu.vector_store %arg11[%c32_181, %c1536_182], %232 {strides = array<i32>} : memref<128x2048xbf16, #tpu.memory_space<vmem>>, vector<16x256xbf16>,
      %c112_183 = arith.constant 112 : index
      %c0_184 = arith.constant 0 : index
      %234 = vector.load %arg9[%c112_183, %c0_184] : memref<128x256xf32, #tpu.memory_space<vmem>>, vector<16x256xf32>
      %c2_185 = arith.constant 2 : index
      %c112_186 = arith.constant 112 : index
      %c0_187 = arith.constant 0 : index
      %235 = vector.load %arg8[%c2_185, %c112_186, %c0_187] : memref<8x128x256xbf16, #tpu.memory_space<vmem>>, vector<1x16x256xbf16>
      %236 = vector.shape_cast %235 : vector<1x16x256xbf16> to vector<16x256xbf16>
      %237 = arith.extf %236 : vector<16x256xbf16> to vector<16x256xf32>
      %238 = arith.addf %234, %237 : vector<16x256xf32>
      %239 = arith.truncf %238 : vector<16x256xf32> to vector<16x256xbf16>
      %c32_188 = arith.constant 32 : index
      %c1792_189 = arith.constant 1792 : index
      %240 = vector.load %arg11[%c32_188, %c1792_189] : memref<128x2048xbf16, #tpu.memory_space<vmem>>, vector<16x256xbf16>
      tpu.vector_store %arg11[%c32_188, %c1792_189], %239 {strides = array<i32>} : memref<128x2048xbf16, #tpu.memory_space<vmem>>, vector<16x256xbf16>,
      %c0_190 = arith.constant 0 : index
      %c0_191 = arith.constant 0 : index
      %241 = vector.load %arg9[%c0_190, %c0_191] : memref<128x256xf32, #tpu.memory_space<vmem>>, vector<16x256xf32>
      %c3 = arith.constant 3 : index
      %c0_192 = arith.constant 0 : index
      %c0_193 = arith.constant 0 : index
      %242 = vector.load %arg8[%c3, %c0_192, %c0_193] : memref<8x128x256xbf16, #tpu.memory_space<vmem>>, vector<1x16x256xbf16>
      %243 = vector.shape_cast %242 : vector<1x16x256xbf16> to vector<16x256xbf16>
      %244 = arith.extf %243 : vector<16x256xbf16> to vector<16x256xf32>
      %245 = arith.addf %241, %244 : vector<16x256xf32>
      %246 = arith.truncf %245 : vector<16x256xf32> to vector<16x256xbf16>
      %c48_194 = arith.constant 48 : index
      %c0_195 = arith.constant 0 : index
      %247 = vector.load %arg11[%c48_194, %c0_195] : memref<128x2048xbf16, #tpu.memory_space<vmem>>, vector<16x256xbf16>
      tpu.vector_store %arg11[%c48_194, %c0_195], %246 {strides = array<i32>} : memref<128x2048xbf16, #tpu.memory_space<vmem>>, vector<16x256xbf16>,
      %c16_196 = arith.constant 16 : index
      %c0_197 = arith.constant 0 : index
      %248 = vector.load %arg9[%c16_196, %c0_197] : memref<128x256xf32, #tpu.memory_space<vmem>>, vector<16x256xf32>
      %c3_198 = arith.constant 3 : index
      %c16_199 = arith.constant 16 : index
      %c0_200 = arith.constant 0 : index
      %249 = vector.load %arg8[%c3_198, %c16_199, %c0_200] : memref<8x128x256xbf16, #tpu.memory_space<vmem>>, vector<1x16x256xbf16>
      %250 = vector.shape_cast %249 : vector<1x16x256xbf16> to vector<16x256xbf16>
      %251 = arith.extf %250 : vector<16x256xbf16> to vector<16x256xf32>
      %252 = arith.addf %248, %251 : vector<16x256xf32>
      %253 = arith.truncf %252 : vector<16x256xf32> to vector<16x256xbf16>
      %c48_201 = arith.constant 48 : index
      %c256_202 = arith.constant 256 : index
      %254 = vector.load %arg11[%c48_201, %c256_202] : memref<128x2048xbf16, #tpu.memory_space<vmem>>, vector<16x256xbf16>
      tpu.vector_store %arg11[%c48_201, %c256_202], %253 {strides = array<i32>} : memref<128x2048xbf16, #tpu.memory_space<vmem>>, vector<16x256xbf16>,
      %c32_203 = arith.constant 32 : index
      %c0_204 = arith.constant 0 : index
      %255 = vector.load %arg9[%c32_203, %c0_204] : memref<128x256xf32, #tpu.memory_space<vmem>>, vector<16x256xf32>
      %c3_205 = arith.constant 3 : index
      %c32_206 = arith.constant 32 : index
      %c0_207 = arith.constant 0 : index
      %256 = vector.load %arg8[%c3_205, %c32_206, %c0_207] : memref<8x128x256xbf16, #tpu.memory_space<vmem>>, vector<1x16x256xbf16>
      %257 = vector.shape_cast %256 : vector<1x16x256xbf16> to vector<16x256xbf16>
      %258 = arith.extf %257 : vector<16x256xbf16> to vector<16x256xf32>
      %259 = arith.addf %255, %258 : vector<16x256xf32>
      %260 = arith.truncf %259 : vector<16x256xf32> to vector<16x256xbf16>
      %c48_208 = arith.constant 48 : index
      %c512_209 = arith.constant 512 : index
      %261 = vector.load %arg11[%c48_208, %c512_209] : memref<128x2048xbf16, #tpu.memory_space<vmem>>, vector<16x256xbf16>
      tpu.vector_store %arg11[%c48_208, %c512_209], %260 {strides = array<i32>} : memref<128x2048xbf16, #tpu.memory_space<vmem>>, vector<16x256xbf16>,
      %c48_210 = arith.constant 48 : index
      %c0_211 = arith.constant 0 : index
      %262 = vector.load %arg9[%c48_210, %c0_211] : memref<128x256xf32, #tpu.memory_space<vmem>>, vector<16x256xf32>
      %c3_212 = arith.constant 3 : index
      %c48_213 = arith.constant 48 : index
      %c0_214 = arith.constant 0 : index
      %263 = vector.load %arg8[%c3_212, %c48_213, %c0_214] : memref<8x128x256xbf16, #tpu.memory_space<vmem>>, vector<1x16x256xbf16>
      %264 = vector.shape_cast %263 : vector<1x16x256xbf16> to vector<16x256xbf16>
      %265 = arith.extf %264 : vector<16x256xbf16> to vector<16x256xf32>
      %266 = arith.addf %262, %265 : vector<16x256xf32>
      %267 = arith.truncf %266 : vector<16x256xf32> to vector<16x256xbf16>
      %c48_215 = arith.constant 48 : index
      %c768_216 = arith.constant 768 : index
      %268 = vector.load %arg11[%c48_215, %c768_216] : memref<128x2048xbf16, #tpu.memory_space<vmem>>, vector<16x256xbf16>
      tpu.vector_store %arg11[%c48_215, %c768_216], %267 {strides = array<i32>} : memref<128x2048xbf16, #tpu.memory_space<vmem>>, vector<16x256xbf16>,
      %c64_217 = arith.constant 64 : index
      %c0_218 = arith.constant 0 : index
      %269 = vector.load %arg9[%c64_217, %c0_218] : memref<128x256xf32, #tpu.memory_space<vmem>>, vector<16x256xf32>
      %c3_219 = arith.constant 3 : index
      %c64_220 = arith.constant 64 : index
      %c0_221 = arith.constant 0 : index
      %270 = vector.load %arg8[%c3_219, %c64_220, %c0_221] : memref<8x128x256xbf16, #tpu.memory_space<vmem>>, vector<1x16x256xbf16>
      %271 = vector.shape_cast %270 : vector<1x16x256xbf16> to vector<16x256xbf16>
      %272 = arith.extf %271 : vector<16x256xbf16> to vector<16x256xf32>
      %273 = arith.addf %269, %272 : vector<16x256xf32>
      %274 = arith.truncf %273 : vector<16x256xf32> to vector<16x256xbf16>
      %c48_222 = arith.constant 48 : index
      %c1024_223 = arith.constant 1024 : index
      %275 = vector.load %arg11[%c48_222, %c1024_223] : memref<128x2048xbf16, #tpu.memory_space<vmem>>, vector<16x256xbf16>
      tpu.vector_store %arg11[%c48_222, %c1024_223], %274 {strides = array<i32>} : memref<128x2048xbf16, #tpu.memory_space<vmem>>, vector<16x256xbf16>,
      %c80_224 = arith.constant 80 : index
      %c0_225 = arith.constant 0 : index
      %276 = vector.load %arg9[%c80_224, %c0_225] : memref<128x256xf32, #tpu.memory_space<vmem>>, vector<16x256xf32>
      %c3_226 = arith.constant 3 : index
      %c80_227 = arith.constant 80 : index
      %c0_228 = arith.constant 0 : index
      %277 = vector.load %arg8[%c3_226, %c80_227, %c0_228] : memref<8x128x256xbf16, #tpu.memory_space<vmem>>, vector<1x16x256xbf16>
      %278 = vector.shape_cast %277 : vector<1x16x256xbf16> to vector<16x256xbf16>
      %279 = arith.extf %278 : vector<16x256xbf16> to vector<16x256xf32>
      %280 = arith.addf %276, %279 : vector<16x256xf32>
      %281 = arith.truncf %280 : vector<16x256xf32> to vector<16x256xbf16>
      %c48_229 = arith.constant 48 : index
      %c1280_230 = arith.constant 1280 : index
      %282 = vector.load %arg11[%c48_229, %c1280_230] : memref<128x2048xbf16, #tpu.memory_space<vmem>>, vector<16x256xbf16>
      tpu.vector_store %arg11[%c48_229, %c1280_230], %281 {strides = array<i32>} : memref<128x2048xbf16, #tpu.memory_space<vmem>>, vector<16x256xbf16>,
      %c96_231 = arith.constant 96 : index
      %c0_232 = arith.constant 0 : index
      %283 = vector.load %arg9[%c96_231, %c0_232] : memref<128x256xf32, #tpu.memory_space<vmem>>, vector<16x256xf32>
      %c3_233 = arith.constant 3 : index
      %c96_234 = arith.constant 96 : index
      %c0_235 = arith.constant 0 : index
      %284 = vector.load %arg8[%c3_233, %c96_234, %c0_235] : memref<8x128x256xbf16, #tpu.memory_space<vmem>>, vector<1x16x256xbf16>
      %285 = vector.shape_cast %284 : vector<1x16x256xbf16> to vector<16x256xbf16>
      %286 = arith.extf %285 : vector<16x256xbf16> to vector<16x256xf32>
      %287 = arith.addf %283, %286 : vector<16x256xf32>
      %288 = arith.truncf %287 : vector<16x256xf32> to vector<16x256xbf16>
      %c48_236 = arith.constant 48 : index
      %c1536_237 = arith.constant 1536 : index
      %289 = vector.load %arg11[%c48_236, %c1536_237] : memref<128x2048xbf16, #tpu.memory_space<vmem>>, vector<16x256xbf16>
      tpu.vector_store %arg11[%c48_236, %c1536_237], %288 {strides = array<i32>} : memref<128x2048xbf16, #tpu.memory_space<vmem>>, vector<16x256xbf16>,
      %c112_238 = arith.constant 112 : index
      %c0_239 = arith.constant 0 : index
      %290 = vector.load %arg9[%c112_238, %c0_239] : memref<128x256xf32, #tpu.memory_space<vmem>>, vector<16x256xf32>
      %c3_240 = arith.constant 3 : index
      %c112_241 = arith.constant 112 : index
      %c0_242 = arith.constant 0 : index
      %291 = vector.load %arg8[%c3_240, %c112_241, %c0_242] : memref<8x128x256xbf16, #tpu.memory_space<vmem>>, vector<1x16x256xbf16>
      %292 = vector.shape_cast %291 : vector<1x16x256xbf16> to vector<16x256xbf16>
      %293 = arith.extf %292 : vector<16x256xbf16> to vector<16x256xf32>
      %294 = arith.addf %290, %293 : vector<16x256xf32>
      %295 = arith.truncf %294 : vector<16x256xf32> to vector<16x256xbf16>
      %c48_243 = arith.constant 48 : index
      %c1792_244 = arith.constant 1792 : index
      %296 = vector.load %arg11[%c48_243, %c1792_244] : memref<128x2048xbf16, #tpu.memory_space<vmem>>, vector<16x256xbf16>
      tpu.vector_store %arg11[%c48_243, %c1792_244], %295 {strides = array<i32>} : memref<128x2048xbf16, #tpu.memory_space<vmem>>, vector<16x256xbf16>,
      %c0_245 = arith.constant 0 : index
      %c0_246 = arith.constant 0 : index
      %297 = vector.load %arg9[%c0_245, %c0_246] : memref<128x256xf32, #tpu.memory_space<vmem>>, vector<16x256xf32>
      %c4 = arith.constant 4 : index
      %c0_247 = arith.constant 0 : index
      %c0_248 = arith.constant 0 : index
      %298 = vector.load %arg8[%c4, %c0_247, %c0_248] : memref<8x128x256xbf16, #tpu.memory_space<vmem>>, vector<1x16x256xbf16>
      %299 = vector.shape_cast %298 : vector<1x16x256xbf16> to vector<16x256xbf16>
      %300 = arith.extf %299 : vector<16x256xbf16> to vector<16x256xf32>
      %301 = arith.addf %297, %300 : vector<16x256xf32>
      %302 = arith.truncf %301 : vector<16x256xf32> to vector<16x256xbf16>
      %c64_249 = arith.constant 64 : index
      %c0_250 = arith.constant 0 : index
      %303 = vector.load %arg11[%c64_249, %c0_250] : memref<128x2048xbf16, #tpu.memory_space<vmem>>, vector<16x256xbf16>
      tpu.vector_store %arg11[%c64_249, %c0_250], %302 {strides = array<i32>} : memref<128x2048xbf16, #tpu.memory_space<vmem>>, vector<16x256xbf16>,
      %c16_251 = arith.constant 16 : index
      %c0_252 = arith.constant 0 : index
      %304 = vector.load %arg9[%c16_251, %c0_252] : memref<128x256xf32, #tpu.memory_space<vmem>>, vector<16x256xf32>
      %c4_253 = arith.constant 4 : index
      %c16_254 = arith.constant 16 : index
      %c0_255 = arith.constant 0 : index
      %305 = vector.load %arg8[%c4_253, %c16_254, %c0_255] : memref<8x128x256xbf16, #tpu.memory_space<vmem>>, vector<1x16x256xbf16>
      %306 = vector.shape_cast %305 : vector<1x16x256xbf16> to vector<16x256xbf16>
      %307 = arith.extf %306 : vector<16x256xbf16> to vector<16x256xf32>
      %308 = arith.addf %304, %307 : vector<16x256xf32>
      %309 = arith.truncf %308 : vector<16x256xf32> to vector<16x256xbf16>
      %c64_256 = arith.constant 64 : index
      %c256_257 = arith.constant 256 : index
      %310 = vector.load %arg11[%c64_256, %c256_257] : memref<128x2048xbf16, #tpu.memory_space<vmem>>, vector<16x256xbf16>
      tpu.vector_store %arg11[%c64_256, %c256_257], %309 {strides = array<i32>} : memref<128x2048xbf16, #tpu.memory_space<vmem>>, vector<16x256xbf16>,
      %c32_258 = arith.constant 32 : index
      %c0_259 = arith.constant 0 : index
      %311 = vector.load %arg9[%c32_258, %c0_259] : memref<128x256xf32, #tpu.memory_space<vmem>>, vector<16x256xf32>
      %c4_260 = arith.constant 4 : index
      %c32_261 = arith.constant 32 : index
      %c0_262 = arith.constant 0 : index
      %312 = vector.load %arg8[%c4_260, %c32_261, %c0_262] : memref<8x128x256xbf16, #tpu.memory_space<vmem>>, vector<1x16x256xbf16>
      %313 = vector.shape_cast %312 : vector<1x16x256xbf16> to vector<16x256xbf16>
      %314 = arith.extf %313 : vector<16x256xbf16> to vector<16x256xf32>
      %315 = arith.addf %311, %314 : vector<16x256xf32>
      %316 = arith.truncf %315 : vector<16x256xf32> to vector<16x256xbf16>
      %c64_263 = arith.constant 64 : index
      %c512_264 = arith.constant 512 : index
      %317 = vector.load %arg11[%c64_263, %c512_264] : memref<128x2048xbf16, #tpu.memory_space<vmem>>, vector<16x256xbf16>
      tpu.vector_store %arg11[%c64_263, %c512_264], %316 {strides = array<i32>} : memref<128x2048xbf16, #tpu.memory_space<vmem>>, vector<16x256xbf16>,
      %c48_265 = arith.constant 48 : index
      %c0_266 = arith.constant 0 : index
      %318 = vector.load %arg9[%c48_265, %c0_266] : memref<128x256xf32, #tpu.memory_space<vmem>>, vector<16x256xf32>
      %c4_267 = arith.constant 4 : index
      %c48_268 = arith.constant 48 : index
      %c0_269 = arith.constant 0 : index
      %319 = vector.load %arg8[%c4_267, %c48_268, %c0_269] : memref<8x128x256xbf16, #tpu.memory_space<vmem>>, vector<1x16x256xbf16>
      %320 = vector.shape_cast %319 : vector<1x16x256xbf16> to vector<16x256xbf16>
      %321 = arith.extf %320 : vector<16x256xbf16> to vector<16x256xf32>
      %322 = arith.addf %318, %321 : vector<16x256xf32>
      %323 = arith.truncf %322 : vector<16x256xf32> to vector<16x256xbf16>
      %c64_270 = arith.constant 64 : index
      %c768_271 = arith.constant 768 : index
      %324 = vector.load %arg11[%c64_270, %c768_271] : memref<128x2048xbf16, #tpu.memory_space<vmem>>, vector<16x256xbf16>
      tpu.vector_store %arg11[%c64_270, %c768_271], %323 {strides = array<i32>} : memref<128x2048xbf16, #tpu.memory_space<vmem>>, vector<16x256xbf16>,
      %c64_272 = arith.constant 64 : index
      %c0_273 = arith.constant 0 : index
      %325 = vector.load %arg9[%c64_272, %c0_273] : memref<128x256xf32, #tpu.memory_space<vmem>>, vector<16x256xf32>
      %c4_274 = arith.constant 4 : index
      %c64_275 = arith.constant 64 : index
      %c0_276 = arith.constant 0 : index
      %326 = vector.load %arg8[%c4_274, %c64_275, %c0_276] : memref<8x128x256xbf16, #tpu.memory_space<vmem>>, vector<1x16x256xbf16>
      %327 = vector.shape_cast %326 : vector<1x16x256xbf16> to vector<16x256xbf16>
      %328 = arith.extf %327 : vector<16x256xbf16> to vector<16x256xf32>
      %329 = arith.addf %325, %328 : vector<16x256xf32>
      %330 = arith.truncf %329 : vector<16x256xf32> to vector<16x256xbf16>
      %c64_277 = arith.constant 64 : index
      %c1024_278 = arith.constant 1024 : index
      %331 = vector.load %arg11[%c64_277, %c1024_278] : memref<128x2048xbf16, #tpu.memory_space<vmem>>, vector<16x256xbf16>
      tpu.vector_store %arg11[%c64_277, %c1024_278], %330 {strides = array<i32>} : memref<128x2048xbf16, #tpu.memory_space<vmem>>, vector<16x256xbf16>,
      %c80_279 = arith.constant 80 : index
      %c0_280 = arith.constant 0 : index
      %332 = vector.load %arg9[%c80_279, %c0_280] : memref<128x256xf32, #tpu.memory_space<vmem>>, vector<16x256xf32>
      %c4_281 = arith.constant 4 : index
      %c80_282 = arith.constant 80 : index
      %c0_283 = arith.constant 0 : index
      %333 = vector.load %arg8[%c4_281, %c80_282, %c0_283] : memref<8x128x256xbf16, #tpu.memory_space<vmem>>, vector<1x16x256xbf16>
      %334 = vector.shape_cast %333 : vector<1x16x256xbf16> to vector<16x256xbf16>
      %335 = arith.extf %334 : vector<16x256xbf16> to vector<16x256xf32>
      %336 = arith.addf %332, %335 : vector<16x256xf32>
      %337 = arith.truncf %336 : vector<16x256xf32> to vector<16x256xbf16>
      %c64_284 = arith.constant 64 : index
      %c1280_285 = arith.constant 1280 : index
      %338 = vector.load %arg11[%c64_284, %c1280_285] : memref<128x2048xbf16, #tpu.memory_space<vmem>>, vector<16x256xbf16>
      tpu.vector_store %arg11[%c64_284, %c1280_285], %337 {strides = array<i32>} : memref<128x2048xbf16, #tpu.memory_space<vmem>>, vector<16x256xbf16>,
      %c96_286 = arith.constant 96 : index
      %c0_287 = arith.constant 0 : index
      %339 = vector.load %arg9[%c96_286, %c0_287] : memref<128x256xf32, #tpu.memory_space<vmem>>, vector<16x256xf32>
      %c4_288 = arith.constant 4 : index
      %c96_289 = arith.constant 96 : index
      %c0_290 = arith.constant 0 : index
      %340 = vector.load %arg8[%c4_288, %c96_289, %c0_290] : memref<8x128x256xbf16, #tpu.memory_space<vmem>>, vector<1x16x256xbf16>
      %341 = vector.shape_cast %340 : vector<1x16x256xbf16> to vector<16x256xbf16>
      %342 = arith.extf %341 : vector<16x256xbf16> to vector<16x256xf32>
      %343 = arith.addf %339, %342 : vector<16x256xf32>
      %344 = arith.truncf %343 : vector<16x256xf32> to vector<16x256xbf16>
      %c64_291 = arith.constant 64 : index
      %c1536_292 = arith.constant 1536 : index
      %345 = vector.load %arg11[%c64_291, %c1536_292] : memref<128x2048xbf16, #tpu.memory_space<vmem>>, vector<16x256xbf16>
      tpu.vector_store %arg11[%c64_291, %c1536_292], %344 {strides = array<i32>} : memref<128x2048xbf16, #tpu.memory_space<vmem>>, vector<16x256xbf16>,
      %c112_293 = arith.constant 112 : index
      %c0_294 = arith.constant 0 : index
      %346 = vector.load %arg9[%c112_293, %c0_294] : memref<128x256xf32, #tpu.memory_space<vmem>>, vector<16x256xf32>
      %c4_295 = arith.constant 4 : index
      %c112_296 = arith.constant 112 : index
      %c0_297 = arith.constant 0 : index
      %347 = vector.load %arg8[%c4_295, %c112_296, %c0_297] : memref<8x128x256xbf16, #tpu.memory_space<vmem>>, vector<1x16x256xbf16>
      %348 = vector.shape_cast %347 : vector<1x16x256xbf16> to vector<16x256xbf16>
      %349 = arith.extf %348 : vector<16x256xbf16> to vector<16x256xf32>
      %350 = arith.addf %346, %349 : vector<16x256xf32>
      %351 = arith.truncf %350 : vector<16x256xf32> to vector<16x256xbf16>
      %c64_298 = arith.constant 64 : index
      %c1792_299 = arith.constant 1792 : index
      %352 = vector.load %arg11[%c64_298, %c1792_299] : memref<128x2048xbf16, #tpu.memory_space<vmem>>, vector<16x256xbf16>
      tpu.vector_store %arg11[%c64_298, %c1792_299], %351 {strides = array<i32>} : memref<128x2048xbf16, #tpu.memory_space<vmem>>, vector<16x256xbf16>,
      %c0_300 = arith.constant 0 : index
      %c0_301 = arith.constant 0 : index
      %353 = vector.load %arg9[%c0_300, %c0_301] : memref<128x256xf32, #tpu.memory_space<vmem>>, vector<16x256xf32>
      %c5 = arith.constant 5 : index
      %c0_302 = arith.constant 0 : index
      %c0_303 = arith.constant 0 : index
      %354 = vector.load %arg8[%c5, %c0_302, %c0_303] : memref<8x128x256xbf16, #tpu.memory_space<vmem>>, vector<1x16x256xbf16>
      %355 = vector.shape_cast %354 : vector<1x16x256xbf16> to vector<16x256xbf16>
      %356 = arith.extf %355 : vector<16x256xbf16> to vector<16x256xf32>
      %357 = arith.addf %353, %356 : vector<16x256xf32>
      %358 = arith.truncf %357 : vector<16x256xf32> to vector<16x256xbf16>
      %c80_304 = arith.constant 80 : index
      %c0_305 = arith.constant 0 : index
      %359 = vector.load %arg11[%c80_304, %c0_305] : memref<128x2048xbf16, #tpu.memory_space<vmem>>, vector<16x256xbf16>
      tpu.vector_store %arg11[%c80_304, %c0_305], %358 {strides = array<i32>} : memref<128x2048xbf16, #tpu.memory_space<vmem>>, vector<16x256xbf16>,
      %c16_306 = arith.constant 16 : index
      %c0_307 = arith.constant 0 : index
      %360 = vector.load %arg9[%c16_306, %c0_307] : memref<128x256xf32, #tpu.memory_space<vmem>>, vector<16x256xf32>
      %c5_308 = arith.constant 5 : index
      %c16_309 = arith.constant 16 : index
      %c0_310 = arith.constant 0 : index
      %361 = vector.load %arg8[%c5_308, %c16_309, %c0_310] : memref<8x128x256xbf16, #tpu.memory_space<vmem>>, vector<1x16x256xbf16>
      %362 = vector.shape_cast %361 : vector<1x16x256xbf16> to vector<16x256xbf16>
      %363 = arith.extf %362 : vector<16x256xbf16> to vector<16x256xf32>
      %364 = arith.addf %360, %363 : vector<16x256xf32>
      %365 = arith.truncf %364 : vector<16x256xf32> to vector<16x256xbf16>
      %c80_311 = arith.constant 80 : index
      %c256_312 = arith.constant 256 : index
      %366 = vector.load %arg11[%c80_311, %c256_312] : memref<128x2048xbf16, #tpu.memory_space<vmem>>, vector<16x256xbf16>
      tpu.vector_store %arg11[%c80_311, %c256_312], %365 {strides = array<i32>} : memref<128x2048xbf16, #tpu.memory_space<vmem>>, vector<16x256xbf16>,
      %c32_313 = arith.constant 32 : index
      %c0_314 = arith.constant 0 : index
      %367 = vector.load %arg9[%c32_313, %c0_314] : memref<128x256xf32, #tpu.memory_space<vmem>>, vector<16x256xf32>
      %c5_315 = arith.constant 5 : index
      %c32_316 = arith.constant 32 : index
      %c0_317 = arith.constant 0 : index
      %368 = vector.load %arg8[%c5_315, %c32_316, %c0_317] : memref<8x128x256xbf16, #tpu.memory_space<vmem>>, vector<1x16x256xbf16>
      %369 = vector.shape_cast %368 : vector<1x16x256xbf16> to vector<16x256xbf16>
      %370 = arith.extf %369 : vector<16x256xbf16> to vector<16x256xf32>
      %371 = arith.addf %367, %370 : vector<16x256xf32>
      %372 = arith.truncf %371 : vector<16x256xf32> to vector<16x256xbf16>
      %c80_318 = arith.constant 80 : index
      %c512_319 = arith.constant 512 : index
      %373 = vector.load %arg11[%c80_318, %c512_319] : memref<128x2048xbf16, #tpu.memory_space<vmem>>, vector<16x256xbf16>
      tpu.vector_store %arg11[%c80_318, %c512_319], %372 {strides = array<i32>} : memref<128x2048xbf16, #tpu.memory_space<vmem>>, vector<16x256xbf16>,
      %c48_320 = arith.constant 48 : index
      %c0_321 = arith.constant 0 : index
      %374 = vector.load %arg9[%c48_320, %c0_321] : memref<128x256xf32, #tpu.memory_space<vmem>>, vector<16x256xf32>
      %c5_322 = arith.constant 5 : index
      %c48_323 = arith.constant 48 : index
      %c0_324 = arith.constant 0 : index
      %375 = vector.load %arg8[%c5_322, %c48_323, %c0_324] : memref<8x128x256xbf16, #tpu.memory_space<vmem>>, vector<1x16x256xbf16>
      %376 = vector.shape_cast %375 : vector<1x16x256xbf16> to vector<16x256xbf16>
      %377 = arith.extf %376 : vector<16x256xbf16> to vector<16x256xf32>
      %378 = arith.addf %374, %377 : vector<16x256xf32>
      %379 = arith.truncf %378 : vector<16x256xf32> to vector<16x256xbf16>
      %c80_325 = arith.constant 80 : index
      %c768_326 = arith.constant 768 : index
      %380 = vector.load %arg11[%c80_325, %c768_326] : memref<128x2048xbf16, #tpu.memory_space<vmem>>, vector<16x256xbf16>
      tpu.vector_store %arg11[%c80_325, %c768_326], %379 {strides = array<i32>} : memref<128x2048xbf16, #tpu.memory_space<vmem>>, vector<16x256xbf16>,
      %c64_327 = arith.constant 64 : index
      %c0_328 = arith.constant 0 : index
      %381 = vector.load %arg9[%c64_327, %c0_328] : memref<128x256xf32, #tpu.memory_space<vmem>>, vector<16x256xf32>
      %c5_329 = arith.constant 5 : index
      %c64_330 = arith.constant 64 : index
      %c0_331 = arith.constant 0 : index
      %382 = vector.load %arg8[%c5_329, %c64_330, %c0_331] : memref<8x128x256xbf16, #tpu.memory_space<vmem>>, vector<1x16x256xbf16>
      %383 = vector.shape_cast %382 : vector<1x16x256xbf16> to vector<16x256xbf16>
      %384 = arith.extf %383 : vector<16x256xbf16> to vector<16x256xf32>
      %385 = arith.addf %381, %384 : vector<16x256xf32>
      %386 = arith.truncf %385 : vector<16x256xf32> to vector<16x256xbf16>
      %c80_332 = arith.constant 80 : index
      %c1024_333 = arith.constant 1024 : index
      %387 = vector.load %arg11[%c80_332, %c1024_333] : memref<128x2048xbf16, #tpu.memory_space<vmem>>, vector<16x256xbf16>
      tpu.vector_store %arg11[%c80_332, %c1024_333], %386 {strides = array<i32>} : memref<128x2048xbf16, #tpu.memory_space<vmem>>, vector<16x256xbf16>,
      %c80_334 = arith.constant 80 : index
      %c0_335 = arith.constant 0 : index
      %388 = vector.load %arg9[%c80_334, %c0_335] : memref<128x256xf32, #tpu.memory_space<vmem>>, vector<16x256xf32>
      %c5_336 = arith.constant 5 : index
      %c80_337 = arith.constant 80 : index
      %c0_338 = arith.constant 0 : index
      %389 = vector.load %arg8[%c5_336, %c80_337, %c0_338] : memref<8x128x256xbf16, #tpu.memory_space<vmem>>, vector<1x16x256xbf16>
      %390 = vector.shape_cast %389 : vector<1x16x256xbf16> to vector<16x256xbf16>
      %391 = arith.extf %390 : vector<16x256xbf16> to vector<16x256xf32>
      %392 = arith.addf %388, %391 : vector<16x256xf32>
      %393 = arith.truncf %392 : vector<16x256xf32> to vector<16x256xbf16>
      %c80_339 = arith.constant 80 : index
      %c1280_340 = arith.constant 1280 : index
      %394 = vector.load %arg11[%c80_339, %c1280_340] : memref<128x2048xbf16, #tpu.memory_space<vmem>>, vector<16x256xbf16>
      tpu.vector_store %arg11[%c80_339, %c1280_340], %393 {strides = array<i32>} : memref<128x2048xbf16, #tpu.memory_space<vmem>>, vector<16x256xbf16>,
      %c96_341 = arith.constant 96 : index
      %c0_342 = arith.constant 0 : index
      %395 = vector.load %arg9[%c96_341, %c0_342] : memref<128x256xf32, #tpu.memory_space<vmem>>, vector<16x256xf32>
      %c5_343 = arith.constant 5 : index
      %c96_344 = arith.constant 96 : index
      %c0_345 = arith.constant 0 : index
      %396 = vector.load %arg8[%c5_343, %c96_344, %c0_345] : memref<8x128x256xbf16, #tpu.memory_space<vmem>>, vector<1x16x256xbf16>
      %397 = vector.shape_cast %396 : vector<1x16x256xbf16> to vector<16x256xbf16>
      %398 = arith.extf %397 : vector<16x256xbf16> to vector<16x256xf32>
      %399 = arith.addf %395, %398 : vector<16x256xf32>
      %400 = arith.truncf %399 : vector<16x256xf32> to vector<16x256xbf16>
      %c80_346 = arith.constant 80 : index
      %c1536_347 = arith.constant 1536 : index
      %401 = vector.load %arg11[%c80_346, %c1536_347] : memref<128x2048xbf16, #tpu.memory_space<vmem>>, vector<16x256xbf16>
      tpu.vector_store %arg11[%c80_346, %c1536_347], %400 {strides = array<i32>} : memref<128x2048xbf16, #tpu.memory_space<vmem>>, vector<16x256xbf16>,
      %c112_348 = arith.constant 112 : index
      %c0_349 = arith.constant 0 : index
      %402 = vector.load %arg9[%c112_348, %c0_349] : memref<128x256xf32, #tpu.memory_space<vmem>>, vector<16x256xf32>
      %c5_350 = arith.constant 5 : index
      %c112_351 = arith.constant 112 : index
      %c0_352 = arith.constant 0 : index
      %403 = vector.load %arg8[%c5_350, %c112_351, %c0_352] : memref<8x128x256xbf16, #tpu.memory_space<vmem>>, vector<1x16x256xbf16>
      %404 = vector.shape_cast %403 : vector<1x16x256xbf16> to vector<16x256xbf16>
      %405 = arith.extf %404 : vector<16x256xbf16> to vector<16x256xf32>
      %406 = arith.addf %402, %405 : vector<16x256xf32>
      %407 = arith.truncf %406 : vector<16x256xf32> to vector<16x256xbf16>
      %c80_353 = arith.constant 80 : index
      %c1792_354 = arith.constant 1792 : index
      %408 = vector.load %arg11[%c80_353, %c1792_354] : memref<128x2048xbf16, #tpu.memory_space<vmem>>, vector<16x256xbf16>
      tpu.vector_store %arg11[%c80_353, %c1792_354], %407 {strides = array<i32>} : memref<128x2048xbf16, #tpu.memory_space<vmem>>, vector<16x256xbf16>,
      %c0_355 = arith.constant 0 : index
      %c0_356 = arith.constant 0 : index
      %409 = vector.load %arg9[%c0_355, %c0_356] : memref<128x256xf32, #tpu.memory_space<vmem>>, vector<16x256xf32>
      %c6 = arith.constant 6 : index
      %c0_357 = arith.constant 0 : index
      %c0_358 = arith.constant 0 : index
      %410 = vector.load %arg8[%c6, %c0_357, %c0_358] : memref<8x128x256xbf16, #tpu.memory_space<vmem>>, vector<1x16x256xbf16>
      %411 = vector.shape_cast %410 : vector<1x16x256xbf16> to vector<16x256xbf16>
      %412 = arith.extf %411 : vector<16x256xbf16> to vector<16x256xf32>
      %413 = arith.addf %409, %412 : vector<16x256xf32>
      %414 = arith.truncf %413 : vector<16x256xf32> to vector<16x256xbf16>
      %c96_359 = arith.constant 96 : index
      %c0_360 = arith.constant 0 : index
      %415 = vector.load %arg11[%c96_359, %c0_360] : memref<128x2048xbf16, #tpu.memory_space<vmem>>, vector<16x256xbf16>
      tpu.vector_store %arg11[%c96_359, %c0_360], %414 {strides = array<i32>} : memref<128x2048xbf16, #tpu.memory_space<vmem>>, vector<16x256xbf16>,
      %c16_361 = arith.constant 16 : index
      %c0_362 = arith.constant 0 : index
      %416 = vector.load %arg9[%c16_361, %c0_362] : memref<128x256xf32, #tpu.memory_space<vmem>>, vector<16x256xf32>
      %c6_363 = arith.constant 6 : index
      %c16_364 = arith.constant 16 : index
      %c0_365 = arith.constant 0 : index
      %417 = vector.load %arg8[%c6_363, %c16_364, %c0_365] : memref<8x128x256xbf16, #tpu.memory_space<vmem>>, vector<1x16x256xbf16>
      %418 = vector.shape_cast %417 : vector<1x16x256xbf16> to vector<16x256xbf16>
      %419 = arith.extf %418 : vector<16x256xbf16> to vector<16x256xf32>
      %420 = arith.addf %416, %419 : vector<16x256xf32>
      %421 = arith.truncf %420 : vector<16x256xf32> to vector<16x256xbf16>
      %c96_366 = arith.constant 96 : index
      %c256_367 = arith.constant 256 : index
      %422 = vector.load %arg11[%c96_366, %c256_367] : memref<128x2048xbf16, #tpu.memory_space<vmem>>, vector<16x256xbf16>
      tpu.vector_store %arg11[%c96_366, %c256_367], %421 {strides = array<i32>} : memref<128x2048xbf16, #tpu.memory_space<vmem>>, vector<16x256xbf16>,
      %c32_368 = arith.constant 32 : index
      %c0_369 = arith.constant 0 : index
      %423 = vector.load %arg9[%c32_368, %c0_369] : memref<128x256xf32, #tpu.memory_space<vmem>>, vector<16x256xf32>
      %c6_370 = arith.constant 6 : index
      %c32_371 = arith.constant 32 : index
      %c0_372 = arith.constant 0 : index
      %424 = vector.load %arg8[%c6_370, %c32_371, %c0_372] : memref<8x128x256xbf16, #tpu.memory_space<vmem>>, vector<1x16x256xbf16>
      %425 = vector.shape_cast %424 : vector<1x16x256xbf16> to vector<16x256xbf16>
      %426 = arith.extf %425 : vector<16x256xbf16> to vector<16x256xf32>
      %427 = arith.addf %423, %426 : vector<16x256xf32>
      %428 = arith.truncf %427 : vector<16x256xf32> to vector<16x256xbf16>
      %c96_373 = arith.constant 96 : index
      %c512_374 = arith.constant 512 : index
      %429 = vector.load %arg11[%c96_373, %c512_374] : memref<128x2048xbf16, #tpu.memory_space<vmem>>, vector<16x256xbf16>
      tpu.vector_store %arg11[%c96_373, %c512_374], %428 {strides = array<i32>} : memref<128x2048xbf16, #tpu.memory_space<vmem>>, vector<16x256xbf16>,
      %c48_375 = arith.constant 48 : index
      %c0_376 = arith.constant 0 : index
      %430 = vector.load %arg9[%c48_375, %c0_376] : memref<128x256xf32, #tpu.memory_space<vmem>>, vector<16x256xf32>
      %c6_377 = arith.constant 6 : index
      %c48_378 = arith.constant 48 : index
      %c0_379 = arith.constant 0 : index
      %431 = vector.load %arg8[%c6_377, %c48_378, %c0_379] : memref<8x128x256xbf16, #tpu.memory_space<vmem>>, vector<1x16x256xbf16>
      %432 = vector.shape_cast %431 : vector<1x16x256xbf16> to vector<16x256xbf16>
      %433 = arith.extf %432 : vector<16x256xbf16> to vector<16x256xf32>
      %434 = arith.addf %430, %433 : vector<16x256xf32>
      %435 = arith.truncf %434 : vector<16x256xf32> to vector<16x256xbf16>
      %c96_380 = arith.constant 96 : index
      %c768_381 = arith.constant 768 : index
      %436 = vector.load %arg11[%c96_380, %c768_381] : memref<128x2048xbf16, #tpu.memory_space<vmem>>, vector<16x256xbf16>
      tpu.vector_store %arg11[%c96_380, %c768_381], %435 {strides = array<i32>} : memref<128x2048xbf16, #tpu.memory_space<vmem>>, vector<16x256xbf16>,
      %c64_382 = arith.constant 64 : index
      %c0_383 = arith.constant 0 : index
      %437 = vector.load %arg9[%c64_382, %c0_383] : memref<128x256xf32, #tpu.memory_space<vmem>>, vector<16x256xf32>
      %c6_384 = arith.constant 6 : index
      %c64_385 = arith.constant 64 : index
      %c0_386 = arith.constant 0 : index
      %438 = vector.load %arg8[%c6_384, %c64_385, %c0_386] : memref<8x128x256xbf16, #tpu.memory_space<vmem>>, vector<1x16x256xbf16>
      %439 = vector.shape_cast %438 : vector<1x16x256xbf16> to vector<16x256xbf16>
      %440 = arith.extf %439 : vector<16x256xbf16> to vector<16x256xf32>
      %441 = arith.addf %437, %440 : vector<16x256xf32>
      %442 = arith.truncf %441 : vector<16x256xf32> to vector<16x256xbf16>
      %c96_387 = arith.constant 96 : index
      %c1024_388 = arith.constant 1024 : index
      %443 = vector.load %arg11[%c96_387, %c1024_388] : memref<128x2048xbf16, #tpu.memory_space<vmem>>, vector<16x256xbf16>
      tpu.vector_store %arg11[%c96_387, %c1024_388], %442 {strides = array<i32>} : memref<128x2048xbf16, #tpu.memory_space<vmem>>, vector<16x256xbf16>,
      %c80_389 = arith.constant 80 : index
      %c0_390 = arith.constant 0 : index
      %444 = vector.load %arg9[%c80_389, %c0_390] : memref<128x256xf32, #tpu.memory_space<vmem>>, vector<16x256xf32>
      %c6_391 = arith.constant 6 : index
      %c80_392 = arith.constant 80 : index
      %c0_393 = arith.constant 0 : index
      %445 = vector.load %arg8[%c6_391, %c80_392, %c0_393] : memref<8x128x256xbf16, #tpu.memory_space<vmem>>, vector<1x16x256xbf16>
      %446 = vector.shape_cast %445 : vector<1x16x256xbf16> to vector<16x256xbf16>
      %447 = arith.extf %446 : vector<16x256xbf16> to vector<16x256xf32>
      %448 = arith.addf %444, %447 : vector<16x256xf32>
      %449 = arith.truncf %448 : vector<16x256xf32> to vector<16x256xbf16>
      %c96_394 = arith.constant 96 : index
      %c1280_395 = arith.constant 1280 : index
      %450 = vector.load %arg11[%c96_394, %c1280_395] : memref<128x2048xbf16, #tpu.memory_space<vmem>>, vector<16x256xbf16>
      tpu.vector_store %arg11[%c96_394, %c1280_395], %449 {strides = array<i32>} : memref<128x2048xbf16, #tpu.memory_space<vmem>>, vector<16x256xbf16>,
      %c96_396 = arith.constant 96 : index
      %c0_397 = arith.constant 0 : index
      %451 = vector.load %arg9[%c96_396, %c0_397] : memref<128x256xf32, #tpu.memory_space<vmem>>, vector<16x256xf32>
      %c6_398 = arith.constant 6 : index
      %c96_399 = arith.constant 96 : index
      %c0_400 = arith.constant 0 : index
      %452 = vector.load %arg8[%c6_398, %c96_399, %c0_400] : memref<8x128x256xbf16, #tpu.memory_space<vmem>>, vector<1x16x256xbf16>
      %453 = vector.shape_cast %452 : vector<1x16x256xbf16> to vector<16x256xbf16>
      %454 = arith.extf %453 : vector<16x256xbf16> to vector<16x256xf32>
      %455 = arith.addf %451, %454 : vector<16x256xf32>
      %456 = arith.truncf %455 : vector<16x256xf32> to vector<16x256xbf16>
      %c96_401 = arith.constant 96 : index
      %c1536_402 = arith.constant 1536 : index
      %457 = vector.load %arg11[%c96_401, %c1536_402] : memref<128x2048xbf16, #tpu.memory_space<vmem>>, vector<16x256xbf16>
      tpu.vector_store %arg11[%c96_401, %c1536_402], %456 {strides = array<i32>} : memref<128x2048xbf16, #tpu.memory_space<vmem>>, vector<16x256xbf16>,
      %c112_403 = arith.constant 112 : index
      %c0_404 = arith.constant 0 : index
      %458 = vector.load %arg9[%c112_403, %c0_404] : memref<128x256xf32, #tpu.memory_space<vmem>>, vector<16x256xf32>
      %c6_405 = arith.constant 6 : index
      %c112_406 = arith.constant 112 : index
      %c0_407 = arith.constant 0 : index
      %459 = vector.load %arg8[%c6_405, %c112_406, %c0_407] : memref<8x128x256xbf16, #tpu.memory_space<vmem>>, vector<1x16x256xbf16>
      %460 = vector.shape_cast %459 : vector<1x16x256xbf16> to vector<16x256xbf16>
      %461 = arith.extf %460 : vector<16x256xbf16> to vector<16x256xf32>
      %462 = arith.addf %458, %461 : vector<16x256xf32>
      %463 = arith.truncf %462 : vector<16x256xf32> to vector<16x256xbf16>
      %c96_408 = arith.constant 96 : index
      %c1792_409 = arith.constant 1792 : index
      %464 = vector.load %arg11[%c96_408, %c1792_409] : memref<128x2048xbf16, #tpu.memory_space<vmem>>, vector<16x256xbf16>
      tpu.vector_store %arg11[%c96_408, %c1792_409], %463 {strides = array<i32>} : memref<128x2048xbf16, #tpu.memory_space<vmem>>, vector<16x256xbf16>,
      %c0_410 = arith.constant 0 : index
      %c0_411 = arith.constant 0 : index
      %465 = vector.load %arg9[%c0_410, %c0_411] : memref<128x256xf32, #tpu.memory_space<vmem>>, vector<16x256xf32>
      %c7 = arith.constant 7 : index
      %c0_412 = arith.constant 0 : index
      %c0_413 = arith.constant 0 : index
      %466 = vector.load %arg8[%c7, %c0_412, %c0_413] : memref<8x128x256xbf16, #tpu.memory_space<vmem>>, vector<1x16x256xbf16>
      %467 = vector.shape_cast %466 : vector<1x16x256xbf16> to vector<16x256xbf16>
      %468 = arith.extf %467 : vector<16x256xbf16> to vector<16x256xf32>
      %469 = arith.addf %465, %468 : vector<16x256xf32>
      %470 = arith.truncf %469 : vector<16x256xf32> to vector<16x256xbf16>
      %c112_414 = arith.constant 112 : index
      %c0_415 = arith.constant 0 : index
      %471 = vector.load %arg11[%c112_414, %c0_415] : memref<128x2048xbf16, #tpu.memory_space<vmem>>, vector<16x256xbf16>
      tpu.vector_store %arg11[%c112_414, %c0_415], %470 {strides = array<i32>} : memref<128x2048xbf16, #tpu.memory_space<vmem>>, vector<16x256xbf16>,
      %c16_416 = arith.constant 16 : index
      %c0_417 = arith.constant 0 : index
      %472 = vector.load %arg9[%c16_416, %c0_417] : memref<128x256xf32, #tpu.memory_space<vmem>>, vector<16x256xf32>
      %c7_418 = arith.constant 7 : index
      %c16_419 = arith.constant 16 : index
      %c0_420 = arith.constant 0 : index
      %473 = vector.load %arg8[%c7_418, %c16_419, %c0_420] : memref<8x128x256xbf16, #tpu.memory_space<vmem>>, vector<1x16x256xbf16>
      %474 = vector.shape_cast %473 : vector<1x16x256xbf16> to vector<16x256xbf16>
      %475 = arith.extf %474 : vector<16x256xbf16> to vector<16x256xf32>
      %476 = arith.addf %472, %475 : vector<16x256xf32>
      %477 = arith.truncf %476 : vector<16x256xf32> to vector<16x256xbf16>
      %c112_421 = arith.constant 112 : index
      %c256_422 = arith.constant 256 : index
      %478 = vector.load %arg11[%c112_421, %c256_422] : memref<128x2048xbf16, #tpu.memory_space<vmem>>, vector<16x256xbf16>
      tpu.vector_store %arg11[%c112_421, %c256_422], %477 {strides = array<i32>} : memref<128x2048xbf16, #tpu.memory_space<vmem>>, vector<16x256xbf16>,
      %c32_423 = arith.constant 32 : index
      %c0_424 = arith.constant 0 : index
      %479 = vector.load %arg9[%c32_423, %c0_424] : memref<128x256xf32, #tpu.memory_space<vmem>>, vector<16x256xf32>
      %c7_425 = arith.constant 7 : index
      %c32_426 = arith.constant 32 : index
      %c0_427 = arith.constant 0 : index
      %480 = vector.load %arg8[%c7_425, %c32_426, %c0_427] : memref<8x128x256xbf16, #tpu.memory_space<vmem>>, vector<1x16x256xbf16>
      %481 = vector.shape_cast %480 : vector<1x16x256xbf16> to vector<16x256xbf16>
      %482 = arith.extf %481 : vector<16x256xbf16> to vector<16x256xf32>
      %483 = arith.addf %479, %482 : vector<16x256xf32>
      %484 = arith.truncf %483 : vector<16x256xf32> to vector<16x256xbf16>
      %c112_428 = arith.constant 112 : index
      %c512_429 = arith.constant 512 : index
      %485 = vector.load %arg11[%c112_428, %c512_429] : memref<128x2048xbf16, #tpu.memory_space<vmem>>, vector<16x256xbf16>
      tpu.vector_store %arg11[%c112_428, %c512_429], %484 {strides = array<i32>} : memref<128x2048xbf16, #tpu.memory_space<vmem>>, vector<16x256xbf16>,
      %c48_430 = arith.constant 48 : index
      %c0_431 = arith.constant 0 : index
      %486 = vector.load %arg9[%c48_430, %c0_431] : memref<128x256xf32, #tpu.memory_space<vmem>>, vector<16x256xf32>
      %c7_432 = arith.constant 7 : index
      %c48_433 = arith.constant 48 : index
      %c0_434 = arith.constant 0 : index
      %487 = vector.load %arg8[%c7_432, %c48_433, %c0_434] : memref<8x128x256xbf16, #tpu.memory_space<vmem>>, vector<1x16x256xbf16>
      %488 = vector.shape_cast %487 : vector<1x16x256xbf16> to vector<16x256xbf16>
      %489 = arith.extf %488 : vector<16x256xbf16> to vector<16x256xf32>
      %490 = arith.addf %486, %489 : vector<16x256xf32>
      %491 = arith.truncf %490 : vector<16x256xf32> to vector<16x256xbf16>
      %c112_435 = arith.constant 112 : index
      %c768_436 = arith.constant 768 : index
      %492 = vector.load %arg11[%c112_435, %c768_436] : memref<128x2048xbf16, #tpu.memory_space<vmem>>, vector<16x256xbf16>
      tpu.vector_store %arg11[%c112_435, %c768_436], %491 {strides = array<i32>} : memref<128x2048xbf16, #tpu.memory_space<vmem>>, vector<16x256xbf16>,
      %c64_437 = arith.constant 64 : index
      %c0_438 = arith.constant 0 : index
      %493 = vector.load %arg9[%c64_437, %c0_438] : memref<128x256xf32, #tpu.memory_space<vmem>>, vector<16x256xf32>
      %c7_439 = arith.constant 7 : index
      %c64_440 = arith.constant 64 : index
      %c0_441 = arith.constant 0 : index
      %494 = vector.load %arg8[%c7_439, %c64_440, %c0_441] : memref<8x128x256xbf16, #tpu.memory_space<vmem>>, vector<1x16x256xbf16>
      %495 = vector.shape_cast %494 : vector<1x16x256xbf16> to vector<16x256xbf16>
      %496 = arith.extf %495 : vector<16x256xbf16> to vector<16x256xf32>
      %497 = arith.addf %493, %496 : vector<16x256xf32>
      %498 = arith.truncf %497 : vector<16x256xf32> to vector<16x256xbf16>
      %c112_442 = arith.constant 112 : index
      %c1024_443 = arith.constant 1024 : index
      %499 = vector.load %arg11[%c112_442, %c1024_443] : memref<128x2048xbf16, #tpu.memory_space<vmem>>, vector<16x256xbf16>
      tpu.vector_store %arg11[%c112_442, %c1024_443], %498 {strides = array<i32>} : memref<128x2048xbf16, #tpu.memory_space<vmem>>, vector<16x256xbf16>,
      %c80_444 = arith.constant 80 : index
      %c0_445 = arith.constant 0 : index
      %500 = vector.load %arg9[%c80_444, %c0_445] : memref<128x256xf32, #tpu.memory_space<vmem>>, vector<16x256xf32>
      %c7_446 = arith.constant 7 : index
      %c80_447 = arith.constant 80 : index
      %c0_448 = arith.constant 0 : index
      %501 = vector.load %arg8[%c7_446, %c80_447, %c0_448] : memref<8x128x256xbf16, #tpu.memory_space<vmem>>, vector<1x16x256xbf16>
      %502 = vector.shape_cast %501 : vector<1x16x256xbf16> to vector<16x256xbf16>
      %503 = arith.extf %502 : vector<16x256xbf16> to vector<16x256xf32>
      %504 = arith.addf %500, %503 : vector<16x256xf32>
      %505 = arith.truncf %504 : vector<16x256xf32> to vector<16x256xbf16>
      %c112_449 = arith.constant 112 : index
      %c1280_450 = arith.constant 1280 : index
      %506 = vector.load %arg11[%c112_449, %c1280_450] : memref<128x2048xbf16, #tpu.memory_space<vmem>>, vector<16x256xbf16>
      tpu.vector_store %arg11[%c112_449, %c1280_450], %505 {strides = array<i32>} : memref<128x2048xbf16, #tpu.memory_space<vmem>>, vector<16x256xbf16>,
      %c96_451 = arith.constant 96 : index
      %c0_452 = arith.constant 0 : index
      %507 = vector.load %arg9[%c96_451, %c0_452] : memref<128x256xf32, #tpu.memory_space<vmem>>, vector<16x256xf32>
      %c7_453 = arith.constant 7 : index
      %c96_454 = arith.constant 96 : index
      %c0_455 = arith.constant 0 : index
      %508 = vector.load %arg8[%c7_453, %c96_454, %c0_455] : memref<8x128x256xbf16, #tpu.memory_space<vmem>>, vector<1x16x256xbf16>
      %509 = vector.shape_cast %508 : vector<1x16x256xbf16> to vector<16x256xbf16>
      %510 = arith.extf %509 : vector<16x256xbf16> to vector<16x256xf32>
      %511 = arith.addf %507, %510 : vector<16x256xf32>
      %512 = arith.truncf %511 : vector<16x256xf32> to vector<16x256xbf16>
      %c112_456 = arith.constant 112 : index
      %c1536_457 = arith.constant 1536 : index
      %513 = vector.load %arg11[%c112_456, %c1536_457] : memref<128x2048xbf16, #tpu.memory_space<vmem>>, vector<16x256xbf16>
      tpu.vector_store %arg11[%c112_456, %c1536_457], %512 {strides = array<i32>} : memref<128x2048xbf16, #tpu.memory_space<vmem>>, vector<16x256xbf16>,
      %c112_458 = arith.constant 112 : index
      %c0_459 = arith.constant 0 : index
      %514 = vector.load %arg9[%c112_458, %c0_459] : memref<128x256xf32, #tpu.memory_space<vmem>>, vector<16x256xf32>
      %c7_460 = arith.constant 7 : index
      %c112_461 = arith.constant 112 : index
      %c0_462 = arith.constant 0 : index
      %515 = vector.load %arg8[%c7_460, %c112_461, %c0_462] : memref<8x128x256xbf16, #tpu.memory_space<vmem>>, vector<1x16x256xbf16>
      %516 = vector.shape_cast %515 : vector<1x16x256xbf16> to vector<16x256xbf16>
      %517 = arith.extf %516 : vector<16x256xbf16> to vector<16x256xf32>
      %518 = arith.addf %514, %517 : vector<16x256xf32>
      %519 = arith.truncf %518 : vector<16x256xf32> to vector<16x256xbf16>
      %c112_463 = arith.constant 112 : index
      %c1792_464 = arith.constant 1792 : index
      %520 = vector.load %arg11[%c112_463, %c1792_464] : memref<128x2048xbf16, #tpu.memory_space<vmem>>, vector<16x256xbf16>
      tpu.vector_store %arg11[%c112_463, %c1792_464], %519 {strides = array<i32>} : memref<128x2048xbf16, #tpu.memory_space<vmem>>, vector<16x256xbf16>,
      %c0_465 = arith.constant 0 : index
      %c0_466 = arith.constant 0 : index
      %521 = vector.load %arg11[%c0_465, %c0_466] : memref<128x2048xbf16, #tpu.memory_space<vmem>>, vector<128x2048xbf16>
      %cst_467 = arith.constant dense<0.000000e+00> : vector<128x2048xf32>
      %522 = tpu.matmul %67, %521, %cst_467 {dimension_numbers = #tpu.dot_dimension_numbers<[1], [0], [0], [1], [0, 0, 1, 1], [], []>} : vector<128x128xbf16>, vector<128x2048xbf16>, vector<128x2048xf32> -> vector<128x2048xf32>
      %c0_468 = arith.constant 0 : index
      %c0_469 = arith.constant 0 : index
      %523 = vector.load %arg7[%c0_468, %c0_469] : memref<128x2048xf32, #tpu.memory_space<vmem>>, vector<128x2048xf32>
      tpu.vector_store %arg7[%c0_468, %c0_469], %522 {strides = array<i32>} : memref<128x2048xf32, #tpu.memory_space<vmem>>, vector<128x2048xf32>,
    } else {
    }
    return
  }
  func.func @transform_0(%arg0: i32) -> (i32, i32, i32) {
    %c0_i32 = arith.constant 0 : i32
    %c0_i32_0 = arith.constant 0 : i32
    %c0_i32_1 = arith.constant 0 : i32
    return %arg0, %c0_i32, %c0_i32_0 : i32, i32, i32
  }
  func.func @transform_1(%arg0: i32) -> (i32, i32) {
    %c0_i32 = arith.constant 0 : i32
    %c0_i32_0 = arith.constant 0 : i32
    %c0_i32_1 = arith.constant 0 : i32
    return %c0_i32, %c0_i32_0 : i32, i32
  }
  func.func @transform_2(%arg0: i32) -> (i32, i32) {
    %c0_i32 = arith.constant 0 : i32
    %c0_i32_0 = arith.constant 0 : i32
    %c0_i32_1 = arith.constant 0 : i32
    return %c0_i32, %c0_i32_0 : i32, i32
  }
  func.func @transform_3(%arg0: i32) -> (i32, i32) {
    %c0_i32 = arith.constant 0 : i32
    %c0_i32_0 = arith.constant 0 : i32
    %c0_i32_1 = arith.constant 0 : i32
    return %c0_i32, %c0_i32_0 : i32, i32
  }
  func.func @transform_4(%arg0: i32) -> (i32, i32) {
    %c0_i32 = arith.constant 0 : i32
    %c0_i32_0 = arith.constant 0 : i32
    %c0_i32_1 = arith.constant 0 : i32
    return %c0_i32, %c0_i32_0 : i32, i32
  }
  func.func @transform_5(%arg0: i32) -> i32 {
    %c0_i32 = arith.constant 0 : i32
    %c0_i32_0 = arith.constant 0 : i32
    return %c0_i32 : i32
  }
  func.func @transform_6(%arg0: i32) -> (i32, i32) {
    %c0_i32 = arith.constant 0 : i32
    %c0_i32_0 = arith.constant 0 : i32
    %c0_i32_1 = arith.constant 0 : i32
    return %c0_i32, %c0_i32_0 : i32, i32
  }
}

</mosaic_0001>

<llo_original>
// kernel: tpu_custom_call.1
$region0: #{tpu_custom_call.1}
  #allocation0 [shape = 'u32[]', space=smem, size = 0x4, offset = 0x4, fixed_abs, tag = 'smem constant byte address 0x4 - core index']
  #allocation1 [shape = 'u32[144,128]{1,0:T(1,128)}', space=vmem, size = 0x12000, scoped, tag = 'internal scratch']
  #allocation2 [shape = 'bf16[8,128,256]{2,1,0:T(8,128)(2,1)}', space=vmem, size = 0x80000, scoped, tag = 'scratch operand']
  #allocation3 [shape = 'f32[128,256]{1,0:T(8,128)}', space=vmem, size = 0x20000, scoped, tag = 'scratch operand']
  #allocation4 [shape = 'f32[128,8]{1,0:T(8,128)}', space=vmem, size = 0x10000, scoped, tag = 'scratch operand']
  #allocation5 [shape = 'bf16[128,2048]{1,0:T(8,128)(2,1)}', space=vmem, size = 0x80000, scoped, tag = 'scratch operand']
  #allocation6 [shape = 'f32[1]{0:T(128)S(6)}', space=smem, size = 0x200, scoped, tag = 'scoped memory for tpu_custom_call.1']
  %s0 = inlined_call_operand.hbm [shape: bf16[8,512,256], index: 0, kind: input, shape index: {}]
  %s1 = inlined_call_operand.hbm [shape: bf16[128,512], index: 1, kind: input, shape index: {}]
  %s2 = inlined_call_operand.vmem [shape: f32[128,1], index: 2, kind: input, shape index: {}]
  %s3 = inlined_call_operand.hbm [shape: f32[1,128], index: 3, kind: input, shape index: {}]
  %s4 = inlined_call_operand.hbm [shape: f32[128,128], index: 4, kind: input, shape index: {}]
  %s5 = inlined_call_operand.<no memory space> [shape: f32[1], index: 5, kind: input, shape index: {}]
  %s6 = inlined_call_operand.hbm [shape: f32[128,2048], index: 6, kind: output, shape index: {}]
  %s7 = sld [smem:[#allocation0]]
  $region81: #{tpu_custom_call.1} parent=0
    _
  %s9 = ssub.s32 1, %s7
  %s10 = scalar_select 0, %s9, %s7
  %11 = sst [smem:[#allocation6]] %s5
  $region1: #{tpu_custom_call.1} parent=0
    #allocation7 [shape = 'u8[524288]{0}', space=vmem, size = 0x80000, scoped, tag = 'input window, operand 0']
    #allocation8 [shape = 's32[2]{0}', space=sflag, size = 0x8, scoped, tag = 'scoped memory for tpu_custom_call.1']
    #allocation9 [shape = 's32[2]{0}', space=sflag, size = 0x8, scoped, tag = 'scoped memory for tpu_custom_call.1']
    #allocation10 [shape = 'u8[131072]{0}', space=vmem, size = 0x20000, scoped, tag = 'input window, operand 1, single buffered']
    #allocation11 [shape = 's32[1]{0}', space=sflag, size = 0x4, scoped, tag = 'scoped memory for tpu_custom_call.1']
    #allocation12 [shape = 'u8[512]{0}', space=vmem, size = 0x400, scoped, tag = 'input window, operand 3, single buffered']
    #allocation13 [shape = 'u8[65536]{0}', space=vmem, size = 0x10000, scoped, tag = 'input window, operand 4, single buffered']
    #allocation14 [shape = 's32[1]{0}', space=sflag, size = 0x4, scoped, tag = 'scoped memory for tpu_custom_call.1']
    #allocation15 [shape = 'u8[1048576]{0}', space=vmem, size = 0x100000, scoped, tag = 'output window, operand 0, single buffered']
    %12 = vsyncpa [#allocation8], 0
    %s13 = scalar_lea.sflag [#allocation8], 1
    %14 = vsyncpa %s13, 0
    %15 = vsyncpa [#allocation11], 0
    %16 = vsyncpa [#allocation14], 0
    %17 = vsyncpa [#allocation9], 0
    loop: start=0, step=1, limit=10
    $region2: #{tpu_custom_call.1} parent=1 // loop_pre_header
      _
    $region3: #{tpu_custom_call.1} parent=1 // loop_header
      %s19 = sphi 0, %s23
      %p20 = scmp.ge.s32.totalorder %s19, 10
      %s29 = sphi 0, %s31
      %s32 = sphi 0, %s29
      %s33 = sphi 0, %s32
      %s49 = sphi 0, %s33
      %s53 = sphi 0, %s53
      %s55 = sphi 0, %s53
      %s56 = sphi 0, %s55
      %s70 = sphi 0, %s56
      %s74 = sphi 0, %s74
      %s76 = sphi 0, %s74
      %s77 = sphi 0, %s76
      %s91 = sphi 0, %s77
      %s95 = sphi 0, %s95
      %s97 = sphi 0, %s95
      %s98 = sphi 0, %s97
      %s112 = sphi 0, %s98
      %s116 = sphi 0, %s116
      %s118 = sphi 0, %s116
      %s119 = sphi 0, %s118
      %s133 = sphi 0, %s119
      %s137 = sphi 0, %s137
      %s139 = sphi 0, %s137
      %s140 = sphi 0, %s139
      %s154 = sphi 0, %s140
      %s158 = sphi 0, %s158
      %s160 = sphi 0, %s158
      %s161 = sphi 0, %s160
      %s175 = sphi 0, %s161
    $region4: #{tpu_custom_call.1} parent=1 // loop_header_branch
      %22 = sbr.rel (%p20) target = $region8
    $region5: #{tpu_custom_call.1} parent=1 // loop_body
      %s24 = ssub.s32 %s19, 1
      %s25 = ssub.s32 %s19, 2
      %s26 = sadd.s32 %s19, 1
      %s27 = ssub.s32 %s19, %s26
      %p28 = scmp.eq.s32.totalorder %s27, 0
      %s30 = sadd.s32 %s29, 1
      %s31 = scalar_select %p28, %s29, %s30
      %p34 = pneg %p28
      %p35 = scmp.eq.s32.totalorder %s19, 7
      %p36 = por %p34, %p35
      %p37 = scmp.ne.s32.totalorder %s29, %s32
      %p38 = scmp.eq.s32.totalorder %s19, 0
      %p39 = por %p37, %p38
      %p40 = scmp.ne.s32.totalorder %s29, %s32
      %p41 = scmp.eq.s32.totalorder %s24, 7
      %p42 = por %p40, %p41
      %p43 = scmp.ne.s32.totalorder %s32, %s33
      %p44 = scmp.eq.s32.totalorder %s24, 0
      %p45 = por %p43, %p44
      %p46 = scmp.ne.s32.totalorder %s32, %s33
      %p47 = scmp.eq.s32.totalorder %s25, 7
      %p48 = por %p46, %p47
      %p50 = scmp.ne.s32.totalorder %s33, %s49
      %p51 = scmp.eq.s32.totalorder %s25, 0
      %p52 = por %p50, %p51
      %s54 = sadd.s32 %s53, 1
      %p57 = scmp.eq.s32.totalorder %s19, 7
      %p58 = scmp.ne.s32.totalorder %s53, %s55
      %p59 = scmp.eq.s32.totalorder %s19, 0
      %p60 = por %p58, %p59
      %p61 = scmp.ne.s32.totalorder %s53, %s55
      %p62 = scmp.eq.s32.totalorder %s24, 7
      %p63 = por %p61, %p62
      %p64 = scmp.ne.s32.totalorder %s55, %s56
      %p65 = scmp.eq.s32.totalorder %s24, 0
      %p66 = por %p64, %p65
      %p67 = scmp.ne.s32.totalorder %s55, %s56
      %p68 = scmp.eq.s32.totalorder %s25, 7
      %p69 = por %p67, %p68
      %p71 = scmp.ne.s32.totalorder %s56, %s70
      %p72 = scmp.eq.s32.totalorder %s25, 0
      %p73 = por %p71, %p72
      %s75 = sadd.s32 %s74, 1
      %p78 = scmp.eq.s32.totalorder %s19, 7
      %p79 = scmp.ne.s32.totalorder %s74, %s76
      %p80 = scmp.eq.s32.totalorder %s19, 0
      %p81 = por %p79, %p80
      %p82 = scmp.ne.s32.totalorder %s74, %s76
      %p83 = scmp.eq.s32.totalorder %s24, 7
      %p84 = por %p82, %p83
      %p85 = scmp.ne.s32.totalorder %s76, %s77
      %p86 = scmp.eq.s32.totalorder %s24, 0
      %p87 = por %p85, %p86
      %p88 = scmp.ne.s32.totalorder %s76, %s77
      %p89 = scmp.eq.s32.totalorder %s25, 7
      %p90 = por %p88, %p89
      %p92 = scmp.ne.s32.totalorder %s77, %s91
      %p93 = scmp.eq.s32.totalorder %s25, 0
      %p94 = por %p92, %p93
      %s96 = sadd.s32 %s95, 1
      %p99 = scmp.eq.s32.totalorder %s19, 7
      %p100 = scmp.ne.s32.totalorder %s95, %s97
      %p101 = scmp.eq.s32.totalorder %s19, 0
      %p102 = por %p100, %p101
      %p103 = scmp.ne.s32.totalorder %s95, %s97
      %p104 = scmp.eq.s32.totalorder %s24, 7
      %p105 = por %p103, %p104
      %p106 = scmp.ne.s32.totalorder %s97, %s98
      %p107 = scmp.eq.s32.totalorder %s24, 0
      %p108 = por %p106, %p107
      %p109 = scmp.ne.s32.totalorder %s97, %s98
      %p110 = scmp.eq.s32.totalorder %s25, 7
      %p111 = por %p109, %p110
      %p113 = scmp.ne.s32.totalorder %s98, %s112
      %p114 = scmp.eq.s32.totalorder %s25, 0
      %p115 = por %p113, %p114
      %s117 = sadd.s32 %s116, 1
      %p120 = scmp.eq.s32.totalorder %s19, 7
      %p121 = scmp.ne.s32.totalorder %s116, %s118
      %p122 = scmp.eq.s32.totalorder %s19, 0
      %p123 = por %p121, %p122
      %p124 = scmp.ne.s32.totalorder %s116, %s118
      %p125 = scmp.eq.s32.totalorder %s24, 7
      %p126 = por %p124, %p125
      %p127 = scmp.ne.s32.totalorder %s118, %s119
      %p128 = scmp.eq.s32.totalorder %s24, 0
      %p129 = por %p127, %p128
      %p130 = scmp.ne.s32.totalorder %s118, %s119
      %p131 = scmp.eq.s32.totalorder %s25, 7
      %p132 = por %p130, %p131
      %p134 = scmp.ne.s32.totalorder %s119, %s133
      %p135 = scmp.eq.s32.totalorder %s25, 0
      %p136 = por %p134, %p135
      %s138 = sadd.s32 %s137, 1
      %p141 = scmp.eq.s32.totalorder %s19, 7
      %p142 = scmp.ne.s32.totalorder %s137, %s139
      %p143 = scmp.eq.s32.totalorder %s19, 0
      %p144 = por %p142, %p143
      %p145 = scmp.ne.s32.totalorder %s137, %s139
      %p146 = scmp.eq.s32.totalorder %s24, 7
      %p147 = por %p145, %p146
      %p148 = scmp.ne.s32.totalorder %s139, %s140
      %p149 = scmp.eq.s32.totalorder %s24, 0
      %p150 = por %p148, %p149
      %p151 = scmp.ne.s32.totalorder %s139, %s140
      %p152 = scmp.eq.s32.totalorder %s25, 7
      %p153 = por %p151, %p152
      %p155 = scmp.ne.s32.totalorder %s140, %s154
      %p156 = scmp.eq.s32.totalorder %s25, 0
      %p157 = por %p155, %p156
      %s159 = sadd.s32 %s158, 1
      %p162 = scmp.eq.s32.totalorder %s19, 7
      %p163 = scmp.ne.s32.totalorder %s158, %s160
      %p164 = scmp.eq.s32.totalorder %s19, 0
      %p165 = por %p163, %p164
      %p166 = scmp.ne.s32.totalorder %s158, %s160
      %p167 = scmp.eq.s32.totalorder %s24, 7
      %p168 = por %p166, %p167
      %p169 = scmp.ne.s32.totalorder %s160, %s161
      %p170 = scmp.eq.s32.totalorder %s24, 0
      %p171 = por %p169, %p170
      %p172 = scmp.ne.s32.totalorder %s160, %s161
      %p173 = scmp.eq.s32.totalorder %s25, 7
      %p174 = por %p172, %p173
      %p176 = scmp.ne.s32.totalorder %s161, %s175
      %p177 = scmp.eq.s32.totalorder %s25, 0
      %p178 = por %p176, %p177
      %p179 = scmp.le.s32.totalorder 1, %s19
      %p180 = scmp.lt.s32.totalorder %s19, 9
      %p181 = pnand %p179, %p180
      %p182 = pneg %p181
      // Predicated region
      $region9: #{tpu_custom_call.1} parent=5 // pred_check
        _
      $region10: #{tpu_custom_call.1} parent=5 // pred_check_branch
        %184 = sbr.rel (%p181) target = $region12
      $region11: #{tpu_custom_call.1} parent=5 // pred_region
        %s185 = ssub.s32 %s19, 1
        // Predicated region
        $region13: #{tpu_custom_call.1} parent=11 // pred_check
          %p186 = pneg %p66
        $region14: #{tpu_custom_call.1} parent=11 // pred_check_branch
          %188 = sbr.rel (%p186) target = $region16
        $region15: #{tpu_custom_call.1} parent=11 // pred_region
          %s190 = ssub.s32 4096, 4096
          %191 = vsyncadd [#allocation11], %s190
          %s192 = sshll.u32 [#allocation10], 4
          %s193 = int_to_ptr.vmem [resolvable:$true] %s192
          %198 = dma.hbm_to_vmem [thread:$0]  %s1, 4096, %s193, [#allocation11], 256, 256, 16
        $region16: #{tpu_custom_call.1} parent=11 // pred_fallthru
          _
        // Predicated region
        $region17: #{tpu_custom_call.1} parent=11 // pred_check
          %p199 = pneg %p87
        $region18: #{tpu_custom_call.1} parent=11 // pred_check_branch
          %201 = sbr.rel (%p199) target = $region20
        $region19: #{tpu_custom_call.1} parent=11 // pred_region
          _
        $region20: #{tpu_custom_call.1} parent=11 // pred_fallthru
          _
        // Predicated region
        $region21: #{tpu_custom_call.1} parent=11 // pred_check
          %p202 = pneg %p108
        $region22: #{tpu_custom_call.1} parent=11 // pred_check_branch
          %204 = sbr.rel (%p202) target = $region24
        $region23: #{tpu_custom_call.1} parent=11 // pred_region
          %s206 = ssub.s32 16, 16
          %207 = vsyncadd [#allocation11], %s206
          %s209 = sshll.u32 [#allocation12], 4
          %s210 = int_to_ptr.vmem [resolvable:$true] %s209
          %212 = dma.hbm_to_vmem [thread:$0]  %s3, 16, %s210, [#allocation11]
        $region24: #{tpu_custom_call.1} parent=11 // pred_fallthru
          _
        // Predicated region
        $region25: #{tpu_custom_call.1} parent=11 // pred_check
          %p213 = pneg %p129
        $region26: #{tpu_custom_call.1} parent=11 // pred_check_branch
          %215 = sbr.rel (%p213) target = $region28
        $region27: #{tpu_custom_call.1} parent=11 // pred_region
          %s217 = ssub.s32 2048, 2048
          %218 = vsyncadd [#allocation14], %s217
          %s219 = sshll.u32 [#allocation13], 4
          %s220 = int_to_ptr.vmem [resolvable:$true] %s219
          %225 = dma.hbm_to_vmem [thread:$0]  %s4, 2048, %s220, [#allocation14], 128, 128, 8
        $region28: #{tpu_custom_call.1} parent=11 // pred_fallthru
          _
        // Predicated region
        $region29: #{tpu_custom_call.1} parent=11 // pred_check
          %p226 = pneg %p150
        $region30: #{tpu_custom_call.1} parent=11 // pred_check_branch
          %228 = sbr.rel (%p226) target = $region32
        $region31: #{tpu_custom_call.1} parent=11 // pred_region
          _
        $region32: #{tpu_custom_call.1} parent=11 // pred_fallthru
          _
      $region12: #{tpu_custom_call.1} parent=5 // pred_fallthru
        _
      %p229 = scmp.lt.s32.totalorder %s19, 8
      // Predicated region
      $region33: #{tpu_custom_call.1} parent=5 // pred_check
        %p230 = pneg %p229
      $region34: #{tpu_custom_call.1} parent=5 // pred_check_branch
        %232 = sbr.rel (%p230) target = $region36
      $region35: #{tpu_custom_call.1} parent=5 // pred_region
        // Predicated region
        $region37: #{tpu_custom_call.1} parent=35 // pred_check
          %p233 = pneg %p39
        $region38: #{tpu_custom_call.1} parent=35 // pred_check_branch
          %235 = sbr.rel (%p233) target = $region40
        $region39: #{tpu_custom_call.1} parent=35 // pred_region
          %s236 = sand.u32 %s29, 1
          %s237 = scalar_lea.sflag [#allocation8], %s236
          %s238 = sand.u32 %s29, 1
          %s239 = smul.addr %s238, 512
          %s240 = scalar_lea.vmem [#allocation7], %s239
          %s242 = ssub.s32 8192, 8192
          %243 = vsyncadd %s237, %s242
          %s244 = smul.addr %s19, 128
          %s245 = smul.addr %s244, 64
          %s246 = scalar_lea.hbm %s0, %s245
          %s247 = sshll.u32 %s240, 4
          %s248 = int_to_ptr.vmem [resolvable:$true] %s247
          %253 = dma.hbm_to_vmem [thread:$0]  %s246, 8192, %s248, %s237, 128, 128, 8
        $region40: #{tpu_custom_call.1} parent=35 // pred_fallthru
          _
      $region36: #{tpu_custom_call.1} parent=5 // pred_fallthru
        _
      %p254 = scmp.le.s32.totalorder 1, %s19
      %p255 = scmp.lt.s32.totalorder %s19, 9
      %p256 = pnand %p254, %p255
      %p257 = pneg %p256
      // Predicated region
      $region41: #{tpu_custom_call.1} parent=5 // pred_check
        _
      $region42: #{tpu_custom_call.1} parent=5 // pred_check_branch
        %259 = sbr.rel (%p256) target = $region44
      $region43: #{tpu_custom_call.1} parent=5 // pred_region
        %s260 = ssub.s32 %s19, 1
        %s261 = sand.u32 %s32, 1
        %s262 = scalar_lea.sflag [#allocation8], %s261
        %s263 = sand.u32 %s32, 1
        %s264 = smul.addr %s263, 512
        %s265 = scalar_lea.vmem [#allocation7], %s264
        // Predicated region
        $region45: #{tpu_custom_call.1} parent=43 // pred_check
          %p266 = pneg %p45
        $region46: #{tpu_custom_call.1} parent=43 // pred_check_branch
          %268 = sbr.rel (%p266) target = $region48
        $region47: #{tpu_custom_call.1} parent=43 // pred_region
          %269 = dma.done %s262, 8192
        $region48: #{tpu_custom_call.1} parent=43 // pred_fallthru
          _
        // Predicated region
        $region49: #{tpu_custom_call.1} parent=43 // pred_check
          %p270 = pneg %p66
        $region50: #{tpu_custom_call.1} parent=43 // pred_check_branch
          %272 = sbr.rel (%p270) target = $region52
        $region51: #{tpu_custom_call.1} parent=43 // pred_region
          %273 = dma.done [#allocation11], 4096
        $region52: #{tpu_custom_call.1} parent=43 // pred_fallthru
          _
        // Predicated region
        $region53: #{tpu_custom_call.1} parent=43 // pred_check
          %p274 = pneg %p108
        $region54: #{tpu_custom_call.1} parent=43 // pred_check_branch
          %276 = sbr.rel (%p274) target = $region56
        $region55: #{tpu_custom_call.1} parent=43 // pred_region
          %277 = dma.done [#allocation11], 16
        $region56: #{tpu_custom_call.1} parent=43 // pred_fallthru
          _
        // Predicated region
        $region57: #{tpu_custom_call.1} parent=43 // pred_check
          %p278 = pneg %p129
        $region58: #{tpu_custom_call.1} parent=43 // pred_check_branch
          %280 = sbr.rel (%p278) target = $region60
        $region59: #{tpu_custom_call.1} parent=43 // pred_region
          %281 = dma.done [#allocation14], 2048
        $region60: #{tpu_custom_call.1} parent=43 // pred_fallthru
          _
        %s282 = sand.u32 %s32, 1
        %s283 = scalar_lea.sflag [#allocation8], %s282
        %s284 = sand.u32 %s32, 1
        %s285 = smul.addr %s284, 512
        %s286 = scalar_lea.vmem [#allocation7], %s285
        %p287 = pneg %p45
        %p288 = pneg %p42
        %p289 = pneg %p66
        %p290 = pneg %p63
        %p291 = pneg %p87
        %p292 = pneg %p84
        %p293 = pneg %p108
        %p294 = pneg %p105
        %p295 = pneg %p129
        %p296 = pneg %p126
        %p297 = pneg %p150
        %p298 = pneg %p147
        %p299 = pneg %p171
        %p300 = pneg %p168
        %p302 = scmp.eq.s32.totalorder %s24, 0
        // Predicated region
        $region61: #{tpu_custom_call.1} parent=43 // pred_check
          %p303 = pneg %p302
        $region62: #{tpu_custom_call.1} parent=43 // pred_check_branch
          %305 = sbr.rel (%p303) target = $region64
        $region63: #{tpu_custom_call.1} parent=43 // pred_region
          %306 = vst [vmem:[#allocation3] sm:$0xff] 0.0
          %307 = vst [vmem:[#allocation3 + $0x8] sm:$0xff] 0.0
          %308 = vst [vmem:[#allocation3 + $0x10] sm:$0xff] 0.0
          %309 = vst [vmem:[#allocation3 + $0x18] sm:$0xff] 0.0
          %310 = vst [vmem:[#allocation3 + $0x20] sm:$0xff] 0.0
          %311 = vst [vmem:[#allocation3 + $0x28] sm:$0xff] 0.0
          %312 = vst [vmem:[#allocation3 + $0x30] sm:$0xff] 0.0
          %313 = vst [vmem:[#allocation3 + $0x38] sm:$0xff] 0.0
          %314 = vst [vmem:[#allocation3 + $0x40] sm:$0xff] 0.0
          %315 = vst [vmem:[#allocation3 + $0x48] sm:$0xff] 0.0
          %316 = vst [vmem:[#allocation3 + $0x50] sm:$0xff] 0.0
          %317 = vst [vmem:[#allocation3 + $0x58] sm:$0xff] 0.0
          %318 = vst [vmem:[#allocation3 + $0x60] sm:$0xff] 0.0
          %319 = vst [vmem:[#allocation3 + $0x68] sm:$0xff] 0.0
          %320 = vst [vmem:[#allocation3 + $0x70] sm:$0xff] 0.0
          %321 = vst [vmem:[#allocation3 + $0x78] sm:$0xff] 0.0
          %322 = vst [vmem:[#allocation3 + $0x80] sm:$0xff] 0.0
          %323 = vst [vmem:[#allocation3 + $0x88] sm:$0xff] 0.0
          %324 = vst [vmem:[#allocation3 + $0x90] sm:$0xff] 0.0
          %325 = vst [vmem:[#allocation3 + $0x98] sm:$0xff] 0.0
          %326 = vst [vmem:[#allocation3 + $0xa0] sm:$0xff] 0.0
          %327 = vst [vmem:[#allocation3 + $0xa8] sm:$0xff] 0.0
          %328 = vst [vmem:[#allocation3 + $0xb0] sm:$0xff] 0.0
          %329 = vst [vmem:[#allocation3 + $0xb8] sm:$0xff] 0.0
          %330 = vst [vmem:[#allocation3 + $0xc0] sm:$0xff] 0.0
          %331 = vst [vmem:[#allocation3 + $0xc8] sm:$0xff] 0.0
          %332 = vst [vmem:[#allocation3 + $0xd0] sm:$0xff] 0.0
          %333 = vst [vmem:[#allocation3 + $0xd8] sm:$0xff] 0.0
          %334 = vst [vmem:[#allocation3 + $0xe0] sm:$0xff] 0.0
          %335 = vst [vmem:[#allocation3 + $0xe8] sm:$0xff] 0.0
          %336 = vst [vmem:[#allocation3 + $0xf0] sm:$0xff] 0.0
          %337 = vst [vmem:[#allocation3 + $0xf8] sm:$0xff] 0.0
          %vm338 = vcmask 64512
          %339 = vst.msk [vmem:[#allocation4] sm:$0xff] %vm338, 0.0
          %340 = vst.msk [vmem:[#allocation4 + $0x8] sm:$0xff] %vm338, 0.0
          %341 = vst.msk [vmem:[#allocation4 + $0x10] sm:$0xff] %vm338, 0.0
          %342 = vst.msk [vmem:[#allocation4 + $0x18] sm:$0xff] %vm338, 0.0
          %343 = vst.msk [vmem:[#allocation4 + $0x20] sm:$0xff] %vm338, 0.0
          %344 = vst.msk [vmem:[#allocation4 + $0x28] sm:$0xff] %vm338, 0.0
          %345 = vst.msk [vmem:[#allocation4 + $0x30] sm:$0xff] %vm338, 0.0
          %346 = vst.msk [vmem:[#allocation4 + $0x38] sm:$0xff] %vm338, 0.0
          %347 = vst.msk [vmem:[#allocation4 + $0x40] sm:$0xff] %vm338, 0.0
          %348 = vst.msk [vmem:[#allocation4 + $0x48] sm:$0xff] %vm338, 0.0
          %349 = vst.msk [vmem:[#allocation4 + $0x50] sm:$0xff] %vm338, 0.0
          %350 = vst.msk [vmem:[#allocation4 + $0x58] sm:$0xff] %vm338, 0.0
          %351 = vst.msk [vmem:[#allocation4 + $0x60] sm:$0xff] %vm338, 0.0
          %352 = vst.msk [vmem:[#allocation4 + $0x68] sm:$0xff] %vm338, 0.0
          %353 = vst.msk [vmem:[#allocation4 + $0x70] sm:$0xff] %vm338, 0.0
          %354 = vst.msk [vmem:[#allocation4 + $0x78] sm:$0xff] %vm338, 0.0
        $region64: #{tpu_custom_call.1} parent=43 // pred_fallthru
          _
        %v355 = vld [vmem:[#allocation10] sm:$0xff]
        %v356 = vld [vmem:[#allocation10 + $0x8] sm:$0xff]
        %v357 = vld [vmem:[#allocation10 + $0x10] sm:$0xff]
        %v358 = vld [vmem:[#allocation10 + $0x18] sm:$0xff]
        %v359 = vld [vmem:[#allocation10 + $0x20] sm:$0xff]
        %v360 = vld [vmem:[#allocation10 + $0x28] sm:$0xff]
        %v361 = vld [vmem:[#allocation10 + $0x30] sm:$0xff]
        %v362 = vld [vmem:[#allocation10 + $0x38] sm:$0xff]
        %v363 = vld [vmem:[#allocation10 + $0x40] sm:$0xff]
        %v364 = vld [vmem:[#allocation10 + $0x48] sm:$0xff]
        %v365 = vld [vmem:[#allocation10 + $0x50] sm:$0xff]
        %v366 = vld [vmem:[#allocation10 + $0x58] sm:$0xff]
        %v367 = vld [vmem:[#allocation10 + $0x60] sm:$0xff]
        %v368 = vld [vmem:[#allocation10 + $0x68] sm:$0xff]
        %v369 = vld [vmem:[#allocation10 + $0x70] sm:$0xff]
        %v370 = vld [vmem:[#allocation10 + $0x78] sm:$0xff]
        %v371 = vld [vmem:[#allocation10 + $0x80] sm:$0xff]
        %v372 = vld [vmem:[#allocation10 + $0x88] sm:$0xff]
        %v373 = vld [vmem:[#allocation10 + $0x90] sm:$0xff]
        %v374 = vld [vmem:[#allocation10 + $0x98] sm:$0xff]
        %v375 = vld [vmem:[#allocation10 + $0xa0] sm:$0xff]
        %v376 = vld [vmem:[#allocation10 + $0xa8] sm:$0xff]
        %v377 = vld [vmem:[#allocation10 + $0xb0] sm:$0xff]
        %v378 = vld [vmem:[#allocation10 + $0xb8] sm:$0xff]
        %v379 = vld [vmem:[#allocation10 + $0xc0] sm:$0xff]
        %v380 = vld [vmem:[#allocation10 + $0xc8] sm:$0xff]
        %v381 = vld [vmem:[#allocation10 + $0xd0] sm:$0xff]
        %v382 = vld [vmem:[#allocation10 + $0xd8] sm:$0xff]
        %v383 = vld [vmem:[#allocation10 + $0xe0] sm:$0xff]
        %v384 = vld [vmem:[#allocation10 + $0xe8] sm:$0xff]
        %v385 = vld [vmem:[#allocation10 + $0xf0] sm:$0xff]
        %v386 = vld [vmem:[#allocation10 + $0xf8] sm:$0xff]
        %v387 = vld [vmem:[%s265] sm:$0xff]
        %v388 = vld [vmem:[%s265 + $0x8] sm:$0xff]
        %v389 = vld [vmem:[%s265 + $0x10] sm:$0xff]
        %v390 = vld [vmem:[%s265 + $0x18] sm:$0xff]
        %v391 = vld [vmem:[%s265 + $0x20] sm:$0xff]
        %v392 = vld [vmem:[%s265 + $0x28] sm:$0xff]
        %v393 = vld [vmem:[%s265 + $0x30] sm:$0xff]
        %v394 = vld [vmem:[%s265 + $0x38] sm:$0xff]
        %v395 = vld [vmem:[%s265 + $0x40] sm:$0xff]
        %v396 = vld [vmem:[%s265 + $0x48] sm:$0xff]
        %v397 = vld [vmem:[%s265 + $0x50] sm:$0xff]
        %v398 = vld [vmem:[%s265 + $0x58] sm:$0xff]
        %v399 = vld [vmem:[%s265 + $0x60] sm:$0xff]
        %v400 = vld [vmem:[%s265 + $0x68] sm:$0xff]
        %v401 = vld [vmem:[%s265 + $0x70] sm:$0xff]
        %v402 = vld [vmem:[%s265 + $0x78] sm:$0xff]
        %v403 = vld [vmem:[%s265 + $0x80] sm:$0xff]
        %v404 = vld [vmem:[%s265 + $0x88] sm:$0xff]
        %v405 = vld [vmem:[%s265 + $0x90] sm:$0xff]
        %v406 = vld [vmem:[%s265 + $0x98] sm:$0xff]
        %v407 = vld [vmem:[%s265 + $0xa0] sm:$0xff]
        %v408 = vld [vmem:[%s265 + $0xa8] sm:$0xff]
        %v409 = vld [vmem:[%s265 + $0xb0] sm:$0xff]
        %v410 = vld [vmem:[%s265 + $0xb8] sm:$0xff]
        %v411 = vld [vmem:[%s265 + $0xc0] sm:$0xff]
        %v412 = vld [vmem:[%s265 + $0xc8] sm:$0xff]
        %v413 = vld [vmem:[%s265 + $0xd0] sm:$0xff]
        %v414 = vld [vmem:[%s265 + $0xd8] sm:$0xff]
        %v415 = vld [vmem:[%s265 + $0xe0] sm:$0xff]
        %v416 = vld [vmem:[%s265 + $0xe8] sm:$0xff]
        %v417 = vld [vmem:[%s265 + $0xf0] sm:$0xff]
        %v418 = vld [vmem:[%s265 + $0xf8] sm:$0xff]
        %v419 = vld [vmem:[%s265 + $0x100] sm:$0xff]
        %v420 = vld [vmem:[%s265 + $0x108] sm:$0xff]
        %v421 = vld [vmem:[%s265 + $0x110] sm:$0xff]
        %v422 = vld [vmem:[%s265 + $0x118] sm:$0xff]
        %v423 = vld [vmem:[%s265 + $0x120] sm:$0xff]
        %v424 = vld [vmem:[%s265 + $0x128] sm:$0xff]
        %v425 = vld [vmem:[%s265 + $0x130] sm:$0xff]
        %v426 = vld [vmem:[%s265 + $0x138] sm:$0xff]
        %v427 = vld [vmem:[%s265 + $0x140] sm:$0xff]
        %v428 = vld [vmem:[%s265 + $0x148] sm:$0xff]
        %v429 = vld [vmem:[%s265 + $0x150] sm:$0xff]
        %v430 = vld [vmem:[%s265 + $0x158] sm:$0xff]
        %v431 = vld [vmem:[%s265 + $0x160] sm:$0xff]
        %v432 = vld [vmem:[%s265 + $0x168] sm:$0xff]
        %v433 = vld [vmem:[%s265 + $0x170] sm:$0xff]
        %v434 = vld [vmem:[%s265 + $0x178] sm:$0xff]
        %v435 = vld [vmem:[%s265 + $0x180] sm:$0xff]
        %v436 = vld [vmem:[%s265 + $0x188] sm:$0xff]
        %v437 = vld [vmem:[%s265 + $0x190] sm:$0xff]
        %v438 = vld [vmem:[%s265 + $0x198] sm:$0xff]
        %v439 = vld [vmem:[%s265 + $0x1a0] sm:$0xff]
        %v440 = vld [vmem:[%s265 + $0x1a8] sm:$0xff]
        %v441 = vld [vmem:[%s265 + $0x1b0] sm:$0xff]
        %v442 = vld [vmem:[%s265 + $0x1b8] sm:$0xff]
        %v443 = vld [vmem:[%s265 + $0x1c0] sm:$0xff]
        %v444 = vld [vmem:[%s265 + $0x1c8] sm:$0xff]
        %v445 = vld [vmem:[%s265 + $0x1d0] sm:$0xff]
        %v446 = vld [vmem:[%s265 + $0x1d8] sm:$0xff]
        %v447 = vld [vmem:[%s265 + $0x1e0] sm:$0xff]
        %v448 = vld [vmem:[%s265 + $0x1e8] sm:$0xff]
        %v449 = vld [vmem:[%s265 + $0x1f0] sm:$0xff]
        %v450 = vld [vmem:[%s265 + $0x1f8] sm:$0xff]
        %v451 = vld [vmem:[%s2] sm:$0xff]
        %v452 = vld [vmem:[%s2 + $0x8] sm:$0xff]
        %v453 = vld [vmem:[%s2 + $0x10] sm:$0xff]
        %v454 = vld [vmem:[%s2 + $0x18] sm:$0xff]
        %v455 = vld [vmem:[%s2 + $0x20] sm:$0xff]
        %v456 = vld [vmem:[%s2 + $0x28] sm:$0xff]
        %v457 = vld [vmem:[%s2 + $0x30] sm:$0xff]
        %v458 = vld [vmem:[%s2 + $0x38] sm:$0xff]
        %v459 = vld [vmem:[%s2 + $0x40] sm:$0xff]
        %v460 = vld [vmem:[%s2 + $0x48] sm:$0xff]
        %v461 = vld [vmem:[%s2 + $0x50] sm:$0xff]
        %v462 = vld [vmem:[%s2 + $0x58] sm:$0xff]
        %v463 = vld [vmem:[%s2 + $0x60] sm:$0xff]
        %v464 = vld [vmem:[%s2 + $0x68] sm:$0xff]
        %v465 = vld [vmem:[%s2 + $0x70] sm:$0xff]
        %v466 = vld [vmem:[%s2 + $0x78] sm:$0xff]
        %468 = vset.pattern.permute.xlu0 0
        %469 = vperm.xlu0 %468, %v451
        %v470 = vpop.permute.xlu0 %469
        %473 = vset.pattern.permute.xlu0 0
        %474 = vperm.xlu0 %473, %v452
        %v475 = vpop.permute.xlu0 %474
        %478 = vset.pattern.permute.xlu0 0
        %479 = vperm.xlu0 %478, %v453
        %v480 = vpop.permute.xlu0 %479
        %483 = vset.pattern.permute.xlu0 0
        %484 = vperm.xlu0 %483, %v454
        %v485 = vpop.permute.xlu0 %484
        %488 = vset.pattern.permute.xlu0 0
        %489 = vperm.xlu0 %488, %v455
        %v490 = vpop.permute.xlu0 %489
        %493 = vset.pattern.permute.xlu0 0
        %494 = vperm.xlu0 %493, %v456
        %v495 = vpop.permute.xlu0 %494
        %498 = vset.pattern.permute.xlu0 0
        %499 = vperm.xlu0 %498, %v457
        %v500 = vpop.permute.xlu0 %499
        %503 = vset.pattern.permute.xlu0 0
        %504 = vperm.xlu0 %503, %v458
        %v505 = vpop.permute.xlu0 %504
        %508 = vset.pattern.permute.xlu0 0
        %509 = vperm.xlu0 %508, %v459
        %v510 = vpop.permute.xlu0 %509
        %513 = vset.pattern.permute.xlu0 0
        %514 = vperm.xlu0 %513, %v460
        %v515 = vpop.permute.xlu0 %514
        %518 = vset.pattern.permute.xlu0 0
        %519 = vperm.xlu0 %518, %v461
        %v520 = vpop.permute.xlu0 %519
        %523 = vset.pattern.permute.xlu0 0
        %524 = vperm.xlu0 %523, %v462
        %v525 = vpop.permute.xlu0 %524
        %528 = vset.pattern.permute.xlu0 0
        %529 = vperm.xlu0 %528, %v463
        %v530 = vpop.permute.xlu0 %529
        %533 = vset.pattern.permute.xlu0 0
        %534 = vperm.xlu0 %533, %v464
        %v535 = vpop.permute.xlu0 %534
        %538 = vset.pattern.permute.xlu0 0
        %539 = vperm.xlu0 %538, %v465
        %v540 = vpop.permute.xlu0 %539
        %543 = vset.pattern.permute.xlu0 0
        %544 = vperm.xlu0 %543, %v466
        %v545 = vpop.permute.xlu0 %544
        %v579 = vunpack.c.l.b16 %v355
        %v580 = vunpack.c.h.b16 %v355
        %v581 = vunpack.c.l.b16 %v356
        %v582 = vunpack.c.h.b16 %v356
        %v583 = vunpack.c.l.b16 %v357
        %v584 = vunpack.c.h.b16 %v357
        %v585 = vunpack.c.l.b16 %v358
        %v586 = vunpack.c.h.b16 %v358
        %v587 = vunpack.c.l.b16 %v359
        %v588 = vunpack.c.h.b16 %v359
        %v589 = vunpack.c.l.b16 %v360
        %v590 = vunpack.c.h.b16 %v360
        %v591 = vunpack.c.l.b16 %v361
        %v592 = vunpack.c.h.b16 %v361
        %v593 = vunpack.c.l.b16 %v362
        %v594 = vunpack.c.h.b16 %v362
        %v595 = vunpack.c.l.b16 %v363
        %v596 = vunpack.c.h.b16 %v363
        %v597 = vunpack.c.l.b16 %v364
        %v598 = vunpack.c.h.b16 %v364
        %v599 = vunpack.c.l.b16 %v365
        %v600 = vunpack.c.h.b16 %v365
        %v601 = vunpack.c.l.b16 %v366
        %v602 = vunpack.c.h.b16 %v366
        %v603 = vunpack.c.l.b16 %v367
        %v604 = vunpack.c.h.b16 %v367
        %v605 = vunpack.c.l.b16 %v368
        %v606 = vunpack.c.h.b16 %v368
        %v607 = vunpack.c.l.b16 %v369
        %v608 = vunpack.c.h.b16 %v369
        %v609 = vunpack.c.l.b16 %v370
        %v610 = vunpack.c.h.b16 %v370
        %v611 = vunpack.c.l.b16 %v371
        %v612 = vunpack.c.h.b16 %v371
        %v613 = vunpack.c.l.b16 %v372
        %v614 = vunpack.c.h.b16 %v372
        %v615 = vunpack.c.l.b16 %v373
        %v616 = vunpack.c.h.b16 %v373
        %v617 = vunpack.c.l.b16 %v374
        %v618 = vunpack.c.h.b16 %v374
        %v619 = vunpack.c.l.b16 %v375
        %v620 = vunpack.c.h.b16 %v375
        %v621 = vunpack.c.l.b16 %v376
        %v622 = vunpack.c.h.b16 %v376
        %v623 = vunpack.c.l.b16 %v377
        %v624 = vunpack.c.h.b16 %v377
        %v625 = vunpack.c.l.b16 %v378
        %v626 = vunpack.c.h.b16 %v378
        %v627 = vunpack.c.l.b16 %v379
        %v628 = vunpack.c.h.b16 %v379
        %v629 = vunpack.c.l.b16 %v380
        %v630 = vunpack.c.h.b16 %v380
        %v631 = vunpack.c.l.b16 %v381
        %v632 = vunpack.c.h.b16 %v381
        %v633 = vunpack.c.l.b16 %v382
        %v634 = vunpack.c.h.b16 %v382
        %v635 = vunpack.c.l.b16 %v383
        %v636 = vunpack.c.h.b16 %v383
        %v637 = vunpack.c.l.b16 %v384
        %v638 = vunpack.c.h.b16 %v384
        %v639 = vunpack.c.l.b16 %v385
        %v640 = vunpack.c.h.b16 %v385
        %v641 = vunpack.c.l.b16 %v386
        %v642 = vunpack.c.h.b16 %v386
        %v643 = vpack.c.b16 %v583, %v579
        %v644 = vpack.c.b16 %v584, %v580
        %v645 = vpack.c.b16 %v585, %v581
        %v646 = vpack.c.b16 %v586, %v582
        %v647 = vpack.c.b16 %v591, %v587
        %v648 = vpack.c.b16 %v592, %v588
        %v649 = vpack.c.b16 %v593, %v589
        %v650 = vpack.c.b16 %v594, %v590
        %v651 = vpack.c.b16 %v599, %v595
        %v652 = vpack.c.b16 %v600, %v596
        %v653 = vpack.c.b16 %v601, %v597
        %v654 = vpack.c.b16 %v602, %v598
        %v655 = vpack.c.b16 %v607, %v603
        %v656 = vpack.c.b16 %v608, %v604
        %v657 = vpack.c.b16 %v609, %v605
        %v658 = vpack.c.b16 %v610, %v606
        %v659 = vpack.c.b16 %v615, %v611
        %v660 = vpack.c.b16 %v616, %v612
        %v661 = vpack.c.b16 %v617, %v613
        %v662 = vpack.c.b16 %v618, %v614
        %v663 = vpack.c.b16 %v623, %v619
        %v664 = vpack.c.b16 %v624, %v620
        %v665 = vpack.c.b16 %v625, %v621
        %v666 = vpack.c.b16 %v626, %v622
        %v667 = vpack.c.b16 %v631, %v627
        %v668 = vpack.c.b16 %v632, %v628
        %v669 = vpack.c.b16 %v633, %v629
        %v670 = vpack.c.b16 %v634, %v630
        %v671 = vpack.c.b16 %v639, %v635
        %v672 = vpack.c.b16 %v640, %v636
        %v673 = vpack.c.b16 %v641, %v637
        %v674 = vpack.c.b16 %v642, %v638
        %v771 = vunpack.c.l.b16 %v387
        %v772 = vunpack.c.h.b16 %v387
        %v773 = vunpack.c.l.b16 %v388
        %v774 = vunpack.c.h.b16 %v388
        %v775 = vunpack.c.l.b16 %v389
        %v776 = vunpack.c.h.b16 %v389
        %v777 = vunpack.c.l.b16 %v390
        %v778 = vunpack.c.h.b16 %v390
        %v779 = vunpack.c.l.b16 %v391
        %v780 = vunpack.c.h.b16 %v391
        %v781 = vunpack.c.l.b16 %v392
        %v782 = vunpack.c.h.b16 %v392
        %v783 = vunpack.c.l.b16 %v393
        %v784 = vunpack.c.h.b16 %v393
        %v785 = vunpack.c.l.b16 %v394
        %v786 = vunpack.c.h.b16 %v394
        %v787 = vunpack.c.l.b16 %v395
        %v788 = vunpack.c.h.b16 %v395
        %v789 = vunpack.c.l.b16 %v396
        %v790 = vunpack.c.h.b16 %v396
        %v791 = vunpack.c.l.b16 %v397
        %v792 = vunpack.c.h.b16 %v397
        %v793 = vunpack.c.l.b16 %v398
        %v794 = vunpack.c.h.b16 %v398
        %v795 = vunpack.c.l.b16 %v399
        %v796 = vunpack.c.h.b16 %v399
        %v797 = vunpack.c.l.b16 %v400
        %v798 = vunpack.c.h.b16 %v400
        %v799 = vunpack.c.l.b16 %v401
        %v800 = vunpack.c.h.b16 %v401
        %v801 = vunpack.c.l.b16 %v402
        %v802 = vunpack.c.h.b16 %v402
        %v803 = vunpack.c.l.b16 %v403
        %v804 = vunpack.c.h.b16 %v403
        %v805 = vunpack.c.l.b16 %v404
        %v806 = vunpack.c.h.b16 %v404
        %v807 = vunpack.c.l.b16 %v405
        %v808 = vunpack.c.h.b16 %v405
        %v809 = vunpack.c.l.b16 %v406
        %v810 = vunpack.c.h.b16 %v406
        %v811 = vunpack.c.l.b16 %v407
        %v812 = vunpack.c.h.b16 %v407
        %v813 = vunpack.c.l.b16 %v408
        %v814 = vunpack.c.h.b16 %v408
        %v815 = vunpack.c.l.b16 %v409
        %v816 = vunpack.c.h.b16 %v409
        %v817 = vunpack.c.l.b16 %v410
        %v818 = vunpack.c.h.b16 %v410
        %v819 = vunpack.c.l.b16 %v411
        %v820 = vunpack.c.h.b16 %v411
        %v821 = vunpack.c.l.b16 %v412
        %v822 = vunpack.c.h.b16 %v412
        %v823 = vunpack.c.l.b16 %v413
        %v824 = vunpack.c.h.b16 %v413
        %v825 = vunpack.c.l.b16 %v414
        %v826 = vunpack.c.h.b16 %v414
        %v827 = vunpack.c.l.b16 %v415
        %v828 = vunpack.c.h.b16 %v415
        %v829 = vunpack.c.l.b16 %v416
        %v830 = vunpack.c.h.b16 %v416
        %v831 = vunpack.c.l.b16 %v417
        %v832 = vunpack.c.h.b16 %v417
        %v833 = vunpack.c.l.b16 %v418
        %v834 = vunpack.c.h.b16 %v418
        %v835 = vunpack.c.l.b16 %v419
        %v836 = vunpack.c.h.b16 %v419
        %v837 = vunpack.c.l.b16 %v420
        %v838 = vunpack.c.h.b16 %v420
        %v839 = vunpack.c.l.b16 %v421
        %v840 = vunpack.c.h.b16 %v421
        %v841 = vunpack.c.l.b16 %v422
        %v842 = vunpack.c.h.b16 %v422
        %v843 = vunpack.c.l.b16 %v423
        %v844 = vunpack.c.h.b16 %v423
        %v845 = vunpack.c.l.b16 %v424
        %v846 = vunpack.c.h.b16 %v424
        %v847 = vunpack.c.l.b16 %v425
        %v848 = vunpack.c.h.b16 %v425
        %v849 = vunpack.c.l.b16 %v426
        %v850 = vunpack.c.h.b16 %v426
        %v851 = vunpack.c.l.b16 %v427
        %v852 = vunpack.c.h.b16 %v427
        %v853 = vunpack.c.l.b16 %v428
        %v854 = vunpack.c.h.b16 %v428
        %v855 = vunpack.c.l.b16 %v429
        %v856 = vunpack.c.h.b16 %v429
        %v857 = vunpack.c.l.b16 %v430
        %v858 = vunpack.c.h.b16 %v430
        %v859 = vunpack.c.l.b16 %v431
        %v860 = vunpack.c.h.b16 %v431
        %v861 = vunpack.c.l.b16 %v432
        %v862 = vunpack.c.h.b16 %v432
        %v863 = vunpack.c.l.b16 %v433
        %v864 = vunpack.c.h.b16 %v433
        %v865 = vunpack.c.l.b16 %v434
        %v866 = vunpack.c.h.b16 %v434
        %v867 = vunpack.c.l.b16 %v435
        %v868 = vunpack.c.h.b16 %v435
        %v869 = vunpack.c.l.b16 %v436
        %v870 = vunpack.c.h.b16 %v436
        %v871 = vunpack.c.l.b16 %v437
        %v872 = vunpack.c.h.b16 %v437
        %v873 = vunpack.c.l.b16 %v438
        %v874 = vunpack.c.h.b16 %v438
        %v875 = vunpack.c.l.b16 %v439
        %v876 = vunpack.c.h.b16 %v439
        %v877 = vunpack.c.l.b16 %v440
        %v878 = vunpack.c.h.b16 %v440
        %v879 = vunpack.c.l.b16 %v441
        %v880 = vunpack.c.h.b16 %v441
        %v881 = vunpack.c.l.b16 %v442
        %v882 = vunpack.c.h.b16 %v442
        %v883 = vunpack.c.l.b16 %v443
        %v884 = vunpack.c.h.b16 %v443
        %v885 = vunpack.c.l.b16 %v444
        %v886 = vunpack.c.h.b16 %v444
        %v887 = vunpack.c.l.b16 %v445
        %v888 = vunpack.c.h.b16 %v445
        %v889 = vunpack.c.l.b16 %v446
        %v890 = vunpack.c.h.b16 %v446
        %v891 = vunpack.c.l.b16 %v447
        %v892 = vunpack.c.h.b16 %v447
        %v893 = vunpack.c.l.b16 %v448
        %v894 = vunpack.c.h.b16 %v448
        %v895 = vunpack.c.l.b16 %v449
        %v896 = vunpack.c.h.b16 %v449
        %v897 = vunpack.c.l.b16 %v450
        %v898 = vunpack.c.h.b16 %v450
        %v899 = vpack.c.b16 %v773, %v771
        %v900 = vpack.c.b16 %v774, %v772
        %v901 = vpack.c.b16 %v777, %v775
        %v902 = vpack.c.b16 %v778, %v776
        %v903 = vpack.c.b16 %v781, %v779
        %v904 = vpack.c.b16 %v782, %v780
        %v905 = vpack.c.b16 %v785, %v783
        %v906 = vpack.c.b16 %v786, %v784
        %v907 = vpack.c.b16 %v789, %v787
        %v908 = vpack.c.b16 %v790, %v788
        %v909 = vpack.c.b16 %v793, %v791
        %v910 = vpack.c.b16 %v794, %v792
        %v911 = vpack.c.b16 %v797, %v795
        %v912 = vpack.c.b16 %v798, %v796
        %v913 = vpack.c.b16 %v801, %v799
        %v914 = vpack.c.b16 %v802, %v800
        %v915 = vpack.c.b16 %v805, %v803
        %v916 = vpack.c.b16 %v806, %v804
        %v917 = vpack.c.b16 %v809, %v807
        %v918 = vpack.c.b16 %v810, %v808
        %v919 = vpack.c.b16 %v813, %v811
        %v920 = vpack.c.b16 %v814, %v812
        %v921 = vpack.c.b16 %v817, %v815
        %v922 = vpack.c.b16 %v818, %v816
        %v923 = vpack.c.b16 %v821, %v819
        %v924 = vpack.c.b16 %v822, %v820
        %v925 = vpack.c.b16 %v825, %v823
        %v926 = vpack.c.b16 %v826, %v824
        %v927 = vpack.c.b16 %v829, %v827
        %v928 = vpack.c.b16 %v830, %v828
        %v929 = vpack.c.b16 %v833, %v831
        %v930 = vpack.c.b16 %v834, %v832
        %v931 = vpack.c.b16 %v837, %v835
        %v932 = vpack.c.b16 %v838, %v836
        %v933 = vpack.c.b16 %v841, %v839
        %v934 = vpack.c.b16 %v842, %v840
        %v935 = vpack.c.b16 %v845, %v843
        %v936 = vpack.c.b16 %v846, %v844
        %v937 = vpack.c.b16 %v849, %v847
        %v938 = vpack.c.b16 %v850, %v848
        %v939 = vpack.c.b16 %v853, %v851
        %v940 = vpack.c.b16 %v854, %v852
        %v941 = vpack.c.b16 %v857, %v855
        %v942 = vpack.c.b16 %v858, %v856
        %v943 = vpack.c.b16 %v861, %v859
        %v944 = vpack.c.b16 %v862, %v860
        %v945 = vpack.c.b16 %v865, %v863
        %v946 = vpack.c.b16 %v866, %v864
        %v947 = vpack.c.b16 %v869, %v867
        %v948 = vpack.c.b16 %v870, %v868
        %v949 = vpack.c.b16 %v873, %v871
        %v950 = vpack.c.b16 %v874, %v872
        %v951 = vpack.c.b16 %v877, %v875
        %v952 = vpack.c.b16 %v878, %v876
        %v953 = vpack.c.b16 %v881, %v879
        %v954 = vpack.c.b16 %v882, %v880
        %v955 = vpack.c.b16 %v885, %v883
        %v956 = vpack.c.b16 %v886, %v884
        %v957 = vpack.c.b16 %v889, %v887
        %v958 = vpack.c.b16 %v890, %v888
        %v959 = vpack.c.b16 %v893, %v891
        %v960 = vpack.c.b16 %v894, %v892
        %v961 = vpack.c.b16 %v897, %v895
        %v962 = vpack.c.b16 %v898, %v896
        %1027 = vmatprep.subr.bf16.mxu0 %v914
        %1028 = vmatpush1.bf16.msra.mxu0 %v913
        %1029 = vmatprep.subr.bf16.mxu0 %v912
        %1030 = vmatpush1.bf16.msra.mxu0 %v911
        %1031 = vmatprep.subr.bf16.mxu0 %v910
        %1032 = vmatpush1.bf16.msra.mxu0 %v909
        %1033 = vmatprep.subr.bf16.mxu0 %v908
        %1034 = vmatpush1.bf16.msra.mxu0 %v907
        %1035 = vmatprep.subr.bf16.mxu0 %v906
        %1036 = vmatpush1.bf16.msra.mxu0 %v905
        %1037 = vmatprep.subr.bf16.mxu0 %v904
        %1038 = vmatpush1.bf16.msra.mxu0 %v903
        %1039 = vmatprep.subr.bf16.mxu0 %v902
        %1040 = vmatpush1.bf16.msra.mxu0 %v901
        %1041 = vmatprep.subr.bf16.mxu0 %v900
        %1042 = vmatpush1.bf16.msra.mxu0 %v899
        %1043 = vmatprep.subr.bf16.mxu0 %v930
        %1044 = vmatpush2.bf16.msra.mxu0 %v929
        %1045 = vmatprep.subr.bf16.mxu0 %v928
        %1046 = vmatpush2.bf16.msra.mxu0 %v927
        %1047 = vmatprep.subr.bf16.mxu0 %v926
        %1048 = vmatpush2.bf16.msra.mxu0 %v925
        %1049 = vmatprep.subr.bf16.mxu0 %v924
        %1050 = vmatpush2.bf16.msra.mxu0 %v923
        %1051 = vmatprep.subr.bf16.mxu0 %v922
        %1052 = vmatpush2.bf16.msra.mxu0 %v921
        %1053 = vmatprep.subr.bf16.mxu0 %v920
        %1054 = vmatpush2.bf16.msra.mxu0 %v919
        %1055 = vmatprep.subr.bf16.mxu0 %v918
        %1056 = vmatpush2.bf16.msra.mxu0 %v917
        %1057 = vmatprep.subr.bf16.mxu0 %v916
        %1058 = vmatpush2.bf16.msra.mxu0 %v915
        %1059 = vmatprep.mubr.bf16.mxu0 %v644
        %1060 = vmatmul.mubr.bf16.gmra.mxu0 %v643
        %v1061 = vpop.f32.mrf.mxu0
        %v1062 = vadd.f32 %v470, %v1061
        %v1063 = vpop.f32.mrf.mxu0
        %v1064 = vadd.f32 %v470, %v1063
        %v1065 = vpop.f32.mrf.mxu0
        %v1066 = vadd.f32 %v475, %v1065
        %v1067 = vpop.f32.mrf.mxu0
        %v1068 = vadd.f32 %v475, %v1067
        %1069 = vmatprep.mubr.bf16.mxu0 %v648
        %1070 = vmatmul.mubr.bf16.gmra.mxu0 %v647
        %v1071 = vpop.f32.mrf.mxu0
        %v1072 = vadd.f32 %v480, %v1071
        %v1073 = vpop.f32.mrf.mxu0
        %v1074 = vadd.f32 %v480, %v1073
        %v1075 = vpop.f32.mrf.mxu0
        %v1076 = vadd.f32 %v485, %v1075
        %v1077 = vpop.f32.mrf.mxu0
        %v1078 = vadd.f32 %v485, %v1077
        %1079 = vmatprep.mubr.bf16.mxu0 %v652
        %1080 = vmatmul.mubr.bf16.gmra.mxu0 %v651
        %v1081 = vpop.f32.mrf.mxu0
        %v1082 = vadd.f32 %v490, %v1081
        %v1083 = vpop.f32.mrf.mxu0
        %v1084 = vadd.f32 %v490, %v1083
        %v1085 = vpop.f32.mrf.mxu0
        %v1086 = vadd.f32 %v495, %v1085
        %v1087 = vpop.f32.mrf.mxu0
        %v1088 = vadd.f32 %v495, %v1087
        %1089 = vmatprep.mubr.bf16.mxu0 %v656
        %1090 = vmatmul.mubr.bf16.gmra.mxu0 %v655
        %v1091 = vpop.f32.mrf.mxu0
        %v1092 = vadd.f32 %v500, %v1091
        %v1093 = vpop.f32.mrf.mxu0
        %v1094 = vadd.f32 %v500, %v1093
        %v1095 = vpop.f32.mrf.mxu0
        %v1096 = vadd.f32 %v505, %v1095
        %v1097 = vpop.f32.mrf.mxu0
        %v1098 = vadd.f32 %v505, %v1097
        %1099 = vmatprep.mubr.bf16.mxu0 %v660
        %1100 = vmatmul.mubr.bf16.gmra.mxu0 %v659
        %v1101 = vpop.f32.mrf.mxu0
        %v1102 = vadd.f32 %v510, %v1101
        %v1103 = vpop.f32.mrf.mxu0
        %v1104 = vadd.f32 %v510, %v1103
        %v1105 = vpop.f32.mrf.mxu0
        %v1106 = vadd.f32 %v515, %v1105
        %v1107 = vpop.f32.mrf.mxu0
        %v1108 = vadd.f32 %v515, %v1107
        %1109 = vmatprep.mubr.bf16.mxu0 %v664
        %1110 = vmatmul.mubr.bf16.gmra.mxu0 %v663
        %v1111 = vpop.f32.mrf.mxu0
        %v1112 = vadd.f32 %v520, %v1111
        %v1113 = vpop.f32.mrf.mxu0
        %v1114 = vadd.f32 %v520, %v1113
        %v1115 = vpop.f32.mrf.mxu0
        %v1116 = vadd.f32 %v525, %v1115
        %v1117 = vpop.f32.mrf.mxu0
        %v1118 = vadd.f32 %v525, %v1117
        %1119 = vmatprep.mubr.bf16.mxu0 %v668
        %1120 = vmatmul.mubr.bf16.gmra.mxu0 %v667
        %v1121 = vpop.f32.mrf.mxu0
        %v1122 = vadd.f32 %v530, %v1121
        %v1123 = vpop.f32.mrf.mxu0
        %v1124 = vadd.f32 %v530, %v1123
        %v1125 = vpop.f32.mrf.mxu0
        %v1126 = vadd.f32 %v535, %v1125
        %v1127 = vpop.f32.mrf.mxu0
        %v1128 = vadd.f32 %v535, %v1127
        %1129 = vmatprep.mubr.bf16.mxu0 %v672
        %1130 = vmatmul.mubr.bf16.gmra.mxu0 %v671
        %v1131 = vpop.f32.mrf.mxu0
        %v1132 = vadd.f32 %v540, %v1131
        %v1133 = vpop.f32.mrf.mxu0
        %v1134 = vadd.f32 %v540, %v1133
        %v1135 = vpop.f32.mrf.mxu0
        %v1136 = vadd.f32 %v545, %v1135
        %v1137 = vpop.f32.mrf.mxu0
        %v1138 = vadd.f32 %v545, %v1137
        %1139 = vdwg.mxu0
        %1140 = vmatprep.subr.bf16.mxu0 %v946
        %1141 = vmatpush1.bf16.msra.mxu0 %v945
        %1142 = vmatprep.subr.bf16.mxu0 %v944
        %1143 = vmatpush1.bf16.msra.mxu0 %v943
        %1144 = vmatprep.subr.bf16.mxu0 %v942
        %1145 = vmatpush1.bf16.msra.mxu0 %v941
        %1146 = vmatprep.subr.bf16.mxu0 %v940
        %1147 = vmatpush1.bf16.msra.mxu0 %v939
        %1148 = vmatprep.subr.bf16.mxu0 %v938
        %1149 = vmatpush1.bf16.msra.mxu0 %v937
        %1150 = vmatprep.subr.bf16.mxu0 %v936
        %1151 = vmatpush1.bf16.msra.mxu0 %v935
        %1152 = vmatprep.subr.bf16.mxu0 %v934
        %1153 = vmatpush1.bf16.msra.mxu0 %v933
        %1154 = vmatprep.subr.bf16.mxu0 %v932
        %1155 = vmatpush1.bf16.msra.mxu0 %v931
        %1156 = vmatprep.subr.bf16.mxu0 %v962
        %1157 = vmatpush2.bf16.msra.mxu0 %v961
        %1158 = vmatprep.subr.bf16.mxu0 %v960
        %1159 = vmatpush2.bf16.msra.mxu0 %v959
        %1160 = vmatprep.subr.bf16.mxu0 %v958
        %1161 = vmatpush2.bf16.msra.mxu0 %v957
        %1162 = vmatprep.subr.bf16.mxu0 %v956
        %1163 = vmatpush2.bf16.msra.mxu0 %v955
        %1164 = vmatprep.subr.bf16.mxu0 %v954
        %1165 = vmatpush2.bf16.msra.mxu0 %v953
        %1166 = vmatprep.subr.bf16.mxu0 %v952
        %1167 = vmatpush2.bf16.msra.mxu0 %v951
        %1168 = vmatprep.subr.bf16.mxu0 %v950
        %1169 = vmatpush2.bf16.msra.mxu0 %v949
        %1170 = vmatprep.subr.bf16.mxu0 %v948
        %1171 = vmatpush2.bf16.msra.mxu0 %v947
        %1172 = vmatprep.mubr.bf16.mxu0 %v646
        %1173 = vmatmul.mubr.bf16.gmra.mxu0 %v645
        %v1174 = vpop.f32.mrf.mxu0
        %v1175 = vadd.f32 %v1062, %v1174
        %v1176 = vpop.f32.mrf.mxu0
        %v1177 = vadd.f32 %v1064, %v1176
        %v1178 = vpop.f32.mrf.mxu0
        %v1179 = vadd.f32 %v1066, %v1178
        %v1180 = vpop.f32.mrf.mxu0
        %v1181 = vadd.f32 %v1068, %v1180
        %1182 = vmatprep.mubr.bf16.mxu0 %v650
        %1183 = vmatmul.mubr.bf16.gmra.mxu0 %v649
        %v1184 = vpop.f32.mrf.mxu0
        %v1185 = vadd.f32 %v1072, %v1184
        %v1186 = vpop.f32.mrf.mxu0
        %v1187 = vadd.f32 %v1074, %v1186
        %v1188 = vpop.f32.mrf.mxu0
        %v1189 = vadd.f32 %v1076, %v1188
        %v1190 = vpop.f32.mrf.mxu0
        %v1191 = vadd.f32 %v1078, %v1190
        %1192 = vmatprep.mubr.bf16.mxu0 %v654
        %1193 = vmatmul.mubr.bf16.gmra.mxu0 %v653
        %v1194 = vpop.f32.mrf.mxu0
        %v1195 = vadd.f32 %v1082, %v1194
        %v1196 = vpop.f32.mrf.mxu0
        %v1197 = vadd.f32 %v1084, %v1196
        %v1198 = vpop.f32.mrf.mxu0
        %v1199 = vadd.f32 %v1086, %v1198
        %v1200 = vpop.f32.mrf.mxu0
        %v1201 = vadd.f32 %v1088, %v1200
        %1202 = vmatprep.mubr.bf16.mxu0 %v658
        %1203 = vmatmul.mubr.bf16.gmra.mxu0 %v657
        %v1204 = vpop.f32.mrf.mxu0
        %v1205 = vadd.f32 %v1092, %v1204
        %v1206 = vpop.f32.mrf.mxu0
        %v1207 = vadd.f32 %v1094, %v1206
        %v1208 = vpop.f32.mrf.mxu0
        %v1209 = vadd.f32 %v1096, %v1208
        %v1210 = vpop.f32.mrf.mxu0
        %v1211 = vadd.f32 %v1098, %v1210
        %1212 = vmatprep.mubr.bf16.mxu0 %v662
        %1213 = vmatmul.mubr.bf16.gmra.mxu0 %v661
        %v1214 = vpop.f32.mrf.mxu0
        %v1215 = vadd.f32 %v1102, %v1214
        %v1216 = vpop.f32.mrf.mxu0
        %v1217 = vadd.f32 %v1104, %v1216
        %v1218 = vpop.f32.mrf.mxu0
        %v1219 = vadd.f32 %v1106, %v1218
        %v1220 = vpop.f32.mrf.mxu0
        %v1221 = vadd.f32 %v1108, %v1220
        %1222 = vmatprep.mubr.bf16.mxu0 %v666
        %1223 = vmatmul.mubr.bf16.gmra.mxu0 %v665
        %v1224 = vpop.f32.mrf.mxu0
        %v1225 = vadd.f32 %v1112, %v1224
        %v1226 = vpop.f32.mrf.mxu0
        %v1227 = vadd.f32 %v1114, %v1226
        %v1228 = vpop.f32.mrf.mxu0
        %v1229 = vadd.f32 %v1116, %v1228
        %v1230 = vpop.f32.mrf.mxu0
        %v1231 = vadd.f32 %v1118, %v1230
        %1232 = vmatprep.mubr.bf16.mxu0 %v670
        %1233 = vmatmul.mubr.bf16.gmra.mxu0 %v669
        %v1234 = vpop.f32.mrf.mxu0
        %v1235 = vadd.f32 %v1122, %v1234
        %v1236 = vpop.f32.mrf.mxu0
        %v1237 = vadd.f32 %v1124, %v1236
        %v1238 = vpop.f32.mrf.mxu0
        %v1239 = vadd.f32 %v1126, %v1238
        %v1240 = vpop.f32.mrf.mxu0
        %v1241 = vadd.f32 %v1128, %v1240
        %1242 = vmatprep.mubr.bf16.mxu0 %v674
        %1243 = vmatmul.mubr.bf16.gmra.mxu0 %v673
        %v1244 = vpop.f32.mrf.mxu0
        %v1245 = vadd.f32 %v1132, %v1244
        %v1246 = vpop.f32.mrf.mxu0
        %v1247 = vadd.f32 %v1134, %v1246
        %v1248 = vpop.f32.mrf.mxu0
        %v1249 = vadd.f32 %v1136, %v1248
        %v1250 = vpop.f32.mrf.mxu0
        %v1251 = vadd.f32 %v1138, %v1250
        %1252 = vdwg.mxu0
        %v1253 = vpack.c.bf16 %v1179, %v1175
        %v1254 = vpack.c.bf16 %v1181, %v1177
        %v1255 = vpack.c.bf16 %v1189, %v1185
        %v1256 = vpack.c.bf16 %v1191, %v1187
        %v1257 = vpack.c.bf16 %v1199, %v1195
        %v1258 = vpack.c.bf16 %v1201, %v1197
        %v1259 = vpack.c.bf16 %v1209, %v1205
        %v1260 = vpack.c.bf16 %v1211, %v1207
        %v1261 = vpack.c.bf16 %v1219, %v1215
        %v1262 = vpack.c.bf16 %v1221, %v1217
        %v1263 = vpack.c.bf16 %v1229, %v1225
        %v1264 = vpack.c.bf16 %v1231, %v1227
        %v1265 = vpack.c.bf16 %v1239, %v1235
        %v1266 = vpack.c.bf16 %v1241, %v1237
        %v1267 = vpack.c.bf16 %v1249, %v1245
        %v1268 = vpack.c.bf16 %v1251, %v1247
        %v1285 = vunpack.c.l.b16 %v1253
        %v1286 = vunpack.c.l.b16 %v1254
        %v1287 = vunpack.c.h.b16 %v1253
        %v1288 = vunpack.c.h.b16 %v1254
        %v1289 = vunpack.c.l.b16 %v1255
        %v1290 = vunpack.c.l.b16 %v1256
        %v1291 = vunpack.c.h.b16 %v1255
        %v1292 = vunpack.c.h.b16 %v1256
        %v1293 = vunpack.c.l.b16 %v1257
        %v1294 = vunpack.c.l.b16 %v1258
        %v1295 = vunpack.c.h.b16 %v1257
        %v1296 = vunpack.c.h.b16 %v1258
        %v1297 = vunpack.c.l.b16 %v1259
        %v1298 = vunpack.c.l.b16 %v1260
        %v1299 = vunpack.c.h.b16 %v1259
        %v1300 = vunpack.c.h.b16 %v1260
        %v1301 = vunpack.c.l.b16 %v1261
        %v1302 = vunpack.c.l.b16 %v1262
        %v1303 = vunpack.c.h.b16 %v1261
        %v1304 = vunpack.c.h.b16 %v1262
        %v1305 = vunpack.c.l.b16 %v1263
        %v1306 = vunpack.c.l.b16 %v1264
        %v1307 = vunpack.c.h.b16 %v1263
        %v1308 = vunpack.c.h.b16 %v1264
        %v1309 = vunpack.c.l.b16 %v1265
        %v1310 = vunpack.c.l.b16 %v1266
        %v1311 = vunpack.c.h.b16 %v1265
        %v1312 = vunpack.c.h.b16 %v1266
        %v1313 = vunpack.c.l.b16 %v1267
        %v1314 = vunpack.c.l.b16 %v1268
        %v1315 = vunpack.c.h.b16 %v1267
        %v1316 = vunpack.c.h.b16 %v1268
        %v1317 = vpack.c.b16 %v1286, %v1285
        %v1318 = vpack.c.b16 %v1288, %v1287
        %v1319 = vpack.c.b16 %v1290, %v1289
        %v1320 = vpack.c.b16 %v1292, %v1291
        %v1321 = vpack.c.b16 %v1294, %v1293
        %v1322 = vpack.c.b16 %v1296, %v1295
        %v1323 = vpack.c.b16 %v1298, %v1297
        %v1324 = vpack.c.b16 %v1300, %v1299
        %v1325 = vpack.c.b16 %v1302, %v1301
        %v1326 = vpack.c.b16 %v1304, %v1303
        %v1327 = vpack.c.b16 %v1306, %v1305
        %v1328 = vpack.c.b16 %v1308, %v1307
        %v1329 = vpack.c.b16 %v1310, %v1309
        %v1330 = vpack.c.b16 %v1312, %v1311
        %v1331 = vpack.c.b16 %v1314, %v1313
        %v1332 = vpack.c.b16 %v1316, %v1315
        %s1349 = smul.u32 %s24, 32
        %s1350 = smul.addr %s1349, 4
        %s1351 = scalar_lea.vmem [#allocation2], %s1350
        %1352 = vst [vmem:[%s1351] sm:$0xff] %v1317
        %1353 = vst [vmem:[%s1351 + $0x8] sm:$0xff] %v1318
        %1354 = vst [vmem:[%s1351 + $0x10] sm:$0xff] %v1319
        %1355 = vst [vmem:[%s1351 + $0x18] sm:$0xff] %v1320
        %1356 = vst [vmem:[%s1351 + $0x20] sm:$0xff] %v1321
        %1357 = vst [vmem:[%s1351 + $0x28] sm:$0xff] %v1322
        %1358 = vst [vmem:[%s1351 + $0x30] sm:$0xff] %v1323
        %1359 = vst [vmem:[%s1351 + $0x38] sm:$0xff] %v1324
        %1360 = vst [vmem:[%s1351 + $0x40] sm:$0xff] %v1325
        %1361 = vst [vmem:[%s1351 + $0x48] sm:$0xff] %v1326
        %1362 = vst [vmem:[%s1351 + $0x50] sm:$0xff] %v1327
        %1363 = vst [vmem:[%s1351 + $0x58] sm:$0xff] %v1328
        %1364 = vst [vmem:[%s1351 + $0x60] sm:$0xff] %v1329
        %1365 = vst [vmem:[%s1351 + $0x68] sm:$0xff] %v1330
        %1366 = vst [vmem:[%s1351 + $0x70] sm:$0xff] %v1331
        %1367 = vst [vmem:[%s1351 + $0x78] sm:$0xff] %v1332
        %v1368 = vld [vmem:[#allocation3] sm:$0xff]
        %v1369 = vld [vmem:[#allocation3 + $0x8] sm:$0xff]
        %v1370 = vld [vmem:[#allocation3 + $0x10] sm:$0xff]
        %v1371 = vld [vmem:[#allocation3 + $0x18] sm:$0xff]
        %v1372 = vld [vmem:[#allocation3 + $0x20] sm:$0xff]
        %v1373 = vld [vmem:[#allocation3 + $0x28] sm:$0xff]
        %v1374 = vld [vmem:[#allocation3 + $0x30] sm:$0xff]
        %v1375 = vld [vmem:[#allocation3 + $0x38] sm:$0xff]
        %v1376 = vld [vmem:[#allocation3 + $0x40] sm:$0xff]
        %v1377 = vld [vmem:[#allocation3 + $0x48] sm:$0xff]
        %v1378 = vld [vmem:[#allocation3 + $0x50] sm:$0xff]
        %v1379 = vld [vmem:[#allocation3 + $0x58] sm:$0xff]
        %v1380 = vld [vmem:[#allocation3 + $0x60] sm:$0xff]
        %v1381 = vld [vmem:[#allocation3 + $0x68] sm:$0xff]
        %v1382 = vld [vmem:[#allocation3 + $0x70] sm:$0xff]
        %v1383 = vld [vmem:[#allocation3 + $0x78] sm:$0xff]
        %v1384 = vld [vmem:[#allocation3 + $0x80] sm:$0xff]
        %v1385 = vld [vmem:[#allocation3 + $0x88] sm:$0xff]
        %v1386 = vld [vmem:[#allocation3 + $0x90] sm:$0xff]
        %v1387 = vld [vmem:[#allocation3 + $0x98] sm:$0xff]
        %v1388 = vld [vmem:[#allocation3 + $0xa0] sm:$0xff]
        %v1389 = vld [vmem:[#allocation3 + $0xa8] sm:$0xff]
        %v1390 = vld [vmem:[#allocation3 + $0xb0] sm:$0xff]
        %v1391 = vld [vmem:[#allocation3 + $0xb8] sm:$0xff]
        %v1392 = vld [vmem:[#allocation3 + $0xc0] sm:$0xff]
        %v1393 = vld [vmem:[#allocation3 + $0xc8] sm:$0xff]
        %v1394 = vld [vmem:[#allocation3 + $0xd0] sm:$0xff]
        %v1395 = vld [vmem:[#allocation3 + $0xd8] sm:$0xff]
        %v1396 = vld [vmem:[#allocation3 + $0xe0] sm:$0xff]
        %v1397 = vld [vmem:[#allocation3 + $0xe8] sm:$0xff]
        %v1398 = vld [vmem:[#allocation3 + $0xf0] sm:$0xff]
        %v1399 = vld [vmem:[#allocation3 + $0xf8] sm:$0xff]
        %v1400 = vadd.f32 %v1368, %v1175
        %v1401 = vadd.f32 %v1369, %v1177
        %v1402 = vadd.f32 %v1370, %v1179
        %v1403 = vadd.f32 %v1371, %v1181
        %v1404 = vadd.f32 %v1372, %v1185
        %v1405 = vadd.f32 %v1373, %v1187
        %v1406 = vadd.f32 %v1374, %v1189
        %v1407 = vadd.f32 %v1375, %v1191
        %v1408 = vadd.f32 %v1376, %v1195
        %v1409 = vadd.f32 %v1377, %v1197
        %v1410 = vadd.f32 %v1378, %v1199
        %v1411 = vadd.f32 %v1379, %v1201
        %v1412 = vadd.f32 %v1380, %v1205
        %v1413 = vadd.f32 %v1381, %v1207
        %v1414 = vadd.f32 %v1382, %v1209
        %v1415 = vadd.f32 %v1383, %v1211
        %v1416 = vadd.f32 %v1384, %v1215
        %v1417 = vadd.f32 %v1385, %v1217
        %v1418 = vadd.f32 %v1386, %v1219
        %v1419 = vadd.f32 %v1387, %v1221
        %v1420 = vadd.f32 %v1388, %v1225
        %v1421 = vadd.f32 %v1389, %v1227
        %v1422 = vadd.f32 %v1390, %v1229
        %v1423 = vadd.f32 %v1391, %v1231
        %v1424 = vadd.f32 %v1392, %v1235
        %v1425 = vadd.f32 %v1393, %v1237
        %v1426 = vadd.f32 %v1394, %v1239
        %v1427 = vadd.f32 %v1395, %v1241
        %v1428 = vadd.f32 %v1396, %v1245
        %v1429 = vadd.f32 %v1397, %v1247
        %v1430 = vadd.f32 %v1398, %v1249
        %v1431 = vadd.f32 %v1399, %v1251
        %1432 = vst [vmem:[#allocation3] sm:$0xff] %v1400
        %1433 = vst [vmem:[#allocation3 + $0x8] sm:$0xff] %v1401
        %1434 = vst [vmem:[#allocation3 + $0x10] sm:$0xff] %v1402
        %1435 = vst [vmem:[#allocation3 + $0x18] sm:$0xff] %v1403
        %1436 = vst [vmem:[#allocation3 + $0x20] sm:$0xff] %v1404
        %1437 = vst [vmem:[#allocation3 + $0x28] sm:$0xff] %v1405
        %1438 = vst [vmem:[#allocation3 + $0x30] sm:$0xff] %v1406
        %1439 = vst [vmem:[#allocation3 + $0x38] sm:$0xff] %v1407
        %1440 = vst [vmem:[#allocation3 + $0x40] sm:$0xff] %v1408
        %1441 = vst [vmem:[#allocation3 + $0x48] sm:$0xff] %v1409
        %1442 = vst [vmem:[#allocation3 + $0x50] sm:$0xff] %v1410
        %1443 = vst [vmem:[#allocation3 + $0x58] sm:$0xff] %v1411
        %1444 = vst [vmem:[#allocation3 + $0x60] sm:$0xff] %v1412
        %1445 = vst [vmem:[#allocation3 + $0x68] sm:$0xff] %v1413
        %1446 = vst [vmem:[#allocation3 + $0x70] sm:$0xff] %v1414
        %1447 = vst [vmem:[#allocation3 + $0x78] sm:$0xff] %v1415
        %1448 = vst [vmem:[#allocation3 + $0x80] sm:$0xff] %v1416
        %1449 = vst [vmem:[#allocation3 + $0x88] sm:$0xff] %v1417
        %1450 = vst [vmem:[#allocation3 + $0x90] sm:$0xff] %v1418
        %1451 = vst [vmem:[#allocation3 + $0x98] sm:$0xff] %v1419
        %1452 = vst [vmem:[#allocation3 + $0xa0] sm:$0xff] %v1420
        %1453 = vst [vmem:[#allocation3 + $0xa8] sm:$0xff] %v1421
        %1454 = vst [vmem:[#allocation3 + $0xb0] sm:$0xff] %v1422
        %1455 = vst [vmem:[#allocation3 + $0xb8] sm:$0xff] %v1423
        %1456 = vst [vmem:[#allocation3 + $0xc0] sm:$0xff] %v1424
        %1457 = vst [vmem:[#allocation3 + $0xc8] sm:$0xff] %v1425
        %1458 = vst [vmem:[#allocation3 + $0xd0] sm:$0xff] %v1426
        %1459 = vst [vmem:[#allocation3 + $0xd8] sm:$0xff] %v1427
        %1460 = vst [vmem:[#allocation3 + $0xe0] sm:$0xff] %v1428
        %1461 = vst [vmem:[#allocation3 + $0xe8] sm:$0xff] %v1429
        %1462 = vst [vmem:[#allocation3 + $0xf0] sm:$0xff] %v1430
        %1463 = vst [vmem:[#allocation3 + $0xf8] sm:$0xff] %v1431
        %v1464 = vadd.f32 %v1175, %v1177
        %1465 = vadd.xlane.f32.xlu0 %v1464
        %v1466 = vpop.xlane.xlu0 %1465
        %v1467 = vadd.f32 %v1179, %v1181
        %1468 = vadd.xlane.f32.xlu0 %v1467
        %v1469 = vpop.xlane.xlu0 %1468
        %v1470 = vadd.f32 %v1185, %v1187
        %1471 = vadd.xlane.f32.xlu0 %v1470
        %v1472 = vpop.xlane.xlu0 %1471
        %v1473 = vadd.f32 %v1189, %v1191
        %1474 = vadd.xlane.f32.xlu0 %v1473
        %v1475 = vpop.xlane.xlu0 %1474
        %v1476 = vadd.f32 %v1195, %v1197
        %1477 = vadd.xlane.f32.xlu0 %v1476
        %v1478 = vpop.xlane.xlu0 %1477
        %v1479 = vadd.f32 %v1199, %v1201
        %1480 = vadd.xlane.f32.xlu0 %v1479
        %v1481 = vpop.xlane.xlu0 %1480
        %v1482 = vadd.f32 %v1205, %v1207
        %1483 = vadd.xlane.f32.xlu0 %v1482
        %v1484 = vpop.xlane.xlu0 %1483
        %v1485 = vadd.f32 %v1209, %v1211
        %1486 = vadd.xlane.f32.xlu0 %v1485
        %v1487 = vpop.xlane.xlu0 %1486
        %v1488 = vadd.f32 %v1215, %v1217
        %1489 = vadd.xlane.f32.xlu0 %v1488
        %v1490 = vpop.xlane.xlu0 %1489
        %v1491 = vadd.f32 %v1219, %v1221
        %1492 = vadd.xlane.f32.xlu0 %v1491
        %v1493 = vpop.xlane.xlu0 %1492
        %v1494 = vadd.f32 %v1225, %v1227
        %1495 = vadd.xlane.f32.xlu0 %v1494
        %v1496 = vpop.xlane.xlu0 %1495
        %v1497 = vadd.f32 %v1229, %v1231
        %1498 = vadd.xlane.f32.xlu0 %v1497
        %v1499 = vpop.xlane.xlu0 %1498
        %v1500 = vadd.f32 %v1235, %v1237
        %1501 = vadd.xlane.f32.xlu0 %v1500
        %v1502 = vpop.xlane.xlu0 %1501
        %v1503 = vadd.f32 %v1239, %v1241
        %1504 = vadd.xlane.f32.xlu0 %v1503
        %v1505 = vpop.xlane.xlu0 %1504
        %v1506 = vadd.f32 %v1245, %v1247
        %1507 = vadd.xlane.f32.xlu0 %v1506
        %v1508 = vpop.xlane.xlu0 %1507
        %v1509 = vadd.f32 %v1249, %v1251
        %1510 = vadd.xlane.f32.xlu0 %v1509
        %v1511 = vpop.xlane.xlu0 %1510
        %v1512 = vmul.f32 %v1466, 0.00390625
        %v1513 = vmul.f32 %v1469, 0.00390625
        %v1514 = vmul.f32 %v1472, 0.00390625
        %v1515 = vmul.f32 %v1475, 0.00390625
        %v1516 = vmul.f32 %v1478, 0.00390625
        %v1517 = vmul.f32 %v1481, 0.00390625
        %v1518 = vmul.f32 %v1484, 0.00390625
        %v1519 = vmul.f32 %v1487, 0.00390625
        %v1520 = vmul.f32 %v1490, 0.00390625
        %v1521 = vmul.f32 %v1493, 0.00390625
        %v1522 = vmul.f32 %v1496, 0.00390625
        %v1523 = vmul.f32 %v1499, 0.00390625
        %v1524 = vmul.f32 %v1502, 0.00390625
        %v1525 = vmul.f32 %v1505, 0.00390625
        %v1526 = vmul.f32 %v1508, 0.00390625
        %v1527 = vmul.f32 %v1511, 0.00390625
        %v1528 = vlaneseq
        %v1529 = vand.u32 %v1528, 127
        %v1530 = vstv %s24
        %vm1531 = vcmp.eq.s32.totalorder %v1529, %v1530
        %v1532 = vsel %vm1531, 1, 0
        %v1533 = vcvt.s32.f32 %v1532
        %v1534 = vld [vmem:[#allocation4] sm:$0xff]
        %v1535 = vld [vmem:[#allocation4 + $0x8] sm:$0xff]
        %v1536 = vld [vmem:[#allocation4 + $0x10] sm:$0xff]
        %v1537 = vld [vmem:[#allocation4 + $0x18] sm:$0xff]
        %v1538 = vld [vmem:[#allocation4 + $0x20] sm:$0xff]
        %v1539 = vld [vmem:[#allocation4 + $0x28] sm:$0xff]
        %v1540 = vld [vmem:[#allocation4 + $0x30] sm:$0xff]
        %v1541 = vld [vmem:[#allocation4 + $0x38] sm:$0xff]
        %v1542 = vld [vmem:[#allocation4 + $0x40] sm:$0xff]
        %v1543 = vld [vmem:[#allocation4 + $0x48] sm:$0xff]
        %v1544 = vld [vmem:[#allocation4 + $0x50] sm:$0xff]
        %v1545 = vld [vmem:[#allocation4 + $0x58] sm:$0xff]
        %v1546 = vld [vmem:[#allocation4 + $0x60] sm:$0xff]
        %v1547 = vld [vmem:[#allocation4 + $0x68] sm:$0xff]
        %v1548 = vld [vmem:[#allocation4 + $0x70] sm:$0xff]
        %v1549 = vld [vmem:[#allocation4 + $0x78] sm:$0xff]
        %v1550 = vmul.f32 %v1512, %v1533
        %v1551 = vmul.f32 %v1513, %v1533
        %v1552 = vmul.f32 %v1514, %v1533
        %v1553 = vmul.f32 %v1515, %v1533
        %v1554 = vmul.f32 %v1516, %v1533
        %v1555 = vmul.f32 %v1517, %v1533
        %v1556 = vmul.f32 %v1518, %v1533
        %v1557 = vmul.f32 %v1519, %v1533
        %v1558 = vmul.f32 %v1520, %v1533
        %v1559 = vmul.f32 %v1521, %v1533
        %v1560 = vmul.f32 %v1522, %v1533
        %v1561 = vmul.f32 %v1523, %v1533
        %v1562 = vmul.f32 %v1524, %v1533
        %v1563 = vmul.f32 %v1525, %v1533
        %v1564 = vmul.f32 %v1526, %v1533
        %v1565 = vmul.f32 %v1527, %v1533
        %v1566 = vadd.f32 %v1534, %v1550
        %v1567 = vadd.f32 %v1535, %v1551
        %v1568 = vadd.f32 %v1536, %v1552
        %v1569 = vadd.f32 %v1537, %v1553
        %v1570 = vadd.f32 %v1538, %v1554
        %v1571 = vadd.f32 %v1539, %v1555
        %v1572 = vadd.f32 %v1540, %v1556
        %v1573 = vadd.f32 %v1541, %v1557
        %v1574 = vadd.f32 %v1542, %v1558
        %v1575 = vadd.f32 %v1543, %v1559
        %v1576 = vadd.f32 %v1544, %v1560
        %v1577 = vadd.f32 %v1545, %v1561
        %v1578 = vadd.f32 %v1546, %v1562
        %v1579 = vadd.f32 %v1547, %v1563
        %v1580 = vadd.f32 %v1548, %v1564
        %v1581 = vadd.f32 %v1549, %v1565
        %vm1582 = vcmask 64512
        %1583 = vst.msk [vmem:[#allocation4] sm:$0xff] %vm1582, %v1566
        %1584 = vst.msk [vmem:[#allocation4 + $0x8] sm:$0xff] %vm1582, %v1567
        %1585 = vst.msk [vmem:[#allocation4 + $0x10] sm:$0xff] %vm1582, %v1568
        %1586 = vst.msk [vmem:[#allocation4 + $0x18] sm:$0xff] %vm1582, %v1569
        %1587 = vst.msk [vmem:[#allocation4 + $0x20] sm:$0xff] %vm1582, %v1570
        %1588 = vst.msk [vmem:[#allocation4 + $0x28] sm:$0xff] %vm1582, %v1571
        %1589 = vst.msk [vmem:[#allocation4 + $0x30] sm:$0xff] %vm1582, %v1572
        %1590 = vst.msk [vmem:[#allocation4 + $0x38] sm:$0xff] %vm1582, %v1573
        %1591 = vst.msk [vmem:[#allocation4 + $0x40] sm:$0xff] %vm1582, %v1574
        %1592 = vst.msk [vmem:[#allocation4 + $0x48] sm:$0xff] %vm1582, %v1575
        %1593 = vst.msk [vmem:[#allocation4 + $0x50] sm:$0xff] %vm1582, %v1576
        %1594 = vst.msk [vmem:[#allocation4 + $0x58] sm:$0xff] %vm1582, %v1577
        %1595 = vst.msk [vmem:[#allocation4 + $0x60] sm:$0xff] %vm1582, %v1578
        %1596 = vst.msk [vmem:[#allocation4 + $0x68] sm:$0xff] %vm1582, %v1579
        %1597 = vst.msk [vmem:[#allocation4 + $0x70] sm:$0xff] %vm1582, %v1580
        %1598 = vst.msk [vmem:[#allocation4 + $0x78] sm:$0xff] %vm1582, %v1581
        %p1599 = scmp.eq.s32.totalorder %s24, 7
        // Predicated region
        $region65: #{tpu_custom_call.1} parent=43 // pred_check
          %p1600 = pneg %p1599
        $region66: #{tpu_custom_call.1} parent=43 // pred_check_branch
          %1602 = sbr.rel (%p1600) target = $region68
        $region67: #{tpu_custom_call.1} parent=43 // pred_region
          %s1603 = sld [smem:[#allocation6]]
          %v1604 = vld [vmem:[#allocation13] sm:$0xff]
          %v1605 = vld [vmem:[#allocation13 + $0x8] sm:$0xff]
          %v1606 = vld [vmem:[#allocation13 + $0x10] sm:$0xff]
          %v1607 = vld [vmem:[#allocation13 + $0x18] sm:$0xff]
          %v1608 = vld [vmem:[#allocation13 + $0x20] sm:$0xff]
          %v1609 = vld [vmem:[#allocation13 + $0x28] sm:$0xff]
          %v1610 = vld [vmem:[#allocation13 + $0x30] sm:$0xff]
          %v1611 = vld [vmem:[#allocation13 + $0x38] sm:$0xff]
          %v1612 = vld [vmem:[#allocation13 + $0x40] sm:$0xff]
          %v1613 = vld [vmem:[#allocation13 + $0x48] sm:$0xff]
          %v1614 = vld [vmem:[#allocation13 + $0x50] sm:$0xff]
          %v1615 = vld [vmem:[#allocation13 + $0x58] sm:$0xff]
          %v1616 = vld [vmem:[#allocation13 + $0x60] sm:$0xff]
          %v1617 = vld [vmem:[#allocation13 + $0x68] sm:$0xff]
          %v1618 = vld [vmem:[#allocation13 + $0x70] sm:$0xff]
          %v1619 = vld [vmem:[#allocation13 + $0x78] sm:$0xff]
          %v1620 = vld [vmem:[#allocation4] sm:$0xff]
          %v1621 = vld [vmem:[#allocation4 + $0x8] sm:$0xff]
          %v1622 = vld [vmem:[#allocation4 + $0x10] sm:$0xff]
          %v1623 = vld [vmem:[#allocation4 + $0x18] sm:$0xff]
          %v1624 = vld [vmem:[#allocation4 + $0x20] sm:$0xff]
          %v1625 = vld [vmem:[#allocation4 + $0x28] sm:$0xff]
          %v1626 = vld [vmem:[#allocation4 + $0x30] sm:$0xff]
          %v1627 = vld [vmem:[#allocation4 + $0x38] sm:$0xff]
          %v1628 = vld [vmem:[#allocation4 + $0x40] sm:$0xff]
          %v1629 = vld [vmem:[#allocation4 + $0x48] sm:$0xff]
          %v1630 = vld [vmem:[#allocation4 + $0x50] sm:$0xff]
          %v1631 = vld [vmem:[#allocation4 + $0x58] sm:$0xff]
          %v1632 = vld [vmem:[#allocation4 + $0x60] sm:$0xff]
          %v1633 = vld [vmem:[#allocation4 + $0x68] sm:$0xff]
          %v1634 = vld [vmem:[#allocation4 + $0x70] sm:$0xff]
          %v1635 = vld [vmem:[#allocation4 + $0x78] sm:$0xff]
          %1636 = vmatprep.subr.mxu0 0.0
          %1637 = vmatpush1.msra.mxu0 %v1635
          %1638 = vmatprep.subr.mxu0 0.0
          %1639 = vmatpush1.msra.mxu0 %v1634
          %1640 = vmatprep.subr.mxu0 0.0
          %1641 = vmatpush1.msra.mxu0 %v1633
          %1642 = vmatprep.subr.mxu0 0.0
          %1643 = vmatpush1.msra.mxu0 %v1632
          %1644 = vmatprep.subr.mxu0 0.0
          %1645 = vmatpush1.msra.mxu0 %v1631
          %1646 = vmatprep.subr.mxu0 0.0
          %1647 = vmatpush1.msra.mxu0 %v1630
          %1648 = vmatprep.subr.mxu0 0.0
          %1649 = vmatpush1.msra.mxu0 %v1629
          %1650 = vmatprep.subr.mxu0 0.0
          %1651 = vmatpush1.msra.mxu0 %v1628
          %1652 = vmatprep.subr.mxu0 0.0
          %1653 = vmatpush1.msra.mxu0 %v1627
          %1654 = vmatprep.subr.mxu0 0.0
          %1655 = vmatpush1.msra.mxu0 %v1626
          %1656 = vmatprep.subr.mxu0 0.0
          %1657 = vmatpush1.msra.mxu0 %v1625
          %1658 = vmatprep.subr.mxu0 0.0
          %1659 = vmatpush1.msra.mxu0 %v1624
          %1660 = vmatprep.subr.mxu0 0.0
          %1661 = vmatpush1.msra.mxu0 %v1623
          %1662 = vmatprep.subr.mxu0 0.0
          %1663 = vmatpush1.msra.mxu0 %v1622
          %1664 = vmatprep.subr.mxu0 0.0
          %1665 = vmatpush1.msra.mxu0 %v1621
          %1666 = vmatprep.subr.mxu0 0.0
          %1667 = vmatpush1.msra.mxu0 %v1620
          %1668 = vmatprep.subr.mxu0 0.0
          %1669 = vmatpush2.msra.mxu0 0.0
          %1670 = vmatprep.subr.mxu0 0.0
          %1671 = vmatpush2.msra.mxu0 0.0
          %1672 = vmatprep.subr.mxu0 0.0
          %1673 = vmatpush2.msra.mxu0 0.0
          %1674 = vmatprep.subr.mxu0 0.0
          %1675 = vmatpush2.msra.mxu0 0.0
          %1676 = vmatprep.subr.mxu0 0.0
          %1677 = vmatpush2.msra.mxu0 0.0
          %1678 = vmatprep.subr.mxu0 0.0
          %1679 = vmatpush2.msra.mxu0 0.0
          %1680 = vmatprep.subr.mxu0 0.0
          %1681 = vmatpush2.msra.mxu0 0.0
          %1682 = vmatprep.subr.mxu0 0.0
          %1683 = vmatpush2.msra.mxu0 0.0
          %1684 = vmatprep.subr.mxu0 0.0
          %1685 = vmatpush2.msra.mxu0 0.0
          %1686 = vmatprep.subr.mxu0 0.0
          %1687 = vmatpush2.msra.mxu0 0.0
          %1688 = vmatprep.subr.mxu0 0.0
          %1689 = vmatpush2.msra.mxu0 0.0
          %1690 = vmatprep.subr.mxu0 0.0
          %1691 = vmatpush2.msra.mxu0 0.0
          %1692 = vmatprep.subr.mxu0 0.0
          %1693 = vmatpush2.msra.mxu0 0.0
          %1694 = vmatprep.subr.mxu0 0.0
          %1695 = vmatpush2.msra.mxu0 0.0
          %1696 = vmatprep.subr.mxu0 0.0
          %1697 = vmatpush2.msra.mxu0 0.0
          %1698 = vmatprep.subr.mxu0 0.0
          %1699 = vmatpush2.msra.mxu0 0.0
          %1700 = vmatprep.mubr.f32.mxu0 0.0
          %1701 = vmatmul.mubr.f32.gmra.mxu0 %v1604
          %v1702 = vpop.f32.mrf.mxu0
          %v1703 = vadd.f32 0.0, %v1702
          %v1704 = vpop.f32.mrf.mxu0
          %1705 = vmatprep.mubr.f32.mxu0 0.0
          %1706 = vmatmul.mubr.f32.gmra.mxu0 %v1605
          %v1707 = vpop.f32.mrf.mxu0
          %v1708 = vadd.f32 0.0, %v1707
          %v1709 = vpop.f32.mrf.mxu0
          %1710 = vmatprep.mubr.f32.mxu0 0.0
          %1711 = vmatmul.mubr.f32.gmra.mxu0 %v1606
          %v1712 = vpop.f32.mrf.mxu0
          %v1713 = vadd.f32 0.0, %v1712
          %v1714 = vpop.f32.mrf.mxu0
          %1715 = vmatprep.mubr.f32.mxu0 0.0
          %1716 = vmatmul.mubr.f32.gmra.mxu0 %v1607
          %v1717 = vpop.f32.mrf.mxu0
          %v1718 = vadd.f32 0.0, %v1717
          %v1719 = vpop.f32.mrf.mxu0
          %1720 = vmatprep.mubr.f32.mxu0 0.0
          %1721 = vmatmul.mubr.f32.gmra.mxu0 %v1608
          %v1722 = vpop.f32.mrf.mxu0
          %v1723 = vadd.f32 0.0, %v1722
          %v1724 = vpop.f32.mrf.mxu0
          %1725 = vmatprep.mubr.f32.mxu0 0.0
          %1726 = vmatmul.mubr.f32.gmra.mxu0 %v1609
          %v1727 = vpop.f32.mrf.mxu0
          %v1728 = vadd.f32 0.0, %v1727
          %v1729 = vpop.f32.mrf.mxu0
          %1730 = vmatprep.mubr.f32.mxu0 0.0
          %1731 = vmatmul.mubr.f32.gmra.mxu0 %v1610
          %v1732 = vpop.f32.mrf.mxu0
          %v1733 = vadd.f32 0.0, %v1732
          %v1734 = vpop.f32.mrf.mxu0
          %1735 = vmatprep.mubr.f32.mxu0 0.0
          %1736 = vmatmul.mubr.f32.gmra.mxu0 %v1611
          %v1737 = vpop.f32.mrf.mxu0
          %v1738 = vadd.f32 0.0, %v1737
          %v1739 = vpop.f32.mrf.mxu0
          %1740 = vmatprep.mubr.f32.mxu0 0.0
          %1741 = vmatmul.mubr.f32.gmra.mxu0 %v1612
          %v1742 = vpop.f32.mrf.mxu0
          %v1743 = vadd.f32 0.0, %v1742
          %v1744 = vpop.f32.mrf.mxu0
          %1745 = vmatprep.mubr.f32.mxu0 0.0
          %1746 = vmatmul.mubr.f32.gmra.mxu0 %v1613
          %v1747 = vpop.f32.mrf.mxu0
          %v1748 = vadd.f32 0.0, %v1747
          %v1749 = vpop.f32.mrf.mxu0
          %1750 = vmatprep.mubr.f32.mxu0 0.0
          %1751 = vmatmul.mubr.f32.gmra.mxu0 %v1614
          %v1752 = vpop.f32.mrf.mxu0
          %v1753 = vadd.f32 0.0, %v1752
          %v1754 = vpop.f32.mrf.mxu0
          %1755 = vmatprep.mubr.f32.mxu0 0.0
          %1756 = vmatmul.mubr.f32.gmra.mxu0 %v1615
          %v1757 = vpop.f32.mrf.mxu0
          %v1758 = vadd.f32 0.0, %v1757
          %v1759 = vpop.f32.mrf.mxu0
          %1760 = vmatprep.mubr.f32.mxu0 0.0
          %1761 = vmatmul.mubr.f32.gmra.mxu0 %v1616
          %v1762 = vpop.f32.mrf.mxu0
          %v1763 = vadd.f32 0.0, %v1762
          %v1764 = vpop.f32.mrf.mxu0
          %1765 = vmatprep.mubr.f32.mxu0 0.0
          %1766 = vmatmul.mubr.f32.gmra.mxu0 %v1617
          %v1767 = vpop.f32.mrf.mxu0
          %v1768 = vadd.f32 0.0, %v1767
          %v1769 = vpop.f32.mrf.mxu0
          %1770 = vmatprep.mubr.f32.mxu0 0.0
          %1771 = vmatmul.mubr.f32.gmra.mxu0 %v1618
          %v1772 = vpop.f32.mrf.mxu0
          %v1773 = vadd.f32 0.0, %v1772
          %v1774 = vpop.f32.mrf.mxu0
          %1775 = vmatprep.mubr.f32.mxu0 0.0
          %1776 = vmatmul.mubr.f32.gmra.mxu0 %v1619
          %v1777 = vpop.f32.mrf.mxu0
          %v1778 = vadd.f32 0.0, %v1777
          %v1779 = vpop.f32.mrf.mxu0
          %1780 = vdwg.mxu0
          %v1781 = vsel %vm1582, %v1703, 0.0
          %1782 = vadd.xlane.f32.xlu0 %v1781
          %v1783 = vpop.xlane.xlu0 %1782
          %v1784 = vsel %vm1582, %v1708, 0.0
          %1785 = vadd.xlane.f32.xlu0 %v1784
          %v1786 = vpop.xlane.xlu0 %1785
          %v1787 = vsel %vm1582, %v1713, 0.0
          %1788 = vadd.xlane.f32.xlu0 %v1787
          %v1789 = vpop.xlane.xlu0 %1788
          %v1790 = vsel %vm1582, %v1718, 0.0
          %1791 = vadd.xlane.f32.xlu0 %v1790
          %v1792 = vpop.xlane.xlu0 %1791
          %v1793 = vsel %vm1582, %v1723, 0.0
          %1794 = vadd.xlane.f32.xlu0 %v1793
          %v1795 = vpop.xlane.xlu0 %1794
          %v1796 = vsel %vm1582, %v1728, 0.0
          %1797 = vadd.xlane.f32.xlu0 %v1796
          %v1798 = vpop.xlane.xlu0 %1797
          %v1799 = vsel %vm1582, %v1733, 0.0
          %1800 = vadd.xlane.f32.xlu0 %v1799
          %v1801 = vpop.xlane.xlu0 %1800
          %v1802 = vsel %vm1582, %v1738, 0.0
          %1803 = vadd.xlane.f32.xlu0 %v1802
          %v1804 = vpop.xlane.xlu0 %1803
          %v1805 = vsel %vm1582, %v1743, 0.0
          %1806 = vadd.xlane.f32.xlu0 %v1805
          %v1807 = vpop.xlane.xlu0 %1806
          %v1808 = vsel %vm1582, %v1748, 0.0
          %1809 = vadd.xlane.f32.xlu0 %v1808
          %v1810 = vpop.xlane.xlu0 %1809
          %v1811 = vsel %vm1582, %v1753, 0.0
          %1812 = vadd.xlane.f32.xlu0 %v1811
          %v1813 = vpop.xlane.xlu0 %1812
          %v1814 = vsel %vm1582, %v1758, 0.0
          %1815 = vadd.xlane.f32.xlu0 %v1814
          %v1816 = vpop.xlane.xlu0 %1815
          %v1817 = vsel %vm1582, %v1763, 0.0
          %1818 = vadd.xlane.f32.xlu0 %v1817
          %v1819 = vpop.xlane.xlu0 %1818
          %v1820 = vsel %vm1582, %v1768, 0.0
          %1821 = vadd.xlane.f32.xlu0 %v1820
          %v1822 = vpop.xlane.xlu0 %1821
          %v1823 = vsel %vm1582, %v1773, 0.0
          %1824 = vadd.xlane.f32.xlu0 %v1823
          %v1825 = vpop.xlane.xlu0 %1824
          %v1826 = vsel %vm1582, %v1778, 0.0
          %1827 = vadd.xlane.f32.xlu0 %v1826
          %v1828 = vpop.xlane.xlu0 %1827
          %v1829 = vrcp.pop 8.0
          %v1830 = vmul.f32 %v1783, %v1829
          %v1831 = vmul.f32 %v1786, %v1829
          %v1832 = vmul.f32 %v1789, %v1829
          %v1833 = vmul.f32 %v1792, %v1829
          %v1834 = vmul.f32 %v1795, %v1829
          %v1835 = vmul.f32 %v1798, %v1829
          %v1836 = vmul.f32 %v1801, %v1829
          %v1837 = vmul.f32 %v1804, %v1829
          %v1838 = vmul.f32 %v1807, %v1829
          %v1839 = vmul.f32 %v1810, %v1829
          %v1840 = vmul.f32 %v1813, %v1829
          %v1841 = vmul.f32 %v1816, %v1829
          %v1842 = vmul.f32 %v1819, %v1829
          %v1843 = vmul.f32 %v1822, %v1829
          %v1844 = vmul.f32 %v1825, %v1829
          %v1845 = vmul.f32 %v1828, %v1829
          %v1846 = vstv %s1603
          %v1847 = vmul.f32 %v1846, %v1830
          %v1848 = vmul.f32 %v1846, %v1831
          %v1849 = vmul.f32 %v1846, %v1832
          %v1850 = vmul.f32 %v1846, %v1833
          %v1851 = vmul.f32 %v1846, %v1834
          %v1852 = vmul.f32 %v1846, %v1835
          %v1853 = vmul.f32 %v1846, %v1836
          %v1854 = vmul.f32 %v1846, %v1837
          %v1855 = vmul.f32 %v1846, %v1838
          %v1856 = vmul.f32 %v1846, %v1839
          %v1857 = vmul.f32 %v1846, %v1840
          %v1858 = vmul.f32 %v1846, %v1841
          %v1859 = vmul.f32 %v1846, %v1842
          %v1860 = vmul.f32 %v1846, %v1843
          %v1861 = vmul.f32 %v1846, %v1844
          %v1862 = vmul.f32 %v1846, %v1845
          %v1863 = vadd.f32 %v1703, %v1847
          %v1864 = vadd.f32 %v1708, %v1848
          %v1865 = vadd.f32 %v1713, %v1849
          %v1866 = vadd.f32 %v1718, %v1850
          %v1867 = vadd.f32 %v1723, %v1851
          %v1868 = vadd.f32 %v1728, %v1852
          %v1869 = vadd.f32 %v1733, %v1853
          %v1870 = vadd.f32 %v1738, %v1854
          %v1871 = vadd.f32 %v1743, %v1855
          %v1872 = vadd.f32 %v1748, %v1856
          %v1873 = vadd.f32 %v1753, %v1857
          %v1874 = vadd.f32 %v1758, %v1858
          %v1875 = vadd.f32 %v1763, %v1859
          %v1876 = vadd.f32 %v1768, %v1860
          %v1877 = vadd.f32 %v1773, %v1861
          %v1878 = vadd.f32 %v1778, %v1862
          %v1880 = vsel %vm1582, %v1863, 0
          %v1883 = vsel %vm1582, %v1864, 0
          %v1886 = vsel %vm1582, %v1865, 0
          %v1889 = vsel %vm1582, %v1866, 0
          %v1892 = vsel %vm1582, %v1867, 0
          %v1895 = vsel %vm1582, %v1868, 0
          %v1898 = vsel %vm1582, %v1869, 0
          %v1901 = vsel %vm1582, %v1870, 0
          %v1904 = vsel %vm1582, %v1871, 0
          %v1907 = vsel %vm1582, %v1872, 0
          %v1910 = vsel %vm1582, %v1873, 0
          %v1913 = vsel %vm1582, %v1874, 0
          %v1916 = vsel %vm1582, %v1875, 0
          %v1919 = vsel %vm1582, %v1876, 0
          %v1922 = vsel %vm1582, %v1877, 0
          %v1925 = vsel %vm1582, %v1878, 0
          %1927 = vmatprep.subr.mxu0 0.0
          %1928 = vmatpush1.xpose.msra.mxu0 %v1925
          %1929 = vmatprep.subr.mxu0 0.0
          %1930 = vmatpush1.xpose.msra.mxu0 %v1922
          %1931 = vmatprep.subr.mxu0 0.0
          %1932 = vmatpush1.xpose.msra.mxu0 %v1919
          %1933 = vmatprep.subr.mxu0 0.0
          %1934 = vmatpush1.xpose.msra.mxu0 %v1916
          %1935 = vmatprep.subr.mxu0 0.0
          %1936 = vmatpush1.xpose.msra.mxu0 %v1913
          %1937 = vmatprep.subr.mxu0 0.0
          %1938 = vmatpush1.xpose.msra.mxu0 %v1910
          %1939 = vmatprep.subr.mxu0 0.0
          %1940 = vmatpush1.xpose.msra.mxu0 %v1907
          %1941 = vmatprep.subr.mxu0 0.0
          %1942 = vmatpush1.xpose.msra.mxu0 %v1904
          %1943 = vmatprep.subr.mxu0 0.0
          %1944 = vmatpush1.xpose.msra.mxu0 %v1901
          %1945 = vmatprep.subr.mxu0 0.0
          %1946 = vmatpush1.xpose.msra.mxu0 %v1898
          %1947 = vmatprep.subr.mxu0 0.0
          %1948 = vmatpush1.xpose.msra.mxu0 %v1895
          %1949 = vmatprep.subr.mxu0 0.0
          %1950 = vmatpush1.xpose.msra.mxu0 %v1892
          %1951 = vmatprep.subr.mxu0 0.0
          %1952 = vmatpush1.xpose.msra.mxu0 %v1889
          %1953 = vmatprep.subr.mxu0 0.0
          %1954 = vmatpush1.xpose.msra.mxu0 %v1886
          %1955 = vmatprep.subr.mxu0 0.0
          %1956 = vmatpush1.xpose.msra.mxu0 %v1883
          %1957 = vmatprep.subr.mxu0 0.0
          %1958 = vmatpush1.xpose.msra.mxu0 %v1880
          %1959 = vmatprep.subr.mxu0 0.0
          %1960 = vmatpush2.xpose.msra.mxu0 0.0
          %1961 = vmatprep.subr.mxu0 0.0
          %1962 = vmatpush2.xpose.msra.mxu0 0.0
          %1963 = vmatprep.subr.mxu0 0.0
          %1964 = vmatpush2.xpose.msra.mxu0 0.0
          %1965 = vmatprep.subr.mxu0 0.0
          %1966 = vmatpush2.xpose.msra.mxu0 0.0
          %1967 = vmatprep.subr.mxu0 0.0
          %1968 = vmatpush2.xpose.msra.mxu0 0.0
          %1969 = vmatprep.subr.mxu0 0.0
          %1970 = vmatpush2.xpose.msra.mxu0 0.0
          %1971 = vmatprep.subr.mxu0 0.0
          %1972 = vmatpush2.xpose.msra.mxu0 0.0
          %1973 = vmatprep.subr.mxu0 0.0
          %1974 = vmatpush2.xpose.msra.mxu0 0.0
          %1975 = vmatprep.subr.mxu0 0.0
          %1976 = vmatpush2.xpose.msra.mxu0 0.0
          %1977 = vmatprep.subr.mxu0 0.0
          %1978 = vmatpush2.xpose.msra.mxu0 0.0
          %1979 = vmatprep.subr.mxu0 0.0
          %1980 = vmatpush2.xpose.msra.mxu0 0.0
          %1981 = vmatprep.subr.mxu0 0.0
          %1982 = vmatpush2.xpose.msra.mxu0 0.0
          %1983 = vmatprep.subr.mxu0 0.0
          %1984 = vmatpush2.xpose.msra.mxu0 0.0
          %1985 = vmatprep.subr.mxu0 0.0
          %1986 = vmatpush2.xpose.msra.mxu0 0.0
          %1987 = vmatprep.subr.mxu0 0.0
          %1988 = vmatpush2.xpose.msra.mxu0 0.0
          %1989 = vmatprep.subr.mxu0 0.0
          %1990 = vmatpush2.xpose.msra.mxu0 0.0
          %1991 = vmatprep.mubr.f32.mxu0 0.0
          %1992 = vmatmul.mubr.f32.gmra.mxu0 %v1880
          %v1993 = vpop.f32.mrf.mxu0
          %v1994 = vadd.f32 0.0, %v1993
          %v1995 = vpop.f32.mrf.mxu0
          %1996 = vmatprep.mubr.f32.mxu0 0.0
          %1997 = vmatmul.mubr.f32.gmra.mxu0 %v1883
          %v1998 = vpop.f32.mrf.mxu0
          %v1999 = vadd.f32 0.0, %v1998
          %v2000 = vpop.f32.mrf.mxu0
          %2001 = vmatprep.mubr.f32.mxu0 0.0
          %2002 = vmatmul.mubr.f32.gmra.mxu0 %v1886
          %v2003 = vpop.f32.mrf.mxu0
          %v2004 = vadd.f32 0.0, %v2003
          %v2005 = vpop.f32.mrf.mxu0
          %2006 = vmatprep.mubr.f32.mxu0 0.0
          %2007 = vmatmul.mubr.f32.gmra.mxu0 %v1889
          %v2008 = vpop.f32.mrf.mxu0
          %v2009 = vadd.f32 0.0, %v2008
          %v2010 = vpop.f32.mrf.mxu0
          %2011 = vmatprep.mubr.f32.mxu0 0.0
          %2012 = vmatmul.mubr.f32.gmra.mxu0 %v1892
          %v2013 = vpop.f32.mrf.mxu0
          %v2014 = vadd.f32 0.0, %v2013
          %v2015 = vpop.f32.mrf.mxu0
          %2016 = vmatprep.mubr.f32.mxu0 0.0
          %2017 = vmatmul.mubr.f32.gmra.mxu0 %v1895
          %v2018 = vpop.f32.mrf.mxu0
          %v2019 = vadd.f32 0.0, %v2018
          %v2020 = vpop.f32.mrf.mxu0
          %2021 = vmatprep.mubr.f32.mxu0 0.0
          %2022 = vmatmul.mubr.f32.gmra.mxu0 %v1898
          %v2023 = vpop.f32.mrf.mxu0
          %v2024 = vadd.f32 0.0, %v2023
          %v2025 = vpop.f32.mrf.mxu0
          %2026 = vmatprep.mubr.f32.mxu0 0.0
          %2027 = vmatmul.mubr.f32.gmra.mxu0 %v1901
          %v2028 = vpop.f32.mrf.mxu0
          %v2029 = vadd.f32 0.0, %v2028
          %v2030 = vpop.f32.mrf.mxu0
          %2031 = vmatprep.mubr.f32.mxu0 0.0
          %2032 = vmatmul.mubr.f32.gmra.mxu0 %v1904
          %v2033 = vpop.f32.mrf.mxu0
          %v2034 = vadd.f32 0.0, %v2033
          %v2035 = vpop.f32.mrf.mxu0
          %2036 = vmatprep.mubr.f32.mxu0 0.0
          %2037 = vmatmul.mubr.f32.gmra.mxu0 %v1907
          %v2038 = vpop.f32.mrf.mxu0
          %v2039 = vadd.f32 0.0, %v2038
          %v2040 = vpop.f32.mrf.mxu0
          %2041 = vmatprep.mubr.f32.mxu0 0.0
          %2042 = vmatmul.mubr.f32.gmra.mxu0 %v1910
          %v2043 = vpop.f32.mrf.mxu0
          %v2044 = vadd.f32 0.0, %v2043
          %v2045 = vpop.f32.mrf.mxu0
          %2046 = vmatprep.mubr.f32.mxu0 0.0
          %2047 = vmatmul.mubr.f32.gmra.mxu0 %v1913
          %v2048 = vpop.f32.mrf.mxu0
          %v2049 = vadd.f32 0.0, %v2048
          %v2050 = vpop.f32.mrf.mxu0
          %2051 = vmatprep.mubr.f32.mxu0 0.0
          %2052 = vmatmul.mubr.f32.gmra.mxu0 %v1916
          %v2053 = vpop.f32.mrf.mxu0
          %v2054 = vadd.f32 0.0, %v2053
          %v2055 = vpop.f32.mrf.mxu0
          %2056 = vmatprep.mubr.f32.mxu0 0.0
          %2057 = vmatmul.mubr.f32.gmra.mxu0 %v1919
          %v2058 = vpop.f32.mrf.mxu0
          %v2059 = vadd.f32 0.0, %v2058
          %v2060 = vpop.f32.mrf.mxu0
          %2061 = vmatprep.mubr.f32.mxu0 0.0
          %2062 = vmatmul.mubr.f32.gmra.mxu0 %v1922
          %v2063 = vpop.f32.mrf.mxu0
          %v2064 = vadd.f32 0.0, %v2063
          %v2065 = vpop.f32.mrf.mxu0
          %2066 = vmatprep.mubr.f32.mxu0 0.0
          %2067 = vmatmul.mubr.f32.gmra.mxu0 %v1925
          %v2068 = vpop.f32.mrf.mxu0
          %v2069 = vadd.f32 0.0, %v2068
          %v2070 = vpop.f32.mrf.mxu0
          %2071 = vdwg.mxu0
          %v2072 = vlaneseq
          %v2073 = vshrl.u32 %v2072, 7
          %v2074 = vadd.s32 %v2073, 8
          %v2075 = vadd.s32 %v2073, 16
          %v2076 = vadd.s32 %v2073, 24
          %v2077 = vadd.s32 %v2073, 32
          %v2078 = vadd.s32 %v2073, 40
          %v2079 = vadd.s32 %v2073, 48
          %v2080 = vadd.s32 %v2073, 56
          %v2081 = vadd.s32 %v2073, 64
          %v2082 = vadd.s32 %v2073, 72
          %v2083 = vadd.s32 %v2073, 80
          %v2084 = vadd.s32 %v2073, 88
          %v2085 = vadd.s32 %v2073, 96
          %v2086 = vadd.s32 %v2073, 104
          %v2087 = vadd.s32 %v2073, 112
          %v2088 = vadd.s32 %v2073, 120
          %vm2089 = vcmp.eq.s32.totalorder %v2073, %v1529
          %vm2090 = vcmp.eq.s32.totalorder %v2074, %v1529
          %vm2091 = vcmp.eq.s32.totalorder %v2075, %v1529
          %vm2092 = vcmp.eq.s32.totalorder %v2076, %v1529
          %vm2093 = vcmp.eq.s32.totalorder %v2077, %v1529
          %vm2094 = vcmp.eq.s32.totalorder %v2078, %v1529
          %vm2095 = vcmp.eq.s32.totalorder %v2079, %v1529
          %vm2096 = vcmp.eq.s32.totalorder %v2080, %v1529
          %vm2097 = vcmp.eq.s32.totalorder %v2081, %v1529
          %vm2098 = vcmp.eq.s32.totalorder %v2082, %v1529
          %vm2099 = vcmp.eq.s32.totalorder %v2083, %v1529
          %vm2100 = vcmp.eq.s32.totalorder %v2084, %v1529
          %vm2101 = vcmp.eq.s32.totalorder %v2085, %v1529
          %vm2102 = vcmp.eq.s32.totalorder %v2086, %v1529
          %vm2103 = vcmp.eq.s32.totalorder %v2087, %v1529
          %vm2104 = vcmp.eq.s32.totalorder %v2088, %v1529
          %v2105 = vsel %vm2089, 1, 0
          %v2106 = vsel %vm2090, 1, 0
          %v2107 = vsel %vm2091, 1, 0
          %v2108 = vsel %vm2092, 1, 0
          %v2109 = vsel %vm2093, 1, 0
          %v2110 = vsel %vm2094, 1, 0
          %v2111 = vsel %vm2095, 1, 0
          %v2112 = vsel %vm2096, 1, 0
          %v2113 = vsel %vm2097, 1, 0
          %v2114 = vsel %vm2098, 1, 0
          %v2115 = vsel %vm2099, 1, 0
          %v2116 = vsel %vm2100, 1, 0
          %v2117 = vsel %vm2101, 1, 0
          %v2118 = vsel %vm2102, 1, 0
          %v2119 = vsel %vm2103, 1, 0
          %v2120 = vsel %vm2104, 1, 0
          %v2121 = vcvt.s32.f32 %v2105
          %v2122 = vcvt.s32.f32 %v2106
          %v2123 = vcvt.s32.f32 %v2107
          %v2124 = vcvt.s32.f32 %v2108
          %v2125 = vcvt.s32.f32 %v2109
          %v2126 = vcvt.s32.f32 %v2110
          %v2127 = vcvt.s32.f32 %v2111
          %v2128 = vcvt.s32.f32 %v2112
          %v2129 = vcvt.s32.f32 %v2113
          %v2130 = vcvt.s32.f32 %v2114
          %v2131 = vcvt.s32.f32 %v2115
          %v2132 = vcvt.s32.f32 %v2116
          %v2133 = vcvt.s32.f32 %v2117
          %v2134 = vcvt.s32.f32 %v2118
          %v2135 = vcvt.s32.f32 %v2119
          %v2136 = vcvt.s32.f32 %v2120
          %2137 = vmax.xlane.f32.xlu0 %v1994
          %v2138 = vpop.xlane.xlu0 %2137
          %2139 = vmax.xlane.f32.xlu0 %v1999
          %v2140 = vpop.xlane.xlu0 %2139
          %2141 = vmax.xlane.f32.xlu0 %v2004
          %v2142 = vpop.xlane.xlu0 %2141
          %2143 = vmax.xlane.f32.xlu0 %v2009
          %v2144 = vpop.xlane.xlu0 %2143
          %2145 = vmax.xlane.f32.xlu0 %v2014
          %v2146 = vpop.xlane.xlu0 %2145
          %2147 = vmax.xlane.f32.xlu0 %v2019
          %v2148 = vpop.xlane.xlu0 %2147
          %2149 = vmax.xlane.f32.xlu0 %v2024
          %v2150 = vpop.xlane.xlu0 %2149
          %2151 = vmax.xlane.f32.xlu0 %v2029
          %v2152 = vpop.xlane.xlu0 %2151
          %2153 = vmax.xlane.f32.xlu0 %v2034
          %v2154 = vpop.xlane.xlu0 %2153
          %2155 = vmax.xlane.f32.xlu0 %v2039
          %v2156 = vpop.xlane.xlu0 %2155
          %2157 = vmax.xlane.f32.xlu0 %v2044
          %v2158 = vpop.xlane.xlu0 %2157
          %2159 = vmax.xlane.f32.xlu0 %v2049
          %v2160 = vpop.xlane.xlu0 %2159
          %2161 = vmax.xlane.f32.xlu0 %v2054
          %v2162 = vpop.xlane.xlu0 %2161
          %2163 = vmax.xlane.f32.xlu0 %v2059
          %v2164 = vpop.xlane.xlu0 %2163
          %2165 = vmax.xlane.f32.xlu0 %v2064
          %v2166 = vpop.xlane.xlu0 %2165
          %2167 = vmax.xlane.f32.xlu0 %v2069
          %v2168 = vpop.xlane.xlu0 %2167
          %v2169 = vsub.f32 %v1994, %v2138
          %v2170 = vsub.f32 %v1999, %v2140
          %v2171 = vsub.f32 %v2004, %v2142
          %v2172 = vsub.f32 %v2009, %v2144
          %v2173 = vsub.f32 %v2014, %v2146
          %v2174 = vsub.f32 %v2019, %v2148
          %v2175 = vsub.f32 %v2024, %v2150
          %v2176 = vsub.f32 %v2029, %v2152
          %v2177 = vsub.f32 %v2034, %v2154
          %v2178 = vsub.f32 %v2039, %v2156
          %v2179 = vsub.f32 %v2044, %v2158
          %v2180 = vsub.f32 %v2049, %v2160
          %v2181 = vsub.f32 %v2054, %v2162
          %v2182 = vsub.f32 %v2059, %v2164
          %v2183 = vsub.f32 %v2064, %v2166
          %v2184 = vsub.f32 %v2069, %v2168
          %v2185 = vmul.f32 %v2169, 1.442695
          %v2186 = vpow.pop %v2185
          %v2187 = vmul.f32 %v2170, 1.442695
          %v2188 = vpow.pop %v2187
          %v2189 = vmul.f32 %v2171, 1.442695
          %v2190 = vpow.pop %v2189
          %v2191 = vmul.f32 %v2172, 1.442695
          %v2192 = vpow.pop %v2191
          %v2193 = vmul.f32 %v2173, 1.442695
          %v2194 = vpow.pop %v2193
          %v2195 = vmul.f32 %v2174, 1.442695
          %v2196 = vpow.pop %v2195
          %v2197 = vmul.f32 %v2175, 1.442695
          %v2198 = vpow.pop %v2197
          %v2199 = vmul.f32 %v2176, 1.442695
          %v2200 = vpow.pop %v2199
          %v2201 = vmul.f32 %v2177, 1.442695
          %v2202 = vpow.pop %v2201
          %v2203 = vmul.f32 %v2178, 1.442695
          %v2204 = vpow.pop %v2203
          %v2205 = vmul.f32 %v2179, 1.442695
          %v2206 = vpow.pop %v2205
          %v2207 = vmul.f32 %v2180, 1.442695
          %v2208 = vpow.pop %v2207
          %v2209 = vmul.f32 %v2181, 1.442695
          %v2210 = vpow.pop %v2209
          %v2211 = vmul.f32 %v2182, 1.442695
          %v2212 = vpow.pop %v2211
          %v2213 = vmul.f32 %v2183, 1.442695
          %v2214 = vpow.pop %v2213
          %v2215 = vmul.f32 %v2184, 1.442695
          %v2216 = vpow.pop %v2215
          %2217 = vadd.xlane.f32.xlu0 %v2186
          %v2218 = vpop.xlane.xlu0 %2217
          %2219 = vadd.xlane.f32.xlu0 %v2188
          %v2220 = vpop.xlane.xlu0 %2219
          %2221 = vadd.xlane.f32.xlu0 %v2190
          %v2222 = vpop.xlane.xlu0 %2221
          %2223 = vadd.xlane.f32.xlu0 %v2192
          %v2224 = vpop.xlane.xlu0 %2223
          %2225 = vadd.xlane.f32.xlu0 %v2194
          %v2226 = vpop.xlane.xlu0 %2225
          %2227 = vadd.xlane.f32.xlu0 %v2196
          %v2228 = vpop.xlane.xlu0 %2227
          %2229 = vadd.xlane.f32.xlu0 %v2198
          %v2230 = vpop.xlane.xlu0 %2229
          %2231 = vadd.xlane.f32.xlu0 %v2200
          %v2232 = vpop.xlane.xlu0 %2231
          %2233 = vadd.xlane.f32.xlu0 %v2202
          %v2234 = vpop.xlane.xlu0 %2233
          %2235 = vadd.xlane.f32.xlu0 %v2204
          %v2236 = vpop.xlane.xlu0 %2235
          %2237 = vadd.xlane.f32.xlu0 %v2206
          %v2238 = vpop.xlane.xlu0 %2237
          %2239 = vadd.xlane.f32.xlu0 %v2208
          %v2240 = vpop.xlane.xlu0 %2239
          %2241 = vadd.xlane.f32.xlu0 %v2210
          %v2242 = vpop.xlane.xlu0 %2241
          %2243 = vadd.xlane.f32.xlu0 %v2212
          %v2244 = vpop.xlane.xlu0 %2243
          %2245 = vadd.xlane.f32.xlu0 %v2214
          %v2246 = vpop.xlane.xlu0 %2245
          %2247 = vadd.xlane.f32.xlu0 %v2216
          %v2248 = vpop.xlane.xlu0 %2247
          %v2249 = vrcp.pop %v2218
          %v2250 = vmul.f32 %v2186, %v2249
          %v2251 = vrcp.pop %v2220
          %v2252 = vmul.f32 %v2188, %v2251
          %v2253 = vrcp.pop %v2222
          %v2254 = vmul.f32 %v2190, %v2253
          %v2255 = vrcp.pop %v2224
          %v2256 = vmul.f32 %v2192, %v2255
          %v2257 = vrcp.pop %v2226
          %v2258 = vmul.f32 %v2194, %v2257
          %v2259 = vrcp.pop %v2228
          %v2260 = vmul.f32 %v2196, %v2259
          %v2261 = vrcp.pop %v2230
          %v2262 = vmul.f32 %v2198, %v2261
          %v2263 = vrcp.pop %v2232
          %v2264 = vmul.f32 %v2200, %v2263
          %v2265 = vrcp.pop %v2234
          %v2266 = vmul.f32 %v2202, %v2265
          %v2267 = vrcp.pop %v2236
          %v2268 = vmul.f32 %v2204, %v2267
          %v2269 = vrcp.pop %v2238
          %v2270 = vmul.f32 %v2206, %v2269
          %v2271 = vrcp.pop %v2240
          %v2272 = vmul.f32 %v2208, %v2271
          %v2273 = vrcp.pop %v2242
          %v2274 = vmul.f32 %v2210, %v2273
          %v2275 = vrcp.pop %v2244
          %v2276 = vmul.f32 %v2212, %v2275
          %v2277 = vrcp.pop %v2246
          %v2278 = vmul.f32 %v2214, %v2277
          %v2279 = vrcp.pop %v2248
          %v2280 = vmul.f32 %v2216, %v2279
          %v2281 = vld [vmem:[#allocation12] sm:$0x1]
          %v2283 = vlaneseq
          %v2284 = vshrl.u32 %v2283, 7
          %v2285 = vsub.s32 0, %v2284
          %v2286 = vrot.slane %v2281, %v2285
          %v2288 = vmul.f32 %v2250, %v2286
          %v2289 = vmul.f32 %v2252, %v2286
          %v2290 = vmul.f32 %v2254, %v2286
          %v2291 = vmul.f32 %v2256, %v2286
          %v2292 = vmul.f32 %v2258, %v2286
          %v2293 = vmul.f32 %v2260, %v2286
          %v2294 = vmul.f32 %v2262, %v2286
          %v2295 = vmul.f32 %v2264, %v2286
          %v2296 = vmul.f32 %v2266, %v2286
          %v2297 = vmul.f32 %v2268, %v2286
          %v2298 = vmul.f32 %v2270, %v2286
          %v2299 = vmul.f32 %v2272, %v2286
          %v2300 = vmul.f32 %v2274, %v2286
          %v2301 = vmul.f32 %v2276, %v2286
          %v2302 = vmul.f32 %v2278, %v2286
          %v2303 = vmul.f32 %v2280, %v2286
          %v2304 = vadd.f32 %v2288, %v2121
          %v2305 = vadd.f32 %v2289, %v2122
          %v2306 = vadd.f32 %v2290, %v2123
          %v2307 = vadd.f32 %v2291, %v2124
          %v2308 = vadd.f32 %v2292, %v2125
          %v2309 = vadd.f32 %v2293, %v2126
          %v2310 = vadd.f32 %v2294, %v2127
          %v2311 = vadd.f32 %v2295, %v2128
          %v2312 = vadd.f32 %v2296, %v2129
          %v2313 = vadd.f32 %v2297, %v2130
          %v2314 = vadd.f32 %v2298, %v2131
          %v2315 = vadd.f32 %v2299, %v2132
          %v2316 = vadd.f32 %v2300, %v2133
          %v2317 = vadd.f32 %v2301, %v2134
          %v2318 = vadd.f32 %v2302, %v2135
          %v2319 = vadd.f32 %v2303, %v2136
          %v2320 = vpack.c.bf16 %v2305, %v2304
          %v2321 = vpack.c.bf16 %v2307, %v2306
          %v2322 = vpack.c.bf16 %v2309, %v2308
          %v2323 = vpack.c.bf16 %v2311, %v2310
          %v2324 = vpack.c.bf16 %v2313, %v2312
          %v2325 = vpack.c.bf16 %v2315, %v2314
          %v2326 = vpack.c.bf16 %v2317, %v2316
          %v2327 = vpack.c.bf16 %v2319, %v2318
          %v2328 = vld [vmem:[#allocation3] sm:$0xff]
          %v2329 = vld [vmem:[#allocation3 + $0x8] sm:$0xff]
          %v2330 = vld [vmem:[#allocation3 + $0x10] sm:$0xff]
          %v2331 = vld [vmem:[#allocation3 + $0x18] sm:$0xff]
          %v2332 = vld [vmem:[#allocation3 + $0x20] sm:$0xff]
          %v2333 = vld [vmem:[#allocation3 + $0x28] sm:$0xff]
          %v2334 = vld [vmem:[#allocation3 + $0x30] sm:$0xff]
          %v2335 = vld [vmem:[#allocation3 + $0x38] sm:$0xff]
          %v2336 = vld [vmem:[#allocation3 + $0x40] sm:$0xff]
          %v2337 = vld [vmem:[#allocation3 + $0x48] sm:$0xff]
          %v2338 = vld [vmem:[#allocation3 + $0x50] sm:$0xff]
          %v2339 = vld [vmem:[#allocation3 + $0x58] sm:$0xff]
          %v2340 = vld [vmem:[#allocation3 + $0x60] sm:$0xff]
          %v2341 = vld [vmem:[#allocation3 + $0x68] sm:$0xff]
          %v2342 = vld [vmem:[#allocation3 + $0x70] sm:$0xff]
          %v2343 = vld [vmem:[#allocation3 + $0x78] sm:$0xff]
          %v2344 = vld [vmem:[#allocation3 + $0x80] sm:$0xff]
          %v2345 = vld [vmem:[#allocation3 + $0x88] sm:$0xff]
          %v2346 = vld [vmem:[#allocation3 + $0x90] sm:$0xff]
          %v2347 = vld [vmem:[#allocation3 + $0x98] sm:$0xff]
          %v2348 = vld [vmem:[#allocation3 + $0xa0] sm:$0xff]
          %v2349 = vld [vmem:[#allocation3 + $0xa8] sm:$0xff]
          %v2350 = vld [vmem:[#allocation3 + $0xb0] sm:$0xff]
          %v2351 = vld [vmem:[#allocation3 + $0xb8] sm:$0xff]
          %v2352 = vld [vmem:[#allocation3 + $0xc0] sm:$0xff]
          %v2353 = vld [vmem:[#allocation3 + $0xc8] sm:$0xff]
          %v2354 = vld [vmem:[#allocation3 + $0xd0] sm:$0xff]
          %v2355 = vld [vmem:[#allocation3 + $0xd8] sm:$0xff]
          %v2356 = vld [vmem:[#allocation3 + $0xe0] sm:$0xff]
          %v2357 = vld [vmem:[#allocation3 + $0xe8] sm:$0xff]
          %v2358 = vld [vmem:[#allocation3 + $0xf0] sm:$0xff]
          %v2359 = vld [vmem:[#allocation3 + $0xf8] sm:$0xff]
          %s2360 = smul.f32 %s1603, 0.125
          %v2361 = vstv %s2360
          %v2362 = vmul.f32 %v2328, %v2361
          %v2363 = vmul.f32 %v2329, %v2361
          %v2364 = vmul.f32 %v2330, %v2361
          %v2365 = vmul.f32 %v2331, %v2361
          %v2366 = vmul.f32 %v2332, %v2361
          %v2367 = vmul.f32 %v2333, %v2361
          %v2368 = vmul.f32 %v2334, %v2361
          %v2369 = vmul.f32 %v2335, %v2361
          %v2370 = vmul.f32 %v2336, %v2361
          %v2371 = vmul.f32 %v2337, %v2361
          %v2372 = vmul.f32 %v2338, %v2361
          %v2373 = vmul.f32 %v2339, %v2361
          %v2374 = vmul.f32 %v2340, %v2361
          %v2375 = vmul.f32 %v2341, %v2361
          %v2376 = vmul.f32 %v2342, %v2361
          %v2377 = vmul.f32 %v2343, %v2361
          %v2378 = vmul.f32 %v2344, %v2361
          %v2379 = vmul.f32 %v2345, %v2361
          %v2380 = vmul.f32 %v2346, %v2361
          %v2381 = vmul.f32 %v2347, %v2361
          %v2382 = vmul.f32 %v2348, %v2361
          %v2383 = vmul.f32 %v2349, %v2361
          %v2384 = vmul.f32 %v2350, %v2361
          %v2385 = vmul.f32 %v2351, %v2361
          %v2386 = vmul.f32 %v2352, %v2361
          %v2387 = vmul.f32 %v2353, %v2361
          %v2388 = vmul.f32 %v2354, %v2361
          %v2389 = vmul.f32 %v2355, %v2361
          %v2390 = vmul.f32 %v2356, %v2361
          %v2391 = vmul.f32 %v2357, %v2361
          %v2392 = vmul.f32 %v2358, %v2361
          %v2393 = vmul.f32 %v2359, %v2361
          %2394 = vst [vmem:[#allocation3] sm:$0xff] %v2362
          %2395 = vst [vmem:[#allocation3 + $0x8] sm:$0xff] %v2363
          %2396 = vst [vmem:[#allocation3 + $0x10] sm:$0xff] %v2364
          %2397 = vst [vmem:[#allocation3 + $0x18] sm:$0xff] %v2365
          %2398 = vst [vmem:[#allocation3 + $0x20] sm:$0xff] %v2366
          %2399 = vst [vmem:[#allocation3 + $0x28] sm:$0xff] %v2367
          %2400 = vst [vmem:[#allocation3 + $0x30] sm:$0xff] %v2368
          %2401 = vst [vmem:[#allocation3 + $0x38] sm:$0xff] %v2369
          %2402 = vst [vmem:[#allocation3 + $0x40] sm:$0xff] %v2370
          %2403 = vst [vmem:[#allocation3 + $0x48] sm:$0xff] %v2371
          %2404 = vst [vmem:[#allocation3 + $0x50] sm:$0xff] %v2372
          %2405 = vst [vmem:[#allocation3 + $0x58] sm:$0xff] %v2373
          %2406 = vst [vmem:[#allocation3 + $0x60] sm:$0xff] %v2374
          %2407 = vst [vmem:[#allocation3 + $0x68] sm:$0xff] %v2375
          %2408 = vst [vmem:[#allocation3 + $0x70] sm:$0xff] %v2376
          %2409 = vst [vmem:[#allocation3 + $0x78] sm:$0xff] %v2377
          %2410 = vst [vmem:[#allocation3 + $0x80] sm:$0xff] %v2378
          %2411 = vst [vmem:[#allocation3 + $0x88] sm:$0xff] %v2379
          %2412 = vst [vmem:[#allocation3 + $0x90] sm:$0xff] %v2380
          %2413 = vst [vmem:[#allocation3 + $0x98] sm:$0xff] %v2381
          %2414 = vst [vmem:[#allocation3 + $0xa0] sm:$0xff] %v2382
          %2415 = vst [vmem:[#allocation3 + $0xa8] sm:$0xff] %v2383
          %2416 = vst [vmem:[#allocation3 + $0xb0] sm:$0xff] %v2384
          %2417 = vst [vmem:[#allocation3 + $0xb8] sm:$0xff] %v2385
          %2418 = vst [vmem:[#allocation3 + $0xc0] sm:$0xff] %v2386
          %2419 = vst [vmem:[#allocation3 + $0xc8] sm:$0xff] %v2387
          %2420 = vst [vmem:[#allocation3 + $0xd0] sm:$0xff] %v2388
          %2421 = vst [vmem:[#allocation3 + $0xd8] sm:$0xff] %v2389
          %2422 = vst [vmem:[#allocation3 + $0xe0] sm:$0xff] %v2390
          %2423 = vst [vmem:[#allocation3 + $0xe8] sm:$0xff] %v2391
          %2424 = vst [vmem:[#allocation3 + $0xf0] sm:$0xff] %v2392
          %2425 = vst [vmem:[#allocation3 + $0xf8] sm:$0xff] %v2393
          %v2426 = vld [vmem:[#allocation3] sm:$0xff]
          %v2427 = vld [vmem:[#allocation3 + $0x8] sm:$0xff]
          %v2428 = vld [vmem:[#allocation3 + $0x10] sm:$0xff]
          %v2429 = vld [vmem:[#allocation3 + $0x18] sm:$0xff]
          %v2430 = vld [vmem:[#allocation2] sm:$0xff]
          %v2431 = vld [vmem:[#allocation2 + $0x8] sm:$0xff]
          %v2432 = vunpack.c.l.bf16 %v2430
          %v2433 = vunpack.c.h.bf16 %v2430
          %v2434 = vunpack.c.l.bf16 %v2431
          %v2435 = vunpack.c.h.bf16 %v2431
          %v2436 = vadd.f32 %v2426, %v2432
          %v2437 = vadd.f32 %v2427, %v2433
          %v2438 = vadd.f32 %v2428, %v2434
          %v2439 = vadd.f32 %v2429, %v2435
          %v2440 = vpack.c.bf16 %v2438, %v2436
          %v2441 = vpack.c.bf16 %v2439, %v2437
          %v2444 = vunpack.c.l.b16 %v2440
          %v2445 = vunpack.c.l.b16 %v2441
          %v2446 = vunpack.c.h.b16 %v2440
          %v2447 = vunpack.c.h.b16 %v2441
          %v2448 = vpack.c.b16 %v2445, %v2444
          %v2449 = vpack.c.b16 %v2447, %v2446
          %2452 = vst [vmem:[#allocation5] sm:$0xff] %v2448
          %2453 = vst [vmem:[#allocation5 + $0x40] sm:$0xff] %v2449
          %v2454 = vld [vmem:[#allocation3 + $0x20] sm:$0xff]
          %v2455 = vld [vmem:[#allocation3 + $0x28] sm:$0xff]
          %v2456 = vld [vmem:[#allocation3 + $0x30] sm:$0xff]
          %v2457 = vld [vmem:[#allocation3 + $0x38] sm:$0xff]
          %v2458 = vld [vmem:[#allocation2 + $0x10] sm:$0xff]
          %v2459 = vld [vmem:[#allocation2 + $0x18] sm:$0xff]
          %v2460 = vunpack.c.l.bf16 %v2458
          %v2461 = vunpack.c.h.bf16 %v2458
          %v2462 = vunpack.c.l.bf16 %v2459
          %v2463 = vunpack.c.h.bf16 %v2459
          %v2464 = vadd.f32 %v2454, %v2460
          %v2465 = vadd.f32 %v2455, %v2461
          %v2466 = vadd.f32 %v2456, %v2462
          %v2467 = vadd.f32 %v2457, %v2463
          %v2468 = vpack.c.bf16 %v2466, %v2464
          %v2469 = vpack.c.bf16 %v2467, %v2465
          %v2472 = vunpack.c.l.b16 %v2468
          %v2473 = vunpack.c.l.b16 %v2469
          %v2474 = vunpack.c.h.b16 %v2468
          %v2475 = vunpack.c.h.b16 %v2469
          %v2476 = vpack.c.b16 %v2473, %v2472
          %v2477 = vpack.c.b16 %v2475, %v2474
          %2480 = vst [vmem:[#allocation5 + $0x8] sm:$0xff] %v2476
          %2481 = vst [vmem:[#allocation5 + $0x48] sm:$0xff] %v2477
          %v2482 = vld [vmem:[#allocation3 + $0x40] sm:$0xff]
          %v2483 = vld [vmem:[#allocation3 + $0x48] sm:$0xff]
          %v2484 = vld [vmem:[#allocation3 + $0x50] sm:$0xff]
          %v2485 = vld [vmem:[#allocation3 + $0x58] sm:$0xff]
          %v2486 = vld [vmem:[#allocation2 + $0x20] sm:$0xff]
          %v2487 = vld [vmem:[#allocation2 + $0x28] sm:$0xff]
          %v2488 = vunpack.c.l.bf16 %v2486
          %v2489 = vunpack.c.h.bf16 %v2486
          %v2490 = vunpack.c.l.bf16 %v2487
          %v2491 = vunpack.c.h.bf16 %v2487
          %v2492 = vadd.f32 %v2482, %v2488
          %v2493 = vadd.f32 %v2483, %v2489
          %v2494 = vadd.f32 %v2484, %v2490
          %v2495 = vadd.f32 %v2485, %v2491
          %v2496 = vpack.c.bf16 %v2494, %v2492
          %v2497 = vpack.c.bf16 %v2495, %v2493
          %v2500 = vunpack.c.l.b16 %v2496
          %v2501 = vunpack.c.l.b16 %v2497
          %v2502 = vunpack.c.h.b16 %v2496
          %v2503 = vunpack.c.h.b16 %v2497
          %v2504 = vpack.c.b16 %v2501, %v2500
          %v2505 = vpack.c.b16 %v2503, %v2502
          %2508 = vst [vmem:[#allocation5 + $0x10] sm:$0xff] %v2504
          %2509 = vst [vmem:[#allocation5 + $0x50] sm:$0xff] %v2505
          %v2510 = vld [vmem:[#allocation3 + $0x60] sm:$0xff]
          %v2511 = vld [vmem:[#allocation3 + $0x68] sm:$0xff]
          %v2512 = vld [vmem:[#allocation3 + $0x70] sm:$0xff]
          %v2513 = vld [vmem:[#allocation3 + $0x78] sm:$0xff]
          %v2514 = vld [vmem:[#allocation2 + $0x30] sm:$0xff]
          %v2515 = vld [vmem:[#allocation2 + $0x38] sm:$0xff]
          %v2516 = vunpack.c.l.bf16 %v2514
          %v2517 = vunpack.c.h.bf16 %v2514
          %v2518 = vunpack.c.l.bf16 %v2515
          %v2519 = vunpack.c.h.bf16 %v2515
          %v2520 = vadd.f32 %v2510, %v2516
          %v2521 = vadd.f32 %v2511, %v2517
          %v2522 = vadd.f32 %v2512, %v2518
          %v2523 = vadd.f32 %v2513, %v2519
          %v2524 = vpack.c.bf16 %v2522, %v2520
          %v2525 = vpack.c.bf16 %v2523, %v2521
          %v2528 = vunpack.c.l.b16 %v2524
          %v2529 = vunpack.c.l.b16 %v2525
          %v2530 = vunpack.c.h.b16 %v2524
          %v2531 = vunpack.c.h.b16 %v2525
          %v2532 = vpack.c.b16 %v2529, %v2528
          %v2533 = vpack.c.b16 %v2531, %v2530
          %2536 = vst [vmem:[#allocation5 + $0x18] sm:$0xff] %v2532
          %2537 = vst [vmem:[#allocation5 + $0x58] sm:$0xff] %v2533
          %v2538 = vld [vmem:[#allocation3 + $0x80] sm:$0xff]
          %v2539 = vld [vmem:[#allocation3 + $0x88] sm:$0xff]
          %v2540 = vld [vmem:[#allocation3 + $0x90] sm:$0xff]
          %v2541 = vld [vmem:[#allocation3 + $0x98] sm:$0xff]
          %v2542 = vld [vmem:[#allocation2 + $0x40] sm:$0xff]
          %v2543 = vld [vmem:[#allocation2 + $0x48] sm:$0xff]
          %v2544 = vunpack.c.l.bf16 %v2542
          %v2545 = vunpack.c.h.bf16 %v2542
          %v2546 = vunpack.c.l.bf16 %v2543
          %v2547 = vunpack.c.h.bf16 %v2543
          %v2548 = vadd.f32 %v2538, %v2544
          %v2549 = vadd.f32 %v2539, %v2545
          %v2550 = vadd.f32 %v2540, %v2546
          %v2551 = vadd.f32 %v2541, %v2547
          %v2552 = vpack.c.bf16 %v2550, %v2548
          %v2553 = vpack.c.bf16 %v2551, %v2549
          %v2556 = vunpack.c.l.b16 %v2552
          %v2557 = vunpack.c.l.b16 %v2553
          %v2558 = vunpack.c.h.b16 %v2552
          %v2559 = vunpack.c.h.b16 %v2553
          %v2560 = vpack.c.b16 %v2557, %v2556
          %v2561 = vpack.c.b16 %v2559, %v2558
          %2564 = vst [vmem:[#allocation5 + $0x20] sm:$0xff] %v2560
          %2565 = vst [vmem:[#allocation5 + $0x60] sm:$0xff] %v2561
          %v2566 = vld [vmem:[#allocation3 + $0xa0] sm:$0xff]
          %v2567 = vld [vmem:[#allocation3 + $0xa8] sm:$0xff]
          %v2568 = vld [vmem:[#allocation3 + $0xb0] sm:$0xff]
          %v2569 = vld [vmem:[#allocation3 + $0xb8] sm:$0xff]
          %v2570 = vld [vmem:[#allocation2 + $0x50] sm:$0xff]
          %v2571 = vld [vmem:[#allocation2 + $0x58] sm:$0xff]
          %v2572 = vunpack.c.l.bf16 %v2570
          %v2573 = vunpack.c.h.bf16 %v2570
          %v2574 = vunpack.c.l.bf16 %v2571
          %v2575 = vunpack.c.h.bf16 %v2571
          %v2576 = vadd.f32 %v2566, %v2572
          %v2577 = vadd.f32 %v2567, %v2573
          %v2578 = vadd.f32 %v2568, %v2574
          %v2579 = vadd.f32 %v2569, %v2575
          %v2580 = vpack.c.bf16 %v2578, %v2576
          %v2581 = vpack.c.bf16 %v2579, %v2577
          %v2584 = vunpack.c.l.b16 %v2580
          %v2585 = vunpack.c.l.b16 %v2581
          %v2586 = vunpack.c.h.b16 %v2580
          %v2587 = vunpack.c.h.b16 %v2581
          %v2588 = vpack.c.b16 %v2585, %v2584
          %v2589 = vpack.c.b16 %v2587, %v2586
          %2592 = vst [vmem:[#allocation5 + $0x28] sm:$0xff] %v2588
          %2593 = vst [vmem:[#allocation5 + $0x68] sm:$0xff] %v2589
          %v2594 = vld [vmem:[#allocation3 + $0xc0] sm:$0xff]
          %v2595 = vld [vmem:[#allocation3 + $0xc8] sm:$0xff]
          %v2596 = vld [vmem:[#allocation3 + $0xd0] sm:$0xff]
          %v2597 = vld [vmem:[#allocation3 + $0xd8] sm:$0xff]
          %v2598 = vld [vmem:[#allocation2 + $0x60] sm:$0xff]
          %v2599 = vld [vmem:[#allocation2 + $0x68] sm:$0xff]
          %v2600 = vunpack.c.l.bf16 %v2598
          %v2601 = vunpack.c.h.bf16 %v2598
          %v2602 = vunpack.c.l.bf16 %v2599
          %v2603 = vunpack.c.h.bf16 %v2599
          %v2604 = vadd.f32 %v2594, %v2600
          %v2605 = vadd.f32 %v2595, %v2601
          %v2606 = vadd.f32 %v2596, %v2602
          %v2607 = vadd.f32 %v2597, %v2603
          %v2608 = vpack.c.bf16 %v2606, %v2604
          %v2609 = vpack.c.bf16 %v2607, %v2605
          %v2612 = vunpack.c.l.b16 %v2608
          %v2613 = vunpack.c.l.b16 %v2609
          %v2614 = vunpack.c.h.b16 %v2608
          %v2615 = vunpack.c.h.b16 %v2609
          %v2616 = vpack.c.b16 %v2613, %v2612
          %v2617 = vpack.c.b16 %v2615, %v2614
          %2620 = vst [vmem:[#allocation5 + $0x30] sm:$0xff] %v2616
          %2621 = vst [vmem:[#allocation5 + $0x70] sm:$0xff] %v2617
          %v2622 = vld [vmem:[#allocation3 + $0xe0] sm:$0xff]
          %v2623 = vld [vmem:[#allocation3 + $0xe8] sm:$0xff]
          %v2624 = vld [vmem:[#allocation3 + $0xf0] sm:$0xff]
          %v2625 = vld [vmem:[#allocation3 + $0xf8] sm:$0xff]
          %v2626 = vld [vmem:[#allocation2 + $0x70] sm:$0xff]
          %v2627 = vld [vmem:[#allocation2 + $0x78] sm:$0xff]
          %v2628 = vunpack.c.l.bf16 %v2626
          %v2629 = vunpack.c.h.bf16 %v2626
          %v2630 = vunpack.c.l.bf16 %v2627
          %v2631 = vunpack.c.h.bf16 %v2627
          %v2632 = vadd.f32 %v2622, %v2628
          %v2633 = vadd.f32 %v2623, %v2629
          %v2634 = vadd.f32 %v2624, %v2630
          %v2635 = vadd.f32 %v2625, %v2631
          %v2636 = vpack.c.bf16 %v2634, %v2632
          %v2637 = vpack.c.bf16 %v2635, %v2633
          %v2640 = vunpack.c.l.b16 %v2636
          %v2641 = vunpack.c.l.b16 %v2637
          %v2642 = vunpack.c.h.b16 %v2636
          %v2643 = vunpack.c.h.b16 %v2637
          %v2644 = vpack.c.b16 %v2641, %v2640
          %v2645 = vpack.c.b16 %v2643, %v2642
          %2648 = vst [vmem:[#allocation5 + $0x38] sm:$0xff] %v2644
          %2649 = vst [vmem:[#allocation5 + $0x78] sm:$0xff] %v2645
          %v2650 = vld [vmem:[#allocation3] sm:$0xff]
          %v2651 = vld [vmem:[#allocation3 + $0x8] sm:$0xff]
          %v2652 = vld [vmem:[#allocation3 + $0x10] sm:$0xff]
          %v2653 = vld [vmem:[#allocation3 + $0x18] sm:$0xff]
          %s2654 = scalar_lea.vmem [#allocation2], 128
          %v2655 = vld [vmem:[%s2654] sm:$0xff]
          %v2656 = vld [vmem:[%s2654 + $0x8] sm:$0xff]
          %v2657 = vunpack.c.l.bf16 %v2655
          %v2658 = vunpack.c.h.bf16 %v2655
          %v2659 = vunpack.c.l.bf16 %v2656
          %v2660 = vunpack.c.h.bf16 %v2656
          %v2661 = vadd.f32 %v2650, %v2657
          %v2662 = vadd.f32 %v2651, %v2658
          %v2663 = vadd.f32 %v2652, %v2659
          %v2664 = vadd.f32 %v2653, %v2660
          %v2665 = vpack.c.bf16 %v2663, %v2661
          %v2666 = vpack.c.bf16 %v2664, %v2662
          %v2669 = vunpack.c.l.b16 %v2665
          %v2670 = vunpack.c.l.b16 %v2666
          %v2671 = vunpack.c.h.b16 %v2665
          %v2672 = vunpack.c.h.b16 %v2666
          %v2673 = vpack.c.b16 %v2670, %v2669
          %v2674 = vpack.c.b16 %v2672, %v2671
          %2677 = vst [vmem:[#allocation5 + $0x80] sm:$0xff] %v2673
          %2678 = vst [vmem:[#allocation5 + $0xc0] sm:$0xff] %v2674
          %v2679 = vld [vmem:[#allocation3 + $0x20] sm:$0xff]
          %v2680 = vld [vmem:[#allocation3 + $0x28] sm:$0xff]
          %v2681 = vld [vmem:[#allocation3 + $0x30] sm:$0xff]
          %v2682 = vld [vmem:[#allocation3 + $0x38] sm:$0xff]
          %v2683 = vld [vmem:[%s2654 + $0x10] sm:$0xff]
          %v2684 = vld [vmem:[%s2654 + $0x18] sm:$0xff]
          %v2685 = vunpack.c.l.bf16 %v2683
          %v2686 = vunpack.c.h.bf16 %v2683
          %v2687 = vunpack.c.l.bf16 %v2684
          %v2688 = vunpack.c.h.bf16 %v2684
          %v2689 = vadd.f32 %v2679, %v2685
          %v2690 = vadd.f32 %v2680, %v2686
          %v2691 = vadd.f32 %v2681, %v2687
          %v2692 = vadd.f32 %v2682, %v2688
          %v2693 = vpack.c.bf16 %v2691, %v2689
          %v2694 = vpack.c.bf16 %v2692, %v2690
          %v2697 = vunpack.c.l.b16 %v2693
          %v2698 = vunpack.c.l.b16 %v2694
          %v2699 = vunpack.c.h.b16 %v2693
          %v2700 = vunpack.c.h.b16 %v2694
          %v2701 = vpack.c.b16 %v2698, %v2697
          %v2702 = vpack.c.b16 %v2700, %v2699
          %2705 = vst [vmem:[#allocation5 + $0x88] sm:$0xff] %v2701
          %2706 = vst [vmem:[#allocation5 + $0xc8] sm:$0xff] %v2702
          %v2707 = vld [vmem:[#allocation3 + $0x40] sm:$0xff]
          %v2708 = vld [vmem:[#allocation3 + $0x48] sm:$0xff]
          %v2709 = vld [vmem:[#allocation3 + $0x50] sm:$0xff]
          %v2710 = vld [vmem:[#allocation3 + $0x58] sm:$0xff]
          %v2711 = vld [vmem:[%s2654 + $0x20] sm:$0xff]
          %v2712 = vld [vmem:[%s2654 + $0x28] sm:$0xff]
          %v2713 = vunpack.c.l.bf16 %v2711
          %v2714 = vunpack.c.h.bf16 %v2711
          %v2715 = vunpack.c.l.bf16 %v2712
          %v2716 = vunpack.c.h.bf16 %v2712
          %v2717 = vadd.f32 %v2707, %v2713
          %v2718 = vadd.f32 %v2708, %v2714
          %v2719 = vadd.f32 %v2709, %v2715
          %v2720 = vadd.f32 %v2710, %v2716
          %v2721 = vpack.c.bf16 %v2719, %v2717
          %v2722 = vpack.c.bf16 %v2720, %v2718
          %v2725 = vunpack.c.l.b16 %v2721
          %v2726 = vunpack.c.l.b16 %v2722
          %v2727 = vunpack.c.h.b16 %v2721
          %v2728 = vunpack.c.h.b16 %v2722
          %v2729 = vpack.c.b16 %v2726, %v2725
          %v2730 = vpack.c.b16 %v2728, %v2727
          %2733 = vst [vmem:[#allocation5 + $0x90] sm:$0xff] %v2729
          %2734 = vst [vmem:[#allocation5 + $0xd0] sm:$0xff] %v2730
          %v2735 = vld [vmem:[#allocation3 + $0x60] sm:$0xff]
          %v2736 = vld [vmem:[#allocation3 + $0x68] sm:$0xff]
          %v2737 = vld [vmem:[#allocation3 + $0x70] sm:$0xff]
          %v2738 = vld [vmem:[#allocation3 + $0x78] sm:$0xff]
          %v2739 = vld [vmem:[%s2654 + $0x30] sm:$0xff]
          %v2740 = vld [vmem:[%s2654 + $0x38] sm:$0xff]
          %v2741 = vunpack.c.l.bf16 %v2739
          %v2742 = vunpack.c.h.bf16 %v2739
          %v2743 = vunpack.c.l.bf16 %v2740
          %v2744 = vunpack.c.h.bf16 %v2740
          %v2745 = vadd.f32 %v2735, %v2741
          %v2746 = vadd.f32 %v2736, %v2742
          %v2747 = vadd.f32 %v2737, %v2743
          %v2748 = vadd.f32 %v2738, %v2744
          %v2749 = vpack.c.bf16 %v2747, %v2745
          %v2750 = vpack.c.bf16 %v2748, %v2746
          %v2753 = vunpack.c.l.b16 %v2749
          %v2754 = vunpack.c.l.b16 %v2750
          %v2755 = vunpack.c.h.b16 %v2749
          %v2756 = vunpack.c.h.b16 %v2750
          %v2757 = vpack.c.b16 %v2754, %v2753
          %v2758 = vpack.c.b16 %v2756, %v2755
          %2761 = vst [vmem:[#allocation5 + $0x98] sm:$0xff] %v2757
          %2762 = vst [vmem:[#allocation5 + $0xd8] sm:$0xff] %v2758
          %v2763 = vld [vmem:[#allocation3 + $0x80] sm:$0xff]
          %v2764 = vld [vmem:[#allocation3 + $0x88] sm:$0xff]
          %v2765 = vld [vmem:[#allocation3 + $0x90] sm:$0xff]
          %v2766 = vld [vmem:[#allocation3 + $0x98] sm:$0xff]
          %v2767 = vld [vmem:[%s2654 + $0x40] sm:$0xff]
          %v2768 = vld [vmem:[%s2654 + $0x48] sm:$0xff]
          %v2769 = vunpack.c.l.bf16 %v2767
          %v2770 = vunpack.c.h.bf16 %v2767
          %v2771 = vunpack.c.l.bf16 %v2768
          %v2772 = vunpack.c.h.bf16 %v2768
          %v2773 = vadd.f32 %v2763, %v2769
          %v2774 = vadd.f32 %v2764, %v2770
          %v2775 = vadd.f32 %v2765, %v2771
          %v2776 = vadd.f32 %v2766, %v2772
          %v2777 = vpack.c.bf16 %v2775, %v2773
          %v2778 = vpack.c.bf16 %v2776, %v2774
          %v2781 = vunpack.c.l.b16 %v2777
          %v2782 = vunpack.c.l.b16 %v2778
          %v2783 = vunpack.c.h.b16 %v2777
          %v2784 = vunpack.c.h.b16 %v2778
          %v2785 = vpack.c.b16 %v2782, %v2781
          %v2786 = vpack.c.b16 %v2784, %v2783
          %2789 = vst [vmem:[#allocation5 + $0xa0] sm:$0xff] %v2785
          %2790 = vst [vmem:[#allocation5 + $0xe0] sm:$0xff] %v2786
          %v2791 = vld [vmem:[#allocation3 + $0xa0] sm:$0xff]
          %v2792 = vld [vmem:[#allocation3 + $0xa8] sm:$0xff]
          %v2793 = vld [vmem:[#allocation3 + $0xb0] sm:$0xff]
          %v2794 = vld [vmem:[#allocation3 + $0xb8] sm:$0xff]
          %v2795 = vld [vmem:[%s2654 + $0x50] sm:$0xff]
          %v2796 = vld [vmem:[%s2654 + $0x58] sm:$0xff]
          %v2797 = vunpack.c.l.bf16 %v2795
          %v2798 = vunpack.c.h.bf16 %v2795
          %v2799 = vunpack.c.l.bf16 %v2796
          %v2800 = vunpack.c.h.bf16 %v2796
          %v2801 = vadd.f32 %v2791, %v2797
          %v2802 = vadd.f32 %v2792, %v2798
          %v2803 = vadd.f32 %v2793, %v2799
          %v2804 = vadd.f32 %v2794, %v2800
          %v2805 = vpack.c.bf16 %v2803, %v2801
          %v2806 = vpack.c.bf16 %v2804, %v2802
          %v2809 = vunpack.c.l.b16 %v2805
          %v2810 = vunpack.c.l.b16 %v2806
          %v2811 = vunpack.c.h.b16 %v2805
          %v2812 = vunpack.c.h.b16 %v2806
          %v2813 = vpack.c.b16 %v2810, %v2809
          %v2814 = vpack.c.b16 %v2812, %v2811
          %2817 = vst [vmem:[#allocation5 + $0xa8] sm:$0xff] %v2813
          %2818 = vst [vmem:[#allocation5 + $0xe8] sm:$0xff] %v2814
          %v2819 = vld [vmem:[#allocation3 + $0xc0] sm:$0xff]
          %v2820 = vld [vmem:[#allocation3 + $0xc8] sm:$0xff]
          %v2821 = vld [vmem:[#allocation3 + $0xd0] sm:$0xff]
          %v2822 = vld [vmem:[#allocation3 + $0xd8] sm:$0xff]
          %v2823 = vld [vmem:[%s2654 + $0x60] sm:$0xff]
          %v2824 = vld [vmem:[%s2654 + $0x68] sm:$0xff]
          %v2825 = vunpack.c.l.bf16 %v2823
          %v2826 = vunpack.c.h.bf16 %v2823
          %v2827 = vunpack.c.l.bf16 %v2824
          %v2828 = vunpack.c.h.bf16 %v2824
          %v2829 = vadd.f32 %v2819, %v2825
          %v2830 = vadd.f32 %v2820, %v2826
          %v2831 = vadd.f32 %v2821, %v2827
          %v2832 = vadd.f32 %v2822, %v2828
          %v2833 = vpack.c.bf16 %v2831, %v2829
          %v2834 = vpack.c.bf16 %v2832, %v2830
          %v2837 = vunpack.c.l.b16 %v2833
          %v2838 = vunpack.c.l.b16 %v2834
          %v2839 = vunpack.c.h.b16 %v2833
          %v2840 = vunpack.c.h.b16 %v2834
          %v2841 = vpack.c.b16 %v2838, %v2837
          %v2842 = vpack.c.b16 %v2840, %v2839
          %2845 = vst [vmem:[#allocation5 + $0xb0] sm:$0xff] %v2841
          %2846 = vst [vmem:[#allocation5 + $0xf0] sm:$0xff] %v2842
          %v2847 = vld [vmem:[#allocation3 + $0xe0] sm:$0xff]
          %v2848 = vld [vmem:[#allocation3 + $0xe8] sm:$0xff]
          %v2849 = vld [vmem:[#allocation3 + $0xf0] sm:$0xff]
          %v2850 = vld [vmem:[#allocation3 + $0xf8] sm:$0xff]
          %v2851 = vld [vmem:[%s2654 + $0x70] sm:$0xff]
          %v2852 = vld [vmem:[%s2654 + $0x78] sm:$0xff]
          %v2853 = vunpack.c.l.bf16 %v2851
          %v2854 = vunpack.c.h.bf16 %v2851
          %v2855 = vunpack.c.l.bf16 %v2852
          %v2856 = vunpack.c.h.bf16 %v2852
          %v2857 = vadd.f32 %v2847, %v2853
          %v2858 = vadd.f32 %v2848, %v2854
          %v2859 = vadd.f32 %v2849, %v2855
          %v2860 = vadd.f32 %v2850, %v2856
          %v2861 = vpack.c.bf16 %v2859, %v2857
          %v2862 = vpack.c.bf16 %v2860, %v2858
          %v2865 = vunpack.c.l.b16 %v2861
          %v2866 = vunpack.c.l.b16 %v2862
          %v2867 = vunpack.c.h.b16 %v2861
          %v2868 = vunpack.c.h.b16 %v2862
          %v2869 = vpack.c.b16 %v2866, %v2865
          %v2870 = vpack.c.b16 %v2868, %v2867
          %2873 = vst [vmem:[#allocation5 + $0xb8] sm:$0xff] %v2869
          %2874 = vst [vmem:[#allocation5 + $0xf8] sm:$0xff] %v2870
          %v2875 = vld [vmem:[#allocation3] sm:$0xff]
          %v2876 = vld [vmem:[#allocation3 + $0x8] sm:$0xff]
          %v2877 = vld [vmem:[#allocation3 + $0x10] sm:$0xff]
          %v2878 = vld [vmem:[#allocation3 + $0x18] sm:$0xff]
          %s2879 = scalar_lea.vmem [#allocation2], 256
          %v2880 = vld [vmem:[%s2879] sm:$0xff]
          %v2881 = vld [vmem:[%s2879 + $0x8] sm:$0xff]
          %v2882 = vunpack.c.l.bf16 %v2880
          %v2883 = vunpack.c.h.bf16 %v2880
          %v2884 = vunpack.c.l.bf16 %v2881
          %v2885 = vunpack.c.h.bf16 %v2881
          %v2886 = vadd.f32 %v2875, %v2882
          %v2887 = vadd.f32 %v2876, %v2883
          %v2888 = vadd.f32 %v2877, %v2884
          %v2889 = vadd.f32 %v2878, %v2885
          %v2890 = vpack.c.bf16 %v2888, %v2886
          %v2891 = vpack.c.bf16 %v2889, %v2887
          %v2894 = vunpack.c.l.b16 %v2890
          %v2895 = vunpack.c.l.b16 %v2891
          %v2896 = vunpack.c.h.b16 %v2890
          %v2897 = vunpack.c.h.b16 %v2891
          %v2898 = vpack.c.b16 %v2895, %v2894
          %v2899 = vpack.c.b16 %v2897, %v2896
          %2902 = vst [vmem:[#allocation5 + $0x100] sm:$0xff] %v2898
          %2903 = vst [vmem:[#allocation5 + $0x140] sm:$0xff] %v2899
          %v2904 = vld [vmem:[#allocation3 + $0x20] sm:$0xff]
          %v2905 = vld [vmem:[#allocation3 + $0x28] sm:$0xff]
          %v2906 = vld [vmem:[#allocation3 + $0x30] sm:$0xff]
          %v2907 = vld [vmem:[#allocation3 + $0x38] sm:$0xff]
          %v2908 = vld [vmem:[%s2879 + $0x10] sm:$0xff]
          %v2909 = vld [vmem:[%s2879 + $0x18] sm:$0xff]
          %v2910 = vunpack.c.l.bf16 %v2908
          %v2911 = vunpack.c.h.bf16 %v2908
          %v2912 = vunpack.c.l.bf16 %v2909
          %v2913 = vunpack.c.h.bf16 %v2909
          %v2914 = vadd.f32 %v2904, %v2910
          %v2915 = vadd.f32 %v2905, %v2911
          %v2916 = vadd.f32 %v2906, %v2912
          %v2917 = vadd.f32 %v2907, %v2913
          %v2918 = vpack.c.bf16 %v2916, %v2914
          %v2919 = vpack.c.bf16 %v2917, %v2915
          %v2922 = vunpack.c.l.b16 %v2918
          %v2923 = vunpack.c.l.b16 %v2919
          %v2924 = vunpack.c.h.b16 %v2918
          %v2925 = vunpack.c.h.b16 %v2919
          %v2926 = vpack.c.b16 %v2923, %v2922
          %v2927 = vpack.c.b16 %v2925, %v2924
          %2930 = vst [vmem:[#allocation5 + $0x108] sm:$0xff] %v2926
          %2931 = vst [vmem:[#allocation5 + $0x148] sm:$0xff] %v2927
          %v2932 = vld [vmem:[#allocation3 + $0x40] sm:$0xff]
          %v2933 = vld [vmem:[#allocation3 + $0x48] sm:$0xff]
          %v2934 = vld [vmem:[#allocation3 + $0x50] sm:$0xff]
          %v2935 = vld [vmem:[#allocation3 + $0x58] sm:$0xff]
          %v2936 = vld [vmem:[%s2879 + $0x20] sm:$0xff]
          %v2937 = vld [vmem:[%s2879 + $0x28] sm:$0xff]
          %v2938 = vunpack.c.l.bf16 %v2936
          %v2939 = vunpack.c.h.bf16 %v2936
          %v2940 = vunpack.c.l.bf16 %v2937
          %v2941 = vunpack.c.h.bf16 %v2937
          %v2942 = vadd.f32 %v2932, %v2938
          %v2943 = vadd.f32 %v2933, %v2939
          %v2944 = vadd.f32 %v2934, %v2940
          %v2945 = vadd.f32 %v2935, %v2941
          %v2946 = vpack.c.bf16 %v2944, %v2942
          %v2947 = vpack.c.bf16 %v2945, %v2943
          %v2950 = vunpack.c.l.b16 %v2946
          %v2951 = vunpack.c.l.b16 %v2947
          %v2952 = vunpack.c.h.b16 %v2946
          %v2953 = vunpack.c.h.b16 %v2947
          %v2954 = vpack.c.b16 %v2951, %v2950
          %v2955 = vpack.c.b16 %v2953, %v2952
          %2958 = vst [vmem:[#allocation5 + $0x110] sm:$0xff] %v2954
          %2959 = vst [vmem:[#allocation5 + $0x150] sm:$0xff] %v2955
          %v2960 = vld [vmem:[#allocation3 + $0x60] sm:$0xff]
          %v2961 = vld [vmem:[#allocation3 + $0x68] sm:$0xff]
          %v2962 = vld [vmem:[#allocation3 + $0x70] sm:$0xff]
          %v2963 = vld [vmem:[#allocation3 + $0x78] sm:$0xff]
          %v2964 = vld [vmem:[%s2879 + $0x30] sm:$0xff]
          %v2965 = vld [vmem:[%s2879 + $0x38] sm:$0xff]
          %v2966 = vunpack.c.l.bf16 %v2964
          %v2967 = vunpack.c.h.bf16 %v2964
          %v2968 = vunpack.c.l.bf16 %v2965
          %v2969 = vunpack.c.h.bf16 %v2965
          %v2970 = vadd.f32 %v2960, %v2966
          %v2971 = vadd.f32 %v2961, %v2967
          %v2972 = vadd.f32 %v2962, %v2968
          %v2973 = vadd.f32 %v2963, %v2969
          %v2974 = vpack.c.bf16 %v2972, %v2970
          %v2975 = vpack.c.bf16 %v2973, %v2971
          %v2978 = vunpack.c.l.b16 %v2974
          %v2979 = vunpack.c.l.b16 %v2975
          %v2980 = vunpack.c.h.b16 %v2974
          %v2981 = vunpack.c.h.b16 %v2975
          %v2982 = vpack.c.b16 %v2979, %v2978
          %v2983 = vpack.c.b16 %v2981, %v2980
          %2986 = vst [vmem:[#allocation5 + $0x118] sm:$0xff] %v2982
          %2987 = vst [vmem:[#allocation5 + $0x158] sm:$0xff] %v2983
          %v2988 = vld [vmem:[#allocation3 + $0x80] sm:$0xff]
          %v2989 = vld [vmem:[#allocation3 + $0x88] sm:$0xff]
          %v2990 = vld [vmem:[#allocation3 + $0x90] sm:$0xff]
          %v2991 = vld [vmem:[#allocation3 + $0x98] sm:$0xff]
          %v2992 = vld [vmem:[%s2879 + $0x40] sm:$0xff]
          %v2993 = vld [vmem:[%s2879 + $0x48] sm:$0xff]
          %v2994 = vunpack.c.l.bf16 %v2992
          %v2995 = vunpack.c.h.bf16 %v2992
          %v2996 = vunpack.c.l.bf16 %v2993
          %v2997 = vunpack.c.h.bf16 %v2993
          %v2998 = vadd.f32 %v2988, %v2994
          %v2999 = vadd.f32 %v2989, %v2995
          %v3000 = vadd.f32 %v2990, %v2996
          %v3001 = vadd.f32 %v2991, %v2997
          %v3002 = vpack.c.bf16 %v3000, %v2998
          %v3003 = vpack.c.bf16 %v3001, %v2999
          %v3006 = vunpack.c.l.b16 %v3002
          %v3007 = vunpack.c.l.b16 %v3003
          %v3008 = vunpack.c.h.b16 %v3002
          %v3009 = vunpack.c.h.b16 %v3003
          %v3010 = vpack.c.b16 %v3007, %v3006
          %v3011 = vpack.c.b16 %v3009, %v3008
          %3014 = vst [vmem:[#allocation5 + $0x120] sm:$0xff] %v3010
          %3015 = vst [vmem:[#allocation5 + $0x160] sm:$0xff] %v3011
          %v3016 = vld [vmem:[#allocation3 + $0xa0] sm:$0xff]
          %v3017 = vld [vmem:[#allocation3 + $0xa8] sm:$0xff]
          %v3018 = vld [vmem:[#allocation3 + $0xb0] sm:$0xff]
          %v3019 = vld [vmem:[#allocation3 + $0xb8] sm:$0xff]
          %v3020 = vld [vmem:[%s2879 + $0x50] sm:$0xff]
          %v3021 = vld [vmem:[%s2879 + $0x58] sm:$0xff]
          %v3022 = vunpack.c.l.bf16 %v3020
          %v3023 = vunpack.c.h.bf16 %v3020
          %v3024 = vunpack.c.l.bf16 %v3021
          %v3025 = vunpack.c.h.bf16 %v3021
          %v3026 = vadd.f32 %v3016, %v3022
          %v3027 = vadd.f32 %v3017, %v3023
          %v3028 = vadd.f32 %v3018, %v3024
          %v3029 = vadd.f32 %v3019, %v3025
          %v3030 = vpack.c.bf16 %v3028, %v3026
          %v3031 = vpack.c.bf16 %v3029, %v3027
          %v3034 = vunpack.c.l.b16 %v3030
          %v3035 = vunpack.c.l.b16 %v3031
          %v3036 = vunpack.c.h.b16 %v3030
          %v3037 = vunpack.c.h.b16 %v3031
          %v3038 = vpack.c.b16 %v3035, %v3034
          %v3039 = vpack.c.b16 %v3037, %v3036
          %3042 = vst [vmem:[#allocation5 + $0x128] sm:$0xff] %v3038
          %3043 = vst [vmem:[#allocation5 + $0x168] sm:$0xff] %v3039
          %v3044 = vld [vmem:[#allocation3 + $0xc0] sm:$0xff]
          %v3045 = vld [vmem:[#allocation3 + $0xc8] sm:$0xff]
          %v3046 = vld [vmem:[#allocation3 + $0xd0] sm:$0xff]
          %v3047 = vld [vmem:[#allocation3 + $0xd8] sm:$0xff]
          %v3048 = vld [vmem:[%s2879 + $0x60] sm:$0xff]
          %v3049 = vld [vmem:[%s2879 + $0x68] sm:$0xff]
          %v3050 = vunpack.c.l.bf16 %v3048
          %v3051 = vunpack.c.h.bf16 %v3048
          %v3052 = vunpack.c.l.bf16 %v3049
          %v3053 = vunpack.c.h.bf16 %v3049
          %v3054 = vadd.f32 %v3044, %v3050
          %v3055 = vadd.f32 %v3045, %v3051
          %v3056 = vadd.f32 %v3046, %v3052
          %v3057 = vadd.f32 %v3047, %v3053
          %v3058 = vpack.c.bf16 %v3056, %v3054
          %v3059 = vpack.c.bf16 %v3057, %v3055
          %v3062 = vunpack.c.l.b16 %v3058
          %v3063 = vunpack.c.l.b16 %v3059
          %v3064 = vunpack.c.h.b16 %v3058
          %v3065 = vunpack.c.h.b16 %v3059
          %v3066 = vpack.c.b16 %v3063, %v3062
          %v3067 = vpack.c.b16 %v3065, %v3064
          %3070 = vst [vmem:[#allocation5 + $0x130] sm:$0xff] %v3066
          %3071 = vst [vmem:[#allocation5 + $0x170] sm:$0xff] %v3067
          %v3072 = vld [vmem:[#allocation3 + $0xe0] sm:$0xff]
          %v3073 = vld [vmem:[#allocation3 + $0xe8] sm:$0xff]
          %v3074 = vld [vmem:[#allocation3 + $0xf0] sm:$0xff]
          %v3075 = vld [vmem:[#allocation3 + $0xf8] sm:$0xff]
          %v3076 = vld [vmem:[%s2879 + $0x70] sm:$0xff]
          %v3077 = vld [vmem:[%s2879 + $0x78] sm:$0xff]
          %v3078 = vunpack.c.l.bf16 %v3076
          %v3079 = vunpack.c.h.bf16 %v3076
          %v3080 = vunpack.c.l.bf16 %v3077
          %v3081 = vunpack.c.h.bf16 %v3077
          %v3082 = vadd.f32 %v3072, %v3078
          %v3083 = vadd.f32 %v3073, %v3079
          %v3084 = vadd.f32 %v3074, %v3080
          %v3085 = vadd.f32 %v3075, %v3081
          %v3086 = vpack.c.bf16 %v3084, %v3082
          %v3087 = vpack.c.bf16 %v3085, %v3083
          %v3090 = vunpack.c.l.b16 %v3086
          %v3091 = vunpack.c.l.b16 %v3087
          %v3092 = vunpack.c.h.b16 %v3086
          %v3093 = vunpack.c.h.b16 %v3087
          %v3094 = vpack.c.b16 %v3091, %v3090
          %v3095 = vpack.c.b16 %v3093, %v3092
          %3098 = vst [vmem:[#allocation5 + $0x138] sm:$0xff] %v3094
          %3099 = vst [vmem:[#allocation5 + $0x178] sm:$0xff] %v3095
          %v3100 = vld [vmem:[#allocation3] sm:$0xff]
          %v3101 = vld [vmem:[#allocation3 + $0x8] sm:$0xff]
          %v3102 = vld [vmem:[#allocation3 + $0x10] sm:$0xff]
          %v3103 = vld [vmem:[#allocation3 + $0x18] sm:$0xff]
          %s3104 = scalar_lea.vmem [#allocation2], 384
          %v3105 = vld [vmem:[%s3104] sm:$0xff]
          %v3106 = vld [vmem:[%s3104 + $0x8] sm:$0xff]
          %v3107 = vunpack.c.l.bf16 %v3105
          %v3108 = vunpack.c.h.bf16 %v3105
          %v3109 = vunpack.c.l.bf16 %v3106
          %v3110 = vunpack.c.h.bf16 %v3106
          %v3111 = vadd.f32 %v3100, %v3107
          %v3112 = vadd.f32 %v3101, %v3108
          %v3113 = vadd.f32 %v3102, %v3109
          %v3114 = vadd.f32 %v3103, %v3110
          %v3115 = vpack.c.bf16 %v3113, %v3111
          %v3116 = vpack.c.bf16 %v3114, %v3112
          %v3119 = vunpack.c.l.b16 %v3115
          %v3120 = vunpack.c.l.b16 %v3116
          %v3121 = vunpack.c.h.b16 %v3115
          %v3122 = vunpack.c.h.b16 %v3116
          %v3123 = vpack.c.b16 %v3120, %v3119
          %v3124 = vpack.c.b16 %v3122, %v3121
          %3127 = vst [vmem:[#allocation5 + $0x180] sm:$0xff] %v3123
          %3128 = vst [vmem:[#allocation5 + $0x1c0] sm:$0xff] %v3124
          %v3129 = vld [vmem:[#allocation3 + $0x20] sm:$0xff]
          %v3130 = vld [vmem:[#allocation3 + $0x28] sm:$0xff]
          %v3131 = vld [vmem:[#allocation3 + $0x30] sm:$0xff]
          %v3132 = vld [vmem:[#allocation3 + $0x38] sm:$0xff]
          %v3133 = vld [vmem:[%s3104 + $0x10] sm:$0xff]
          %v3134 = vld [vmem:[%s3104 + $0x18] sm:$0xff]
          %v3135 = vunpack.c.l.bf16 %v3133
          %v3136 = vunpack.c.h.bf16 %v3133
          %v3137 = vunpack.c.l.bf16 %v3134
          %v3138 = vunpack.c.h.bf16 %v3134
          %v3139 = vadd.f32 %v3129, %v3135
          %v3140 = vadd.f32 %v3130, %v3136
          %v3141 = vadd.f32 %v3131, %v3137
          %v3142 = vadd.f32 %v3132, %v3138
          %v3143 = vpack.c.bf16 %v3141, %v3139
          %v3144 = vpack.c.bf16 %v3142, %v3140
          %v3147 = vunpack.c.l.b16 %v3143
          %v3148 = vunpack.c.l.b16 %v3144
          %v3149 = vunpack.c.h.b16 %v3143
          %v3150 = vunpack.c.h.b16 %v3144
          %v3151 = vpack.c.b16 %v3148, %v3147
          %v3152 = vpack.c.b16 %v3150, %v3149
          %3155 = vst [vmem:[#allocation5 + $0x188] sm:$0xff] %v3151
          %3156 = vst [vmem:[#allocation5 + $0x1c8] sm:$0xff] %v3152
          %v3157 = vld [vmem:[#allocation3 + $0x40] sm:$0xff]
          %v3158 = vld [vmem:[#allocation3 + $0x48] sm:$0xff]
          %v3159 = vld [vmem:[#allocation3 + $0x50] sm:$0xff]
          %v3160 = vld [vmem:[#allocation3 + $0x58] sm:$0xff]
          %v3161 = vld [vmem:[%s3104 + $0x20] sm:$0xff]
          %v3162 = vld [vmem:[%s3104 + $0x28] sm:$0xff]
          %v3163 = vunpack.c.l.bf16 %v3161
          %v3164 = vunpack.c.h.bf16 %v3161
          %v3165 = vunpack.c.l.bf16 %v3162
          %v3166 = vunpack.c.h.bf16 %v3162
          %v3167 = vadd.f32 %v3157, %v3163
          %v3168 = vadd.f32 %v3158, %v3164
          %v3169 = vadd.f32 %v3159, %v3165
          %v3170 = vadd.f32 %v3160, %v3166
          %v3171 = vpack.c.bf16 %v3169, %v3167
          %v3172 = vpack.c.bf16 %v3170, %v3168
          %v3175 = vunpack.c.l.b16 %v3171
          %v3176 = vunpack.c.l.b16 %v3172
          %v3177 = vunpack.c.h.b16 %v3171
          %v3178 = vunpack.c.h.b16 %v3172
          %v3179 = vpack.c.b16 %v3176, %v3175
          %v3180 = vpack.c.b16 %v3178, %v3177
          %3183 = vst [vmem:[#allocation5 + $0x190] sm:$0xff] %v3179
          %3184 = vst [vmem:[#allocation5 + $0x1d0] sm:$0xff] %v3180
          %v3185 = vld [vmem:[#allocation3 + $0x60] sm:$0xff]
          %v3186 = vld [vmem:[#allocation3 + $0x68] sm:$0xff]
          %v3187 = vld [vmem:[#allocation3 + $0x70] sm:$0xff]
          %v3188 = vld [vmem:[#allocation3 + $0x78] sm:$0xff]
          %v3189 = vld [vmem:[%s3104 + $0x30] sm:$0xff]
          %v3190 = vld [vmem:[%s3104 + $0x38] sm:$0xff]
          %v3191 = vunpack.c.l.bf16 %v3189
          %v3192 = vunpack.c.h.bf16 %v3189
          %v3193 = vunpack.c.l.bf16 %v3190
          %v3194 = vunpack.c.h.bf16 %v3190
          %v3195 = vadd.f32 %v3185, %v3191
          %v3196 = vadd.f32 %v3186, %v3192
          %v3197 = vadd.f32 %v3187, %v3193
          %v3198 = vadd.f32 %v3188, %v3194
          %v3199 = vpack.c.bf16 %v3197, %v3195
          %v3200 = vpack.c.bf16 %v3198, %v3196
          %v3203 = vunpack.c.l.b16 %v3199
          %v3204 = vunpack.c.l.b16 %v3200
          %v3205 = vunpack.c.h.b16 %v3199
          %v3206 = vunpack.c.h.b16 %v3200
          %v3207 = vpack.c.b16 %v3204, %v3203
          %v3208 = vpack.c.b16 %v3206, %v3205
          %3211 = vst [vmem:[#allocation5 + $0x198] sm:$0xff] %v3207
          %3212 = vst [vmem:[#allocation5 + $0x1d8] sm:$0xff] %v3208
          %v3213 = vld [vmem:[#allocation3 + $0x80] sm:$0xff]
          %v3214 = vld [vmem:[#allocation3 + $0x88] sm:$0xff]
          %v3215 = vld [vmem:[#allocation3 + $0x90] sm:$0xff]
          %v3216 = vld [vmem:[#allocation3 + $0x98] sm:$0xff]
          %v3217 = vld [vmem:[%s3104 + $0x40] sm:$0xff]
          %v3218 = vld [vmem:[%s3104 + $0x48] sm:$0xff]
          %v3219 = vunpack.c.l.bf16 %v3217
          %v3220 = vunpack.c.h.bf16 %v3217
          %v3221 = vunpack.c.l.bf16 %v3218
          %v3222 = vunpack.c.h.bf16 %v3218
          %v3223 = vadd.f32 %v3213, %v3219
          %v3224 = vadd.f32 %v3214, %v3220
          %v3225 = vadd.f32 %v3215, %v3221
          %v3226 = vadd.f32 %v3216, %v3222
          %v3227 = vpack.c.bf16 %v3225, %v3223
          %v3228 = vpack.c.bf16 %v3226, %v3224
          %v3231 = vunpack.c.l.b16 %v3227
          %v3232 = vunpack.c.l.b16 %v3228
          %v3233 = vunpack.c.h.b16 %v3227
          %v3234 = vunpack.c.h.b16 %v3228
          %v3235 = vpack.c.b16 %v3232, %v3231
          %v3236 = vpack.c.b16 %v3234, %v3233
          %3239 = vst [vmem:[#allocation5 + $0x1a0] sm:$0xff] %v3235
          %3240 = vst [vmem:[#allocation5 + $0x1e0] sm:$0xff] %v3236
          %v3241 = vld [vmem:[#allocation3 + $0xa0] sm:$0xff]
          %v3242 = vld [vmem:[#allocation3 + $0xa8] sm:$0xff]
          %v3243 = vld [vmem:[#allocation3 + $0xb0] sm:$0xff]
          %v3244 = vld [vmem:[#allocation3 + $0xb8] sm:$0xff]
          %v3245 = vld [vmem:[%s3104 + $0x50] sm:$0xff]
          %v3246 = vld [vmem:[%s3104 + $0x58] sm:$0xff]
          %v3247 = vunpack.c.l.bf16 %v3245
          %v3248 = vunpack.c.h.bf16 %v3245
          %v3249 = vunpack.c.l.bf16 %v3246
          %v3250 = vunpack.c.h.bf16 %v3246
          %v3251 = vadd.f32 %v3241, %v3247
          %v3252 = vadd.f32 %v3242, %v3248
          %v3253 = vadd.f32 %v3243, %v3249
          %v3254 = vadd.f32 %v3244, %v3250
          %v3255 = vpack.c.bf16 %v3253, %v3251
          %v3256 = vpack.c.bf16 %v3254, %v3252
          %v3259 = vunpack.c.l.b16 %v3255
          %v3260 = vunpack.c.l.b16 %v3256
          %v3261 = vunpack.c.h.b16 %v3255
          %v3262 = vunpack.c.h.b16 %v3256
          %v3263 = vpack.c.b16 %v3260, %v3259
          %v3264 = vpack.c.b16 %v3262, %v3261
          %3267 = vst [vmem:[#allocation5 + $0x1a8] sm:$0xff] %v3263
          %3268 = vst [vmem:[#allocation5 + $0x1e8] sm:$0xff] %v3264
          %v3269 = vld [vmem:[#allocation3 + $0xc0] sm:$0xff]
          %v3270 = vld [vmem:[#allocation3 + $0xc8] sm:$0xff]
          %v3271 = vld [vmem:[#allocation3 + $0xd0] sm:$0xff]
          %v3272 = vld [vmem:[#allocation3 + $0xd8] sm:$0xff]
          %v3273 = vld [vmem:[%s3104 + $0x60] sm:$0xff]
          %v3274 = vld [vmem:[%s3104 + $0x68] sm:$0xff]
          %v3275 = vunpack.c.l.bf16 %v3273
          %v3276 = vunpack.c.h.bf16 %v3273
          %v3277 = vunpack.c.l.bf16 %v3274
          %v3278 = vunpack.c.h.bf16 %v3274
          %v3279 = vadd.f32 %v3269, %v3275
          %v3280 = vadd.f32 %v3270, %v3276
          %v3281 = vadd.f32 %v3271, %v3277
          %v3282 = vadd.f32 %v3272, %v3278
          %v3283 = vpack.c.bf16 %v3281, %v3279
          %v3284 = vpack.c.bf16 %v3282, %v3280
          %v3287 = vunpack.c.l.b16 %v3283
          %v3288 = vunpack.c.l.b16 %v3284
          %v3289 = vunpack.c.h.b16 %v3283
          %v3290 = vunpack.c.h.b16 %v3284
          %v3291 = vpack.c.b16 %v3288, %v3287
          %v3292 = vpack.c.b16 %v3290, %v3289
          %3295 = vst [vmem:[#allocation5 + $0x1b0] sm:$0xff] %v3291
          %3296 = vst [vmem:[#allocation5 + $0x1f0] sm:$0xff] %v3292
          %v3297 = vld [vmem:[#allocation3 + $0xe0] sm:$0xff]
          %v3298 = vld [vmem:[#allocation3 + $0xe8] sm:$0xff]
          %v3299 = vld [vmem:[#allocation3 + $0xf0] sm:$0xff]
          %v3300 = vld [vmem:[#allocation3 + $0xf8] sm:$0xff]
          %v3301 = vld [vmem:[%s3104 + $0x70] sm:$0xff]
          %v3302 = vld [vmem:[%s3104 + $0x78] sm:$0xff]
          %v3303 = vunpack.c.l.bf16 %v3301
          %v3304 = vunpack.c.h.bf16 %v3301
          %v3305 = vunpack.c.l.bf16 %v3302
          %v3306 = vunpack.c.h.bf16 %v3302
          %v3307 = vadd.f32 %v3297, %v3303
          %v3308 = vadd.f32 %v3298, %v3304
          %v3309 = vadd.f32 %v3299, %v3305
          %v3310 = vadd.f32 %v3300, %v3306
          %v3311 = vpack.c.bf16 %v3309, %v3307
          %v3312 = vpack.c.bf16 %v3310, %v3308
          %v3315 = vunpack.c.l.b16 %v3311
          %v3316 = vunpack.c.l.b16 %v3312
          %v3317 = vunpack.c.h.b16 %v3311
          %v3318 = vunpack.c.h.b16 %v3312
          %v3319 = vpack.c.b16 %v3316, %v3315
          %v3320 = vpack.c.b16 %v3318, %v3317
          %3323 = vst [vmem:[#allocation5 + $0x1b8] sm:$0xff] %v3319
          %3324 = vst [vmem:[#allocation5 + $0x1f8] sm:$0xff] %v3320
          %v3325 = vld [vmem:[#allocation3] sm:$0xff]
          %v3326 = vld [vmem:[#allocation3 + $0x8] sm:$0xff]
          %v3327 = vld [vmem:[#allocation3 + $0x10] sm:$0xff]
          %v3328 = vld [vmem:[#allocation3 + $0x18] sm:$0xff]
          %s3329 = scalar_lea.vmem [#allocation2], 512
          %v3330 = vld [vmem:[%s3329] sm:$0xff]
          %v3331 = vld [vmem:[%s3329 + $0x8] sm:$0xff]
          %v3332 = vunpack.c.l.bf16 %v3330
          %v3333 = vunpack.c.h.bf16 %v3330
          %v3334 = vunpack.c.l.bf16 %v3331
          %v3335 = vunpack.c.h.bf16 %v3331
          %v3336 = vadd.f32 %v3325, %v3332
          %v3337 = vadd.f32 %v3326, %v3333
          %v3338 = vadd.f32 %v3327, %v3334
          %v3339 = vadd.f32 %v3328, %v3335
          %v3340 = vpack.c.bf16 %v3338, %v3336
          %v3341 = vpack.c.bf16 %v3339, %v3337
          %v3344 = vunpack.c.l.b16 %v3340
          %v3345 = vunpack.c.l.b16 %v3341
          %v3346 = vunpack.c.h.b16 %v3340
          %v3347 = vunpack.c.h.b16 %v3341
          %v3348 = vpack.c.b16 %v3345, %v3344
          %v3349 = vpack.c.b16 %v3347, %v3346
          %3352 = vst [vmem:[#allocation5 + $0x200] sm:$0xff] %v3348
          %3353 = vst [vmem:[#allocation5 + $0x240] sm:$0xff] %v3349
          %v3354 = vld [vmem:[#allocation3 + $0x20] sm:$0xff]
          %v3355 = vld [vmem:[#allocation3 + $0x28] sm:$0xff]
          %v3356 = vld [vmem:[#allocation3 + $0x30] sm:$0xff]
          %v3357 = vld [vmem:[#allocation3 + $0x38] sm:$0xff]
          %v3358 = vld [vmem:[%s3329 + $0x10] sm:$0xff]
          %v3359 = vld [vmem:[%s3329 + $0x18] sm:$0xff]
          %v3360 = vunpack.c.l.bf16 %v3358
          %v3361 = vunpack.c.h.bf16 %v3358
          %v3362 = vunpack.c.l.bf16 %v3359
          %v3363 = vunpack.c.h.bf16 %v3359
          %v3364 = vadd.f32 %v3354, %v3360
          %v3365 = vadd.f32 %v3355, %v3361
          %v3366 = vadd.f32 %v3356, %v3362
          %v3367 = vadd.f32 %v3357, %v3363
          %v3368 = vpack.c.bf16 %v3366, %v3364
          %v3369 = vpack.c.bf16 %v3367, %v3365
          %v3372 = vunpack.c.l.b16 %v3368
          %v3373 = vunpack.c.l.b16 %v3369
          %v3374 = vunpack.c.h.b16 %v3368
          %v3375 = vunpack.c.h.b16 %v3369
          %v3376 = vpack.c.b16 %v3373, %v3372
          %v3377 = vpack.c.b16 %v3375, %v3374
          %3380 = vst [vmem:[#allocation5 + $0x208] sm:$0xff] %v3376
          %3381 = vst [vmem:[#allocation5 + $0x248] sm:$0xff] %v3377
          %v3382 = vld [vmem:[#allocation3 + $0x40] sm:$0xff]
          %v3383 = vld [vmem:[#allocation3 + $0x48] sm:$0xff]
          %v3384 = vld [vmem:[#allocation3 + $0x50] sm:$0xff]
          %v3385 = vld [vmem:[#allocation3 + $0x58] sm:$0xff]
          %v3386 = vld [vmem:[%s3329 + $0x20] sm:$0xff]
          %v3387 = vld [vmem:[%s3329 + $0x28] sm:$0xff]
          %v3388 = vunpack.c.l.bf16 %v3386
          %v3389 = vunpack.c.h.bf16 %v3386
          %v3390 = vunpack.c.l.bf16 %v3387
          %v3391 = vunpack.c.h.bf16 %v3387
          %v3392 = vadd.f32 %v3382, %v3388
          %v3393 = vadd.f32 %v3383, %v3389
          %v3394 = vadd.f32 %v3384, %v3390
          %v3395 = vadd.f32 %v3385, %v3391
          %v3396 = vpack.c.bf16 %v3394, %v3392
          %v3397 = vpack.c.bf16 %v3395, %v3393
          %v3400 = vunpack.c.l.b16 %v3396
          %v3401 = vunpack.c.l.b16 %v3397
          %v3402 = vunpack.c.h.b16 %v3396
          %v3403 = vunpack.c.h.b16 %v3397
          %v3404 = vpack.c.b16 %v3401, %v3400
          %v3405 = vpack.c.b16 %v3403, %v3402
          %3408 = vst [vmem:[#allocation5 + $0x210] sm:$0xff] %v3404
          %3409 = vst [vmem:[#allocation5 + $0x250] sm:$0xff] %v3405
          %v3410 = vld [vmem:[#allocation3 + $0x60] sm:$0xff]
          %v3411 = vld [vmem:[#allocation3 + $0x68] sm:$0xff]
          %v3412 = vld [vmem:[#allocation3 + $0x70] sm:$0xff]
          %v3413 = vld [vmem:[#allocation3 + $0x78] sm:$0xff]
          %v3414 = vld [vmem:[%s3329 + $0x30] sm:$0xff]
          %v3415 = vld [vmem:[%s3329 + $0x38] sm:$0xff]
          %v3416 = vunpack.c.l.bf16 %v3414
          %v3417 = vunpack.c.h.bf16 %v3414
          %v3418 = vunpack.c.l.bf16 %v3415
          %v3419 = vunpack.c.h.bf16 %v3415
          %v3420 = vadd.f32 %v3410, %v3416
          %v3421 = vadd.f32 %v3411, %v3417
          %v3422 = vadd.f32 %v3412, %v3418
          %v3423 = vadd.f32 %v3413, %v3419
          %v3424 = vpack.c.bf16 %v3422, %v3420
          %v3425 = vpack.c.bf16 %v3423, %v3421
          %v3428 = vunpack.c.l.b16 %v3424
          %v3429 = vunpack.c.l.b16 %v3425
          %v3430 = vunpack.c.h.b16 %v3424
          %v3431 = vunpack.c.h.b16 %v3425
          %v3432 = vpack.c.b16 %v3429, %v3428
          %v3433 = vpack.c.b16 %v3431, %v3430
          %3436 = vst [vmem:[#allocation5 + $0x218] sm:$0xff] %v3432
          %3437 = vst [vmem:[#allocation5 + $0x258] sm:$0xff] %v3433
          %v3438 = vld [vmem:[#allocation3 + $0x80] sm:$0xff]
          %v3439 = vld [vmem:[#allocation3 + $0x88] sm:$0xff]
          %v3440 = vld [vmem:[#allocation3 + $0x90] sm:$0xff]
          %v3441 = vld [vmem:[#allocation3 + $0x98] sm:$0xff]
          %v3442 = vld [vmem:[%s3329 + $0x40] sm:$0xff]
          %v3443 = vld [vmem:[%s3329 + $0x48] sm:$0xff]
          %v3444 = vunpack.c.l.bf16 %v3442
          %v3445 = vunpack.c.h.bf16 %v3442
          %v3446 = vunpack.c.l.bf16 %v3443
          %v3447 = vunpack.c.h.bf16 %v3443
          %v3448 = vadd.f32 %v3438, %v3444
          %v3449 = vadd.f32 %v3439, %v3445
          %v3450 = vadd.f32 %v3440, %v3446
          %v3451 = vadd.f32 %v3441, %v3447
          %v3452 = vpack.c.bf16 %v3450, %v3448
          %v3453 = vpack.c.bf16 %v3451, %v3449
          %v3456 = vunpack.c.l.b16 %v3452
          %v3457 = vunpack.c.l.b16 %v3453
          %v3458 = vunpack.c.h.b16 %v3452
          %v3459 = vunpack.c.h.b16 %v3453
          %v3460 = vpack.c.b16 %v3457, %v3456
          %v3461 = vpack.c.b16 %v3459, %v3458
          %3464 = vst [vmem:[#allocation5 + $0x220] sm:$0xff] %v3460
          %3465 = vst [vmem:[#allocation5 + $0x260] sm:$0xff] %v3461
          %v3466 = vld [vmem:[#allocation3 + $0xa0] sm:$0xff]
          %v3467 = vld [vmem:[#allocation3 + $0xa8] sm:$0xff]
          %v3468 = vld [vmem:[#allocation3 + $0xb0] sm:$0xff]
          %v3469 = vld [vmem:[#allocation3 + $0xb8] sm:$0xff]
          %v3470 = vld [vmem:[%s3329 + $0x50] sm:$0xff]
          %v3471 = vld [vmem:[%s3329 + $0x58] sm:$0xff]
          %v3472 = vunpack.c.l.bf16 %v3470
          %v3473 = vunpack.c.h.bf16 %v3470
          %v3474 = vunpack.c.l.bf16 %v3471
          %v3475 = vunpack.c.h.bf16 %v3471
          %v3476 = vadd.f32 %v3466, %v3472
          %v3477 = vadd.f32 %v3467, %v3473
          %v3478 = vadd.f32 %v3468, %v3474
          %v3479 = vadd.f32 %v3469, %v3475
          %v3480 = vpack.c.bf16 %v3478, %v3476
          %v3481 = vpack.c.bf16 %v3479, %v3477
          %v3484 = vunpack.c.l.b16 %v3480
          %v3485 = vunpack.c.l.b16 %v3481
          %v3486 = vunpack.c.h.b16 %v3480
          %v3487 = vunpack.c.h.b16 %v3481
          %v3488 = vpack.c.b16 %v3485, %v3484
          %v3489 = vpack.c.b16 %v3487, %v3486
          %3492 = vst [vmem:[#allocation5 + $0x228] sm:$0xff] %v3488
          %3493 = vst [vmem:[#allocation5 + $0x268] sm:$0xff] %v3489
          %v3494 = vld [vmem:[#allocation3 + $0xc0] sm:$0xff]
          %v3495 = vld [vmem:[#allocation3 + $0xc8] sm:$0xff]
          %v3496 = vld [vmem:[#allocation3 + $0xd0] sm:$0xff]
          %v3497 = vld [vmem:[#allocation3 + $0xd8] sm:$0xff]
          %v3498 = vld [vmem:[%s3329 + $0x60] sm:$0xff]
          %v3499 = vld [vmem:[%s3329 + $0x68] sm:$0xff]
          %v3500 = vunpack.c.l.bf16 %v3498
          %v3501 = vunpack.c.h.bf16 %v3498
          %v3502 = vunpack.c.l.bf16 %v3499
          %v3503 = vunpack.c.h.bf16 %v3499
          %v3504 = vadd.f32 %v3494, %v3500
          %v3505 = vadd.f32 %v3495, %v3501
          %v3506 = vadd.f32 %v3496, %v3502
          %v3507 = vadd.f32 %v3497, %v3503
          %v3508 = vpack.c.bf16 %v3506, %v3504
          %v3509 = vpack.c.bf16 %v3507, %v3505
          %v3512 = vunpack.c.l.b16 %v3508
          %v3513 = vunpack.c.l.b16 %v3509
          %v3514 = vunpack.c.h.b16 %v3508
          %v3515 = vunpack.c.h.b16 %v3509
          %v3516 = vpack.c.b16 %v3513, %v3512
          %v3517 = vpack.c.b16 %v3515, %v3514
          %3520 = vst [vmem:[#allocation5 + $0x230] sm:$0xff] %v3516
          %3521 = vst [vmem:[#allocation5 + $0x270] sm:$0xff] %v3517
          %v3522 = vld [vmem:[#allocation3 + $0xe0] sm:$0xff]
          %v3523 = vld [vmem:[#allocation3 + $0xe8] sm:$0xff]
          %v3524 = vld [vmem:[#allocation3 + $0xf0] sm:$0xff]
          %v3525 = vld [vmem:[#allocation3 + $0xf8] sm:$0xff]
          %v3526 = vld [vmem:[%s3329 + $0x70] sm:$0xff]
          %v3527 = vld [vmem:[%s3329 + $0x78] sm:$0xff]
          %v3528 = vunpack.c.l.bf16 %v3526
          %v3529 = vunpack.c.h.bf16 %v3526
          %v3530 = vunpack.c.l.bf16 %v3527
          %v3531 = vunpack.c.h.bf16 %v3527
          %v3532 = vadd.f32 %v3522, %v3528
          %v3533 = vadd.f32 %v3523, %v3529
          %v3534 = vadd.f32 %v3524, %v3530
          %v3535 = vadd.f32 %v3525, %v3531
          %v3536 = vpack.c.bf16 %v3534, %v3532
          %v3537 = vpack.c.bf16 %v3535, %v3533
          %v3540 = vunpack.c.l.b16 %v3536
          %v3541 = vunpack.c.l.b16 %v3537
          %v3542 = vunpack.c.h.b16 %v3536
          %v3543 = vunpack.c.h.b16 %v3537
          %v3544 = vpack.c.b16 %v3541, %v3540
          %v3545 = vpack.c.b16 %v3543, %v3542
          %3548 = vst [vmem:[#allocation5 + $0x238] sm:$0xff] %v3544
          %3549 = vst [vmem:[#allocation5 + $0x278] sm:$0xff] %v3545
          %v3550 = vld [vmem:[#allocation3] sm:$0xff]
          %v3551 = vld [vmem:[#allocation3 + $0x8] sm:$0xff]
          %v3552 = vld [vmem:[#allocation3 + $0x10] sm:$0xff]
          %v3553 = vld [vmem:[#allocation3 + $0x18] sm:$0xff]
          %s3554 = scalar_lea.vmem [#allocation2], 640
          %v3555 = vld [vmem:[%s3554] sm:$0xff]
          %v3556 = vld [vmem:[%s3554 + $0x8] sm:$0xff]
          %v3557 = vunpack.c.l.bf16 %v3555
          %v3558 = vunpack.c.h.bf16 %v3555
          %v3559 = vunpack.c.l.bf16 %v3556
          %v3560 = vunpack.c.h.bf16 %v3556
          %v3561 = vadd.f32 %v3550, %v3557
          %v3562 = vadd.f32 %v3551, %v3558
          %v3563 = vadd.f32 %v3552, %v3559
          %v3564 = vadd.f32 %v3553, %v3560
          %v3565 = vpack.c.bf16 %v3563, %v3561
          %v3566 = vpack.c.bf16 %v3564, %v3562
          %v3569 = vunpack.c.l.b16 %v3565
          %v3570 = vunpack.c.l.b16 %v3566
          %v3571 = vunpack.c.h.b16 %v3565
          %v3572 = vunpack.c.h.b16 %v3566
          %v3573 = vpack.c.b16 %v3570, %v3569
          %v3574 = vpack.c.b16 %v3572, %v3571
          %3577 = vst [vmem:[#allocation5 + $0x280] sm:$0xff] %v3573
          %3578 = vst [vmem:[#allocation5 + $0x2c0] sm:$0xff] %v3574
          %v3579 = vld [vmem:[#allocation3 + $0x20] sm:$0xff]
          %v3580 = vld [vmem:[#allocation3 + $0x28] sm:$0xff]
          %v3581 = vld [vmem:[#allocation3 + $0x30] sm:$0xff]
          %v3582 = vld [vmem:[#allocation3 + $0x38] sm:$0xff]
          %v3583 = vld [vmem:[%s3554 + $0x10] sm:$0xff]
          %v3584 = vld [vmem:[%s3554 + $0x18] sm:$0xff]
          %v3585 = vunpack.c.l.bf16 %v3583
          %v3586 = vunpack.c.h.bf16 %v3583
          %v3587 = vunpack.c.l.bf16 %v3584
          %v3588 = vunpack.c.h.bf16 %v3584
          %v3589 = vadd.f32 %v3579, %v3585
          %v3590 = vadd.f32 %v3580, %v3586
          %v3591 = vadd.f32 %v3581, %v3587
          %v3592 = vadd.f32 %v3582, %v3588
          %v3593 = vpack.c.bf16 %v3591, %v3589
          %v3594 = vpack.c.bf16 %v3592, %v3590
          %v3597 = vunpack.c.l.b16 %v3593
          %v3598 = vunpack.c.l.b16 %v3594
          %v3599 = vunpack.c.h.b16 %v3593
          %v3600 = vunpack.c.h.b16 %v3594
          %v3601 = vpack.c.b16 %v3598, %v3597
          %v3602 = vpack.c.b16 %v3600, %v3599
          %3605 = vst [vmem:[#allocation5 + $0x288] sm:$0xff] %v3601
          %3606 = vst [vmem:[#allocation5 + $0x2c8] sm:$0xff] %v3602
          %v3607 = vld [vmem:[#allocation3 + $0x40] sm:$0xff]
          %v3608 = vld [vmem:[#allocation3 + $0x48] sm:$0xff]
          %v3609 = vld [vmem:[#allocation3 + $0x50] sm:$0xff]
          %v3610 = vld [vmem:[#allocation3 + $0x58] sm:$0xff]
          %v3611 = vld [vmem:[%s3554 + $0x20] sm:$0xff]
          %v3612 = vld [vmem:[%s3554 + $0x28] sm:$0xff]
          %v3613 = vunpack.c.l.bf16 %v3611
          %v3614 = vunpack.c.h.bf16 %v3611
          %v3615 = vunpack.c.l.bf16 %v3612
          %v3616 = vunpack.c.h.bf16 %v3612
          %v3617 = vadd.f32 %v3607, %v3613
          %v3618 = vadd.f32 %v3608, %v3614
          %v3619 = vadd.f32 %v3609, %v3615
          %v3620 = vadd.f32 %v3610, %v3616
          %v3621 = vpack.c.bf16 %v3619, %v3617
          %v3622 = vpack.c.bf16 %v3620, %v3618
          %v3625 = vunpack.c.l.b16 %v3621
          %v3626 = vunpack.c.l.b16 %v3622
          %v3627 = vunpack.c.h.b16 %v3621
          %v3628 = vunpack.c.h.b16 %v3622
          %v3629 = vpack.c.b16 %v3626, %v3625
          %v3630 = vpack.c.b16 %v3628, %v3627
          %3633 = vst [vmem:[#allocation5 + $0x290] sm:$0xff] %v3629
          %3634 = vst [vmem:[#allocation5 + $0x2d0] sm:$0xff] %v3630
          %v3635 = vld [vmem:[#allocation3 + $0x60] sm:$0xff]
          %v3636 = vld [vmem:[#allocation3 + $0x68] sm:$0xff]
          %v3637 = vld [vmem:[#allocation3 + $0x70] sm:$0xff]
          %v3638 = vld [vmem:[#allocation3 + $0x78] sm:$0xff]
          %v3639 = vld [vmem:[%s3554 + $0x30] sm:$0xff]
          %v3640 = vld [vmem:[%s3554 + $0x38] sm:$0xff]
          %v3641 = vunpack.c.l.bf16 %v3639
          %v3642 = vunpack.c.h.bf16 %v3639
          %v3643 = vunpack.c.l.bf16 %v3640
          %v3644 = vunpack.c.h.bf16 %v3640
          %v3645 = vadd.f32 %v3635, %v3641
          %v3646 = vadd.f32 %v3636, %v3642
          %v3647 = vadd.f32 %v3637, %v3643
          %v3648 = vadd.f32 %v3638, %v3644
          %v3649 = vpack.c.bf16 %v3647, %v3645
          %v3650 = vpack.c.bf16 %v3648, %v3646
          %v3653 = vunpack.c.l.b16 %v3649
          %v3654 = vunpack.c.l.b16 %v3650
          %v3655 = vunpack.c.h.b16 %v3649
          %v3656 = vunpack.c.h.b16 %v3650
          %v3657 = vpack.c.b16 %v3654, %v3653
          %v3658 = vpack.c.b16 %v3656, %v3655
          %3661 = vst [vmem:[#allocation5 + $0x298] sm:$0xff] %v3657
          %3662 = vst [vmem:[#allocation5 + $0x2d8] sm:$0xff] %v3658
          %v3663 = vld [vmem:[#allocation3 + $0x80] sm:$0xff]
          %v3664 = vld [vmem:[#allocation3 + $0x88] sm:$0xff]
          %v3665 = vld [vmem:[#allocation3 + $0x90] sm:$0xff]
          %v3666 = vld [vmem:[#allocation3 + $0x98] sm:$0xff]
          %v3667 = vld [vmem:[%s3554 + $0x40] sm:$0xff]
          %v3668 = vld [vmem:[%s3554 + $0x48] sm:$0xff]
          %v3669 = vunpack.c.l.bf16 %v3667
          %v3670 = vunpack.c.h.bf16 %v3667
          %v3671 = vunpack.c.l.bf16 %v3668
          %v3672 = vunpack.c.h.bf16 %v3668
          %v3673 = vadd.f32 %v3663, %v3669
          %v3674 = vadd.f32 %v3664, %v3670
          %v3675 = vadd.f32 %v3665, %v3671
          %v3676 = vadd.f32 %v3666, %v3672
          %v3677 = vpack.c.bf16 %v3675, %v3673
          %v3678 = vpack.c.bf16 %v3676, %v3674
          %v3681 = vunpack.c.l.b16 %v3677
          %v3682 = vunpack.c.l.b16 %v3678
          %v3683 = vunpack.c.h.b16 %v3677
          %v3684 = vunpack.c.h.b16 %v3678
          %v3685 = vpack.c.b16 %v3682, %v3681
          %v3686 = vpack.c.b16 %v3684, %v3683
          %3689 = vst [vmem:[#allocation5 + $0x2a0] sm:$0xff] %v3685
          %3690 = vst [vmem:[#allocation5 + $0x2e0] sm:$0xff] %v3686
          %v3691 = vld [vmem:[#allocation3 + $0xa0] sm:$0xff]
          %v3692 = vld [vmem:[#allocation3 + $0xa8] sm:$0xff]
          %v3693 = vld [vmem:[#allocation3 + $0xb0] sm:$0xff]
          %v3694 = vld [vmem:[#allocation3 + $0xb8] sm:$0xff]
          %v3695 = vld [vmem:[%s3554 + $0x50] sm:$0xff]
          %v3696 = vld [vmem:[%s3554 + $0x58] sm:$0xff]
          %v3697 = vunpack.c.l.bf16 %v3695
          %v3698 = vunpack.c.h.bf16 %v3695
          %v3699 = vunpack.c.l.bf16 %v3696
          %v3700 = vunpack.c.h.bf16 %v3696
          %v3701 = vadd.f32 %v3691, %v3697
          %v3702 = vadd.f32 %v3692, %v3698
          %v3703 = vadd.f32 %v3693, %v3699
          %v3704 = vadd.f32 %v3694, %v3700
          %v3705 = vpack.c.bf16 %v3703, %v3701
          %v3706 = vpack.c.bf16 %v3704, %v3702
          %v3709 = vunpack.c.l.b16 %v3705
          %v3710 = vunpack.c.l.b16 %v3706
          %v3711 = vunpack.c.h.b16 %v3705
          %v3712 = vunpack.c.h.b16 %v3706
          %v3713 = vpack.c.b16 %v3710, %v3709
          %v3714 = vpack.c.b16 %v3712, %v3711
          %3717 = vst [vmem:[#allocation5 + $0x2a8] sm:$0xff] %v3713
          %3718 = vst [vmem:[#allocation5 + $0x2e8] sm:$0xff] %v3714
          %v3719 = vld [vmem:[#allocation3 + $0xc0] sm:$0xff]
          %v3720 = vld [vmem:[#allocation3 + $0xc8] sm:$0xff]
          %v3721 = vld [vmem:[#allocation3 + $0xd0] sm:$0xff]
          %v3722 = vld [vmem:[#allocation3 + $0xd8] sm:$0xff]
          %v3723 = vld [vmem:[%s3554 + $0x60] sm:$0xff]
          %v3724 = vld [vmem:[%s3554 + $0x68] sm:$0xff]
          %v3725 = vunpack.c.l.bf16 %v3723
          %v3726 = vunpack.c.h.bf16 %v3723
          %v3727 = vunpack.c.l.bf16 %v3724
          %v3728 = vunpack.c.h.bf16 %v3724
          %v3729 = vadd.f32 %v3719, %v3725
          %v3730 = vadd.f32 %v3720, %v3726
          %v3731 = vadd.f32 %v3721, %v3727
          %v3732 = vadd.f32 %v3722, %v3728
          %v3733 = vpack.c.bf16 %v3731, %v3729
          %v3734 = vpack.c.bf16 %v3732, %v3730
          %v3737 = vunpack.c.l.b16 %v3733
          %v3738 = vunpack.c.l.b16 %v3734
          %v3739 = vunpack.c.h.b16 %v3733
          %v3740 = vunpack.c.h.b16 %v3734
          %v3741 = vpack.c.b16 %v3738, %v3737
          %v3742 = vpack.c.b16 %v3740, %v3739
          %3745 = vst [vmem:[#allocation5 + $0x2b0] sm:$0xff] %v3741
          %3746 = vst [vmem:[#allocation5 + $0x2f0] sm:$0xff] %v3742
          %v3747 = vld [vmem:[#allocation3 + $0xe0] sm:$0xff]
          %v3748 = vld [vmem:[#allocation3 + $0xe8] sm:$0xff]
          %v3749 = vld [vmem:[#allocation3 + $0xf0] sm:$0xff]
          %v3750 = vld [vmem:[#allocation3 + $0xf8] sm:$0xff]
          %v3751 = vld [vmem:[%s3554 + $0x70] sm:$0xff]
          %v3752 = vld [vmem:[%s3554 + $0x78] sm:$0xff]
          %v3753 = vunpack.c.l.bf16 %v3751
          %v3754 = vunpack.c.h.bf16 %v3751
          %v3755 = vunpack.c.l.bf16 %v3752
          %v3756 = vunpack.c.h.bf16 %v3752
          %v3757 = vadd.f32 %v3747, %v3753
          %v3758 = vadd.f32 %v3748, %v3754
          %v3759 = vadd.f32 %v3749, %v3755
          %v3760 = vadd.f32 %v3750, %v3756
          %v3761 = vpack.c.bf16 %v3759, %v3757
          %v3762 = vpack.c.bf16 %v3760, %v3758
          %v3765 = vunpack.c.l.b16 %v3761
          %v3766 = vunpack.c.l.b16 %v3762
          %v3767 = vunpack.c.h.b16 %v3761
          %v3768 = vunpack.c.h.b16 %v3762
          %v3769 = vpack.c.b16 %v3766, %v3765
          %v3770 = vpack.c.b16 %v3768, %v3767
          %3773 = vst [vmem:[#allocation5 + $0x2b8] sm:$0xff] %v3769
          %3774 = vst [vmem:[#allocation5 + $0x2f8] sm:$0xff] %v3770
          %v3775 = vld [vmem:[#allocation3] sm:$0xff]
          %v3776 = vld [vmem:[#allocation3 + $0x8] sm:$0xff]
          %v3777 = vld [vmem:[#allocation3 + $0x10] sm:$0xff]
          %v3778 = vld [vmem:[#allocation3 + $0x18] sm:$0xff]
          %s3779 = scalar_lea.vmem [#allocation2], 768
          %v3780 = vld [vmem:[%s3779] sm:$0xff]
          %v3781 = vld [vmem:[%s3779 + $0x8] sm:$0xff]
          %v3782 = vunpack.c.l.bf16 %v3780
          %v3783 = vunpack.c.h.bf16 %v3780
          %v3784 = vunpack.c.l.bf16 %v3781
          %v3785 = vunpack.c.h.bf16 %v3781
          %v3786 = vadd.f32 %v3775, %v3782
          %v3787 = vadd.f32 %v3776, %v3783
          %v3788 = vadd.f32 %v3777, %v3784
          %v3789 = vadd.f32 %v3778, %v3785
          %v3790 = vpack.c.bf16 %v3788, %v3786
          %v3791 = vpack.c.bf16 %v3789, %v3787
          %v3794 = vunpack.c.l.b16 %v3790
          %v3795 = vunpack.c.l.b16 %v3791
          %v3796 = vunpack.c.h.b16 %v3790
          %v3797 = vunpack.c.h.b16 %v3791
          %v3798 = vpack.c.b16 %v3795, %v3794
          %v3799 = vpack.c.b16 %v3797, %v3796
          %3802 = vst [vmem:[#allocation5 + $0x300] sm:$0xff] %v3798
          %3803 = vst [vmem:[#allocation5 + $0x340] sm:$0xff] %v3799
          %v3804 = vld [vmem:[#allocation3 + $0x20] sm:$0xff]
          %v3805 = vld [vmem:[#allocation3 + $0x28] sm:$0xff]
          %v3806 = vld [vmem:[#allocation3 + $0x30] sm:$0xff]
          %v3807 = vld [vmem:[#allocation3 + $0x38] sm:$0xff]
          %v3808 = vld [vmem:[%s3779 + $0x10] sm:$0xff]
          %v3809 = vld [vmem:[%s3779 + $0x18] sm:$0xff]
          %v3810 = vunpack.c.l.bf16 %v3808
          %v3811 = vunpack.c.h.bf16 %v3808
          %v3812 = vunpack.c.l.bf16 %v3809
          %v3813 = vunpack.c.h.bf16 %v3809
          %v3814 = vadd.f32 %v3804, %v3810
          %v3815 = vadd.f32 %v3805, %v3811
          %v3816 = vadd.f32 %v3806, %v3812
          %v3817 = vadd.f32 %v3807, %v3813
          %v3818 = vpack.c.bf16 %v3816, %v3814
          %v3819 = vpack.c.bf16 %v3817, %v3815
          %v3822 = vunpack.c.l.b16 %v3818
          %v3823 = vunpack.c.l.b16 %v3819
          %v3824 = vunpack.c.h.b16 %v3818
          %v3825 = vunpack.c.h.b16 %v3819
          %v3826 = vpack.c.b16 %v3823, %v3822
          %v3827 = vpack.c.b16 %v3825, %v3824
          %3830 = vst [vmem:[#allocation5 + $0x308] sm:$0xff] %v3826
          %3831 = vst [vmem:[#allocation5 + $0x348] sm:$0xff] %v3827
          %v3832 = vld [vmem:[#allocation3 + $0x40] sm:$0xff]
          %v3833 = vld [vmem:[#allocation3 + $0x48] sm:$0xff]
          %v3834 = vld [vmem:[#allocation3 + $0x50] sm:$0xff]
          %v3835 = vld [vmem:[#allocation3 + $0x58] sm:$0xff]
          %v3836 = vld [vmem:[%s3779 + $0x20] sm:$0xff]
          %v3837 = vld [vmem:[%s3779 + $0x28] sm:$0xff]
          %v3838 = vunpack.c.l.bf16 %v3836
          %v3839 = vunpack.c.h.bf16 %v3836
          %v3840 = vunpack.c.l.bf16 %v3837
          %v3841 = vunpack.c.h.bf16 %v3837
          %v3842 = vadd.f32 %v3832, %v3838
          %v3843 = vadd.f32 %v3833, %v3839
          %v3844 = vadd.f32 %v3834, %v3840
          %v3845 = vadd.f32 %v3835, %v3841
          %v3846 = vpack.c.bf16 %v3844, %v3842
          %v3847 = vpack.c.bf16 %v3845, %v3843
          %v3850 = vunpack.c.l.b16 %v3846
          %v3851 = vunpack.c.l.b16 %v3847
          %v3852 = vunpack.c.h.b16 %v3846
          %v3853 = vunpack.c.h.b16 %v3847
          %v3854 = vpack.c.b16 %v3851, %v3850
          %v3855 = vpack.c.b16 %v3853, %v3852
          %3858 = vst [vmem:[#allocation5 + $0x310] sm:$0xff] %v3854
          %3859 = vst [vmem:[#allocation5 + $0x350] sm:$0xff] %v3855
          %v3860 = vld [vmem:[#allocation3 + $0x60] sm:$0xff]
          %v3861 = vld [vmem:[#allocation3 + $0x68] sm:$0xff]
          %v3862 = vld [vmem:[#allocation3 + $0x70] sm:$0xff]
          %v3863 = vld [vmem:[#allocation3 + $0x78] sm:$0xff]
          %v3864 = vld [vmem:[%s3779 + $0x30] sm:$0xff]
          %v3865 = vld [vmem:[%s3779 + $0x38] sm:$0xff]
          %v3866 = vunpack.c.l.bf16 %v3864
          %v3867 = vunpack.c.h.bf16 %v3864
          %v3868 = vunpack.c.l.bf16 %v3865
          %v3869 = vunpack.c.h.bf16 %v3865
          %v3870 = vadd.f32 %v3860, %v3866
          %v3871 = vadd.f32 %v3861, %v3867
          %v3872 = vadd.f32 %v3862, %v3868
          %v3873 = vadd.f32 %v3863, %v3869
          %v3874 = vpack.c.bf16 %v3872, %v3870
          %v3875 = vpack.c.bf16 %v3873, %v3871
          %v3878 = vunpack.c.l.b16 %v3874
          %v3879 = vunpack.c.l.b16 %v3875
          %v3880 = vunpack.c.h.b16 %v3874
          %v3881 = vunpack.c.h.b16 %v3875
          %v3882 = vpack.c.b16 %v3879, %v3878
          %v3883 = vpack.c.b16 %v3881, %v3880
          %3886 = vst [vmem:[#allocation5 + $0x318] sm:$0xff] %v3882
          %3887 = vst [vmem:[#allocation5 + $0x358] sm:$0xff] %v3883
          %v3888 = vld [vmem:[#allocation3 + $0x80] sm:$0xff]
          %v3889 = vld [vmem:[#allocation3 + $0x88] sm:$0xff]
          %v3890 = vld [vmem:[#allocation3 + $0x90] sm:$0xff]
          %v3891 = vld [vmem:[#allocation3 + $0x98] sm:$0xff]
          %v3892 = vld [vmem:[%s3779 + $0x40] sm:$0xff]
          %v3893 = vld [vmem:[%s3779 + $0x48] sm:$0xff]
          %v3894 = vunpack.c.l.bf16 %v3892
          %v3895 = vunpack.c.h.bf16 %v3892
          %v3896 = vunpack.c.l.bf16 %v3893
          %v3897 = vunpack.c.h.bf16 %v3893
          %v3898 = vadd.f32 %v3888, %v3894
          %v3899 = vadd.f32 %v3889, %v3895
          %v3900 = vadd.f32 %v3890, %v3896
          %v3901 = vadd.f32 %v3891, %v3897
          %v3902 = vpack.c.bf16 %v3900, %v3898
          %v3903 = vpack.c.bf16 %v3901, %v3899
          %v3906 = vunpack.c.l.b16 %v3902
          %v3907 = vunpack.c.l.b16 %v3903
          %v3908 = vunpack.c.h.b16 %v3902
          %v3909 = vunpack.c.h.b16 %v3903
          %v3910 = vpack.c.b16 %v3907, %v3906
          %v3911 = vpack.c.b16 %v3909, %v3908
          %3914 = vst [vmem:[#allocation5 + $0x320] sm:$0xff] %v3910
          %3915 = vst [vmem:[#allocation5 + $0x360] sm:$0xff] %v3911
          %v3916 = vld [vmem:[#allocation3 + $0xa0] sm:$0xff]
          %v3917 = vld [vmem:[#allocation3 + $0xa8] sm:$0xff]
          %v3918 = vld [vmem:[#allocation3 + $0xb0] sm:$0xff]
          %v3919 = vld [vmem:[#allocation3 + $0xb8] sm:$0xff]
          %v3920 = vld [vmem:[%s3779 + $0x50] sm:$0xff]
          %v3921 = vld [vmem:[%s3779 + $0x58] sm:$0xff]
          %v3922 = vunpack.c.l.bf16 %v3920
          %v3923 = vunpack.c.h.bf16 %v3920
          %v3924 = vunpack.c.l.bf16 %v3921
          %v3925 = vunpack.c.h.bf16 %v3921
          %v3926 = vadd.f32 %v3916, %v3922
          %v3927 = vadd.f32 %v3917, %v3923
          %v3928 = vadd.f32 %v3918, %v3924
          %v3929 = vadd.f32 %v3919, %v3925
          %v3930 = vpack.c.bf16 %v3928, %v3926
          %v3931 = vpack.c.bf16 %v3929, %v3927
          %v3934 = vunpack.c.l.b16 %v3930
          %v3935 = vunpack.c.l.b16 %v3931
          %v3936 = vunpack.c.h.b16 %v3930
          %v3937 = vunpack.c.h.b16 %v3931
          %v3938 = vpack.c.b16 %v3935, %v3934
          %v3939 = vpack.c.b16 %v3937, %v3936
          %3942 = vst [vmem:[#allocation5 + $0x328] sm:$0xff] %v3938
          %3943 = vst [vmem:[#allocation5 + $0x368] sm:$0xff] %v3939
          %v3944 = vld [vmem:[#allocation3 + $0xc0] sm:$0xff]
          %v3945 = vld [vmem:[#allocation3 + $0xc8] sm:$0xff]
          %v3946 = vld [vmem:[#allocation3 + $0xd0] sm:$0xff]
          %v3947 = vld [vmem:[#allocation3 + $0xd8] sm:$0xff]
          %v3948 = vld [vmem:[%s3779 + $0x60] sm:$0xff]
          %v3949 = vld [vmem:[%s3779 + $0x68] sm:$0xff]
          %v3950 = vunpack.c.l.bf16 %v3948
          %v3951 = vunpack.c.h.bf16 %v3948
          %v3952 = vunpack.c.l.bf16 %v3949
          %v3953 = vunpack.c.h.bf16 %v3949
          %v3954 = vadd.f32 %v3944, %v3950
          %v3955 = vadd.f32 %v3945, %v3951
          %v3956 = vadd.f32 %v3946, %v3952
          %v3957 = vadd.f32 %v3947, %v3953
          %v3958 = vpack.c.bf16 %v3956, %v3954
          %v3959 = vpack.c.bf16 %v3957, %v3955
          %v3962 = vunpack.c.l.b16 %v3958
          %v3963 = vunpack.c.l.b16 %v3959
          %v3964 = vunpack.c.h.b16 %v3958
          %v3965 = vunpack.c.h.b16 %v3959
          %v3966 = vpack.c.b16 %v3963, %v3962
          %v3967 = vpack.c.b16 %v3965, %v3964
          %3970 = vst [vmem:[#allocation5 + $0x330] sm:$0xff] %v3966
          %3971 = vst [vmem:[#allocation5 + $0x370] sm:$0xff] %v3967
          %v3972 = vld [vmem:[#allocation3 + $0xe0] sm:$0xff]
          %v3973 = vld [vmem:[#allocation3 + $0xe8] sm:$0xff]
          %v3974 = vld [vmem:[#allocation3 + $0xf0] sm:$0xff]
          %v3975 = vld [vmem:[#allocation3 + $0xf8] sm:$0xff]
          %v3976 = vld [vmem:[%s3779 + $0x70] sm:$0xff]
          %v3977 = vld [vmem:[%s3779 + $0x78] sm:$0xff]
          %v3978 = vunpack.c.l.bf16 %v3976
          %v3979 = vunpack.c.h.bf16 %v3976
          %v3980 = vunpack.c.l.bf16 %v3977
          %v3981 = vunpack.c.h.bf16 %v3977
          %v3982 = vadd.f32 %v3972, %v3978
          %v3983 = vadd.f32 %v3973, %v3979
          %v3984 = vadd.f32 %v3974, %v3980
          %v3985 = vadd.f32 %v3975, %v3981
          %v3986 = vpack.c.bf16 %v3984, %v3982
          %v3987 = vpack.c.bf16 %v3985, %v3983
          %v3990 = vunpack.c.l.b16 %v3986
          %v3991 = vunpack.c.l.b16 %v3987
          %v3992 = vunpack.c.h.b16 %v3986
          %v3993 = vunpack.c.h.b16 %v3987
          %v3994 = vpack.c.b16 %v3991, %v3990
          %v3995 = vpack.c.b16 %v3993, %v3992
          %3998 = vst [vmem:[#allocation5 + $0x338] sm:$0xff] %v3994
          %3999 = vst [vmem:[#allocation5 + $0x378] sm:$0xff] %v3995
          %v4000 = vld [vmem:[#allocation3] sm:$0xff]
          %v4001 = vld [vmem:[#allocation3 + $0x8] sm:$0xff]
          %v4002 = vld [vmem:[#allocation3 + $0x10] sm:$0xff]
          %v4003 = vld [vmem:[#allocation3 + $0x18] sm:$0xff]
          %s4004 = scalar_lea.vmem [#allocation2], 896
          %v4005 = vld [vmem:[%s4004] sm:$0xff]
          %v4006 = vld [vmem:[%s4004 + $0x8] sm:$0xff]
          %v4007 = vunpack.c.l.bf16 %v4005
          %v4008 = vunpack.c.h.bf16 %v4005
          %v4009 = vunpack.c.l.bf16 %v4006
          %v4010 = vunpack.c.h.bf16 %v4006
          %v4011 = vadd.f32 %v4000, %v4007
          %v4012 = vadd.f32 %v4001, %v4008
          %v4013 = vadd.f32 %v4002, %v4009
          %v4014 = vadd.f32 %v4003, %v4010
          %v4015 = vpack.c.bf16 %v4013, %v4011
          %v4016 = vpack.c.bf16 %v4014, %v4012
          %v4019 = vunpack.c.l.b16 %v4015
          %v4020 = vunpack.c.l.b16 %v4016
          %v4021 = vunpack.c.h.b16 %v4015
          %v4022 = vunpack.c.h.b16 %v4016
          %v4023 = vpack.c.b16 %v4020, %v4019
          %v4024 = vpack.c.b16 %v4022, %v4021
          %4027 = vst [vmem:[#allocation5 + $0x380] sm:$0xff] %v4023
          %4028 = vst [vmem:[#allocation5 + $0x3c0] sm:$0xff] %v4024
          %v4029 = vld [vmem:[#allocation3 + $0x20] sm:$0xff]
          %v4030 = vld [vmem:[#allocation3 + $0x28] sm:$0xff]
          %v4031 = vld [vmem:[#allocation3 + $0x30] sm:$0xff]
          %v4032 = vld [vmem:[#allocation3 + $0x38] sm:$0xff]
          %v4033 = vld [vmem:[%s4004 + $0x10] sm:$0xff]
          %v4034 = vld [vmem:[%s4004 + $0x18] sm:$0xff]
          %v4035 = vunpack.c.l.bf16 %v4033
          %v4036 = vunpack.c.h.bf16 %v4033
          %v4037 = vunpack.c.l.bf16 %v4034
          %v4038 = vunpack.c.h.bf16 %v4034
          %v4039 = vadd.f32 %v4029, %v4035
          %v4040 = vadd.f32 %v4030, %v4036
          %v4041 = vadd.f32 %v4031, %v4037
          %v4042 = vadd.f32 %v4032, %v4038
          %v4043 = vpack.c.bf16 %v4041, %v4039
          %v4044 = vpack.c.bf16 %v4042, %v4040
          %v4047 = vunpack.c.l.b16 %v4043
          %v4048 = vunpack.c.l.b16 %v4044
          %v4049 = vunpack.c.h.b16 %v4043
          %v4050 = vunpack.c.h.b16 %v4044
          %v4051 = vpack.c.b16 %v4048, %v4047
          %v4052 = vpack.c.b16 %v4050, %v4049
          %4055 = vst [vmem:[#allocation5 + $0x388] sm:$0xff] %v4051
          %4056 = vst [vmem:[#allocation5 + $0x3c8] sm:$0xff] %v4052
          %v4057 = vld [vmem:[#allocation3 + $0x40] sm:$0xff]
          %v4058 = vld [vmem:[#allocation3 + $0x48] sm:$0xff]
          %v4059 = vld [vmem:[#allocation3 + $0x50] sm:$0xff]
          %v4060 = vld [vmem:[#allocation3 + $0x58] sm:$0xff]
          %v4061 = vld [vmem:[%s4004 + $0x20] sm:$0xff]
          %v4062 = vld [vmem:[%s4004 + $0x28] sm:$0xff]
          %v4063 = vunpack.c.l.bf16 %v4061
          %v4064 = vunpack.c.h.bf16 %v4061
          %v4065 = vunpack.c.l.bf16 %v4062
          %v4066 = vunpack.c.h.bf16 %v4062
          %v4067 = vadd.f32 %v4057, %v4063
          %v4068 = vadd.f32 %v4058, %v4064
          %v4069 = vadd.f32 %v4059, %v4065
          %v4070 = vadd.f32 %v4060, %v4066
          %v4071 = vpack.c.bf16 %v4069, %v4067
          %v4072 = vpack.c.bf16 %v4070, %v4068
          %v4075 = vunpack.c.l.b16 %v4071
          %v4076 = vunpack.c.l.b16 %v4072
          %v4077 = vunpack.c.h.b16 %v4071
          %v4078 = vunpack.c.h.b16 %v4072
          %v4079 = vpack.c.b16 %v4076, %v4075
          %v4080 = vpack.c.b16 %v4078, %v4077
          %4083 = vst [vmem:[#allocation5 + $0x390] sm:$0xff] %v4079
          %4084 = vst [vmem:[#allocation5 + $0x3d0] sm:$0xff] %v4080
          %v4085 = vld [vmem:[#allocation3 + $0x60] sm:$0xff]
          %v4086 = vld [vmem:[#allocation3 + $0x68] sm:$0xff]
          %v4087 = vld [vmem:[#allocation3 + $0x70] sm:$0xff]
          %v4088 = vld [vmem:[#allocation3 + $0x78] sm:$0xff]
          %v4089 = vld [vmem:[%s4004 + $0x30] sm:$0xff]
          %v4090 = vld [vmem:[%s4004 + $0x38] sm:$0xff]
          %v4091 = vunpack.c.l.bf16 %v4089
          %v4092 = vunpack.c.h.bf16 %v4089
          %v4093 = vunpack.c.l.bf16 %v4090
          %v4094 = vunpack.c.h.bf16 %v4090
          %v4095 = vadd.f32 %v4085, %v4091
          %v4096 = vadd.f32 %v4086, %v4092
          %v4097 = vadd.f32 %v4087, %v4093
          %v4098 = vadd.f32 %v4088, %v4094
          %v4099 = vpack.c.bf16 %v4097, %v4095
          %v4100 = vpack.c.bf16 %v4098, %v4096
          %v4103 = vunpack.c.l.b16 %v4099
          %v4104 = vunpack.c.l.b16 %v4100
          %v4105 = vunpack.c.h.b16 %v4099
          %v4106 = vunpack.c.h.b16 %v4100
          %v4107 = vpack.c.b16 %v4104, %v4103
          %v4108 = vpack.c.b16 %v4106, %v4105
          %4111 = vst [vmem:[#allocation5 + $0x398] sm:$0xff] %v4107
          %4112 = vst [vmem:[#allocation5 + $0x3d8] sm:$0xff] %v4108
          %v4113 = vld [vmem:[#allocation3 + $0x80] sm:$0xff]
          %v4114 = vld [vmem:[#allocation3 + $0x88] sm:$0xff]
          %v4115 = vld [vmem:[#allocation3 + $0x90] sm:$0xff]
          %v4116 = vld [vmem:[#allocation3 + $0x98] sm:$0xff]
          %v4117 = vld [vmem:[%s4004 + $0x40] sm:$0xff]
          %v4118 = vld [vmem:[%s4004 + $0x48] sm:$0xff]
          %v4119 = vunpack.c.l.bf16 %v4117
          %v4120 = vunpack.c.h.bf16 %v4117
          %v4121 = vunpack.c.l.bf16 %v4118
          %v4122 = vunpack.c.h.bf16 %v4118
          %v4123 = vadd.f32 %v4113, %v4119
          %v4124 = vadd.f32 %v4114, %v4120
          %v4125 = vadd.f32 %v4115, %v4121
          %v4126 = vadd.f32 %v4116, %v4122
          %v4127 = vpack.c.bf16 %v4125, %v4123
          %v4128 = vpack.c.bf16 %v4126, %v4124
          %v4131 = vunpack.c.l.b16 %v4127
          %v4132 = vunpack.c.l.b16 %v4128
          %v4133 = vunpack.c.h.b16 %v4127
          %v4134 = vunpack.c.h.b16 %v4128
          %v4135 = vpack.c.b16 %v4132, %v4131
          %v4136 = vpack.c.b16 %v4134, %v4133
          %4139 = vst [vmem:[#allocation5 + $0x3a0] sm:$0xff] %v4135
          %4140 = vst [vmem:[#allocation5 + $0x3e0] sm:$0xff] %v4136
          %v4141 = vld [vmem:[#allocation3 + $0xa0] sm:$0xff]
          %v4142 = vld [vmem:[#allocation3 + $0xa8] sm:$0xff]
          %v4143 = vld [vmem:[#allocation3 + $0xb0] sm:$0xff]
          %v4144 = vld [vmem:[#allocation3 + $0xb8] sm:$0xff]
          %v4145 = vld [vmem:[%s4004 + $0x50] sm:$0xff]
          %v4146 = vld [vmem:[%s4004 + $0x58] sm:$0xff]
          %v4147 = vunpack.c.l.bf16 %v4145
          %v4148 = vunpack.c.h.bf16 %v4145
          %v4149 = vunpack.c.l.bf16 %v4146
          %v4150 = vunpack.c.h.bf16 %v4146
          %v4151 = vadd.f32 %v4141, %v4147
          %v4152 = vadd.f32 %v4142, %v4148
          %v4153 = vadd.f32 %v4143, %v4149
          %v4154 = vadd.f32 %v4144, %v4150
          %v4155 = vpack.c.bf16 %v4153, %v4151
          %v4156 = vpack.c.bf16 %v4154, %v4152
          %v4159 = vunpack.c.l.b16 %v4155
          %v4160 = vunpack.c.l.b16 %v4156
          %v4161 = vunpack.c.h.b16 %v4155
          %v4162 = vunpack.c.h.b16 %v4156
          %v4163 = vpack.c.b16 %v4160, %v4159
          %v4164 = vpack.c.b16 %v4162, %v4161
          %4167 = vst [vmem:[#allocation5 + $0x3a8] sm:$0xff] %v4163
          %4168 = vst [vmem:[#allocation5 + $0x3e8] sm:$0xff] %v4164
          %v4169 = vld [vmem:[#allocation3 + $0xc0] sm:$0xff]
          %v4170 = vld [vmem:[#allocation3 + $0xc8] sm:$0xff]
          %v4171 = vld [vmem:[#allocation3 + $0xd0] sm:$0xff]
          %v4172 = vld [vmem:[#allocation3 + $0xd8] sm:$0xff]
          %v4173 = vld [vmem:[%s4004 + $0x60] sm:$0xff]
          %v4174 = vld [vmem:[%s4004 + $0x68] sm:$0xff]
          %v4175 = vunpack.c.l.bf16 %v4173
          %v4176 = vunpack.c.h.bf16 %v4173
          %v4177 = vunpack.c.l.bf16 %v4174
          %v4178 = vunpack.c.h.bf16 %v4174
          %v4179 = vadd.f32 %v4169, %v4175
          %v4180 = vadd.f32 %v4170, %v4176
          %v4181 = vadd.f32 %v4171, %v4177
          %v4182 = vadd.f32 %v4172, %v4178
          %v4183 = vpack.c.bf16 %v4181, %v4179
          %v4184 = vpack.c.bf16 %v4182, %v4180
          %v4187 = vunpack.c.l.b16 %v4183
          %v4188 = vunpack.c.l.b16 %v4184
          %v4189 = vunpack.c.h.b16 %v4183
          %v4190 = vunpack.c.h.b16 %v4184
          %v4191 = vpack.c.b16 %v4188, %v4187
          %v4192 = vpack.c.b16 %v4190, %v4189
          %4195 = vst [vmem:[#allocation5 + $0x3b0] sm:$0xff] %v4191
          %4196 = vst [vmem:[#allocation5 + $0x3f0] sm:$0xff] %v4192
          %v4197 = vld [vmem:[#allocation3 + $0xe0] sm:$0xff]
          %v4198 = vld [vmem:[#allocation3 + $0xe8] sm:$0xff]
          %v4199 = vld [vmem:[#allocation3 + $0xf0] sm:$0xff]
          %v4200 = vld [vmem:[#allocation3 + $0xf8] sm:$0xff]
          %v4201 = vld [vmem:[%s4004 + $0x70] sm:$0xff]
          %v4202 = vld [vmem:[%s4004 + $0x78] sm:$0xff]
          %v4203 = vunpack.c.l.bf16 %v4201
          %v4204 = vunpack.c.h.bf16 %v4201
          %v4205 = vunpack.c.l.bf16 %v4202
          %v4206 = vunpack.c.h.bf16 %v4202
          %v4207 = vadd.f32 %v4197, %v4203
          %v4208 = vadd.f32 %v4198, %v4204
          %v4209 = vadd.f32 %v4199, %v4205
          %v4210 = vadd.f32 %v4200, %v4206
          %v4211 = vpack.c.bf16 %v4209, %v4207
          %v4212 = vpack.c.bf16 %v4210, %v4208
          %v4215 = vunpack.c.l.b16 %v4211
          %v4216 = vunpack.c.l.b16 %v4212
          %v4217 = vunpack.c.h.b16 %v4211
          %v4218 = vunpack.c.h.b16 %v4212
          %v4219 = vpack.c.b16 %v4216, %v4215
          %v4220 = vpack.c.b16 %v4218, %v4217
          %4223 = vst [vmem:[#allocation5 + $0x3b8] sm:$0xff] %v4219
          %4224 = vst [vmem:[#allocation5 + $0x3f8] sm:$0xff] %v4220
          %v4225 = vld [vmem:[#allocation5] sm:$0xff]
          %v4226 = vld [vmem:[#allocation5 + $0x8] sm:$0xff]
          %v4227 = vld [vmem:[#allocation5 + $0x10] sm:$0xff]
          %v4228 = vld [vmem:[#allocation5 + $0x18] sm:$0xff]
          %v4229 = vld [vmem:[#allocation5 + $0x20] sm:$0xff]
          %v4230 = vld [vmem:[#allocation5 + $0x28] sm:$0xff]
          %v4231 = vld [vmem:[#allocation5 + $0x30] sm:$0xff]
          %v4232 = vld [vmem:[#allocation5 + $0x38] sm:$0xff]
          %v4233 = vld [vmem:[#allocation5 + $0x40] sm:$0xff]
          %v4234 = vld [vmem:[#allocation5 + $0x48] sm:$0xff]
          %v4235 = vld [vmem:[#allocation5 + $0x50] sm:$0xff]
          %v4236 = vld [vmem:[#allocation5 + $0x58] sm:$0xff]
          %v4237 = vld [vmem:[#allocation5 + $0x60] sm:$0xff]
          %v4238 = vld [vmem:[#allocation5 + $0x68] sm:$0xff]
          %v4239 = vld [vmem:[#allocation5 + $0x70] sm:$0xff]
          %v4240 = vld [vmem:[#allocation5 + $0x78] sm:$0xff]
          %v4241 = vld [vmem:[#allocation5 + $0x80] sm:$0xff]
          %v4242 = vld [vmem:[#allocation5 + $0x88] sm:$0xff]
          %v4243 = vld [vmem:[#allocation5 + $0x90] sm:$0xff]
          %v4244 = vld [vmem:[#allocation5 + $0x98] sm:$0xff]
          %v4245 = vld [vmem:[#allocation5 + $0xa0] sm:$0xff]
          %v4246 = vld [vmem:[#allocation5 + $0xa8] sm:$0xff]
          %v4247 = vld [vmem:[#allocation5 + $0xb0] sm:$0xff]
          %v4248 = vld [vmem:[#allocation5 + $0xb8] sm:$0xff]
          %v4249 = vld [vmem:[#allocation5 + $0xc0] sm:$0xff]
          %v4250 = vld [vmem:[#allocation5 + $0xc8] sm:$0xff]
          %v4251 = vld [vmem:[#allocation5 + $0xd0] sm:$0xff]
          %v4252 = vld [vmem:[#allocation5 + $0xd8] sm:$0xff]
          %v4253 = vld [vmem:[#allocation5 + $0xe0] sm:$0xff]
          %v4254 = vld [vmem:[#allocation5 + $0xe8] sm:$0xff]
          %v4255 = vld [vmem:[#allocation5 + $0xf0] sm:$0xff]
          %v4256 = vld [vmem:[#allocation5 + $0xf8] sm:$0xff]
          %v4257 = vld [vmem:[#allocation5 + $0x100] sm:$0xff]
          %v4258 = vld [vmem:[#allocation5 + $0x108] sm:$0xff]
          %v4259 = vld [vmem:[#allocation5 + $0x110] sm:$0xff]
          %v4260 = vld [vmem:[#allocation5 + $0x118] sm:$0xff]
          %v4261 = vld [vmem:[#allocation5 + $0x120] sm:$0xff]
          %v4262 = vld [vmem:[#allocation5 + $0x128] sm:$0xff]
          %v4263 = vld [vmem:[#allocation5 + $0x130] sm:$0xff]
          %v4264 = vld [vmem:[#allocation5 + $0x138] sm:$0xff]
          %v4265 = vld [vmem:[#allocation5 + $0x140] sm:$0xff]
          %v4266 = vld [vmem:[#allocation5 + $0x148] sm:$0xff]
          %v4267 = vld [vmem:[#allocation5 + $0x150] sm:$0xff]
          %v4268 = vld [vmem:[#allocation5 + $0x158] sm:$0xff]
          %v4269 = vld [vmem:[#allocation5 + $0x160] sm:$0xff]
          %v4270 = vld [vmem:[#allocation5 + $0x168] sm:$0xff]
          %v4271 = vld [vmem:[#allocation5 + $0x170] sm:$0xff]
          %v4272 = vld [vmem:[#allocation5 + $0x178] sm:$0xff]
          %v4273 = vld [vmem:[#allocation5 + $0x180] sm:$0xff]
          %v4274 = vld [vmem:[#allocation5 + $0x188] sm:$0xff]
          %v4275 = vld [vmem:[#allocation5 + $0x190] sm:$0xff]
          %v4276 = vld [vmem:[#allocation5 + $0x198] sm:$0xff]
          %v4277 = vld [vmem:[#allocation5 + $0x1a0] sm:$0xff]
          %v4278 = vld [vmem:[#allocation5 + $0x1a8] sm:$0xff]
          %v4279 = vld [vmem:[#allocation5 + $0x1b0] sm:$0xff]
          %v4280 = vld [vmem:[#allocation5 + $0x1b8] sm:$0xff]
          %v4281 = vld [vmem:[#allocation5 + $0x1c0] sm:$0xff]
          %v4282 = vld [vmem:[#allocation5 + $0x1c8] sm:$0xff]
          %v4283 = vld [vmem:[#allocation5 + $0x1d0] sm:$0xff]
          %v4284 = vld [vmem:[#allocation5 + $0x1d8] sm:$0xff]
          %v4285 = vld [vmem:[#allocation5 + $0x1e0] sm:$0xff]
          %v4286 = vld [vmem:[#allocation5 + $0x1e8] sm:$0xff]
          %v4287 = vld [vmem:[#allocation5 + $0x1f0] sm:$0xff]
          %v4288 = vld [vmem:[#allocation5 + $0x1f8] sm:$0xff]
          %v4289 = vld [vmem:[#allocation5 + $0x200] sm:$0xff]
          %v4290 = vld [vmem:[#allocation5 + $0x208] sm:$0xff]
          %v4291 = vld [vmem:[#allocation5 + $0x210] sm:$0xff]
          %v4292 = vld [vmem:[#allocation5 + $0x218] sm:$0xff]
          %v4293 = vld [vmem:[#allocation5 + $0x220] sm:$0xff]
          %v4294 = vld [vmem:[#allocation5 + $0x228] sm:$0xff]
          %v4295 = vld [vmem:[#allocation5 + $0x230] sm:$0xff]
          %v4296 = vld [vmem:[#allocation5 + $0x238] sm:$0xff]
          %v4297 = vld [vmem:[#allocation5 + $0x240] sm:$0xff]
          %v4298 = vld [vmem:[#allocation5 + $0x248] sm:$0xff]
          %v4299 = vld [vmem:[#allocation5 + $0x250] sm:$0xff]
          %v4300 = vld [vmem:[#allocation5 + $0x258] sm:$0xff]
          %v4301 = vld [vmem:[#allocation5 + $0x260] sm:$0xff]
          %v4302 = vld [vmem:[#allocation5 + $0x268] sm:$0xff]
          %v4303 = vld [vmem:[#allocation5 + $0x270] sm:$0xff]
          %v4304 = vld [vmem:[#allocation5 + $0x278] sm:$0xff]
          %v4305 = vld [vmem:[#allocation5 + $0x280] sm:$0xff]
          %v4306 = vld [vmem:[#allocation5 + $0x288] sm:$0xff]
          %v4307 = vld [vmem:[#allocation5 + $0x290] sm:$0xff]
          %v4308 = vld [vmem:[#allocation5 + $0x298] sm:$0xff]
          %v4309 = vld [vmem:[#allocation5 + $0x2a0] sm:$0xff]
          %v4310 = vld [vmem:[#allocation5 + $0x2a8] sm:$0xff]
          %v4311 = vld [vmem:[#allocation5 + $0x2b0] sm:$0xff]
          %v4312 = vld [vmem:[#allocation5 + $0x2b8] sm:$0xff]
          %v4313 = vld [vmem:[#allocation5 + $0x2c0] sm:$0xff]
          %v4314 = vld [vmem:[#allocation5 + $0x2c8] sm:$0xff]
          %v4315 = vld [vmem:[#allocation5 + $0x2d0] sm:$0xff]
          %v4316 = vld [vmem:[#allocation5 + $0x2d8] sm:$0xff]
          %v4317 = vld [vmem:[#allocation5 + $0x2e0] sm:$0xff]
          %v4318 = vld [vmem:[#allocation5 + $0x2e8] sm:$0xff]
          %v4319 = vld [vmem:[#allocation5 + $0x2f0] sm:$0xff]
          %v4320 = vld [vmem:[#allocation5 + $0x2f8] sm:$0xff]
          %v4321 = vld [vmem:[#allocation5 + $0x300] sm:$0xff]
          %v4322 = vld [vmem:[#allocation5 + $0x308] sm:$0xff]
          %v4323 = vld [vmem:[#allocation5 + $0x310] sm:$0xff]
          %v4324 = vld [vmem:[#allocation5 + $0x318] sm:$0xff]
          %v4325 = vld [vmem:[#allocation5 + $0x320] sm:$0xff]
          %v4326 = vld [vmem:[#allocation5 + $0x328] sm:$0xff]
          %v4327 = vld [vmem:[#allocation5 + $0x330] sm:$0xff]
          %v4328 = vld [vmem:[#allocation5 + $0x338] sm:$0xff]
          %v4329 = vld [vmem:[#allocation5 + $0x340] sm:$0xff]
          %v4330 = vld [vmem:[#allocation5 + $0x348] sm:$0xff]
          %v4331 = vld [vmem:[#allocation5 + $0x350] sm:$0xff]
          %v4332 = vld [vmem:[#allocation5 + $0x358] sm:$0xff]
          %v4333 = vld [vmem:[#allocation5 + $0x360] sm:$0xff]
          %v4334 = vld [vmem:[#allocation5 + $0x368] sm:$0xff]
          %v4335 = vld [vmem:[#allocation5 + $0x370] sm:$0xff]
          %v4336 = vld [vmem:[#allocation5 + $0x378] sm:$0xff]
          %v4337 = vld [vmem:[#allocation5 + $0x380] sm:$0xff]
          %v4338 = vld [vmem:[#allocation5 + $0x388] sm:$0xff]
          %v4339 = vld [vmem:[#allocation5 + $0x390] sm:$0xff]
          %v4340 = vld [vmem:[#allocation5 + $0x398] sm:$0xff]
          %v4341 = vld [vmem:[#allocation5 + $0x3a0] sm:$0xff]
          %v4342 = vld [vmem:[#allocation5 + $0x3a8] sm:$0xff]
          %v4343 = vld [vmem:[#allocation5 + $0x3b0] sm:$0xff]
          %v4344 = vld [vmem:[#allocation5 + $0x3b8] sm:$0xff]
          %v4345 = vld [vmem:[#allocation5 + $0x3c0] sm:$0xff]
          %v4346 = vld [vmem:[#allocation5 + $0x3c8] sm:$0xff]
          %v4347 = vld [vmem:[#allocation5 + $0x3d0] sm:$0xff]
          %v4348 = vld [vmem:[#allocation5 + $0x3d8] sm:$0xff]
          %v4349 = vld [vmem:[#allocation5 + $0x3e0] sm:$0xff]
          %v4350 = vld [vmem:[#allocation5 + $0x3e8] sm:$0xff]
          %v4351 = vld [vmem:[#allocation5 + $0x3f0] sm:$0xff]
          %v4352 = vld [vmem:[#allocation5 + $0x3f8] sm:$0xff]
          %v4481 = vunpack.c.l.b16 %v4225
          %v4482 = vunpack.c.h.b16 %v4225
          %v4483 = vunpack.c.l.b16 %v4226
          %v4484 = vunpack.c.h.b16 %v4226
          %v4485 = vunpack.c.l.b16 %v4227
          %v4486 = vunpack.c.h.b16 %v4227
          %v4487 = vunpack.c.l.b16 %v4228
          %v4488 = vunpack.c.h.b16 %v4228
          %v4489 = vunpack.c.l.b16 %v4229
          %v4490 = vunpack.c.h.b16 %v4229
          %v4491 = vunpack.c.l.b16 %v4230
          %v4492 = vunpack.c.h.b16 %v4230
          %v4493 = vunpack.c.l.b16 %v4231
          %v4494 = vunpack.c.h.b16 %v4231
          %v4495 = vunpack.c.l.b16 %v4232
          %v4496 = vunpack.c.h.b16 %v4232
          %v4497 = vunpack.c.l.b16 %v4233
          %v4498 = vunpack.c.h.b16 %v4233
          %v4499 = vunpack.c.l.b16 %v4234
          %v4500 = vunpack.c.h.b16 %v4234
          %v4501 = vunpack.c.l.b16 %v4235
          %v4502 = vunpack.c.h.b16 %v4235
          %v4503 = vunpack.c.l.b16 %v4236
          %v4504 = vunpack.c.h.b16 %v4236
          %v4505 = vunpack.c.l.b16 %v4237
          %v4506 = vunpack.c.h.b16 %v4237
          %v4507 = vunpack.c.l.b16 %v4238
          %v4508 = vunpack.c.h.b16 %v4238
          %v4509 = vunpack.c.l.b16 %v4239
          %v4510 = vunpack.c.h.b16 %v4239
          %v4511 = vunpack.c.l.b16 %v4240
          %v4512 = vunpack.c.h.b16 %v4240
          %v4513 = vunpack.c.l.b16 %v4241
          %v4514 = vunpack.c.h.b16 %v4241
          %v4515 = vunpack.c.l.b16 %v4242
          %v4516 = vunpack.c.h.b16 %v4242
          %v4517 = vunpack.c.l.b16 %v4243
          %v4518 = vunpack.c.h.b16 %v4243
          %v4519 = vunpack.c.l.b16 %v4244
          %v4520 = vunpack.c.h.b16 %v4244
          %v4521 = vunpack.c.l.b16 %v4245
          %v4522 = vunpack.c.h.b16 %v4245
          %v4523 = vunpack.c.l.b16 %v4246
          %v4524 = vunpack.c.h.b16 %v4246
          %v4525 = vunpack.c.l.b16 %v4247
          %v4526 = vunpack.c.h.b16 %v4247
          %v4527 = vunpack.c.l.b16 %v4248
          %v4528 = vunpack.c.h.b16 %v4248
          %v4529 = vunpack.c.l.b16 %v4249
          %v4530 = vunpack.c.h.b16 %v4249
          %v4531 = vunpack.c.l.b16 %v4250
          %v4532 = vunpack.c.h.b16 %v4250
          %v4533 = vunpack.c.l.b16 %v4251
          %v4534 = vunpack.c.h.b16 %v4251
          %v4535 = vunpack.c.l.b16 %v4252
          %v4536 = vunpack.c.h.b16 %v4252
          %v4537 = vunpack.c.l.b16 %v4253
          %v4538 = vunpack.c.h.b16 %v4253
          %v4539 = vunpack.c.l.b16 %v4254
          %v4540 = vunpack.c.h.b16 %v4254
          %v4541 = vunpack.c.l.b16 %v4255
          %v4542 = vunpack.c.h.b16 %v4255
          %v4543 = vunpack.c.l.b16 %v4256
          %v4544 = vunpack.c.h.b16 %v4256
          %v4545 = vunpack.c.l.b16 %v4257
          %v4546 = vunpack.c.h.b16 %v4257
          %v4547 = vunpack.c.l.b16 %v4258
          %v4548 = vunpack.c.h.b16 %v4258
          %v4549 = vunpack.c.l.b16 %v4259
          %v4550 = vunpack.c.h.b16 %v4259
          %v4551 = vunpack.c.l.b16 %v4260
          %v4552 = vunpack.c.h.b16 %v4260
          %v4553 = vunpack.c.l.b16 %v4261
          %v4554 = vunpack.c.h.b16 %v4261
          %v4555 = vunpack.c.l.b16 %v4262
          %v4556 = vunpack.c.h.b16 %v4262
          %v4557 = vunpack.c.l.b16 %v4263
          %v4558 = vunpack.c.h.b16 %v4263
          %v4559 = vunpack.c.l.b16 %v4264
          %v4560 = vunpack.c.h.b16 %v4264
          %v4561 = vunpack.c.l.b16 %v4265
          %v4562 = vunpack.c.h.b16 %v4265
          %v4563 = vunpack.c.l.b16 %v4266
          %v4564 = vunpack.c.h.b16 %v4266
          %v4565 = vunpack.c.l.b16 %v4267
          %v4566 = vunpack.c.h.b16 %v4267
          %v4567 = vunpack.c.l.b16 %v4268
          %v4568 = vunpack.c.h.b16 %v4268
          %v4569 = vunpack.c.l.b16 %v4269
          %v4570 = vunpack.c.h.b16 %v4269
          %v4571 = vunpack.c.l.b16 %v4270
          %v4572 = vunpack.c.h.b16 %v4270
          %v4573 = vunpack.c.l.b16 %v4271
          %v4574 = vunpack.c.h.b16 %v4271
          %v4575 = vunpack.c.l.b16 %v4272
          %v4576 = vunpack.c.h.b16 %v4272
          %v4577 = vunpack.c.l.b16 %v4273
          %v4578 = vunpack.c.h.b16 %v4273
          %v4579 = vunpack.c.l.b16 %v4274
          %v4580 = vunpack.c.h.b16 %v4274
          %v4581 = vunpack.c.l.b16 %v4275
          %v4582 = vunpack.c.h.b16 %v4275
          %v4583 = vunpack.c.l.b16 %v4276
          %v4584 = vunpack.c.h.b16 %v4276
          %v4585 = vunpack.c.l.b16 %v4277
          %v4586 = vunpack.c.h.b16 %v4277
          %v4587 = vunpack.c.l.b16 %v4278
          %v4588 = vunpack.c.h.b16 %v4278
          %v4589 = vunpack.c.l.b16 %v4279
          %v4590 = vunpack.c.h.b16 %v4279
          %v4591 = vunpack.c.l.b16 %v4280
          %v4592 = vunpack.c.h.b16 %v4280
          %v4593 = vunpack.c.l.b16 %v4281
          %v4594 = vunpack.c.h.b16 %v4281
          %v4595 = vunpack.c.l.b16 %v4282
          %v4596 = vunpack.c.h.b16 %v4282
          %v4597 = vunpack.c.l.b16 %v4283
          %v4598 = vunpack.c.h.b16 %v4283
          %v4599 = vunpack.c.l.b16 %v4284
          %v4600 = vunpack.c.h.b16 %v4284
          %v4601 = vunpack.c.l.b16 %v4285
          %v4602 = vunpack.c.h.b16 %v4285
          %v4603 = vunpack.c.l.b16 %v4286
          %v4604 = vunpack.c.h.b16 %v4286
          %v4605 = vunpack.c.l.b16 %v4287
          %v4606 = vunpack.c.h.b16 %v4287
          %v4607 = vunpack.c.l.b16 %v4288
          %v4608 = vunpack.c.h.b16 %v4288
          %v4609 = vunpack.c.l.b16 %v4289
          %v4610 = vunpack.c.h.b16 %v4289
          %v4611 = vunpack.c.l.b16 %v4290
          %v4612 = vunpack.c.h.b16 %v4290
          %v4613 = vunpack.c.l.b16 %v4291
          %v4614 = vunpack.c.h.b16 %v4291
          %v4615 = vunpack.c.l.b16 %v4292
          %v4616 = vunpack.c.h.b16 %v4292
          %v4617 = vunpack.c.l.b16 %v4293
          %v4618 = vunpack.c.h.b16 %v4293
          %v4619 = vunpack.c.l.b16 %v4294
          %v4620 = vunpack.c.h.b16 %v4294
          %v4621 = vunpack.c.l.b16 %v4295
          %v4622 = vunpack.c.h.b16 %v4295
          %v4623 = vunpack.c.l.b16 %v4296
          %v4624 = vunpack.c.h.b16 %v4296
          %v4625 = vunpack.c.l.b16 %v4297
          %v4626 = vunpack.c.h.b16 %v4297
          %v4627 = vunpack.c.l.b16 %v4298
          %v4628 = vunpack.c.h.b16 %v4298
          %v4629 = vunpack.c.l.b16 %v4299
          %v4630 = vunpack.c.h.b16 %v4299
          %v4631 = vunpack.c.l.b16 %v4300
          %v4632 = vunpack.c.h.b16 %v4300
          %v4633 = vunpack.c.l.b16 %v4301
          %v4634 = vunpack.c.h.b16 %v4301
          %v4635 = vunpack.c.l.b16 %v4302
          %v4636 = vunpack.c.h.b16 %v4302
          %v4637 = vunpack.c.l.b16 %v4303
          %v4638 = vunpack.c.h.b16 %v4303
          %v4639 = vunpack.c.l.b16 %v4304
          %v4640 = vunpack.c.h.b16 %v4304
          %v4641 = vunpack.c.l.b16 %v4305
          %v4642 = vunpack.c.h.b16 %v4305
          %v4643 = vunpack.c.l.b16 %v4306
          %v4644 = vunpack.c.h.b16 %v4306
          %v4645 = vunpack.c.l.b16 %v4307
          %v4646 = vunpack.c.h.b16 %v4307
          %v4647 = vunpack.c.l.b16 %v4308
          %v4648 = vunpack.c.h.b16 %v4308
          %v4649 = vunpack.c.l.b16 %v4309
          %v4650 = vunpack.c.h.b16 %v4309
          %v4651 = vunpack.c.l.b16 %v4310
          %v4652 = vunpack.c.h.b16 %v4310
          %v4653 = vunpack.c.l.b16 %v4311
          %v4654 = vunpack.c.h.b16 %v4311
          %v4655 = vunpack.c.l.b16 %v4312
          %v4656 = vunpack.c.h.b16 %v4312
          %v4657 = vunpack.c.l.b16 %v4313
          %v4658 = vunpack.c.h.b16 %v4313
          %v4659 = vunpack.c.l.b16 %v4314
          %v4660 = vunpack.c.h.b16 %v4314
          %v4661 = vunpack.c.l.b16 %v4315
          %v4662 = vunpack.c.h.b16 %v4315
          %v4663 = vunpack.c.l.b16 %v4316
          %v4664 = vunpack.c.h.b16 %v4316
          %v4665 = vunpack.c.l.b16 %v4317
          %v4666 = vunpack.c.h.b16 %v4317
          %v4667 = vunpack.c.l.b16 %v4318
          %v4668 = vunpack.c.h.b16 %v4318
          %v4669 = vunpack.c.l.b16 %v4319
          %v4670 = vunpack.c.h.b16 %v4319
          %v4671 = vunpack.c.l.b16 %v4320
          %v4672 = vunpack.c.h.b16 %v4320
          %v4673 = vunpack.c.l.b16 %v4321
          %v4674 = vunpack.c.h.b16 %v4321
          %v4675 = vunpack.c.l.b16 %v4322
          %v4676 = vunpack.c.h.b16 %v4322
          %v4677 = vunpack.c.l.b16 %v4323
          %v4678 = vunpack.c.h.b16 %v4323
          %v4679 = vunpack.c.l.b16 %v4324
          %v4680 = vunpack.c.h.b16 %v4324
          %v4681 = vunpack.c.l.b16 %v4325
          %v4682 = vunpack.c.h.b16 %v4325
          %v4683 = vunpack.c.l.b16 %v4326
          %v4684 = vunpack.c.h.b16 %v4326
          %v4685 = vunpack.c.l.b16 %v4327
          %v4686 = vunpack.c.h.b16 %v4327
          %v4687 = vunpack.c.l.b16 %v4328
          %v4688 = vunpack.c.h.b16 %v4328
          %v4689 = vunpack.c.l.b16 %v4329
          %v4690 = vunpack.c.h.b16 %v4329
          %v4691 = vunpack.c.l.b16 %v4330
          %v4692 = vunpack.c.h.b16 %v4330
          %v4693 = vunpack.c.l.b16 %v4331
          %v4694 = vunpack.c.h.b16 %v4331
          %v4695 = vunpack.c.l.b16 %v4332
          %v4696 = vunpack.c.h.b16 %v4332
          %v4697 = vunpack.c.l.b16 %v4333
          %v4698 = vunpack.c.h.b16 %v4333
          %v4699 = vunpack.c.l.b16 %v4334
          %v4700 = vunpack.c.h.b16 %v4334
          %v4701 = vunpack.c.l.b16 %v4335
          %v4702 = vunpack.c.h.b16 %v4335
          %v4703 = vunpack.c.l.b16 %v4336
          %v4704 = vunpack.c.h.b16 %v4336
          %v4705 = vunpack.c.l.b16 %v4337
          %v4706 = vunpack.c.h.b16 %v4337
          %v4707 = vunpack.c.l.b16 %v4338
          %v4708 = vunpack.c.h.b16 %v4338
          %v4709 = vunpack.c.l.b16 %v4339
          %v4710 = vunpack.c.h.b16 %v4339
          %v4711 = vunpack.c.l.b16 %v4340
          %v4712 = vunpack.c.h.b16 %v4340
          %v4713 = vunpack.c.l.b16 %v4341
          %v4714 = vunpack.c.h.b16 %v4341
          %v4715 = vunpack.c.l.b16 %v4342
          %v4716 = vunpack.c.h.b16 %v4342
          %v4717 = vunpack.c.l.b16 %v4343
          %v4718 = vunpack.c.h.b16 %v4343
          %v4719 = vunpack.c.l.b16 %v4344
          %v4720 = vunpack.c.h.b16 %v4344
          %v4721 = vunpack.c.l.b16 %v4345
          %v4722 = vunpack.c.h.b16 %v4345
          %v4723 = vunpack.c.l.b16 %v4346
          %v4724 = vunpack.c.h.b16 %v4346
          %v4725 = vunpack.c.l.b16 %v4347
          %v4726 = vunpack.c.h.b16 %v4347
          %v4727 = vunpack.c.l.b16 %v4348
          %v4728 = vunpack.c.h.b16 %v4348
          %v4729 = vunpack.c.l.b16 %v4349
          %v4730 = vunpack.c.h.b16 %v4349
          %v4731 = vunpack.c.l.b16 %v4350
          %v4732 = vunpack.c.h.b16 %v4350
          %v4733 = vunpack.c.l.b16 %v4351
          %v4734 = vunpack.c.h.b16 %v4351
          %v4735 = vunpack.c.l.b16 %v4352
          %v4736 = vunpack.c.h.b16 %v4352
          %v4737 = vpack.c.b16 %v4497, %v4481
          %v4738 = vpack.c.b16 %v4498, %v4482
          %v4739 = vpack.c.b16 %v4499, %v4483
          %v4740 = vpack.c.b16 %v4500, %v4484
          %v4741 = vpack.c.b16 %v4501, %v4485
          %v4742 = vpack.c.b16 %v4502, %v4486
          %v4743 = vpack.c.b16 %v4503, %v4487
          %v4744 = vpack.c.b16 %v4504, %v4488
          %v4745 = vpack.c.b16 %v4505, %v4489
          %v4746 = vpack.c.b16 %v4506, %v4490
          %v4747 = vpack.c.b16 %v4507, %v4491
          %v4748 = vpack.c.b16 %v4508, %v4492
          %v4749 = vpack.c.b16 %v4509, %v4493
          %v4750 = vpack.c.b16 %v4510, %v4494
          %v4751 = vpack.c.b16 %v4511, %v4495
          %v4752 = vpack.c.b16 %v4512, %v4496
          %v4753 = vpack.c.b16 %v4529, %v4513
          %v4754 = vpack.c.b16 %v4530, %v4514
          %v4755 = vpack.c.b16 %v4531, %v4515
          %v4756 = vpack.c.b16 %v4532, %v4516
          %v4757 = vpack.c.b16 %v4533, %v4517
          %v4758 = vpack.c.b16 %v4534, %v4518
          %v4759 = vpack.c.b16 %v4535, %v4519
          %v4760 = vpack.c.b16 %v4536, %v4520
          %v4761 = vpack.c.b16 %v4537, %v4521
          %v4762 = vpack.c.b16 %v4538, %v4522
          %v4763 = vpack.c.b16 %v4539, %v4523
          %v4764 = vpack.c.b16 %v4540, %v4524
          %v4765 = vpack.c.b16 %v4541, %v4525
          %v4766 = vpack.c.b16 %v4542, %v4526
          %v4767 = vpack.c.b16 %v4543, %v4527
          %v4768 = vpack.c.b16 %v4544, %v4528
          %v4769 = vpack.c.b16 %v4561, %v4545
          %v4770 = vpack.c.b16 %v4562, %v4546
          %v4771 = vpack.c.b16 %v4563, %v4547
          %v4772 = vpack.c.b16 %v4564, %v4548
          %v4773 = vpack.c.b16 %v4565, %v4549
          %v4774 = vpack.c.b16 %v4566, %v4550
          %v4775 = vpack.c.b16 %v4567, %v4551
          %v4776 = vpack.c.b16 %v4568, %v4552
          %v4777 = vpack.c.b16 %v4569, %v4553
          %v4778 = vpack.c.b16 %v4570, %v4554
          %v4779 = vpack.c.b16 %v4571, %v4555
          %v4780 = vpack.c.b16 %v4572, %v4556
          %v4781 = vpack.c.b16 %v4573, %v4557
          %v4782 = vpack.c.b16 %v4574, %v4558
          %v4783 = vpack.c.b16 %v4575, %v4559
          %v4784 = vpack.c.b16 %v4576, %v4560
          %v4785 = vpack.c.b16 %v4593, %v4577
          %v4786 = vpack.c.b16 %v4594, %v4578
          %v4787 = vpack.c.b16 %v4595, %v4579
          %v4788 = vpack.c.b16 %v4596, %v4580
          %v4789 = vpack.c.b16 %v4597, %v4581
          %v4790 = vpack.c.b16 %v4598, %v4582
          %v4791 = vpack.c.b16 %v4599, %v4583
          %v4792 = vpack.c.b16 %v4600, %v4584
          %v4793 = vpack.c.b16 %v4601, %v4585
          %v4794 = vpack.c.b16 %v4602, %v4586
          %v4795 = vpack.c.b16 %v4603, %v4587
          %v4796 = vpack.c.b16 %v4604, %v4588
          %v4797 = vpack.c.b16 %v4605, %v4589
          %v4798 = vpack.c.b16 %v4606, %v4590
          %v4799 = vpack.c.b16 %v4607, %v4591
          %v4800 = vpack.c.b16 %v4608, %v4592
          %v4801 = vpack.c.b16 %v4625, %v4609
          %v4802 = vpack.c.b16 %v4626, %v4610
          %v4803 = vpack.c.b16 %v4627, %v4611
          %v4804 = vpack.c.b16 %v4628, %v4612
          %v4805 = vpack.c.b16 %v4629, %v4613
          %v4806 = vpack.c.b16 %v4630, %v4614
          %v4807 = vpack.c.b16 %v4631, %v4615
          %v4808 = vpack.c.b16 %v4632, %v4616
          %v4809 = vpack.c.b16 %v4633, %v4617
          %v4810 = vpack.c.b16 %v4634, %v4618
          %v4811 = vpack.c.b16 %v4635, %v4619
          %v4812 = vpack.c.b16 %v4636, %v4620
          %v4813 = vpack.c.b16 %v4637, %v4621
          %v4814 = vpack.c.b16 %v4638, %v4622
          %v4815 = vpack.c.b16 %v4639, %v4623
          %v4816 = vpack.c.b16 %v4640, %v4624
          %v4817 = vpack.c.b16 %v4657, %v4641
          %v4818 = vpack.c.b16 %v4658, %v4642
          %v4819 = vpack.c.b16 %v4659, %v4643
          %v4820 = vpack.c.b16 %v4660, %v4644
          %v4821 = vpack.c.b16 %v4661, %v4645
          %v4822 = vpack.c.b16 %v4662, %v4646
          %v4823 = vpack.c.b16 %v4663, %v4647
          %v4824 = vpack.c.b16 %v4664, %v4648
          %v4825 = vpack.c.b16 %v4665, %v4649
          %v4826 = vpack.c.b16 %v4666, %v4650
          %v4827 = vpack.c.b16 %v4667, %v4651
          %v4828 = vpack.c.b16 %v4668, %v4652
          %v4829 = vpack.c.b16 %v4669, %v4653
          %v4830 = vpack.c.b16 %v4670, %v4654
          %v4831 = vpack.c.b16 %v4671, %v4655
          %v4832 = vpack.c.b16 %v4672, %v4656
          %v4833 = vpack.c.b16 %v4689, %v4673
          %v4834 = vpack.c.b16 %v4690, %v4674
          %v4835 = vpack.c.b16 %v4691, %v4675
          %v4836 = vpack.c.b16 %v4692, %v4676
          %v4837 = vpack.c.b16 %v4693, %v4677
          %v4838 = vpack.c.b16 %v4694, %v4678
          %v4839 = vpack.c.b16 %v4695, %v4679
          %v4840 = vpack.c.b16 %v4696, %v4680
          %v4841 = vpack.c.b16 %v4697, %v4681
          %v4842 = vpack.c.b16 %v4698, %v4682
          %v4843 = vpack.c.b16 %v4699, %v4683
          %v4844 = vpack.c.b16 %v4700, %v4684
          %v4845 = vpack.c.b16 %v4701, %v4685
          %v4846 = vpack.c.b16 %v4702, %v4686
          %v4847 = vpack.c.b16 %v4703, %v4687
          %v4848 = vpack.c.b16 %v4704, %v4688
          %v4849 = vpack.c.b16 %v4721, %v4705
          %v4850 = vpack.c.b16 %v4722, %v4706
          %v4851 = vpack.c.b16 %v4723, %v4707
          %v4852 = vpack.c.b16 %v4724, %v4708
          %v4853 = vpack.c.b16 %v4725, %v4709
          %v4854 = vpack.c.b16 %v4726, %v4710
          %v4855 = vpack.c.b16 %v4727, %v4711
          %v4856 = vpack.c.b16 %v4728, %v4712
          %v4857 = vpack.c.b16 %v4729, %v4713
          %v4858 = vpack.c.b16 %v4730, %v4714
          %v4859 = vpack.c.b16 %v4731, %v4715
          %v4860 = vpack.c.b16 %v4732, %v4716
          %v4861 = vpack.c.b16 %v4733, %v4717
          %v4862 = vpack.c.b16 %v4734, %v4718
          %v4863 = vpack.c.b16 %v4735, %v4719
          %v4864 = vpack.c.b16 %v4736, %v4720
          %4993 = vmatprep.subr.bf16.mxu0 %v4850
          %4994 = vmatpush1.bf16.msra.mxu0 %v4849
          %4995 = vmatprep.subr.bf16.mxu0 %v4834
          %4996 = vmatpush1.bf16.msra.mxu0 %v4833
          %4997 = vmatprep.subr.bf16.mxu0 %v4818
          %4998 = vmatpush1.bf16.msra.mxu0 %v4817
          %4999 = vmatprep.subr.bf16.mxu0 %v4802
          %5000 = vmatpush1.bf16.msra.mxu0 %v4801
          %5001 = vmatprep.subr.bf16.mxu0 %v4786
          %5002 = vmatpush1.bf16.msra.mxu0 %v4785
          %5003 = vmatprep.subr.bf16.mxu0 %v4770
          %5004 = vmatpush1.bf16.msra.mxu0 %v4769
          %5005 = vmatprep.subr.bf16.mxu0 %v4754
          %5006 = vmatpush1.bf16.msra.mxu0 %v4753
          %5007 = vmatprep.subr.bf16.mxu0 %v4738
          %5008 = vmatpush1.bf16.msra.mxu0 %v4737
          %5009 = vmatprep.subr.bf16.mxu0 0
          %5010 = vmatpush2.bf16.msra.mxu0 0
          %5011 = vmatprep.subr.bf16.mxu0 0
          %5012 = vmatpush2.bf16.msra.mxu0 0
          %5013 = vmatprep.subr.bf16.mxu0 0
          %5014 = vmatpush2.bf16.msra.mxu0 0
          %5015 = vmatprep.subr.bf16.mxu0 0
          %5016 = vmatpush2.bf16.msra.mxu0 0
          %5017 = vmatprep.subr.bf16.mxu0 0
          %5018 = vmatpush2.bf16.msra.mxu0 0
          %5019 = vmatprep.subr.bf16.mxu0 0
          %5020 = vmatpush2.bf16.msra.mxu0 0
          %5021 = vmatprep.subr.bf16.mxu0 0
          %5022 = vmatpush2.bf16.msra.mxu0 0
          %5023 = vmatprep.subr.bf16.mxu0 0
          %5024 = vmatpush2.bf16.msra.mxu0 0
          %5025 = vmatprep.mubr.bf16.mxu0 0
          %5026 = vmatmul.mubr.bf16.gmra.mxu0 %v2320
          %v5027 = vpop.f32.mrf.mxu0
          %v5028 = vadd.f32 0.0, %v5027
          %v5029 = vpop.f32.mrf.mxu0
          %v5030 = vadd.f32 0.0, %v5029
          %v5031 = vpop.f32.mrf.mxu0
          %v5032 = vadd.f32 0.0, %v5031
          %v5033 = vpop.f32.mrf.mxu0
          %v5034 = vadd.f32 0.0, %v5033
          %5035 = vmatprep.mubr.bf16.mxu0 0
          %5036 = vmatmul.mubr.bf16.gmra.mxu0 %v2321
          %v5037 = vpop.f32.mrf.mxu0
          %v5038 = vadd.f32 0.0, %v5037
          %v5039 = vpop.f32.mrf.mxu0
          %v5040 = vadd.f32 0.0, %v5039
          %v5041 = vpop.f32.mrf.mxu0
          %v5042 = vadd.f32 0.0, %v5041
          %v5043 = vpop.f32.mrf.mxu0
          %v5044 = vadd.f32 0.0, %v5043
          %5045 = vmatprep.mubr.bf16.mxu0 0
          %5046 = vmatmul.mubr.bf16.gmra.mxu0 %v2322
          %v5047 = vpop.f32.mrf.mxu0
          %v5048 = vadd.f32 0.0, %v5047
          %v5049 = vpop.f32.mrf.mxu0
          %v5050 = vadd.f32 0.0, %v5049
          %v5051 = vpop.f32.mrf.mxu0
          %v5052 = vadd.f32 0.0, %v5051
          %v5053 = vpop.f32.mrf.mxu0
          %v5054 = vadd.f32 0.0, %v5053
          %5055 = vmatprep.mubr.bf16.mxu0 0
          %5056 = vmatmul.mubr.bf16.gmra.mxu0 %v2323
          %v5057 = vpop.f32.mrf.mxu0
          %v5058 = vadd.f32 0.0, %v5057
          %v5059 = vpop.f32.mrf.mxu0
          %v5060 = vadd.f32 0.0, %v5059
          %v5061 = vpop.f32.mrf.mxu0
          %v5062 = vadd.f32 0.0, %v5061
          %v5063 = vpop.f32.mrf.mxu0
          %v5064 = vadd.f32 0.0, %v5063
          %5065 = vmatprep.mubr.bf16.mxu0 0
          %5066 = vmatmul.mubr.bf16.gmra.mxu0 %v2324
          %v5067 = vpop.f32.mrf.mxu0
          %v5068 = vadd.f32 0.0, %v5067
          %v5069 = vpop.f32.mrf.mxu0
          %v5070 = vadd.f32 0.0, %v5069
          %v5071 = vpop.f32.mrf.mxu0
          %v5072 = vadd.f32 0.0, %v5071
          %v5073 = vpop.f32.mrf.mxu0
          %v5074 = vadd.f32 0.0, %v5073
          %5075 = vmatprep.mubr.bf16.mxu0 0
          %5076 = vmatmul.mubr.bf16.gmra.mxu0 %v2325
          %v5077 = vpop.f32.mrf.mxu0
          %v5078 = vadd.f32 0.0, %v5077
          %v5079 = vpop.f32.mrf.mxu0
          %v5080 = vadd.f32 0.0, %v5079
          %v5081 = vpop.f32.mrf.mxu0
          %v5082 = vadd.f32 0.0, %v5081
          %v5083 = vpop.f32.mrf.mxu0
          %v5084 = vadd.f32 0.0, %v5083
          %5085 = vmatprep.mubr.bf16.mxu0 0
          %5086 = vmatmul.mubr.bf16.gmra.mxu0 %v2326
          %v5087 = vpop.f32.mrf.mxu0
          %v5088 = vadd.f32 0.0, %v5087
          %v5089 = vpop.f32.mrf.mxu0
          %v5090 = vadd.f32 0.0, %v5089
          %v5091 = vpop.f32.mrf.mxu0
          %v5092 = vadd.f32 0.0, %v5091
          %v5093 = vpop.f32.mrf.mxu0
          %v5094 = vadd.f32 0.0, %v5093
          %5095 = vmatprep.mubr.bf16.mxu0 0
          %5096 = vmatmul.mubr.bf16.gmra.mxu0 %v2327
          %v5097 = vpop.f32.mrf.mxu0
          %v5098 = vadd.f32 0.0, %v5097
          %v5099 = vpop.f32.mrf.mxu0
          %v5100 = vadd.f32 0.0, %v5099
          %v5101 = vpop.f32.mrf.mxu0
          %v5102 = vadd.f32 0.0, %v5101
          %v5103 = vpop.f32.mrf.mxu0
          %v5104 = vadd.f32 0.0, %v5103
          %5105 = vdwg.mxu0
          %5106 = vmatprep.subr.bf16.mxu0 %v4852
          %5107 = vmatpush1.bf16.msra.mxu0 %v4851
          %5108 = vmatprep.subr.bf16.mxu0 %v4836
          %5109 = vmatpush1.bf16.msra.mxu0 %v4835
          %5110 = vmatprep.subr.bf16.mxu0 %v4820
          %5111 = vmatpush1.bf16.msra.mxu0 %v4819
          %5112 = vmatprep.subr.bf16.mxu0 %v4804
          %5113 = vmatpush1.bf16.msra.mxu0 %v4803
          %5114 = vmatprep.subr.bf16.mxu0 %v4788
          %5115 = vmatpush1.bf16.msra.mxu0 %v4787
          %5116 = vmatprep.subr.bf16.mxu0 %v4772
          %5117 = vmatpush1.bf16.msra.mxu0 %v4771
          %5118 = vmatprep.subr.bf16.mxu0 %v4756
          %5119 = vmatpush1.bf16.msra.mxu0 %v4755
          %5120 = vmatprep.subr.bf16.mxu0 %v4740
          %5121 = vmatpush1.bf16.msra.mxu0 %v4739
          %5122 = vmatprep.subr.bf16.mxu0 0
          %5123 = vmatpush2.bf16.msra.mxu0 0
          %5124 = vmatprep.subr.bf16.mxu0 0
          %5125 = vmatpush2.bf16.msra.mxu0 0
          %5126 = vmatprep.subr.bf16.mxu0 0
          %5127 = vmatpush2.bf16.msra.mxu0 0
          %5128 = vmatprep.subr.bf16.mxu0 0
          %5129 = vmatpush2.bf16.msra.mxu0 0
          %5130 = vmatprep.subr.bf16.mxu0 0
          %5131 = vmatpush2.bf16.msra.mxu0 0
          %5132 = vmatprep.subr.bf16.mxu0 0
          %5133 = vmatpush2.bf16.msra.mxu0 0
          %5134 = vmatprep.subr.bf16.mxu0 0
          %5135 = vmatpush2.bf16.msra.mxu0 0
          %5136 = vmatprep.subr.bf16.mxu0 0
          %5137 = vmatpush2.bf16.msra.mxu0 0
          %5138 = vmatprep.mubr.bf16.mxu0 0
          %5139 = vmatmul.mubr.bf16.gmra.mxu0 %v2320
          %v5140 = vpop.f32.mrf.mxu0
          %v5141 = vadd.f32 0.0, %v5140
          %v5142 = vpop.f32.mrf.mxu0
          %v5143 = vadd.f32 0.0, %v5142
          %v5144 = vpop.f32.mrf.mxu0
          %v5145 = vadd.f32 0.0, %v5144
          %v5146 = vpop.f32.mrf.mxu0
          %v5147 = vadd.f32 0.0, %v5146
          %5148 = vmatprep.mubr.bf16.mxu0 0
          %5149 = vmatmul.mubr.bf16.gmra.mxu0 %v2321
          %v5150 = vpop.f32.mrf.mxu0
          %v5151 = vadd.f32 0.0, %v5150
          %v5152 = vpop.f32.mrf.mxu0
          %v5153 = vadd.f32 0.0, %v5152
          %v5154 = vpop.f32.mrf.mxu0
          %v5155 = vadd.f32 0.0, %v5154
          %v5156 = vpop.f32.mrf.mxu0
          %v5157 = vadd.f32 0.0, %v5156
          %5158 = vmatprep.mubr.bf16.mxu0 0
          %5159 = vmatmul.mubr.bf16.gmra.mxu0 %v2322
          %v5160 = vpop.f32.mrf.mxu0
          %v5161 = vadd.f32 0.0, %v5160
          %v5162 = vpop.f32.mrf.mxu0
          %v5163 = vadd.f32 0.0, %v5162
          %v5164 = vpop.f32.mrf.mxu0
          %v5165 = vadd.f32 0.0, %v5164
          %v5166 = vpop.f32.mrf.mxu0
          %v5167 = vadd.f32 0.0, %v5166
          %5168 = vmatprep.mubr.bf16.mxu0 0
          %5169 = vmatmul.mubr.bf16.gmra.mxu0 %v2323
          %v5170 = vpop.f32.mrf.mxu0
          %v5171 = vadd.f32 0.0, %v5170
          %v5172 = vpop.f32.mrf.mxu0
          %v5173 = vadd.f32 0.0, %v5172
          %v5174 = vpop.f32.mrf.mxu0
          %v5175 = vadd.f32 0.0, %v5174
          %v5176 = vpop.f32.mrf.mxu0
          %v5177 = vadd.f32 0.0, %v5176
          %5178 = vmatprep.mubr.bf16.mxu0 0
          %5179 = vmatmul.mubr.bf16.gmra.mxu0 %v2324
          %v5180 = vpop.f32.mrf.mxu0
          %v5181 = vadd.f32 0.0, %v5180
          %v5182 = vpop.f32.mrf.mxu0
          %v5183 = vadd.f32 0.0, %v5182
          %v5184 = vpop.f32.mrf.mxu0
          %v5185 = vadd.f32 0.0, %v5184
          %v5186 = vpop.f32.mrf.mxu0
          %v5187 = vadd.f32 0.0, %v5186
          %5188 = vmatprep.mubr.bf16.mxu0 0
          %5189 = vmatmul.mubr.bf16.gmra.mxu0 %v2325
          %v5190 = vpop.f32.mrf.mxu0
          %v5191 = vadd.f32 0.0, %v5190
          %v5192 = vpop.f32.mrf.mxu0
          %v5193 = vadd.f32 0.0, %v5192
          %v5194 = vpop.f32.mrf.mxu0
          %v5195 = vadd.f32 0.0, %v5194
          %v5196 = vpop.f32.mrf.mxu0
          %v5197 = vadd.f32 0.0, %v5196
          %5198 = vmatprep.mubr.bf16.mxu0 0
          %5199 = vmatmul.mubr.bf16.gmra.mxu0 %v2326
          %v5200 = vpop.f32.mrf.mxu0
          %v5201 = vadd.f32 0.0, %v5200
          %v5202 = vpop.f32.mrf.mxu0
          %v5203 = vadd.f32 0.0, %v5202
          %v5204 = vpop.f32.mrf.mxu0
          %v5205 = vadd.f32 0.0, %v5204
          %v5206 = vpop.f32.mrf.mxu0
          %v5207 = vadd.f32 0.0, %v5206
          %5208 = vmatprep.mubr.bf16.mxu0 0
          %5209 = vmatmul.mubr.bf16.gmra.mxu0 %v2327
          %v5210 = vpop.f32.mrf.mxu0
          %v5211 = vadd.f32 0.0, %v5210
          %v5212 = vpop.f32.mrf.mxu0
          %v5213 = vadd.f32 0.0, %v5212
          %v5214 = vpop.f32.mrf.mxu0
          %v5215 = vadd.f32 0.0, %v5214
          %v5216 = vpop.f32.mrf.mxu0
          %v5217 = vadd.f32 0.0, %v5216
          %5218 = vdwg.mxu0
          %5219 = vmatprep.subr.bf16.mxu0 %v4854
          %5220 = vmatpush1.bf16.msra.mxu0 %v4853
          %5221 = vmatprep.subr.bf16.mxu0 %v4838
          %5222 = vmatpush1.bf16.msra.mxu0 %v4837
          %5223 = vmatprep.subr.bf16.mxu0 %v4822
          %5224 = vmatpush1.bf16.msra.mxu0 %v4821
          %5225 = vmatprep.subr.bf16.mxu0 %v4806
          %5226 = vmatpush1.bf16.msra.mxu0 %v4805
          %5227 = vmatprep.subr.bf16.mxu0 %v4790
          %5228 = vmatpush1.bf16.msra.mxu0 %v4789
          %5229 = vmatprep.subr.bf16.mxu0 %v4774
          %5230 = vmatpush1.bf16.msra.mxu0 %v4773
          %5231 = vmatprep.subr.bf16.mxu0 %v4758
          %5232 = vmatpush1.bf16.msra.mxu0 %v4757
          %5233 = vmatprep.subr.bf16.mxu0 %v4742
          %5234 = vmatpush1.bf16.msra.mxu0 %v4741
          %5235 = vmatprep.subr.bf16.mxu0 0
          %5236 = vmatpush2.bf16.msra.mxu0 0
          %5237 = vmatprep.subr.bf16.mxu0 0
          %5238 = vmatpush2.bf16.msra.mxu0 0
          %5239 = vmatprep.subr.bf16.mxu0 0
          %5240 = vmatpush2.bf16.msra.mxu0 0
          %5241 = vmatprep.subr.bf16.mxu0 0
          %5242 = vmatpush2.bf16.msra.mxu0 0
          %5243 = vmatprep.subr.bf16.mxu0 0
          %5244 = vmatpush2.bf16.msra.mxu0 0
          %5245 = vmatprep.subr.bf16.mxu0 0
          %5246 = vmatpush2.bf16.msra.mxu0 0
          %5247 = vmatprep.subr.bf16.mxu0 0
          %5248 = vmatpush2.bf16.msra.mxu0 0
          %5249 = vmatprep.subr.bf16.mxu0 0
          %5250 = vmatpush2.bf16.msra.mxu0 0
          %5251 = vmatprep.mubr.bf16.mxu0 0
          %5252 = vmatmul.mubr.bf16.gmra.mxu0 %v2320
          %v5253 = vpop.f32.mrf.mxu0
          %v5254 = vadd.f32 0.0, %v5253
          %v5255 = vpop.f32.mrf.mxu0
          %v5256 = vadd.f32 0.0, %v5255
          %v5257 = vpop.f32.mrf.mxu0
          %v5258 = vadd.f32 0.0, %v5257
          %v5259 = vpop.f32.mrf.mxu0
          %v5260 = vadd.f32 0.0, %v5259
          %5261 = vmatprep.mubr.bf16.mxu0 0
          %5262 = vmatmul.mubr.bf16.gmra.mxu0 %v2321
          %v5263 = vpop.f32.mrf.mxu0
          %v5264 = vadd.f32 0.0, %v5263
          %v5265 = vpop.f32.mrf.mxu0
          %v5266 = vadd.f32 0.0, %v5265
          %v5267 = vpop.f32.mrf.mxu0
          %v5268 = vadd.f32 0.0, %v5267
          %v5269 = vpop.f32.mrf.mxu0
          %v5270 = vadd.f32 0.0, %v5269
          %5271 = vmatprep.mubr.bf16.mxu0 0
          %5272 = vmatmul.mubr.bf16.gmra.mxu0 %v2322
          %v5273 = vpop.f32.mrf.mxu0
          %v5274 = vadd.f32 0.0, %v5273
          %v5275 = vpop.f32.mrf.mxu0
          %v5276 = vadd.f32 0.0, %v5275
          %v5277 = vpop.f32.mrf.mxu0
          %v5278 = vadd.f32 0.0, %v5277
          %v5279 = vpop.f32.mrf.mxu0
          %v5280 = vadd.f32 0.0, %v5279
          %5281 = vmatprep.mubr.bf16.mxu0 0
          %5282 = vmatmul.mubr.bf16.gmra.mxu0 %v2323
          %v5283 = vpop.f32.mrf.mxu0
          %v5284 = vadd.f32 0.0, %v5283
          %v5285 = vpop.f32.mrf.mxu0
          %v5286 = vadd.f32 0.0, %v5285
          %v5287 = vpop.f32.mrf.mxu0
          %v5288 = vadd.f32 0.0, %v5287
          %v5289 = vpop.f32.mrf.mxu0
          %v5290 = vadd.f32 0.0, %v5289
          %5291 = vmatprep.mubr.bf16.mxu0 0
          %5292 = vmatmul.mubr.bf16.gmra.mxu0 %v2324
          %v5293 = vpop.f32.mrf.mxu0
          %v5294 = vadd.f32 0.0, %v5293
          %v5295 = vpop.f32.mrf.mxu0
          %v5296 = vadd.f32 0.0, %v5295
          %v5297 = vpop.f32.mrf.mxu0
          %v5298 = vadd.f32 0.0, %v5297
          %v5299 = vpop.f32.mrf.mxu0
          %v5300 = vadd.f32 0.0, %v5299
          %5301 = vmatprep.mubr.bf16.mxu0 0
          %5302 = vmatmul.mubr.bf16.gmra.mxu0 %v2325
          %v5303 = vpop.f32.mrf.mxu0
          %v5304 = vadd.f32 0.0, %v5303
          %v5305 = vpop.f32.mrf.mxu0
          %v5306 = vadd.f32 0.0, %v5305
          %v5307 = vpop.f32.mrf.mxu0
          %v5308 = vadd.f32 0.0, %v5307
          %v5309 = vpop.f32.mrf.mxu0
          %v5310 = vadd.f32 0.0, %v5309
          %5311 = vmatprep.mubr.bf16.mxu0 0
          %5312 = vmatmul.mubr.bf16.gmra.mxu0 %v2326
          %v5313 = vpop.f32.mrf.mxu0
          %v5314 = vadd.f32 0.0, %v5313
          %v5315 = vpop.f32.mrf.mxu0
          %v5316 = vadd.f32 0.0, %v5315
          %v5317 = vpop.f32.mrf.mxu0
          %v5318 = vadd.f32 0.0, %v5317
          %v5319 = vpop.f32.mrf.mxu0
          %v5320 = vadd.f32 0.0, %v5319
          %5321 = vmatprep.mubr.bf16.mxu0 0
          %5322 = vmatmul.mubr.bf16.gmra.mxu0 %v2327
          %v5323 = vpop.f32.mrf.mxu0
          %v5324 = vadd.f32 0.0, %v5323
          %v5325 = vpop.f32.mrf.mxu0
          %v5326 = vadd.f32 0.0, %v5325
          %v5327 = vpop.f32.mrf.mxu0
          %v5328 = vadd.f32 0.0, %v5327
          %v5329 = vpop.f32.mrf.mxu0
          %v5330 = vadd.f32 0.0, %v5329
          %5331 = vdwg.mxu0
          %5332 = vmatprep.subr.bf16.mxu0 %v4856
          %5333 = vmatpush1.bf16.msra.mxu0 %v4855
          %5334 = vmatprep.subr.bf16.mxu0 %v4840
          %5335 = vmatpush1.bf16.msra.mxu0 %v4839
          %5336 = vmatprep.subr.bf16.mxu0 %v4824
          %5337 = vmatpush1.bf16.msra.mxu0 %v4823
          %5338 = vmatprep.subr.bf16.mxu0 %v4808
          %5339 = vmatpush1.bf16.msra.mxu0 %v4807
          %5340 = vmatprep.subr.bf16.mxu0 %v4792
          %5341 = vmatpush1.bf16.msra.mxu0 %v4791
          %5342 = vmatprep.subr.bf16.mxu0 %v4776
          %5343 = vmatpush1.bf16.msra.mxu0 %v4775
          %5344 = vmatprep.subr.bf16.mxu0 %v4760
          %5345 = vmatpush1.bf16.msra.mxu0 %v4759
          %5346 = vmatprep.subr.bf16.mxu0 %v4744
          %5347 = vmatpush1.bf16.msra.mxu0 %v4743
          %5348 = vmatprep.subr.bf16.mxu0 0
          %5349 = vmatpush2.bf16.msra.mxu0 0
          %5350 = vmatprep.subr.bf16.mxu0 0
          %5351 = vmatpush2.bf16.msra.mxu0 0
          %5352 = vmatprep.subr.bf16.mxu0 0
          %5353 = vmatpush2.bf16.msra.mxu0 0
          %5354 = vmatprep.subr.bf16.mxu0 0
          %5355 = vmatpush2.bf16.msra.mxu0 0
          %5356 = vmatprep.subr.bf16.mxu0 0
          %5357 = vmatpush2.bf16.msra.mxu0 0
          %5358 = vmatprep.subr.bf16.mxu0 0
          %5359 = vmatpush2.bf16.msra.mxu0 0
          %5360 = vmatprep.subr.bf16.mxu0 0
          %5361 = vmatpush2.bf16.msra.mxu0 0
          %5362 = vmatprep.subr.bf16.mxu0 0
          %5363 = vmatpush2.bf16.msra.mxu0 0
          %5364 = vmatprep.mubr.bf16.mxu0 0
          %5365 = vmatmul.mubr.bf16.gmra.mxu0 %v2320
          %v5366 = vpop.f32.mrf.mxu0
          %v5367 = vadd.f32 0.0, %v5366
          %v5368 = vpop.f32.mrf.mxu0
          %v5369 = vadd.f32 0.0, %v5368
          %v5370 = vpop.f32.mrf.mxu0
          %v5371 = vadd.f32 0.0, %v5370
          %v5372 = vpop.f32.mrf.mxu0
          %v5373 = vadd.f32 0.0, %v5372
          %5374 = vmatprep.mubr.bf16.mxu0 0
          %5375 = vmatmul.mubr.bf16.gmra.mxu0 %v2321
          %v5376 = vpop.f32.mrf.mxu0
          %v5377 = vadd.f32 0.0, %v5376
          %v5378 = vpop.f32.mrf.mxu0
          %v5379 = vadd.f32 0.0, %v5378
          %v5380 = vpop.f32.mrf.mxu0
          %v5381 = vadd.f32 0.0, %v5380
          %v5382 = vpop.f32.mrf.mxu0
          %v5383 = vadd.f32 0.0, %v5382
          %5384 = vmatprep.mubr.bf16.mxu0 0
          %5385 = vmatmul.mubr.bf16.gmra.mxu0 %v2322
          %v5386 = vpop.f32.mrf.mxu0
          %v5387 = vadd.f32 0.0, %v5386
          %v5388 = vpop.f32.mrf.mxu0
          %v5389 = vadd.f32 0.0, %v5388
          %v5390 = vpop.f32.mrf.mxu0
          %v5391 = vadd.f32 0.0, %v5390
          %v5392 = vpop.f32.mrf.mxu0
          %v5393 = vadd.f32 0.0, %v5392
          %5394 = vmatprep.mubr.bf16.mxu0 0
          %5395 = vmatmul.mubr.bf16.gmra.mxu0 %v2323
          %v5396 = vpop.f32.mrf.mxu0
          %v5397 = vadd.f32 0.0, %v5396
          %v5398 = vpop.f32.mrf.mxu0
          %v5399 = vadd.f32 0.0, %v5398
          %v5400 = vpop.f32.mrf.mxu0
          %v5401 = vadd.f32 0.0, %v5400
          %v5402 = vpop.f32.mrf.mxu0
          %v5403 = vadd.f32 0.0, %v5402
          %5404 = vmatprep.mubr.bf16.mxu0 0
          %5405 = vmatmul.mubr.bf16.gmra.mxu0 %v2324
          %v5406 = vpop.f32.mrf.mxu0
          %v5407 = vadd.f32 0.0, %v5406
          %v5408 = vpop.f32.mrf.mxu0
          %v5409 = vadd.f32 0.0, %v5408
          %v5410 = vpop.f32.mrf.mxu0
          %v5411 = vadd.f32 0.0, %v5410
          %v5412 = vpop.f32.mrf.mxu0
          %v5413 = vadd.f32 0.0, %v5412
          %5414 = vmatprep.mubr.bf16.mxu0 0
          %5415 = vmatmul.mubr.bf16.gmra.mxu0 %v2325
          %v5416 = vpop.f32.mrf.mxu0
          %v5417 = vadd.f32 0.0, %v5416
          %v5418 = vpop.f32.mrf.mxu0
          %v5419 = vadd.f32 0.0, %v5418
          %v5420 = vpop.f32.mrf.mxu0
          %v5421 = vadd.f32 0.0, %v5420
          %v5422 = vpop.f32.mrf.mxu0
          %v5423 = vadd.f32 0.0, %v5422
          %5424 = vmatprep.mubr.bf16.mxu0 0
          %5425 = vmatmul.mubr.bf16.gmra.mxu0 %v2326
          %v5426 = vpop.f32.mrf.mxu0
          %v5427 = vadd.f32 0.0, %v5426
          %v5428 = vpop.f32.mrf.mxu0
          %v5429 = vadd.f32 0.0, %v5428
          %v5430 = vpop.f32.mrf.mxu0
          %v5431 = vadd.f32 0.0, %v5430
          %v5432 = vpop.f32.mrf.mxu0
          %v5433 = vadd.f32 0.0, %v5432
          %5434 = vmatprep.mubr.bf16.mxu0 0
          %5435 = vmatmul.mubr.bf16.gmra.mxu0 %v2327
          %v5436 = vpop.f32.mrf.mxu0
          %v5437 = vadd.f32 0.0, %v5436
          %v5438 = vpop.f32.mrf.mxu0
          %v5439 = vadd.f32 0.0, %v5438
          %v5440 = vpop.f32.mrf.mxu0
          %v5441 = vadd.f32 0.0, %v5440
          %v5442 = vpop.f32.mrf.mxu0
          %v5443 = vadd.f32 0.0, %v5442
          %5444 = vdwg.mxu0
          %5445 = vmatprep.subr.bf16.mxu0 %v4858
          %5446 = vmatpush1.bf16.msra.mxu0 %v4857
          %5447 = vmatprep.subr.bf16.mxu0 %v4842
          %5448 = vmatpush1.bf16.msra.mxu0 %v4841
          %5449 = vmatprep.subr.bf16.mxu0 %v4826
          %5450 = vmatpush1.bf16.msra.mxu0 %v4825
          %5451 = vmatprep.subr.bf16.mxu0 %v4810
          %5452 = vmatpush1.bf16.msra.mxu0 %v4809
          %5453 = vmatprep.subr.bf16.mxu0 %v4794
          %5454 = vmatpush1.bf16.msra.mxu0 %v4793
          %5455 = vmatprep.subr.bf16.mxu0 %v4778
          %5456 = vmatpush1.bf16.msra.mxu0 %v4777
          %5457 = vmatprep.subr.bf16.mxu0 %v4762
          %5458 = vmatpush1.bf16.msra.mxu0 %v4761
          %5459 = vmatprep.subr.bf16.mxu0 %v4746
          %5460 = vmatpush1.bf16.msra.mxu0 %v4745
          %5461 = vmatprep.subr.bf16.mxu0 0
          %5462 = vmatpush2.bf16.msra.mxu0 0
          %5463 = vmatprep.subr.bf16.mxu0 0
          %5464 = vmatpush2.bf16.msra.mxu0 0
          %5465 = vmatprep.subr.bf16.mxu0 0
          %5466 = vmatpush2.bf16.msra.mxu0 0
          %5467 = vmatprep.subr.bf16.mxu0 0
          %5468 = vmatpush2.bf16.msra.mxu0 0
          %5469 = vmatprep.subr.bf16.mxu0 0
          %5470 = vmatpush2.bf16.msra.mxu0 0
          %5471 = vmatprep.subr.bf16.mxu0 0
          %5472 = vmatpush2.bf16.msra.mxu0 0
          %5473 = vmatprep.subr.bf16.mxu0 0
          %5474 = vmatpush2.bf16.msra.mxu0 0
          %5475 = vmatprep.subr.bf16.mxu0 0
          %5476 = vmatpush2.bf16.msra.mxu0 0
          %5477 = vmatprep.mubr.bf16.mxu0 0
          %5478 = vmatmul.mubr.bf16.gmra.mxu0 %v2320
          %v5479 = vpop.f32.mrf.mxu0
          %v5480 = vadd.f32 0.0, %v5479
          %v5481 = vpop.f32.mrf.mxu0
          %v5482 = vadd.f32 0.0, %v5481
          %v5483 = vpop.f32.mrf.mxu0
          %v5484 = vadd.f32 0.0, %v5483
          %v5485 = vpop.f32.mrf.mxu0
          %v5486 = vadd.f32 0.0, %v5485
          %5487 = vmatprep.mubr.bf16.mxu0 0
          %5488 = vmatmul.mubr.bf16.gmra.mxu0 %v2321
          %v5489 = vpop.f32.mrf.mxu0
          %v5490 = vadd.f32 0.0, %v5489
          %v5491 = vpop.f32.mrf.mxu0
          %v5492 = vadd.f32 0.0, %v5491
          %v5493 = vpop.f32.mrf.mxu0
          %v5494 = vadd.f32 0.0, %v5493
          %v5495 = vpop.f32.mrf.mxu0
          %v5496 = vadd.f32 0.0, %v5495
          %5497 = vmatprep.mubr.bf16.mxu0 0
          %5498 = vmatmul.mubr.bf16.gmra.mxu0 %v2322
          %v5499 = vpop.f32.mrf.mxu0
          %v5500 = vadd.f32 0.0, %v5499
          %v5501 = vpop.f32.mrf.mxu0
          %v5502 = vadd.f32 0.0, %v5501
          %v5503 = vpop.f32.mrf.mxu0
          %v5504 = vadd.f32 0.0, %v5503
          %v5505 = vpop.f32.mrf.mxu0
          %v5506 = vadd.f32 0.0, %v5505
          %5507 = vmatprep.mubr.bf16.mxu0 0
          %5508 = vmatmul.mubr.bf16.gmra.mxu0 %v2323
          %v5509 = vpop.f32.mrf.mxu0
          %v5510 = vadd.f32 0.0, %v5509
          %v5511 = vpop.f32.mrf.mxu0
          %v5512 = vadd.f32 0.0, %v5511
          %v5513 = vpop.f32.mrf.mxu0
          %v5514 = vadd.f32 0.0, %v5513
          %v5515 = vpop.f32.mrf.mxu0
          %v5516 = vadd.f32 0.0, %v5515
          %5517 = vmatprep.mubr.bf16.mxu0 0
          %5518 = vmatmul.mubr.bf16.gmra.mxu0 %v2324
          %v5519 = vpop.f32.mrf.mxu0
          %v5520 = vadd.f32 0.0, %v5519
          %v5521 = vpop.f32.mrf.mxu0
          %v5522 = vadd.f32 0.0, %v5521
          %v5523 = vpop.f32.mrf.mxu0
          %v5524 = vadd.f32 0.0, %v5523
          %v5525 = vpop.f32.mrf.mxu0
          %v5526 = vadd.f32 0.0, %v5525
          %5527 = vmatprep.mubr.bf16.mxu0 0
          %5528 = vmatmul.mubr.bf16.gmra.mxu0 %v2325
          %v5529 = vpop.f32.mrf.mxu0
          %v5530 = vadd.f32 0.0, %v5529
          %v5531 = vpop.f32.mrf.mxu0
          %v5532 = vadd.f32 0.0, %v5531
          %v5533 = vpop.f32.mrf.mxu0
          %v5534 = vadd.f32 0.0, %v5533
          %v5535 = vpop.f32.mrf.mxu0
          %v5536 = vadd.f32 0.0, %v5535
          %5537 = vmatprep.mubr.bf16.mxu0 0
          %5538 = vmatmul.mubr.bf16.gmra.mxu0 %v2326
          %v5539 = vpop.f32.mrf.mxu0
          %v5540 = vadd.f32 0.0, %v5539
          %v5541 = vpop.f32.mrf.mxu0
          %v5542 = vadd.f32 0.0, %v5541
          %v5543 = vpop.f32.mrf.mxu0
          %v5544 = vadd.f32 0.0, %v5543
          %v5545 = vpop.f32.mrf.mxu0
          %v5546 = vadd.f32 0.0, %v5545
          %5547 = vmatprep.mubr.bf16.mxu0 0
          %5548 = vmatmul.mubr.bf16.gmra.mxu0 %v2327
          %v5549 = vpop.f32.mrf.mxu0
          %v5550 = vadd.f32 0.0, %v5549
          %v5551 = vpop.f32.mrf.mxu0
          %v5552 = vadd.f32 0.0, %v5551
          %v5553 = vpop.f32.mrf.mxu0
          %v5554 = vadd.f32 0.0, %v5553
          %v5555 = vpop.f32.mrf.mxu0
          %v5556 = vadd.f32 0.0, %v5555
          %5557 = vdwg.mxu0
          %5558 = vmatprep.subr.bf16.mxu0 %v4860
          %5559 = vmatpush1.bf16.msra.mxu0 %v4859
          %5560 = vmatprep.subr.bf16.mxu0 %v4844
          %5561 = vmatpush1.bf16.msra.mxu0 %v4843
          %5562 = vmatprep.subr.bf16.mxu0 %v4828
          %5563 = vmatpush1.bf16.msra.mxu0 %v4827
          %5564 = vmatprep.subr.bf16.mxu0 %v4812
          %5565 = vmatpush1.bf16.msra.mxu0 %v4811
          %5566 = vmatprep.subr.bf16.mxu0 %v4796
          %5567 = vmatpush1.bf16.msra.mxu0 %v4795
          %5568 = vmatprep.subr.bf16.mxu0 %v4780
          %5569 = vmatpush1.bf16.msra.mxu0 %v4779
          %5570 = vmatprep.subr.bf16.mxu0 %v4764
          %5571 = vmatpush1.bf16.msra.mxu0 %v4763
          %5572 = vmatprep.subr.bf16.mxu0 %v4748
          %5573 = vmatpush1.bf16.msra.mxu0 %v4747
          %5574 = vmatprep.subr.bf16.mxu0 0
          %5575 = vmatpush2.bf16.msra.mxu0 0
          %5576 = vmatprep.subr.bf16.mxu0 0
          %5577 = vmatpush2.bf16.msra.mxu0 0
          %5578 = vmatprep.subr.bf16.mxu0 0
          %5579 = vmatpush2.bf16.msra.mxu0 0
          %5580 = vmatprep.subr.bf16.mxu0 0
          %5581 = vmatpush2.bf16.msra.mxu0 0
          %5582 = vmatprep.subr.bf16.mxu0 0
          %5583 = vmatpush2.bf16.msra.mxu0 0
          %5584 = vmatprep.subr.bf16.mxu0 0
          %5585 = vmatpush2.bf16.msra.mxu0 0
          %5586 = vmatprep.subr.bf16.mxu0 0
          %5587 = vmatpush2.bf16.msra.mxu0 0
          %5588 = vmatprep.subr.bf16.mxu0 0
          %5589 = vmatpush2.bf16.msra.mxu0 0
          %5590 = vmatprep.mubr.bf16.mxu0 0
          %5591 = vmatmul.mubr.bf16.gmra.mxu0 %v2320
          %v5592 = vpop.f32.mrf.mxu0
          %v5593 = vadd.f32 0.0, %v5592
          %v5594 = vpop.f32.mrf.mxu0
          %v5595 = vadd.f32 0.0, %v5594
          %v5596 = vpop.f32.mrf.mxu0
          %v5597 = vadd.f32 0.0, %v5596
          %v5598 = vpop.f32.mrf.mxu0
          %v5599 = vadd.f32 0.0, %v5598
          %5600 = vmatprep.mubr.bf16.mxu0 0
          %5601 = vmatmul.mubr.bf16.gmra.mxu0 %v2321
          %v5602 = vpop.f32.mrf.mxu0
          %v5603 = vadd.f32 0.0, %v5602
          %v5604 = vpop.f32.mrf.mxu0
          %v5605 = vadd.f32 0.0, %v5604
          %v5606 = vpop.f32.mrf.mxu0
          %v5607 = vadd.f32 0.0, %v5606
          %v5608 = vpop.f32.mrf.mxu0
          %v5609 = vadd.f32 0.0, %v5608
          %5610 = vmatprep.mubr.bf16.mxu0 0
          %5611 = vmatmul.mubr.bf16.gmra.mxu0 %v2322
          %v5612 = vpop.f32.mrf.mxu0
          %v5613 = vadd.f32 0.0, %v5612
          %v5614 = vpop.f32.mrf.mxu0
          %v5615 = vadd.f32 0.0, %v5614
          %v5616 = vpop.f32.mrf.mxu0
          %v5617 = vadd.f32 0.0, %v5616
          %v5618 = vpop.f32.mrf.mxu0
          %v5619 = vadd.f32 0.0, %v5618
          %5620 = vmatprep.mubr.bf16.mxu0 0
          %5621 = vmatmul.mubr.bf16.gmra.mxu0 %v2323
          %v5622 = vpop.f32.mrf.mxu0
          %v5623 = vadd.f32 0.0, %v5622
          %v5624 = vpop.f32.mrf.mxu0
          %v5625 = vadd.f32 0.0, %v5624
          %v5626 = vpop.f32.mrf.mxu0
          %v5627 = vadd.f32 0.0, %v5626
          %v5628 = vpop.f32.mrf.mxu0
          %v5629 = vadd.f32 0.0, %v5628
          %5630 = vmatprep.mubr.bf16.mxu0 0
          %5631 = vmatmul.mubr.bf16.gmra.mxu0 %v2324
          %v5632 = vpop.f32.mrf.mxu0
          %v5633 = vadd.f32 0.0, %v5632
          %v5634 = vpop.f32.mrf.mxu0
          %v5635 = vadd.f32 0.0, %v5634
          %v5636 = vpop.f32.mrf.mxu0
          %v5637 = vadd.f32 0.0, %v5636
          %v5638 = vpop.f32.mrf.mxu0
          %v5639 = vadd.f32 0.0, %v5638
          %5640 = vmatprep.mubr.bf16.mxu0 0
          %5641 = vmatmul.mubr.bf16.gmra.mxu0 %v2325
          %v5642 = vpop.f32.mrf.mxu0
          %v5643 = vadd.f32 0.0, %v5642
          %v5644 = vpop.f32.mrf.mxu0
          %v5645 = vadd.f32 0.0, %v5644
          %v5646 = vpop.f32.mrf.mxu0
          %v5647 = vadd.f32 0.0, %v5646
          %v5648 = vpop.f32.mrf.mxu0
          %v5649 = vadd.f32 0.0, %v5648
          %5650 = vmatprep.mubr.bf16.mxu0 0
          %5651 = vmatmul.mubr.bf16.gmra.mxu0 %v2326
          %v5652 = vpop.f32.mrf.mxu0
          %v5653 = vadd.f32 0.0, %v5652
          %v5654 = vpop.f32.mrf.mxu0
          %v5655 = vadd.f32 0.0, %v5654
          %v5656 = vpop.f32.mrf.mxu0
          %v5657 = vadd.f32 0.0, %v5656
          %v5658 = vpop.f32.mrf.mxu0
          %v5659 = vadd.f32 0.0, %v5658
          %5660 = vmatprep.mubr.bf16.mxu0 0
          %5661 = vmatmul.mubr.bf16.gmra.mxu0 %v2327
          %v5662 = vpop.f32.mrf.mxu0
          %v5663 = vadd.f32 0.0, %v5662
          %v5664 = vpop.f32.mrf.mxu0
          %v5665 = vadd.f32 0.0, %v5664
          %v5666 = vpop.f32.mrf.mxu0
          %v5667 = vadd.f32 0.0, %v5666
          %v5668 = vpop.f32.mrf.mxu0
          %v5669 = vadd.f32 0.0, %v5668
          %5670 = vdwg.mxu0
          %5671 = vmatprep.subr.bf16.mxu0 %v4862
          %5672 = vmatpush1.bf16.msra.mxu0 %v4861
          %5673 = vmatprep.subr.bf16.mxu0 %v4846
          %5674 = vmatpush1.bf16.msra.mxu0 %v4845
          %5675 = vmatprep.subr.bf16.mxu0 %v4830
          %5676 = vmatpush1.bf16.msra.mxu0 %v4829
          %5677 = vmatprep.subr.bf16.mxu0 %v4814
          %5678 = vmatpush1.bf16.msra.mxu0 %v4813
          %5679 = vmatprep.subr.bf16.mxu0 %v4798
          %5680 = vmatpush1.bf16.msra.mxu0 %v4797
          %5681 = vmatprep.subr.bf16.mxu0 %v4782
          %5682 = vmatpush1.bf16.msra.mxu0 %v4781
          %5683 = vmatprep.subr.bf16.mxu0 %v4766
          %5684 = vmatpush1.bf16.msra.mxu0 %v4765
          %5685 = vmatprep.subr.bf16.mxu0 %v4750
          %5686 = vmatpush1.bf16.msra.mxu0 %v4749
          %5687 = vmatprep.subr.bf16.mxu0 0
          %5688 = vmatpush2.bf16.msra.mxu0 0
          %5689 = vmatprep.subr.bf16.mxu0 0
          %5690 = vmatpush2.bf16.msra.mxu0 0
          %5691 = vmatprep.subr.bf16.mxu0 0
          %5692 = vmatpush2.bf16.msra.mxu0 0
          %5693 = vmatprep.subr.bf16.mxu0 0
          %5694 = vmatpush2.bf16.msra.mxu0 0
          %5695 = vmatprep.subr.bf16.mxu0 0
          %5696 = vmatpush2.bf16.msra.mxu0 0
          %5697 = vmatprep.subr.bf16.mxu0 0
          %5698 = vmatpush2.bf16.msra.mxu0 0
          %5699 = vmatprep.subr.bf16.mxu0 0
          %5700 = vmatpush2.bf16.msra.mxu0 0
          %5701 = vmatprep.subr.bf16.mxu0 0
          %5702 = vmatpush2.bf16.msra.mxu0 0
          %5703 = vmatprep.mubr.bf16.mxu0 0
          %5704 = vmatmul.mubr.bf16.gmra.mxu0 %v2320
          %v5705 = vpop.f32.mrf.mxu0
          %v5706 = vadd.f32 0.0, %v5705
          %v5707 = vpop.f32.mrf.mxu0
          %v5708 = vadd.f32 0.0, %v5707
          %v5709 = vpop.f32.mrf.mxu0
          %v5710 = vadd.f32 0.0, %v5709
          %v5711 = vpop.f32.mrf.mxu0
          %v5712 = vadd.f32 0.0, %v5711
          %5713 = vmatprep.mubr.bf16.mxu0 0
          %5714 = vmatmul.mubr.bf16.gmra.mxu0 %v2321
          %v5715 = vpop.f32.mrf.mxu0
          %v5716 = vadd.f32 0.0, %v5715
          %v5717 = vpop.f32.mrf.mxu0
          %v5718 = vadd.f32 0.0, %v5717
          %v5719 = vpop.f32.mrf.mxu0
          %v5720 = vadd.f32 0.0, %v5719
          %v5721 = vpop.f32.mrf.mxu0
          %v5722 = vadd.f32 0.0, %v5721
          %5723 = vmatprep.mubr.bf16.mxu0 0
          %5724 = vmatmul.mubr.bf16.gmra.mxu0 %v2322
          %v5725 = vpop.f32.mrf.mxu0
          %v5726 = vadd.f32 0.0, %v5725
          %v5727 = vpop.f32.mrf.mxu0
          %v5728 = vadd.f32 0.0, %v5727
          %v5729 = vpop.f32.mrf.mxu0
          %v5730 = vadd.f32 0.0, %v5729
          %v5731 = vpop.f32.mrf.mxu0
          %v5732 = vadd.f32 0.0, %v5731
          %5733 = vmatprep.mubr.bf16.mxu0 0
          %5734 = vmatmul.mubr.bf16.gmra.mxu0 %v2323
          %v5735 = vpop.f32.mrf.mxu0
          %v5736 = vadd.f32 0.0, %v5735
          %v5737 = vpop.f32.mrf.mxu0
          %v5738 = vadd.f32 0.0, %v5737
          %v5739 = vpop.f32.mrf.mxu0
          %v5740 = vadd.f32 0.0, %v5739
          %v5741 = vpop.f32.mrf.mxu0
          %v5742 = vadd.f32 0.0, %v5741
          %5743 = vmatprep.mubr.bf16.mxu0 0
          %5744 = vmatmul.mubr.bf16.gmra.mxu0 %v2324
          %v5745 = vpop.f32.mrf.mxu0
          %v5746 = vadd.f32 0.0, %v5745
          %v5747 = vpop.f32.mrf.mxu0
          %v5748 = vadd.f32 0.0, %v5747
          %v5749 = vpop.f32.mrf.mxu0
          %v5750 = vadd.f32 0.0, %v5749
          %v5751 = vpop.f32.mrf.mxu0
          %v5752 = vadd.f32 0.0, %v5751
          %5753 = vmatprep.mubr.bf16.mxu0 0
          %5754 = vmatmul.mubr.bf16.gmra.mxu0 %v2325
          %v5755 = vpop.f32.mrf.mxu0
          %v5756 = vadd.f32 0.0, %v5755
          %v5757 = vpop.f32.mrf.mxu0
          %v5758 = vadd.f32 0.0, %v5757
          %v5759 = vpop.f32.mrf.mxu0
          %v5760 = vadd.f32 0.0, %v5759
          %v5761 = vpop.f32.mrf.mxu0
          %v5762 = vadd.f32 0.0, %v5761
          %5763 = vmatprep.mubr.bf16.mxu0 0
          %5764 = vmatmul.mubr.bf16.gmra.mxu0 %v2326
          %v5765 = vpop.f32.mrf.mxu0
          %v5766 = vadd.f32 0.0, %v5765
          %v5767 = vpop.f32.mrf.mxu0
          %v5768 = vadd.f32 0.0, %v5767
          %v5769 = vpop.f32.mrf.mxu0
          %v5770 = vadd.f32 0.0, %v5769
          %v5771 = vpop.f32.mrf.mxu0
          %v5772 = vadd.f32 0.0, %v5771
          %5773 = vmatprep.mubr.bf16.mxu0 0
          %5774 = vmatmul.mubr.bf16.gmra.mxu0 %v2327
          %v5775 = vpop.f32.mrf.mxu0
          %v5776 = vadd.f32 0.0, %v5775
          %v5777 = vpop.f32.mrf.mxu0
          %v5778 = vadd.f32 0.0, %v5777
          %v5779 = vpop.f32.mrf.mxu0
          %v5780 = vadd.f32 0.0, %v5779
          %v5781 = vpop.f32.mrf.mxu0
          %v5782 = vadd.f32 0.0, %v5781
          %5783 = vdwg.mxu0
          %5784 = vmatprep.subr.bf16.mxu0 %v4864
          %5785 = vmatpush1.bf16.msra.mxu0 %v4863
          %5786 = vmatprep.subr.bf16.mxu0 %v4848
          %5787 = vmatpush1.bf16.msra.mxu0 %v4847
          %5788 = vmatprep.subr.bf16.mxu0 %v4832
          %5789 = vmatpush1.bf16.msra.mxu0 %v4831
          %5790 = vmatprep.subr.bf16.mxu0 %v4816
          %5791 = vmatpush1.bf16.msra.mxu0 %v4815
          %5792 = vmatprep.subr.bf16.mxu0 %v4800
          %5793 = vmatpush1.bf16.msra.mxu0 %v4799
          %5794 = vmatprep.subr.bf16.mxu0 %v4784
          %5795 = vmatpush1.bf16.msra.mxu0 %v4783
          %5796 = vmatprep.subr.bf16.mxu0 %v4768
          %5797 = vmatpush1.bf16.msra.mxu0 %v4767
          %5798 = vmatprep.subr.bf16.mxu0 %v4752
          %5799 = vmatpush1.bf16.msra.mxu0 %v4751
          %5800 = vmatprep.subr.bf16.mxu0 0
          %5801 = vmatpush2.bf16.msra.mxu0 0
          %5802 = vmatprep.subr.bf16.mxu0 0
          %5803 = vmatpush2.bf16.msra.mxu0 0
          %5804 = vmatprep.subr.bf16.mxu0 0
          %5805 = vmatpush2.bf16.msra.mxu0 0
          %5806 = vmatprep.subr.bf16.mxu0 0
          %5807 = vmatpush2.bf16.msra.mxu0 0
          %5808 = vmatprep.subr.bf16.mxu0 0
          %5809 = vmatpush2.bf16.msra.mxu0 0
          %5810 = vmatprep.subr.bf16.mxu0 0
          %5811 = vmatpush2.bf16.msra.mxu0 0
          %5812 = vmatprep.subr.bf16.mxu0 0
          %5813 = vmatpush2.bf16.msra.mxu0 0
          %5814 = vmatprep.subr.bf16.mxu0 0
          %5815 = vmatpush2.bf16.msra.mxu0 0
          %5816 = vmatprep.mubr.bf16.mxu0 0
          %5817 = vmatmul.mubr.bf16.gmra.mxu0 %v2320
          %v5818 = vpop.f32.mrf.mxu0
          %v5819 = vadd.f32 0.0, %v5818
          %v5820 = vpop.f32.mrf.mxu0
          %v5821 = vadd.f32 0.0, %v5820
          %v5822 = vpop.f32.mrf.mxu0
          %v5823 = vadd.f32 0.0, %v5822
          %v5824 = vpop.f32.mrf.mxu0
          %v5825 = vadd.f32 0.0, %v5824
          %5826 = vmatprep.mubr.bf16.mxu0 0
          %5827 = vmatmul.mubr.bf16.gmra.mxu0 %v2321
          %v5828 = vpop.f32.mrf.mxu0
          %v5829 = vadd.f32 0.0, %v5828
          %v5830 = vpop.f32.mrf.mxu0
          %v5831 = vadd.f32 0.0, %v5830
          %v5832 = vpop.f32.mrf.mxu0
          %v5833 = vadd.f32 0.0, %v5832
          %v5834 = vpop.f32.mrf.mxu0
          %v5835 = vadd.f32 0.0, %v5834
          %5836 = vmatprep.mubr.bf16.mxu0 0
          %5837 = vmatmul.mubr.bf16.gmra.mxu0 %v2322
          %v5838 = vpop.f32.mrf.mxu0
          %v5839 = vadd.f32 0.0, %v5838
          %v5840 = vpop.f32.mrf.mxu0
          %v5841 = vadd.f32 0.0, %v5840
          %v5842 = vpop.f32.mrf.mxu0
          %v5843 = vadd.f32 0.0, %v5842
          %v5844 = vpop.f32.mrf.mxu0
          %v5845 = vadd.f32 0.0, %v5844
          %5846 = vmatprep.mubr.bf16.mxu0 0
          %5847 = vmatmul.mubr.bf16.gmra.mxu0 %v2323
          %v5848 = vpop.f32.mrf.mxu0
          %v5849 = vadd.f32 0.0, %v5848
          %v5850 = vpop.f32.mrf.mxu0
          %v5851 = vadd.f32 0.0, %v5850
          %v5852 = vpop.f32.mrf.mxu0
          %v5853 = vadd.f32 0.0, %v5852
          %v5854 = vpop.f32.mrf.mxu0
          %v5855 = vadd.f32 0.0, %v5854
          %5856 = vmatprep.mubr.bf16.mxu0 0
          %5857 = vmatmul.mubr.bf16.gmra.mxu0 %v2324
          %v5858 = vpop.f32.mrf.mxu0
          %v5859 = vadd.f32 0.0, %v5858
          %v5860 = vpop.f32.mrf.mxu0
          %v5861 = vadd.f32 0.0, %v5860
          %v5862 = vpop.f32.mrf.mxu0
          %v5863 = vadd.f32 0.0, %v5862
          %v5864 = vpop.f32.mrf.mxu0
          %v5865 = vadd.f32 0.0, %v5864
          %5866 = vmatprep.mubr.bf16.mxu0 0
          %5867 = vmatmul.mubr.bf16.gmra.mxu0 %v2325
          %v5868 = vpop.f32.mrf.mxu0
          %v5869 = vadd.f32 0.0, %v5868
          %v5870 = vpop.f32.mrf.mxu0
          %v5871 = vadd.f32 0.0, %v5870
          %v5872 = vpop.f32.mrf.mxu0
          %v5873 = vadd.f32 0.0, %v5872
          %v5874 = vpop.f32.mrf.mxu0
          %v5875 = vadd.f32 0.0, %v5874
          %5876 = vmatprep.mubr.bf16.mxu0 0
          %5877 = vmatmul.mubr.bf16.gmra.mxu0 %v2326
          %v5878 = vpop.f32.mrf.mxu0
          %v5879 = vadd.f32 0.0, %v5878
          %v5880 = vpop.f32.mrf.mxu0
          %v5881 = vadd.f32 0.0, %v5880
          %v5882 = vpop.f32.mrf.mxu0
          %v5883 = vadd.f32 0.0, %v5882
          %v5884 = vpop.f32.mrf.mxu0
          %v5885 = vadd.f32 0.0, %v5884
          %5886 = vmatprep.mubr.bf16.mxu0 0
          %5887 = vmatmul.mubr.bf16.gmra.mxu0 %v2327
          %v5888 = vpop.f32.mrf.mxu0
          %v5889 = vadd.f32 0.0, %v5888
          %v5890 = vpop.f32.mrf.mxu0
          %v5891 = vadd.f32 0.0, %v5890
          %v5892 = vpop.f32.mrf.mxu0
          %v5893 = vadd.f32 0.0, %v5892
          %v5894 = vpop.f32.mrf.mxu0
          %v5895 = vadd.f32 0.0, %v5894
          %5896 = vdwg.mxu0
          %5897 = vst [vmem:[#allocation15] sm:$0xff] %v5028
          %5898 = vst [vmem:[#allocation15 + $0x8] sm:$0xff] %v5030
          %5899 = vst [vmem:[#allocation15 + $0x10] sm:$0xff] %v5141
          %5900 = vst [vmem:[#allocation15 + $0x18] sm:$0xff] %v5143
          %5901 = vst [vmem:[#allocation15 + $0x20] sm:$0xff] %v5254
          %5902 = vst [vmem:[#allocation15 + $0x28] sm:$0xff] %v5256
          %5903 = vst [vmem:[#allocation15 + $0x30] sm:$0xff] %v5367
          %5904 = vst [vmem:[#allocation15 + $0x38] sm:$0xff] %v5369
          %5905 = vst [vmem:[#allocation15 + $0x40] sm:$0xff] %v5480
          %5906 = vst [vmem:[#allocation15 + $0x48] sm:$0xff] %v5482
          %5907 = vst [vmem:[#allocation15 + $0x50] sm:$0xff] %v5593
          %5908 = vst [vmem:[#allocation15 + $0x58] sm:$0xff] %v5595
          %5909 = vst [vmem:[#allocation15 + $0x60] sm:$0xff] %v5706
          %5910 = vst [vmem:[#allocation15 + $0x68] sm:$0xff] %v5708
          %5911 = vst [vmem:[#allocation15 + $0x70] sm:$0xff] %v5819
          %5912 = vst [vmem:[#allocation15 + $0x78] sm:$0xff] %v5821
          %5913 = vst [vmem:[#allocation15 + $0x80] sm:$0xff] %v5032
          %5914 = vst [vmem:[#allocation15 + $0x88] sm:$0xff] %v5034
          %5915 = vst [vmem:[#allocation15 + $0x90] sm:$0xff] %v5145
          %5916 = vst [vmem:[#allocation15 + $0x98] sm:$0xff] %v5147
          %5917 = vst [vmem:[#allocation15 + $0xa0] sm:$0xff] %v5258
          %5918 = vst [vmem:[#allocation15 + $0xa8] sm:$0xff] %v5260
          %5919 = vst [vmem:[#allocation15 + $0xb0] sm:$0xff] %v5371
          %5920 = vst [vmem:[#allocation15 + $0xb8] sm:$0xff] %v5373
          %5921 = vst [vmem:[#allocation15 + $0xc0] sm:$0xff] %v5484
          %5922 = vst [vmem:[#allocation15 + $0xc8] sm:$0xff] %v5486
          %5923 = vst [vmem:[#allocation15 + $0xd0] sm:$0xff] %v5597
          %5924 = vst [vmem:[#allocation15 + $0xd8] sm:$0xff] %v5599
          %5925 = vst [vmem:[#allocation15 + $0xe0] sm:$0xff] %v5710
          %5926 = vst [vmem:[#allocation15 + $0xe8] sm:$0xff] %v5712
          %5927 = vst [vmem:[#allocation15 + $0xf0] sm:$0xff] %v5823
          %5928 = vst [vmem:[#allocation15 + $0xf8] sm:$0xff] %v5825
          %5929 = vst [vmem:[#allocation15 + $0x100] sm:$0xff] %v5038
          %5930 = vst [vmem:[#allocation15 + $0x108] sm:$0xff] %v5040
          %5931 = vst [vmem:[#allocation15 + $0x110] sm:$0xff] %v5151
          %5932 = vst [vmem:[#allocation15 + $0x118] sm:$0xff] %v5153
          %5933 = vst [vmem:[#allocation15 + $0x120] sm:$0xff] %v5264
          %5934 = vst [vmem:[#allocation15 + $0x128] sm:$0xff] %v5266
          %5935 = vst [vmem:[#allocation15 + $0x130] sm:$0xff] %v5377
          %5936 = vst [vmem:[#allocation15 + $0x138] sm:$0xff] %v5379
          %5937 = vst [vmem:[#allocation15 + $0x140] sm:$0xff] %v5490
          %5938 = vst [vmem:[#allocation15 + $0x148] sm:$0xff] %v5492
          %5939 = vst [vmem:[#allocation15 + $0x150] sm:$0xff] %v5603
          %5940 = vst [vmem:[#allocation15 + $0x158] sm:$0xff] %v5605
          %5941 = vst [vmem:[#allocation15 + $0x160] sm:$0xff] %v5716
          %5942 = vst [vmem:[#allocation15 + $0x168] sm:$0xff] %v5718
          %5943 = vst [vmem:[#allocation15 + $0x170] sm:$0xff] %v5829
          %5944 = vst [vmem:[#allocation15 + $0x178] sm:$0xff] %v5831
          %5945 = vst [vmem:[#allocation15 + $0x180] sm:$0xff] %v5042
          %5946 = vst [vmem:[#allocation15 + $0x188] sm:$0xff] %v5044
          %5947 = vst [vmem:[#allocation15 + $0x190] sm:$0xff] %v5155
          %5948 = vst [vmem:[#allocation15 + $0x198] sm:$0xff] %v5157
          %5949 = vst [vmem:[#allocation15 + $0x1a0] sm:$0xff] %v5268
          %5950 = vst [vmem:[#allocation15 + $0x1a8] sm:$0xff] %v5270
          %5951 = vst [vmem:[#allocation15 + $0x1b0] sm:$0xff] %v5381
          %5952 = vst [vmem:[#allocation15 + $0x1b8] sm:$0xff] %v5383
          %5953 = vst [vmem:[#allocation15 + $0x1c0] sm:$0xff] %v5494
          %5954 = vst [vmem:[#allocation15 + $0x1c8] sm:$0xff] %v5496
          %5955 = vst [vmem:[#allocation15 + $0x1d0] sm:$0xff] %v5607
          %5956 = vst [vmem:[#allocation15 + $0x1d8] sm:$0xff] %v5609
          %5957 = vst [vmem:[#allocation15 + $0x1e0] sm:$0xff] %v5720
          %5958 = vst [vmem:[#allocation15 + $0x1e8] sm:$0xff] %v5722
          %5959 = vst [vmem:[#allocation15 + $0x1f0] sm:$0xff] %v5833
          %5960 = vst [vmem:[#allocation15 + $0x1f8] sm:$0xff] %v5835
          %5961 = vst [vmem:[#allocation15 + $0x200] sm:$0xff] %v5048
          %5962 = vst [vmem:[#allocation15 + $0x208] sm:$0xff] %v5050
          %5963 = vst [vmem:[#allocation15 + $0x210] sm:$0xff] %v5161
          %5964 = vst [vmem:[#allocation15 + $0x218] sm:$0xff] %v5163
          %5965 = vst [vmem:[#allocation15 + $0x220] sm:$0xff] %v5274
          %5966 = vst [vmem:[#allocation15 + $0x228] sm:$0xff] %v5276
          %5967 = vst [vmem:[#allocation15 + $0x230] sm:$0xff] %v5387
          %5968 = vst [vmem:[#allocation15 + $0x238] sm:$0xff] %v5389
          %5969 = vst [vmem:[#allocation15 + $0x240] sm:$0xff] %v5500
          %5970 = vst [vmem:[#allocation15 + $0x248] sm:$0xff] %v5502
          %5971 = vst [vmem:[#allocation15 + $0x250] sm:$0xff] %v5613
          %5972 = vst [vmem:[#allocation15 + $0x258] sm:$0xff] %v5615
          %5973 = vst [vmem:[#allocation15 + $0x260] sm:$0xff] %v5726
          %5974 = vst [vmem:[#allocation15 + $0x268] sm:$0xff] %v5728
          %5975 = vst [vmem:[#allocation15 + $0x270] sm:$0xff] %v5839
          %5976 = vst [vmem:[#allocation15 + $0x278] sm:$0xff] %v5841
          %5977 = vst [vmem:[#allocation15 + $0x280] sm:$0xff] %v5052
          %5978 = vst [vmem:[#allocation15 + $0x288] sm:$0xff] %v5054
          %5979 = vst [vmem:[#allocation15 + $0x290] sm:$0xff] %v5165
          %5980 = vst [vmem:[#allocation15 + $0x298] sm:$0xff] %v5167
          %5981 = vst [vmem:[#allocation15 + $0x2a0] sm:$0xff] %v5278
          %5982 = vst [vmem:[#allocation15 + $0x2a8] sm:$0xff] %v5280
          %5983 = vst [vmem:[#allocation15 + $0x2b0] sm:$0xff] %v5391
          %5984 = vst [vmem:[#allocation15 + $0x2b8] sm:$0xff] %v5393
          %5985 = vst [vmem:[#allocation15 + $0x2c0] sm:$0xff] %v5504
          %5986 = vst [vmem:[#allocation15 + $0x2c8] sm:$0xff] %v5506
          %5987 = vst [vmem:[#allocation15 + $0x2d0] sm:$0xff] %v5617
          %5988 = vst [vmem:[#allocation15 + $0x2d8] sm:$0xff] %v5619
          %5989 = vst [vmem:[#allocation15 + $0x2e0] sm:$0xff] %v5730
          %5990 = vst [vmem:[#allocation15 + $0x2e8] sm:$0xff] %v5732
          %5991 = vst [vmem:[#allocation15 + $0x2f0] sm:$0xff] %v5843
          %5992 = vst [vmem:[#allocation15 + $0x2f8] sm:$0xff] %v5845
          %5993 = vst [vmem:[#allocation15 + $0x300] sm:$0xff] %v5058
          %5994 = vst [vmem:[#allocation15 + $0x308] sm:$0xff] %v5060
          %5995 = vst [vmem:[#allocation15 + $0x310] sm:$0xff] %v5171
          %5996 = vst [vmem:[#allocation15 + $0x318] sm:$0xff] %v5173
          %5997 = vst [vmem:[#allocation15 + $0x320] sm:$0xff] %v5284
          %5998 = vst [vmem:[#allocation15 + $0x328] sm:$0xff] %v5286
          %5999 = vst [vmem:[#allocation15 + $0x330] sm:$0xff] %v5397
          %6000 = vst [vmem:[#allocation15 + $0x338] sm:$0xff] %v5399
          %6001 = vst [vmem:[#allocation15 + $0x340] sm:$0xff] %v5510
          %6002 = vst [vmem:[#allocation15 + $0x348] sm:$0xff] %v5512
          %6003 = vst [vmem:[#allocation15 + $0x350] sm:$0xff] %v5623
          %6004 = vst [vmem:[#allocation15 + $0x358] sm:$0xff] %v5625
          %6005 = vst [vmem:[#allocation15 + $0x360] sm:$0xff] %v5736
          %6006 = vst [vmem:[#allocation15 + $0x368] sm:$0xff] %v5738
          %6007 = vst [vmem:[#allocation15 + $0x370] sm:$0xff] %v5849
          %6008 = vst [vmem:[#allocation15 + $0x378] sm:$0xff] %v5851
          %6009 = vst [vmem:[#allocation15 + $0x380] sm:$0xff] %v5062
          %6010 = vst [vmem:[#allocation15 + $0x388] sm:$0xff] %v5064
          %6011 = vst [vmem:[#allocation15 + $0x390] sm:$0xff] %v5175
          %6012 = vst [vmem:[#allocation15 + $0x398] sm:$0xff] %v5177
          %6013 = vst [vmem:[#allocation15 + $0x3a0] sm:$0xff] %v5288
          %6014 = vst [vmem:[#allocation15 + $0x3a8] sm:$0xff] %v5290
          %6015 = vst [vmem:[#allocation15 + $0x3b0] sm:$0xff] %v5401
          %6016 = vst [vmem:[#allocation15 + $0x3b8] sm:$0xff] %v5403
          %6017 = vst [vmem:[#allocation15 + $0x3c0] sm:$0xff] %v5514
          %6018 = vst [vmem:[#allocation15 + $0x3c8] sm:$0xff] %v5516
          %6019 = vst [vmem:[#allocation15 + $0x3d0] sm:$0xff] %v5627
          %6020 = vst [vmem:[#allocation15 + $0x3d8] sm:$0xff] %v5629
          %6021 = vst [vmem:[#allocation15 + $0x3e0] sm:$0xff] %v5740
          %6022 = vst [vmem:[#allocation15 + $0x3e8] sm:$0xff] %v5742
          %6023 = vst [vmem:[#allocation15 + $0x3f0] sm:$0xff] %v5853
          %6024 = vst [vmem:[#allocation15 + $0x3f8] sm:$0xff] %v5855
          %6025 = vst [vmem:[#allocation15 + $0x400] sm:$0xff] %v5068
          %6026 = vst [vmem:[#allocation15 + $0x408] sm:$0xff] %v5070
          %6027 = vst [vmem:[#allocation15 + $0x410] sm:$0xff] %v5181
          %6028 = vst [vmem:[#allocation15 + $0x418] sm:$0xff] %v5183
          %6029 = vst [vmem:[#allocation15 + $0x420] sm:$0xff] %v5294
          %6030 = vst [vmem:[#allocation15 + $0x428] sm:$0xff] %v5296
          %6031 = vst [vmem:[#allocation15 + $0x430] sm:$0xff] %v5407
          %6032 = vst [vmem:[#allocation15 + $0x438] sm:$0xff] %v5409
          %6033 = vst [vmem:[#allocation15 + $0x440] sm:$0xff] %v5520
          %6034 = vst [vmem:[#allocation15 + $0x448] sm:$0xff] %v5522
          %6035 = vst [vmem:[#allocation15 + $0x450] sm:$0xff] %v5633
          %6036 = vst [vmem:[#allocation15 + $0x458] sm:$0xff] %v5635
          %6037 = vst [vmem:[#allocation15 + $0x460] sm:$0xff] %v5746
          %6038 = vst [vmem:[#allocation15 + $0x468] sm:$0xff] %v5748
          %6039 = vst [vmem:[#allocation15 + $0x470] sm:$0xff] %v5859
          %6040 = vst [vmem:[#allocation15 + $0x478] sm:$0xff] %v5861
          %6041 = vst [vmem:[#allocation15 + $0x480] sm:$0xff] %v5072
          %6042 = vst [vmem:[#allocation15 + $0x488] sm:$0xff] %v5074
          %6043 = vst [vmem:[#allocation15 + $0x490] sm:$0xff] %v5185
          %6044 = vst [vmem:[#allocation15 + $0x498] sm:$0xff] %v5187
          %6045 = vst [vmem:[#allocation15 + $0x4a0] sm:$0xff] %v5298
          %6046 = vst [vmem:[#allocation15 + $0x4a8] sm:$0xff] %v5300
          %6047 = vst [vmem:[#allocation15 + $0x4b0] sm:$0xff] %v5411
          %6048 = vst [vmem:[#allocation15 + $0x4b8] sm:$0xff] %v5413
          %6049 = vst [vmem:[#allocation15 + $0x4c0] sm:$0xff] %v5524
          %6050 = vst [vmem:[#allocation15 + $0x4c8] sm:$0xff] %v5526
          %6051 = vst [vmem:[#allocation15 + $0x4d0] sm:$0xff] %v5637
          %6052 = vst [vmem:[#allocation15 + $0x4d8] sm:$0xff] %v5639
          %6053 = vst [vmem:[#allocation15 + $0x4e0] sm:$0xff] %v5750
          %6054 = vst [vmem:[#allocation15 + $0x4e8] sm:$0xff] %v5752
          %6055 = vst [vmem:[#allocation15 + $0x4f0] sm:$0xff] %v5863
          %6056 = vst [vmem:[#allocation15 + $0x4f8] sm:$0xff] %v5865
          %6057 = vst [vmem:[#allocation15 + $0x500] sm:$0xff] %v5078
          %6058 = vst [vmem:[#allocation15 + $0x508] sm:$0xff] %v5080
          %6059 = vst [vmem:[#allocation15 + $0x510] sm:$0xff] %v5191
          %6060 = vst [vmem:[#allocation15 + $0x518] sm:$0xff] %v5193
          %6061 = vst [vmem:[#allocation15 + $0x520] sm:$0xff] %v5304
          %6062 = vst [vmem:[#allocation15 + $0x528] sm:$0xff] %v5306
          %6063 = vst [vmem:[#allocation15 + $0x530] sm:$0xff] %v5417
          %6064 = vst [vmem:[#allocation15 + $0x538] sm:$0xff] %v5419
          %6065 = vst [vmem:[#allocation15 + $0x540] sm:$0xff] %v5530
          %6066 = vst [vmem:[#allocation15 + $0x548] sm:$0xff] %v5532
          %6067 = vst [vmem:[#allocation15 + $0x550] sm:$0xff] %v5643
          %6068 = vst [vmem:[#allocation15 + $0x558] sm:$0xff] %v5645
          %6069 = vst [vmem:[#allocation15 + $0x560] sm:$0xff] %v5756
          %6070 = vst [vmem:[#allocation15 + $0x568] sm:$0xff] %v5758
          %6071 = vst [vmem:[#allocation15 + $0x570] sm:$0xff] %v5869
          %6072 = vst [vmem:[#allocation15 + $0x578] sm:$0xff] %v5871
          %6073 = vst [vmem:[#allocation15 + $0x580] sm:$0xff] %v5082
          %6074 = vst [vmem:[#allocation15 + $0x588] sm:$0xff] %v5084
          %6075 = vst [vmem:[#allocation15 + $0x590] sm:$0xff] %v5195
          %6076 = vst [vmem:[#allocation15 + $0x598] sm:$0xff] %v5197
          %6077 = vst [vmem:[#allocation15 + $0x5a0] sm:$0xff] %v5308
          %6078 = vst [vmem:[#allocation15 + $0x5a8] sm:$0xff] %v5310
          %6079 = vst [vmem:[#allocation15 + $0x5b0] sm:$0xff] %v5421
          %6080 = vst [vmem:[#allocation15 + $0x5b8] sm:$0xff] %v5423
          %6081 = vst [vmem:[#allocation15 + $0x5c0] sm:$0xff] %v5534
          %6082 = vst [vmem:[#allocation15 + $0x5c8] sm:$0xff] %v5536
          %6083 = vst [vmem:[#allocation15 + $0x5d0] sm:$0xff] %v5647
          %6084 = vst [vmem:[#allocation15 + $0x5d8] sm:$0xff] %v5649
          %6085 = vst [vmem:[#allocation15 + $0x5e0] sm:$0xff] %v5760
          %6086 = vst [vmem:[#allocation15 + $0x5e8] sm:$0xff] %v5762
          %6087 = vst [vmem:[#allocation15 + $0x5f0] sm:$0xff] %v5873
          %6088 = vst [vmem:[#allocation15 + $0x5f8] sm:$0xff] %v5875
          %6089 = vst [vmem:[#allocation15 + $0x600] sm:$0xff] %v5088
          %6090 = vst [vmem:[#allocation15 + $0x608] sm:$0xff] %v5090
          %6091 = vst [vmem:[#allocation15 + $0x610] sm:$0xff] %v5201
          %6092 = vst [vmem:[#allocation15 + $0x618] sm:$0xff] %v5203
          %6093 = vst [vmem:[#allocation15 + $0x620] sm:$0xff] %v5314
          %6094 = vst [vmem:[#allocation15 + $0x628] sm:$0xff] %v5316
          %6095 = vst [vmem:[#allocation15 + $0x630] sm:$0xff] %v5427
          %6096 = vst [vmem:[#allocation15 + $0x638] sm:$0xff] %v5429
          %6097 = vst [vmem:[#allocation15 + $0x640] sm:$0xff] %v5540
          %6098 = vst [vmem:[#allocation15 + $0x648] sm:$0xff] %v5542
          %6099 = vst [vmem:[#allocation15 + $0x650] sm:$0xff] %v5653
          %6100 = vst [vmem:[#allocation15 + $0x658] sm:$0xff] %v5655
          %6101 = vst [vmem:[#allocation15 + $0x660] sm:$0xff] %v5766
          %6102 = vst [vmem:[#allocation15 + $0x668] sm:$0xff] %v5768
          %6103 = vst [vmem:[#allocation15 + $0x670] sm:$0xff] %v5879
          %6104 = vst [vmem:[#allocation15 + $0x678] sm:$0xff] %v5881
          %6105 = vst [vmem:[#allocation15 + $0x680] sm:$0xff] %v5092
          %6106 = vst [vmem:[#allocation15 + $0x688] sm:$0xff] %v5094
          %6107 = vst [vmem:[#allocation15 + $0x690] sm:$0xff] %v5205
          %6108 = vst [vmem:[#allocation15 + $0x698] sm:$0xff] %v5207
          %6109 = vst [vmem:[#allocation15 + $0x6a0] sm:$0xff] %v5318
          %6110 = vst [vmem:[#allocation15 + $0x6a8] sm:$0xff] %v5320
          %6111 = vst [vmem:[#allocation15 + $0x6b0] sm:$0xff] %v5431
          %6112 = vst [vmem:[#allocation15 + $0x6b8] sm:$0xff] %v5433
          %6113 = vst [vmem:[#allocation15 + $0x6c0] sm:$0xff] %v5544
          %6114 = vst [vmem:[#allocation15 + $0x6c8] sm:$0xff] %v5546
          %6115 = vst [vmem:[#allocation15 + $0x6d0] sm:$0xff] %v5657
          %6116 = vst [vmem:[#allocation15 + $0x6d8] sm:$0xff] %v5659
          %6117 = vst [vmem:[#allocation15 + $0x6e0] sm:$0xff] %v5770
          %6118 = vst [vmem:[#allocation15 + $0x6e8] sm:$0xff] %v5772
          %6119 = vst [vmem:[#allocation15 + $0x6f0] sm:$0xff] %v5883
          %6120 = vst [vmem:[#allocation15 + $0x6f8] sm:$0xff] %v5885
          %6121 = vst [vmem:[#allocation15 + $0x700] sm:$0xff] %v5098
          %6122 = vst [vmem:[#allocation15 + $0x708] sm:$0xff] %v5100
          %6123 = vst [vmem:[#allocation15 + $0x710] sm:$0xff] %v5211
          %6124 = vst [vmem:[#allocation15 + $0x718] sm:$0xff] %v5213
          %6125 = vst [vmem:[#allocation15 + $0x720] sm:$0xff] %v5324
          %6126 = vst [vmem:[#allocation15 + $0x728] sm:$0xff] %v5326
          %6127 = vst [vmem:[#allocation15 + $0x730] sm:$0xff] %v5437
          %6128 = vst [vmem:[#allocation15 + $0x738] sm:$0xff] %v5439
          %6129 = vst [vmem:[#allocation15 + $0x740] sm:$0xff] %v5550
          %6130 = vst [vmem:[#allocation15 + $0x748] sm:$0xff] %v5552
          %6131 = vst [vmem:[#allocation15 + $0x750] sm:$0xff] %v5663
          %6132 = vst [vmem:[#allocation15 + $0x758] sm:$0xff] %v5665
          %6133 = vst [vmem:[#allocation15 + $0x760] sm:$0xff] %v5776
          %6134 = vst [vmem:[#allocation15 + $0x768] sm:$0xff] %v5778
          %6135 = vst [vmem:[#allocation15 + $0x770] sm:$0xff] %v5889
          %6136 = vst [vmem:[#allocation15 + $0x778] sm:$0xff] %v5891
          %6137 = vst [vmem:[#allocation15 + $0x780] sm:$0xff] %v5102
          %6138 = vst [vmem:[#allocation15 + $0x788] sm:$0xff] %v5104
          %6139 = vst [vmem:[#allocation15 + $0x790] sm:$0xff] %v5215
          %6140 = vst [vmem:[#allocation15 + $0x798] sm:$0xff] %v5217
          %6141 = vst [vmem:[#allocation15 + $0x7a0] sm:$0xff] %v5328
          %6142 = vst [vmem:[#allocation15 + $0x7a8] sm:$0xff] %v5330
          %6143 = vst [vmem:[#allocation15 + $0x7b0] sm:$0xff] %v5441
          %6144 = vst [vmem:[#allocation15 + $0x7b8] sm:$0xff] %v5443
          %6145 = vst [vmem:[#allocation15 + $0x7c0] sm:$0xff] %v5554
          %6146 = vst [vmem:[#allocation15 + $0x7c8] sm:$0xff] %v5556
          %6147 = vst [vmem:[#allocation15 + $0x7d0] sm:$0xff] %v5667
          %6148 = vst [vmem:[#allocation15 + $0x7d8] sm:$0xff] %v5669
          %6149 = vst [vmem:[#allocation15 + $0x7e0] sm:$0xff] %v5780
          %6150 = vst [vmem:[#allocation15 + $0x7e8] sm:$0xff] %v5782
          %6151 = vst [vmem:[#allocation15 + $0x7f0] sm:$0xff] %v5893
          %6152 = vst [vmem:[#allocation15 + $0x7f8] sm:$0xff] %v5895
        $region68: #{tpu_custom_call.1} parent=43 // pred_fallthru
          _
        // Predicated region
        $region69: #{tpu_custom_call.1} parent=43 // pred_check
          %p6153 = pneg %p168
        $region70: #{tpu_custom_call.1} parent=43 // pred_check_branch
          %6155 = sbr.rel (%p6153) target = $region72
        $region71: #{tpu_custom_call.1} parent=43 // pred_region
          %s6157 = ssub.s32 32768, 32768
          %6158 = vsyncadd [#allocation9], %s6157
          %s6159 = sshll.u32 [#allocation15], 4
          %s6160 = int_to_ptr.vmem [resolvable:$true] %s6159
          %6165 = dma.vmem_to_hbm [thread:$0]  %s6160, 32768, %s6, [#allocation9], 2048, 2048, 128
        $region72: #{tpu_custom_call.1} parent=43 // pred_fallthru
          _
        // Predicated region
        $region73: #{tpu_custom_call.1} parent=43 // pred_check
          %p6166 = pneg %p168
        $region74: #{tpu_custom_call.1} parent=43 // pred_check_branch
          %6168 = sbr.rel (%p6166) target = $region76
        $region75: #{tpu_custom_call.1} parent=43 // pred_region
          %6169 = dma.done [#allocation9], 32768
        $region76: #{tpu_custom_call.1} parent=43 // pred_fallthru
          _
      $region44: #{tpu_custom_call.1} parent=5 // pred_fallthru
        _
      %p6170 = scmp.le.s32.totalorder 2, %s19
      // Predicated region
      $region77: #{tpu_custom_call.1} parent=5 // pred_check
        %p6171 = pneg %p6170
      $region78: #{tpu_custom_call.1} parent=5 // pred_check_branch
        %6173 = sbr.rel (%p6171) target = $region80
      $region79: #{tpu_custom_call.1} parent=5 // pred_region
        %s6174 = ssub.s32 %s19, 2
      $region80: #{tpu_custom_call.1} parent=5 // pred_fallthru
        _
    $region6: #{tpu_custom_call.1} parent=1 // loop_footer
      %s23 = sadd.s32 1, %s19
    $region7: #{tpu_custom_call.1} parent=1 // loop_footer_branch
      %18 = sbr.rel target = $region3
    $region8: #{tpu_custom_call.1} parent=1 // loop_exit
      _
    %6175 = vsyncpa [#allocation8], 1
    %s6176 = scalar_lea.sflag [#allocation8], 1
    %6177 = vsyncpa %s6176, 1
    %6178 = vsyncpa [#allocation11], 1
    %6179 = vsyncpa [#allocation14], 1
    %6180 = vsyncpa [#allocation9], 1
    %s6181 = scalar_lea.sflag [#allocation9], 1
    %6182 = vsyncpa %s6181, 1

</llo_original>
